<compile_context>
chip_gen: v7x
topology: tpu7x:2x2x1
jax: 0.10.0
libtpu: 0.0.40
codegen_flags: <defaults>
</compile_context>

<pallas_src>
import functools

import jax
import jax.numpy as jnp
from jax.experimental import pallas as pl
from jax.experimental.pallas import tpu as pltpu

EPS = 1e-5
LANE = 128                      # lane width: pad all channel dims to this


def _round_up(n, m):
    return (n + m - 1) // m * m


def _pick_vmem_limit():
    """Generation-aware scoped-VMEM budget (leave headroom below physical)."""
    phys = 64 * 1024 * 1024
    try:
        phys = int(pltpu.get_tpu_info().vmem_capacity_bytes)
    except Exception:
        pass
    return max(32 * 1024 * 1024, min(phys * 3 // 4, 96 * 1024 * 1024))


VMEM_LIMIT = _pick_vmem_limit()


def _pick_rt(H, W):
    """Row-tile height: ~128 output positions per register accumulator."""
    rt = max(1, min(H, 128 // max(W, 1)))
    while H % rt:
        rt -= 1
    return rt


def _pick_nb(N, H, W, cin, cout):
    """Images per conv grid step: aim for >=512 matmul rows, bounded by VMEM."""
    target = max(1, 512 // max(H * W, 1))
    per_img = 2 * ((H + 2) * (W + 2) * cin * 2 + H * W * cout * 2)  # dbl-buffered bf16 in+out
    cap = max(1, (VMEM_LIMIT // 2) // max(per_img, 1))
    target = min(target, cap, N)
    nb = 1
    for d in range(1, N + 1):
        if N % d == 0 and d <= target:
            nb = d
    return nb


# ---------------------------------------------------------------------------
# Kernel 1: implicit-GEMM 3x3 conv (stride 1, pad 1) + BN statistics
# ---------------------------------------------------------------------------
def _conv3x3_bn_stats_kernel(x_ref, w_ref, y_ref, s_ref, *, H, W, NB, RT):
    """One batch-block of NB zero-padded images per grid step.

    x_ref : (NB, H+2, W+2, Cin)  bf16   padded activation (zero halo)
    w_ref : (3, 3*Cin, Cout)     bf16   3x3 weights, dh-major, dw K-packed
    y_ref : (NB, H, W, Cout)     bf16   pre-BN conv output
    s_ref : (1, 8, Cout)         f32    rows 0/1 = [sum, sum-of-squares]
    """
    cin = x_ref.shape[-1]
    cout = w_ref.shape[-1]
    ssum = jnp.zeros((1, cout), jnp.float32)
    ssq = jnp.zeros((1, cout), jnp.float32)
    for b in range(NB):
        for t in range(H // RT):
            r0 = t * RT
            # Register accumulator for this spatial tile (no VMEM RMW).
            acc = jnp.zeros((RT * W, cout), jnp.float32)
            for dh in range(3):
                # Load the dh slab once; reuse it for all three dw taps.
                slab = x_ref[b, r0 + dh:r0 + dh + RT, :, :]     # (RT, W+2, Cin)
                # K-pack the dw taps: one (RT*W, 3*Cin) @ (3*Cin, Cout) MXU
                # pass instead of three K=Cin passes (fills 256-deep MXU).
                lhs = jnp.concatenate(
                    [slab[:, dw:dw + W, :] for dw in range(3)],
                    axis=-1).reshape(RT * W, 3 * cin)
                acc = acc + jnp.dot(lhs, w_ref[dh],
                                    preferred_element_type=jnp.float32)
            y_ref[b, r0:r0 + RT, :, :] = (
                acc.reshape(RT, W, cout).astype(y_ref.dtype))
            # BN statistics folded in while acc is still live.
            ssum = ssum + jnp.sum(acc, axis=0, keepdims=True)
            ssq = ssq + jnp.sum(acc * acc, axis=0, keepdims=True)
    s_ref[0, 0:1, :] = ssum
    s_ref[0, 1:2, :] = ssq
    s_ref[0, 2:8, :] = jnp.zeros((6, cout), jnp.float32)


def conv3x3_bn_stats(x_pad, w):
    """x_pad: (N, H+2, W+2, Cin) bf16; w: (3, 3*Cin, Cout) bf16.

    Returns y (N, H, W, Cout) bf16 and stats (N//NB, 8, Cout) f32.
    """
    N, Hp, Wp, cin = x_pad.shape
    H, W = Hp - 2, Wp - 2
    cout = w.shape[-1]
    nb = _pick_nb(N, H, W, cin, cout)
    rt = _pick_rt(H, W)
    kernel = functools.partial(_conv3x3_bn_stats_kernel, H=H, W=W, NB=nb, RT=rt)
    y, stats = pl.pallas_call(
        kernel,
        grid=(N // nb,),
        in_specs=[
            pl.BlockSpec((nb, Hp, Wp, cin), lambda g: (g, 0, 0, 0)),
            # Constant index map: the weight DMA is issued once and elided on
            # later grid steps.  TODO(synk): pl.Buffered(1) would also drop the
            # second pipeline buffer; left at default for lowering safety.
            pl.BlockSpec((3, w.shape[1], cout), lambda g: (0, 0, 0)),
        ],
        out_specs=[
            pl.BlockSpec((nb, H, W, cout), lambda g: (g, 0, 0, 0)),
            pl.BlockSpec((1, 8, cout), lambda g: (g, 0, 0)),
        ],
        out_shape=[
            jax.ShapeDtypeStruct((N, H, W, cout), jnp.bfloat16),
            jax.ShapeDtypeStruct((N // nb, 8, cout), jnp.float32),
        ],
        compiler_params=pltpu.CompilerParams(
            dimension_semantics=("parallel",),          # megacore-shardable
            vmem_limit_bytes=VMEM_LIMIT),
    )(x_pad, w)
    return y, stats


# ---------------------------------------------------------------------------
# Kernel 2: BN epilogue (y*scale + shift) [+ ReLU | + residual], writing the
# result into the interior of a zero-halo padded buffer (fuses jnp.pad away).
# ---------------------------------------------------------------------------
def _bn_pad_act_kernel(y_ref, sc_ref, sh_ref, o_ref, *, relu, H, W):
    c = o_ref.shape[-1]
    sc = sc_ref[...].reshape(1, 1, c)
    sh = sh_ref[...].reshape(1, 1, c)
    out = y_ref[0].astype(jnp.float32) * sc + sh
    if relu:
        out = jnp.maximum(out, 0.0)
    o_ref[...] = jnp.zeros_like(o_ref)                  # halo must stay zero
    o_ref[0, 1:H + 1, 1:W + 1, :] = out.astype(o_ref.dtype)


def _bn_pad_add_kernel(y_ref, sc_ref, sh_ref, r_ref, o_ref, *, H, W):
    c = o_ref.shape[-1]
    sc = sc_ref[...].reshape(1, 1, c)
    sh = sh_ref[...].reshape(1, 1, c)
    out = (y_ref[0].astype(jnp.float32) * sc + sh
           + r_ref[0, 1:H + 1, 1:W + 1, :].astype(jnp.float32))
    o_ref[...] = jnp.zeros_like(o_ref)
    o_ref[0, 1:H + 1, 1:W + 1, :] = out.astype(o_ref.dtype)   # no post-add ReLU


def bn_epilogue_pad(y, scale, shift, *, relu, residual=None,
                    out_dtype=jnp.bfloat16):
    """y: (N,H,W,C) bf16; scale/shift: (C,) f32; residual: padded (N,H+2,W+2,C).

    Returns a zero-halo (N, H+2, W+2, C) activation ready for the next conv.
    """
    N, H, W, C = y.shape
    sc = scale.reshape(1, C).astype(jnp.float32)
    sh = shift.reshape(1, C).astype(jnp.float32)
    in_specs = [pl.BlockSpec((1, H, W, C), lambda n: (n, 0, 0, 0)),
                pl.BlockSpec((1, C), lambda n: (0, 0)),
                pl.BlockSpec((1, C), lambda n: (0, 0))]
    args = [y, sc, sh]
    if residual is None:
        kernel = functools.partial(_bn_pad_act_kernel, relu=relu, H=H, W=W)
    else:
        kernel = functools.partial(_bn_pad_add_kernel, H=H, W=W)
        in_specs.append(pl.BlockSpec((1, H + 2, W + 2, C),
                                     lambda n: (n, 0, 0, 0)))
        args.append(residual)
    return pl.pallas_call(
        kernel,
        grid=(N,),
        in_specs=in_specs,
        out_specs=pl.BlockSpec((1, H + 2, W + 2, C), lambda n: (n, 0, 0, 0)),
        out_shape=jax.ShapeDtypeStruct((N, H + 2, W + 2, C), out_dtype),
        compiler_params=pltpu.CompilerParams(
            dimension_semantics=("parallel",),
            vmem_limit_bytes=VMEM_LIMIT),
    )(*args)


# ---------------------------------------------------------------------------
# conv3x3 -> train-mode BatchNorm -> [ReLU | + residual]
# ---------------------------------------------------------------------------
def conv3x3_bn(x_pad, w, gamma_p, beta_p, *, relu, residual=None,
               out_dtype=jnp.bfloat16):
    """x_pad: (N,H+2,W+2,Cin_p) bf16 (zero halo, lane-padded channels).

    Returns the next zero-halo padded activation (N, H+2, W+2, Cout_p).
    """
    N, Hp, Wp, _ = x_pad.shape
    H, W = Hp - 2, Wp - 2
    y, stats = conv3x3_bn_stats(x_pad, w)

    # Tiny O(C) reduction of per-grid-step partial sums -> BN scale/shift.
    M = N * H * W
    ssum = jnp.sum(stats[:, 0, :], axis=0)
    ssq = jnp.sum(stats[:, 1, :], axis=0)
    mean = ssum / M
    # TODO(synk): E[x^2]-E[x]^2 in f32; a shifted two-pass would be safer for
    #             exact BN parity at very large N*H*W.
    var = jnp.maximum(ssq / M - mean * mean, 0.0)    # biased (training) variance
    inv_std = jax.lax.rsqrt(var + EPS)
    scale = gamma_p * inv_std
    shift = beta_p - mean * scale
    return bn_epilogue_pad(y, scale, shift, relu=relu, residual=residual,
                           out_dtype=out_dtype)


# ---------------------------------------------------------------------------
# ResNetEncoder forward
# ---------------------------------------------------------------------------
@functools.partial(jax.jit, static_argnums=(2,))
def resnet_encoder_forward(x_nchw, packed, c_out):
    x = jnp.transpose(x_nchw, (0, 2, 3, 1))                       # NCHW -> NHWC
    cin = x.shape[-1]
    cin_p = packed['gate']['w'].shape[1] // 3
    # One-time spatial + channel pad; per-layer pads are fused into the
    # epilogue kernels (zero-halo outputs).
    x = jnp.pad(x, ((0, 0), (1, 1), (1, 1), (0, cin_p - cin))).astype(jnp.bfloat16)

    # gate: conv3x3 -> BN -> ReLU
    g = packed['gate']
    h = conv3x3_bn(x, g['w'], g['gamma'], g['beta'], relu=True)

    # ResNetLayer of identity ResNetBasicBlocks (in == out, downsampling == 1)
    blocks = packed['blocks']
    for bi, bp in enumerate(blocks):
        last = bi == len(blocks) - 1
        resid = h                                                  # identity shortcut
        h1 = conv3x3_bn(h, bp['conv1_w'], bp['bn1_gamma'], bp['bn1_beta'],
                        relu=True)
        h = conv3x3_bn(h1, bp['conv2_w'], bp['bn2_gamma'], bp['bn2_beta'],
                       relu=False, residual=resid,
                       out_dtype=jnp.float32 if last else jnp.bfloat16)

    Hp, Wp = h.shape[1], h.shape[2]
    out = h[:, 1:Hp - 1, 1:Wp - 1, :c_out].astype(jnp.float32)    # strip halo + lane pad
    return jnp.transpose(out, (0, 3, 1, 2))                       # back to NCHW


# ---------------------------------------------------------------------------
# Parameter construction (PyTorch layouts) + packing into padded bf16 layout
# ---------------------------------------------------------------------------
def _pack_conv3x3(w, cin_p, cout_p):
    """(Cout, Cin, 3, 3) -> (3, 3*Cin_p, Cout_p) bf16: dh-major, the three dw
    taps stacked along the contraction dim (matches the in-kernel concat)."""
    cout, cin = w.shape[0], w.shape[1]
    wk = jnp.transpose(w, (2, 3, 1, 0))                  # (dh, dw, Cin, Cout)
    wk = jnp.pad(wk, ((0, 0), (0, 0), (0, cin_p - cin), (0, cout_p - cout)))
    return wk.reshape(3, 3 * cin_p, cout_p).astype(jnp.bfloat16)


def _pack_bn(gamma, beta, cout_p):
    c = gamma.shape[0]
    return (jnp.pad(gamma.astype(jnp.float32), (0, cout_p - c)),
            jnp.pad(beta.astype(jnp.float32), (0, cout_p - c)))


def init_and_pack_params(key, in_channels, c0, depth):
    cin_p = _round_up(in_channels, LANE)
    c0_p = _round_up(c0, LANE)
    keys = jax.random.split(key, 1 + 2 * depth)

    gate_w = 0.1 * jax.random.normal(keys[0], (c0, in_channels, 3, 3), jnp.float32)
    g_gamma, g_beta = _pack_bn(jnp.ones((c0,)), jnp.zeros((c0,)), c0_p)
    packed = {'gate': {'w': _pack_conv3x3(gate_w, cin_p, c0_p),
                       'gamma': g_gamma, 'beta': g_beta},
              'blocks': []}
    for i in range(depth):
        w1 = 0.1 * jax.random.normal(keys[1 + 2 * i], (c0, c0, 3, 3), jnp.float32)
        w2 = 0.1 * jax.random.normal(keys[2 + 2 * i], (c0, c0, 3, 3), jnp.float32)
        g1, b1 = _pack_bn(jnp.ones((c0,)), jnp.zeros((c0,)), c0_p)
        g2, b2 = _pack_bn(jnp.ones((c0,)), jnp.zeros((c0,)), c0_p)
        packed['blocks'].append({
            'conv1_w': _pack_conv3x3(w1, c0_p, c0_p),
            'bn1_gamma': g1, 'bn1_beta': b1,
            'conv2_w': _pack_conv3x3(w2, c0_p, c0_p),
            'bn2_gamma': g2, 'bn2_beta': b2,
        })
    return packed


if __name__ == "__main__":
    key = jax.random.PRNGKey(0)
    kx, kp = jax.random.split(key)

    # Small test shapes consistent with the module (defaults: in_channels=3,
    # blocks_sizes=[128], deepths=[20] -> scaled down to 32 channels, depth 2).
    N, CIN, H, W = 2, 3, 16, 16
    C0, DEPTH = 32, 2

    x = jax.random.normal(kx, (N, CIN, H, W), jnp.float32)
    packed = init_and_pack_params(kp, CIN, C0, DEPTH)

    y = resnet_encoder_forward(x, packed, C0)
    y = jax.block_until_ready(y)

    assert y.shape == (N, C0, H, W), y.shape
    assert bool(jnp.all(jnp.isfinite(y)))
    print("KERNEL_OK")
</pallas_src>

<mosaic_0001>
module attributes {stable_mosaic.version = 11 : i64} {
  func.func @_conv3x3_bn_stats_kernel(%arg0: i32, %arg1: memref<2x18x18x128xbf16, #tpu.memory_space<vmem>>, %arg2: memref<3x384x128xbf16, #tpu.memory_space<vmem>>, %arg3: memref<2x16x16x128xbf16, #tpu.memory_space<vmem>>, %arg4: memref<1x8x128xf32, #tpu.memory_space<vmem>>) attributes {dimension_semantics = [#tpu.dimension_semantics<parallel>], iteration_bounds = array<i64: 1>, scalar_prefetch = 0 : i64, scratch_operands = 0 : i64, tpu.core_type = #tpu.core_type<tc>, window_params = [{transform_indices = @transform_0, window_bounds = array<i64: 2, 18, 18, 128>}, {pipeline_mode = #tpu.pipeline_mode<synchronous>, transform_indices = @transform_1, window_bounds = array<i64: 3, 384, 128>}, {transform_indices = @transform_2, window_bounds = array<i64: 2, 16, 16, 128>}, {transform_indices = @transform_3, window_bounds = array<i64: 1, 8, 128>}]} {
    %cst = arith.constant 0.000000e+00 : f32
    %0 = vector.broadcast %cst : f32 to vector<1x128xf32>
    %cst_0 = arith.constant 0.000000e+00 : f32
    %1 = vector.broadcast %cst_0 : f32 to vector<1x128xf32>
    %cst_1 = arith.constant 0.000000e+00 : f32
    %2 = vector.broadcast %cst_1 : f32 to vector<128x128xf32>
    %c0 = arith.constant 0 : index
    %c0_2 = arith.constant 0 : index
    %c0_3 = arith.constant 0 : index
    %c0_4 = arith.constant 0 : index
    %3 = vector.load %arg1[%c0, %c0_2, %c0_3, %c0_4] : memref<2x18x18x128xbf16, #tpu.memory_space<vmem>>, vector<1x8x18x128xbf16>
    %4 = vector.shape_cast %3 : vector<1x8x18x128xbf16> to vector<8x18x128xbf16>
    %5 = vector.extract_strided_slice %4 {offsets = [0, 0, 0], sizes = [8, 16, 128], strides = [1, 1, 1]} : vector<8x18x128xbf16> to vector<8x16x128xbf16>
    %6 = vector.extract_strided_slice %4 {offsets = [0, 1, 0], sizes = [8, 16, 128], strides = [1, 1, 1]} : vector<8x18x128xbf16> to vector<8x16x128xbf16>
    %7 = vector.extract_strided_slice %4 {offsets = [0, 2, 0], sizes = [8, 16, 128], strides = [1, 1, 1]} : vector<8x18x128xbf16> to vector<8x16x128xbf16>
    %8 = tpu.concatenate %5, %6, %7 in 2 : vector<8x16x128xbf16>, vector<8x16x128xbf16>, vector<8x16x128xbf16> -> vector<8x16x384xbf16>
    %9 = vector.shape_cast %8 : vector<8x16x384xbf16> to vector<128x384xbf16>
    %c0_5 = arith.constant 0 : index
    %c0_6 = arith.constant 0 : index
    %c0_7 = arith.constant 0 : index
    %10 = vector.load %arg2[%c0_5, %c0_6, %c0_7] : memref<3x384x128xbf16, #tpu.memory_space<vmem>>, vector<1x384x128xbf16>
    %11 = vector.shape_cast %10 : vector<1x384x128xbf16> to vector<384x128xbf16>
    %cst_8 = arith.constant dense<0.000000e+00> : vector<128x128xf32>
    %12 = tpu.matmul %9, %11, %cst_8 {dimension_numbers = #tpu.dot_dimension_numbers<[1], [0], [0], [1], [0, 0, 1, 1], [], []>} : vector<128x384xbf16>, vector<384x128xbf16>, vector<128x128xf32> -> vector<128x128xf32>
    %13 = arith.addf %2, %12 : vector<128x128xf32>
    %c0_9 = arith.constant 0 : index
    %c1 = arith.constant 1 : index
    %c0_10 = arith.constant 0 : index
    %c0_11 = arith.constant 0 : index
    %14 = vector.load %arg1[%c0_9, %c1, %c0_10, %c0_11] : memref<2x18x18x128xbf16, #tpu.memory_space<vmem>>, vector<1x8x18x128xbf16>
    %15 = vector.shape_cast %14 : vector<1x8x18x128xbf16> to vector<8x18x128xbf16>
    %16 = vector.extract_strided_slice %15 {offsets = [0, 0, 0], sizes = [8, 16, 128], strides = [1, 1, 1]} : vector<8x18x128xbf16> to vector<8x16x128xbf16>
    %17 = vector.extract_strided_slice %15 {offsets = [0, 1, 0], sizes = [8, 16, 128], strides = [1, 1, 1]} : vector<8x18x128xbf16> to vector<8x16x128xbf16>
    %18 = vector.extract_strided_slice %15 {offsets = [0, 2, 0], sizes = [8, 16, 128], strides = [1, 1, 1]} : vector<8x18x128xbf16> to vector<8x16x128xbf16>
    %19 = tpu.concatenate %16, %17, %18 in 2 : vector<8x16x128xbf16>, vector<8x16x128xbf16>, vector<8x16x128xbf16> -> vector<8x16x384xbf16>
    %20 = vector.shape_cast %19 : vector<8x16x384xbf16> to vector<128x384xbf16>
    %c1_12 = arith.constant 1 : index
    %c0_13 = arith.constant 0 : index
    %c0_14 = arith.constant 0 : index
    %21 = vector.load %arg2[%c1_12, %c0_13, %c0_14] : memref<3x384x128xbf16, #tpu.memory_space<vmem>>, vector<1x384x128xbf16>
    %22 = vector.shape_cast %21 : vector<1x384x128xbf16> to vector<384x128xbf16>
    %cst_15 = arith.constant dense<0.000000e+00> : vector<128x128xf32>
    %23 = tpu.matmul %20, %22, %cst_15 {dimension_numbers = #tpu.dot_dimension_numbers<[1], [0], [0], [1], [0, 0, 1, 1], [], []>} : vector<128x384xbf16>, vector<384x128xbf16>, vector<128x128xf32> -> vector<128x128xf32>
    %24 = arith.addf %13, %23 : vector<128x128xf32>
    %c0_16 = arith.constant 0 : index
    %c2 = arith.constant 2 : index
    %c0_17 = arith.constant 0 : index
    %c0_18 = arith.constant 0 : index
    %25 = vector.load %arg1[%c0_16, %c2, %c0_17, %c0_18] : memref<2x18x18x128xbf16, #tpu.memory_space<vmem>>, vector<1x8x18x128xbf16>
    %26 = vector.shape_cast %25 : vector<1x8x18x128xbf16> to vector<8x18x128xbf16>
    %27 = vector.extract_strided_slice %26 {offsets = [0, 0, 0], sizes = [8, 16, 128], strides = [1, 1, 1]} : vector<8x18x128xbf16> to vector<8x16x128xbf16>
    %28 = vector.extract_strided_slice %26 {offsets = [0, 1, 0], sizes = [8, 16, 128], strides = [1, 1, 1]} : vector<8x18x128xbf16> to vector<8x16x128xbf16>
    %29 = vector.extract_strided_slice %26 {offsets = [0, 2, 0], sizes = [8, 16, 128], strides = [1, 1, 1]} : vector<8x18x128xbf16> to vector<8x16x128xbf16>
    %30 = tpu.concatenate %27, %28, %29 in 2 : vector<8x16x128xbf16>, vector<8x16x128xbf16>, vector<8x16x128xbf16> -> vector<8x16x384xbf16>
    %31 = vector.shape_cast %30 : vector<8x16x384xbf16> to vector<128x384xbf16>
    %c2_19 = arith.constant 2 : index
    %c0_20 = arith.constant 0 : index
    %c0_21 = arith.constant 0 : index
    %32 = vector.load %arg2[%c2_19, %c0_20, %c0_21] : memref<3x384x128xbf16, #tpu.memory_space<vmem>>, vector<1x384x128xbf16>
    %33 = vector.shape_cast %32 : vector<1x384x128xbf16> to vector<384x128xbf16>
    %cst_22 = arith.constant dense<0.000000e+00> : vector<128x128xf32>
    %34 = tpu.matmul %31, %33, %cst_22 {dimension_numbers = #tpu.dot_dimension_numbers<[1], [0], [0], [1], [0, 0, 1, 1], [], []>} : vector<128x384xbf16>, vector<384x128xbf16>, vector<128x128xf32> -> vector<128x128xf32>
    %35 = arith.addf %24, %34 : vector<128x128xf32>
    %36 = vector.shape_cast %35 : vector<128x128xf32> to vector<8x16x128xf32>
    %37 = arith.truncf %36 : vector<8x16x128xf32> to vector<8x16x128xbf16>
    %c0_23 = arith.constant 0 : index
    %c0_24 = arith.constant 0 : index
    %c0_25 = arith.constant 0 : index
    %c0_26 = arith.constant 0 : index
    %38 = vector.load %arg3[%c0_23, %c0_24, %c0_25, %c0_26] : memref<2x16x16x128xbf16, #tpu.memory_space<vmem>>, vector<1x8x16x128xbf16>
    %39 = vector.shape_cast %38 : vector<1x8x16x128xbf16> to vector<8x16x128xbf16>
    %40 = vector.shape_cast %37 : vector<8x16x128xbf16> to vector<1x8x16x128xbf16>
    tpu.vector_store %arg3[%c0_23, %c0_24, %c0_25, %c0_26], %40 {strides = array<i32>} : memref<2x16x16x128xbf16, #tpu.memory_space<vmem>>, vector<1x8x16x128xbf16>,
    %cst_27 = arith.constant dense<0.000000e+00> : vector<128xf32>
    %41 = vector.multi_reduction <add>, %35, %cst_27 [0] : vector<128x128xf32> to vector<128xf32>
    %42 = vector.shape_cast %41 : vector<128xf32> to vector<1x128xf32>
    %43 = arith.addf %0, %42 : vector<1x128xf32>
    %44 = arith.mulf %35, %35 : vector<128x128xf32>
    %cst_28 = arith.constant dense<0.000000e+00> : vector<128xf32>
    %45 = vector.multi_reduction <add>, %44, %cst_28 [0] : vector<128x128xf32> to vector<128xf32>
    %46 = vector.shape_cast %45 : vector<128xf32> to vector<1x128xf32>
    %47 = arith.addf %1, %46 : vector<1x128xf32>
    %cst_29 = arith.constant 0.000000e+00 : f32
    %48 = vector.broadcast %cst_29 : f32 to vector<128x128xf32>
    %c0_30 = arith.constant 0 : index
    %c8 = arith.constant 8 : index
    %c0_31 = arith.constant 0 : index
    %c0_32 = arith.constant 0 : index
    %49 = vector.load %arg1[%c0_30, %c8, %c0_31, %c0_32] : memref<2x18x18x128xbf16, #tpu.memory_space<vmem>>, vector<1x8x18x128xbf16>
    %50 = vector.shape_cast %49 : vector<1x8x18x128xbf16> to vector<8x18x128xbf16>
    %51 = vector.extract_strided_slice %50 {offsets = [0, 0, 0], sizes = [8, 16, 128], strides = [1, 1, 1]} : vector<8x18x128xbf16> to vector<8x16x128xbf16>
    %52 = vector.extract_strided_slice %50 {offsets = [0, 1, 0], sizes = [8, 16, 128], strides = [1, 1, 1]} : vector<8x18x128xbf16> to vector<8x16x128xbf16>
    %53 = vector.extract_strided_slice %50 {offsets = [0, 2, 0], sizes = [8, 16, 128], strides = [1, 1, 1]} : vector<8x18x128xbf16> to vector<8x16x128xbf16>
    %54 = tpu.concatenate %51, %52, %53 in 2 : vector<8x16x128xbf16>, vector<8x16x128xbf16>, vector<8x16x128xbf16> -> vector<8x16x384xbf16>
    %55 = vector.shape_cast %54 : vector<8x16x384xbf16> to vector<128x384xbf16>
    %c0_33 = arith.constant 0 : index
    %c0_34 = arith.constant 0 : index
    %c0_35 = arith.constant 0 : index
    %56 = vector.load %arg2[%c0_33, %c0_34, %c0_35] : memref<3x384x128xbf16, #tpu.memory_space<vmem>>, vector<1x384x128xbf16>
    %57 = vector.shape_cast %56 : vector<1x384x128xbf16> to vector<384x128xbf16>
    %cst_36 = arith.constant dense<0.000000e+00> : vector<128x128xf32>
    %58 = tpu.matmul %55, %57, %cst_36 {dimension_numbers = #tpu.dot_dimension_numbers<[1], [0], [0], [1], [0, 0, 1, 1], [], []>} : vector<128x384xbf16>, vector<384x128xbf16>, vector<128x128xf32> -> vector<128x128xf32>
    %59 = arith.addf %48, %58 : vector<128x128xf32>
    %c0_37 = arith.constant 0 : index
    %c9 = arith.constant 9 : index
    %c0_38 = arith.constant 0 : index
    %c0_39 = arith.constant 0 : index
    %60 = vector.load %arg1[%c0_37, %c9, %c0_38, %c0_39] : memref<2x18x18x128xbf16, #tpu.memory_space<vmem>>, vector<1x8x18x128xbf16>
    %61 = vector.shape_cast %60 : vector<1x8x18x128xbf16> to vector<8x18x128xbf16>
    %62 = vector.extract_strided_slice %61 {offsets = [0, 0, 0], sizes = [8, 16, 128], strides = [1, 1, 1]} : vector<8x18x128xbf16> to vector<8x16x128xbf16>
    %63 = vector.extract_strided_slice %61 {offsets = [0, 1, 0], sizes = [8, 16, 128], strides = [1, 1, 1]} : vector<8x18x128xbf16> to vector<8x16x128xbf16>
    %64 = vector.extract_strided_slice %61 {offsets = [0, 2, 0], sizes = [8, 16, 128], strides = [1, 1, 1]} : vector<8x18x128xbf16> to vector<8x16x128xbf16>
    %65 = tpu.concatenate %62, %63, %64 in 2 : vector<8x16x128xbf16>, vector<8x16x128xbf16>, vector<8x16x128xbf16> -> vector<8x16x384xbf16>
    %66 = vector.shape_cast %65 : vector<8x16x384xbf16> to vector<128x384xbf16>
    %c1_40 = arith.constant 1 : index
    %c0_41 = arith.constant 0 : index
    %c0_42 = arith.constant 0 : index
    %67 = vector.load %arg2[%c1_40, %c0_41, %c0_42] : memref<3x384x128xbf16, #tpu.memory_space<vmem>>, vector<1x384x128xbf16>
    %68 = vector.shape_cast %67 : vector<1x384x128xbf16> to vector<384x128xbf16>
    %cst_43 = arith.constant dense<0.000000e+00> : vector<128x128xf32>
    %69 = tpu.matmul %66, %68, %cst_43 {dimension_numbers = #tpu.dot_dimension_numbers<[1], [0], [0], [1], [0, 0, 1, 1], [], []>} : vector<128x384xbf16>, vector<384x128xbf16>, vector<128x128xf32> -> vector<128x128xf32>
    %70 = arith.addf %59, %69 : vector<128x128xf32>
    %c0_44 = arith.constant 0 : index
    %c10 = arith.constant 10 : index
    %c0_45 = arith.constant 0 : index
    %c0_46 = arith.constant 0 : index
    %71 = vector.load %arg1[%c0_44, %c10, %c0_45, %c0_46] : memref<2x18x18x128xbf16, #tpu.memory_space<vmem>>, vector<1x8x18x128xbf16>
    %72 = vector.shape_cast %71 : vector<1x8x18x128xbf16> to vector<8x18x128xbf16>
    %73 = vector.extract_strided_slice %72 {offsets = [0, 0, 0], sizes = [8, 16, 128], strides = [1, 1, 1]} : vector<8x18x128xbf16> to vector<8x16x128xbf16>
    %74 = vector.extract_strided_slice %72 {offsets = [0, 1, 0], sizes = [8, 16, 128], strides = [1, 1, 1]} : vector<8x18x128xbf16> to vector<8x16x128xbf16>
    %75 = vector.extract_strided_slice %72 {offsets = [0, 2, 0], sizes = [8, 16, 128], strides = [1, 1, 1]} : vector<8x18x128xbf16> to vector<8x16x128xbf16>
    %76 = tpu.concatenate %73, %74, %75 in 2 : vector<8x16x128xbf16>, vector<8x16x128xbf16>, vector<8x16x128xbf16> -> vector<8x16x384xbf16>
    %77 = vector.shape_cast %76 : vector<8x16x384xbf16> to vector<128x384xbf16>
    %c2_47 = arith.constant 2 : index
    %c0_48 = arith.constant 0 : index
    %c0_49 = arith.constant 0 : index
    %78 = vector.load %arg2[%c2_47, %c0_48, %c0_49] : memref<3x384x128xbf16, #tpu.memory_space<vmem>>, vector<1x384x128xbf16>
    %79 = vector.shape_cast %78 : vector<1x384x128xbf16> to vector<384x128xbf16>
    %cst_50 = arith.constant dense<0.000000e+00> : vector<128x128xf32>
    %80 = tpu.matmul %77, %79, %cst_50 {dimension_numbers = #tpu.dot_dimension_numbers<[1], [0], [0], [1], [0, 0, 1, 1], [], []>} : vector<128x384xbf16>, vector<384x128xbf16>, vector<128x128xf32> -> vector<128x128xf32>
    %81 = arith.addf %70, %80 : vector<128x128xf32>
    %82 = vector.shape_cast %81 : vector<128x128xf32> to vector<8x16x128xf32>
    %83 = arith.truncf %82 : vector<8x16x128xf32> to vector<8x16x128xbf16>
    %c0_51 = arith.constant 0 : index
    %c8_52 = arith.constant 8 : index
    %c0_53 = arith.constant 0 : index
    %c0_54 = arith.constant 0 : index
    %84 = vector.load %arg3[%c0_51, %c8_52, %c0_53, %c0_54] : memref<2x16x16x128xbf16, #tpu.memory_space<vmem>>, vector<1x8x16x128xbf16>
    %85 = vector.shape_cast %84 : vector<1x8x16x128xbf16> to vector<8x16x128xbf16>
    %86 = vector.shape_cast %83 : vector<8x16x128xbf16> to vector<1x8x16x128xbf16>
    tpu.vector_store %arg3[%c0_51, %c8_52, %c0_53, %c0_54], %86 {strides = array<i32>} : memref<2x16x16x128xbf16, #tpu.memory_space<vmem>>, vector<1x8x16x128xbf16>,
    %cst_55 = arith.constant dense<0.000000e+00> : vector<128xf32>
    %87 = vector.multi_reduction <add>, %81, %cst_55 [0] : vector<128x128xf32> to vector<128xf32>
    %88 = vector.shape_cast %87 : vector<128xf32> to vector<1x128xf32>
    %89 = arith.addf %43, %88 : vector<1x128xf32>
    %90 = arith.mulf %81, %81 : vector<128x128xf32>
    %cst_56 = arith.constant dense<0.000000e+00> : vector<128xf32>
    %91 = vector.multi_reduction <add>, %90, %cst_56 [0] : vector<128x128xf32> to vector<128xf32>
    %92 = vector.shape_cast %91 : vector<128xf32> to vector<1x128xf32>
    %93 = arith.addf %47, %92 : vector<1x128xf32>
    %cst_57 = arith.constant 0.000000e+00 : f32
    %94 = vector.broadcast %cst_57 : f32 to vector<128x128xf32>
    %c1_58 = arith.constant 1 : index
    %c0_59 = arith.constant 0 : index
    %c0_60 = arith.constant 0 : index
    %c0_61 = arith.constant 0 : index
    %95 = vector.load %arg1[%c1_58, %c0_59, %c0_60, %c0_61] : memref<2x18x18x128xbf16, #tpu.memory_space<vmem>>, vector<1x8x18x128xbf16>
    %96 = vector.shape_cast %95 : vector<1x8x18x128xbf16> to vector<8x18x128xbf16>
    %97 = vector.extract_strided_slice %96 {offsets = [0, 0, 0], sizes = [8, 16, 128], strides = [1, 1, 1]} : vector<8x18x128xbf16> to vector<8x16x128xbf16>
    %98 = vector.extract_strided_slice %96 {offsets = [0, 1, 0], sizes = [8, 16, 128], strides = [1, 1, 1]} : vector<8x18x128xbf16> to vector<8x16x128xbf16>
    %99 = vector.extract_strided_slice %96 {offsets = [0, 2, 0], sizes = [8, 16, 128], strides = [1, 1, 1]} : vector<8x18x128xbf16> to vector<8x16x128xbf16>
    %100 = tpu.concatenate %97, %98, %99 in 2 : vector<8x16x128xbf16>, vector<8x16x128xbf16>, vector<8x16x128xbf16> -> vector<8x16x384xbf16>
    %101 = vector.shape_cast %100 : vector<8x16x384xbf16> to vector<128x384xbf16>
    %c0_62 = arith.constant 0 : index
    %c0_63 = arith.constant 0 : index
    %c0_64 = arith.constant 0 : index
    %102 = vector.load %arg2[%c0_62, %c0_63, %c0_64] : memref<3x384x128xbf16, #tpu.memory_space<vmem>>, vector<1x384x128xbf16>
    %103 = vector.shape_cast %102 : vector<1x384x128xbf16> to vector<384x128xbf16>
    %cst_65 = arith.constant dense<0.000000e+00> : vector<128x128xf32>
    %104 = tpu.matmul %101, %103, %cst_65 {dimension_numbers = #tpu.dot_dimension_numbers<[1], [0], [0], [1], [0, 0, 1, 1], [], []>} : vector<128x384xbf16>, vector<384x128xbf16>, vector<128x128xf32> -> vector<128x128xf32>
    %105 = arith.addf %94, %104 : vector<128x128xf32>
    %c1_66 = arith.constant 1 : index
    %c1_67 = arith.constant 1 : index
    %c0_68 = arith.constant 0 : index
    %c0_69 = arith.constant 0 : index
    %106 = vector.load %arg1[%c1_66, %c1_67, %c0_68, %c0_69] : memref<2x18x18x128xbf16, #tpu.memory_space<vmem>>, vector<1x8x18x128xbf16>
    %107 = vector.shape_cast %106 : vector<1x8x18x128xbf16> to vector<8x18x128xbf16>
    %108 = vector.extract_strided_slice %107 {offsets = [0, 0, 0], sizes = [8, 16, 128], strides = [1, 1, 1]} : vector<8x18x128xbf16> to vector<8x16x128xbf16>
    %109 = vector.extract_strided_slice %107 {offsets = [0, 1, 0], sizes = [8, 16, 128], strides = [1, 1, 1]} : vector<8x18x128xbf16> to vector<8x16x128xbf16>
    %110 = vector.extract_strided_slice %107 {offsets = [0, 2, 0], sizes = [8, 16, 128], strides = [1, 1, 1]} : vector<8x18x128xbf16> to vector<8x16x128xbf16>
    %111 = tpu.concatenate %108, %109, %110 in 2 : vector<8x16x128xbf16>, vector<8x16x128xbf16>, vector<8x16x128xbf16> -> vector<8x16x384xbf16>
    %112 = vector.shape_cast %111 : vector<8x16x384xbf16> to vector<128x384xbf16>
    %c1_70 = arith.constant 1 : index
    %c0_71 = arith.constant 0 : index
    %c0_72 = arith.constant 0 : index
    %113 = vector.load %arg2[%c1_70, %c0_71, %c0_72] : memref<3x384x128xbf16, #tpu.memory_space<vmem>>, vector<1x384x128xbf16>
    %114 = vector.shape_cast %113 : vector<1x384x128xbf16> to vector<384x128xbf16>
    %cst_73 = arith.constant dense<0.000000e+00> : vector<128x128xf32>
    %115 = tpu.matmul %112, %114, %cst_73 {dimension_numbers = #tpu.dot_dimension_numbers<[1], [0], [0], [1], [0, 0, 1, 1], [], []>} : vector<128x384xbf16>, vector<384x128xbf16>, vector<128x128xf32> -> vector<128x128xf32>
    %116 = arith.addf %105, %115 : vector<128x128xf32>
    %c1_74 = arith.constant 1 : index
    %c2_75 = arith.constant 2 : index
    %c0_76 = arith.constant 0 : index
    %c0_77 = arith.constant 0 : index
    %117 = vector.load %arg1[%c1_74, %c2_75, %c0_76, %c0_77] : memref<2x18x18x128xbf16, #tpu.memory_space<vmem>>, vector<1x8x18x128xbf16>
    %118 = vector.shape_cast %117 : vector<1x8x18x128xbf16> to vector<8x18x128xbf16>
    %119 = vector.extract_strided_slice %118 {offsets = [0, 0, 0], sizes = [8, 16, 128], strides = [1, 1, 1]} : vector<8x18x128xbf16> to vector<8x16x128xbf16>
    %120 = vector.extract_strided_slice %118 {offsets = [0, 1, 0], sizes = [8, 16, 128], strides = [1, 1, 1]} : vector<8x18x128xbf16> to vector<8x16x128xbf16>
    %121 = vector.extract_strided_slice %118 {offsets = [0, 2, 0], sizes = [8, 16, 128], strides = [1, 1, 1]} : vector<8x18x128xbf16> to vector<8x16x128xbf16>
    %122 = tpu.concatenate %119, %120, %121 in 2 : vector<8x16x128xbf16>, vector<8x16x128xbf16>, vector<8x16x128xbf16> -> vector<8x16x384xbf16>
    %123 = vector.shape_cast %122 : vector<8x16x384xbf16> to vector<128x384xbf16>
    %c2_78 = arith.constant 2 : index
    %c0_79 = arith.constant 0 : index
    %c0_80 = arith.constant 0 : index
    %124 = vector.load %arg2[%c2_78, %c0_79, %c0_80] : memref<3x384x128xbf16, #tpu.memory_space<vmem>>, vector<1x384x128xbf16>
    %125 = vector.shape_cast %124 : vector<1x384x128xbf16> to vector<384x128xbf16>
    %cst_81 = arith.constant dense<0.000000e+00> : vector<128x128xf32>
    %126 = tpu.matmul %123, %125, %cst_81 {dimension_numbers = #tpu.dot_dimension_numbers<[1], [0], [0], [1], [0, 0, 1, 1], [], []>} : vector<128x384xbf16>, vector<384x128xbf16>, vector<128x128xf32> -> vector<128x128xf32>
    %127 = arith.addf %116, %126 : vector<128x128xf32>
    %128 = vector.shape_cast %127 : vector<128x128xf32> to vector<8x16x128xf32>
    %129 = arith.truncf %128 : vector<8x16x128xf32> to vector<8x16x128xbf16>
    %c1_82 = arith.constant 1 : index
    %c0_83 = arith.constant 0 : index
    %c0_84 = arith.constant 0 : index
    %c0_85 = arith.constant 0 : index
    %130 = vector.load %arg3[%c1_82, %c0_83, %c0_84, %c0_85] : memref<2x16x16x128xbf16, #tpu.memory_space<vmem>>, vector<1x8x16x128xbf16>
    %131 = vector.shape_cast %130 : vector<1x8x16x128xbf16> to vector<8x16x128xbf16>
    %132 = vector.shape_cast %129 : vector<8x16x128xbf16> to vector<1x8x16x128xbf16>
    tpu.vector_store %arg3[%c1_82, %c0_83, %c0_84, %c0_85], %132 {strides = array<i32>} : memref<2x16x16x128xbf16, #tpu.memory_space<vmem>>, vector<1x8x16x128xbf16>,
    %cst_86 = arith.constant dense<0.000000e+00> : vector<128xf32>
    %133 = vector.multi_reduction <add>, %127, %cst_86 [0] : vector<128x128xf32> to vector<128xf32>
    %134 = vector.shape_cast %133 : vector<128xf32> to vector<1x128xf32>
    %135 = arith.addf %89, %134 : vector<1x128xf32>
    %136 = arith.mulf %127, %127 : vector<128x128xf32>
    %cst_87 = arith.constant dense<0.000000e+00> : vector<128xf32>
    %137 = vector.multi_reduction <add>, %136, %cst_87 [0] : vector<128x128xf32> to vector<128xf32>
    %138 = vector.shape_cast %137 : vector<128xf32> to vector<1x128xf32>
    %139 = arith.addf %93, %138 : vector<1x128xf32>
    %cst_88 = arith.constant 0.000000e+00 : f32
    %140 = vector.broadcast %cst_88 : f32 to vector<128x128xf32>
    %c1_89 = arith.constant 1 : index
    %c8_90 = arith.constant 8 : index
    %c0_91 = arith.constant 0 : index
    %c0_92 = arith.constant 0 : index
    %141 = vector.load %arg1[%c1_89, %c8_90, %c0_91, %c0_92] : memref<2x18x18x128xbf16, #tpu.memory_space<vmem>>, vector<1x8x18x128xbf16>
    %142 = vector.shape_cast %141 : vector<1x8x18x128xbf16> to vector<8x18x128xbf16>
    %143 = vector.extract_strided_slice %142 {offsets = [0, 0, 0], sizes = [8, 16, 128], strides = [1, 1, 1]} : vector<8x18x128xbf16> to vector<8x16x128xbf16>
    %144 = vector.extract_strided_slice %142 {offsets = [0, 1, 0], sizes = [8, 16, 128], strides = [1, 1, 1]} : vector<8x18x128xbf16> to vector<8x16x128xbf16>
    %145 = vector.extract_strided_slice %142 {offsets = [0, 2, 0], sizes = [8, 16, 128], strides = [1, 1, 1]} : vector<8x18x128xbf16> to vector<8x16x128xbf16>
    %146 = tpu.concatenate %143, %144, %145 in 2 : vector<8x16x128xbf16>, vector<8x16x128xbf16>, vector<8x16x128xbf16> -> vector<8x16x384xbf16>
    %147 = vector.shape_cast %146 : vector<8x16x384xbf16> to vector<128x384xbf16>
    %c0_93 = arith.constant 0 : index
    %c0_94 = arith.constant 0 : index
    %c0_95 = arith.constant 0 : index
    %148 = vector.load %arg2[%c0_93, %c0_94, %c0_95] : memref<3x384x128xbf16, #tpu.memory_space<vmem>>, vector<1x384x128xbf16>
    %149 = vector.shape_cast %148 : vector<1x384x128xbf16> to vector<384x128xbf16>
    %cst_96 = arith.constant dense<0.000000e+00> : vector<128x128xf32>
    %150 = tpu.matmul %147, %149, %cst_96 {dimension_numbers = #tpu.dot_dimension_numbers<[1], [0], [0], [1], [0, 0, 1, 1], [], []>} : vector<128x384xbf16>, vector<384x128xbf16>, vector<128x128xf32> -> vector<128x128xf32>
    %151 = arith.addf %140, %150 : vector<128x128xf32>
    %c1_97 = arith.constant 1 : index
    %c9_98 = arith.constant 9 : index
    %c0_99 = arith.constant 0 : index
    %c0_100 = arith.constant 0 : index
    %152 = vector.load %arg1[%c1_97, %c9_98, %c0_99, %c0_100] : memref<2x18x18x128xbf16, #tpu.memory_space<vmem>>, vector<1x8x18x128xbf16>
    %153 = vector.shape_cast %152 : vector<1x8x18x128xbf16> to vector<8x18x128xbf16>
    %154 = vector.extract_strided_slice %153 {offsets = [0, 0, 0], sizes = [8, 16, 128], strides = [1, 1, 1]} : vector<8x18x128xbf16> to vector<8x16x128xbf16>
    %155 = vector.extract_strided_slice %153 {offsets = [0, 1, 0], sizes = [8, 16, 128], strides = [1, 1, 1]} : vector<8x18x128xbf16> to vector<8x16x128xbf16>
    %156 = vector.extract_strided_slice %153 {offsets = [0, 2, 0], sizes = [8, 16, 128], strides = [1, 1, 1]} : vector<8x18x128xbf16> to vector<8x16x128xbf16>
    %157 = tpu.concatenate %154, %155, %156 in 2 : vector<8x16x128xbf16>, vector<8x16x128xbf16>, vector<8x16x128xbf16> -> vector<8x16x384xbf16>
    %158 = vector.shape_cast %157 : vector<8x16x384xbf16> to vector<128x384xbf16>
    %c1_101 = arith.constant 1 : index
    %c0_102 = arith.constant 0 : index
    %c0_103 = arith.constant 0 : index
    %159 = vector.load %arg2[%c1_101, %c0_102, %c0_103] : memref<3x384x128xbf16, #tpu.memory_space<vmem>>, vector<1x384x128xbf16>
    %160 = vector.shape_cast %159 : vector<1x384x128xbf16> to vector<384x128xbf16>
    %cst_104 = arith.constant dense<0.000000e+00> : vector<128x128xf32>
    %161 = tpu.matmul %158, %160, %cst_104 {dimension_numbers = #tpu.dot_dimension_numbers<[1], [0], [0], [1], [0, 0, 1, 1], [], []>} : vector<128x384xbf16>, vector<384x128xbf16>, vector<128x128xf32> -> vector<128x128xf32>
    %162 = arith.addf %151, %161 : vector<128x128xf32>
    %c1_105 = arith.constant 1 : index
    %c10_106 = arith.constant 10 : index
    %c0_107 = arith.constant 0 : index
    %c0_108 = arith.constant 0 : index
    %163 = vector.load %arg1[%c1_105, %c10_106, %c0_107, %c0_108] : memref<2x18x18x128xbf16, #tpu.memory_space<vmem>>, vector<1x8x18x128xbf16>
    %164 = vector.shape_cast %163 : vector<1x8x18x128xbf16> to vector<8x18x128xbf16>
    %165 = vector.extract_strided_slice %164 {offsets = [0, 0, 0], sizes = [8, 16, 128], strides = [1, 1, 1]} : vector<8x18x128xbf16> to vector<8x16x128xbf16>
    %166 = vector.extract_strided_slice %164 {offsets = [0, 1, 0], sizes = [8, 16, 128], strides = [1, 1, 1]} : vector<8x18x128xbf16> to vector<8x16x128xbf16>
    %167 = vector.extract_strided_slice %164 {offsets = [0, 2, 0], sizes = [8, 16, 128], strides = [1, 1, 1]} : vector<8x18x128xbf16> to vector<8x16x128xbf16>
    %168 = tpu.concatenate %165, %166, %167 in 2 : vector<8x16x128xbf16>, vector<8x16x128xbf16>, vector<8x16x128xbf16> -> vector<8x16x384xbf16>
    %169 = vector.shape_cast %168 : vector<8x16x384xbf16> to vector<128x384xbf16>
    %c2_109 = arith.constant 2 : index
    %c0_110 = arith.constant 0 : index
    %c0_111 = arith.constant 0 : index
    %170 = vector.load %arg2[%c2_109, %c0_110, %c0_111] : memref<3x384x128xbf16, #tpu.memory_space<vmem>>, vector<1x384x128xbf16>
    %171 = vector.shape_cast %170 : vector<1x384x128xbf16> to vector<384x128xbf16>
    %cst_112 = arith.constant dense<0.000000e+00> : vector<128x128xf32>
    %172 = tpu.matmul %169, %171, %cst_112 {dimension_numbers = #tpu.dot_dimension_numbers<[1], [0], [0], [1], [0, 0, 1, 1], [], []>} : vector<128x384xbf16>, vector<384x128xbf16>, vector<128x128xf32> -> vector<128x128xf32>
    %173 = arith.addf %162, %172 : vector<128x128xf32>
    %174 = vector.shape_cast %173 : vector<128x128xf32> to vector<8x16x128xf32>
    %175 = arith.truncf %174 : vector<8x16x128xf32> to vector<8x16x128xbf16>
    %c1_113 = arith.constant 1 : index
    %c8_114 = arith.constant 8 : index
    %c0_115 = arith.constant 0 : index
    %c0_116 = arith.constant 0 : index
    %176 = vector.load %arg3[%c1_113, %c8_114, %c0_115, %c0_116] : memref<2x16x16x128xbf16, #tpu.memory_space<vmem>>, vector<1x8x16x128xbf16>
    %177 = vector.shape_cast %176 : vector<1x8x16x128xbf16> to vector<8x16x128xbf16>
    %178 = vector.shape_cast %175 : vector<8x16x128xbf16> to vector<1x8x16x128xbf16>
    tpu.vector_store %arg3[%c1_113, %c8_114, %c0_115, %c0_116], %178 {strides = array<i32>} : memref<2x16x16x128xbf16, #tpu.memory_space<vmem>>, vector<1x8x16x128xbf16>,
    %cst_117 = arith.constant dense<0.000000e+00> : vector<128xf32>
    %179 = vector.multi_reduction <add>, %173, %cst_117 [0] : vector<128x128xf32> to vector<128xf32>
    %180 = vector.shape_cast %179 : vector<128xf32> to vector<1x128xf32>
    %181 = arith.addf %135, %180 : vector<1x128xf32>
    %182 = arith.mulf %173, %173 : vector<128x128xf32>
    %cst_118 = arith.constant dense<0.000000e+00> : vector<128xf32>
    %183 = vector.multi_reduction <add>, %182, %cst_118 [0] : vector<128x128xf32> to vector<128xf32>
    %184 = vector.shape_cast %183 : vector<128xf32> to vector<1x128xf32>
    %185 = arith.addf %139, %184 : vector<1x128xf32>
    %c0_119 = arith.constant 0 : index
    %c0_120 = arith.constant 0 : index
    %c0_121 = arith.constant 0 : index
    %186 = vector.load %arg4[%c0_119, %c0_120, %c0_121] : memref<1x8x128xf32, #tpu.memory_space<vmem>>, vector<1x1x128xf32>
    %187 = vector.shape_cast %186 : vector<1x1x128xf32> to vector<1x128xf32>
    %188 = vector.shape_cast %181 : vector<1x128xf32> to vector<1x1x128xf32>
    tpu.vector_store %arg4[%c0_119, %c0_120, %c0_121], %188 {strides = array<i32>} : memref<1x8x128xf32, #tpu.memory_space<vmem>>, vector<1x1x128xf32>,
    %c0_122 = arith.constant 0 : index
    %c1_123 = arith.constant 1 : index
    %c0_124 = arith.constant 0 : index
    %189 = vector.load %arg4[%c0_122, %c1_123, %c0_124] : memref<1x8x128xf32, #tpu.memory_space<vmem>>, vector<1x1x128xf32>
    %190 = vector.shape_cast %189 : vector<1x1x128xf32> to vector<1x128xf32>
    %191 = vector.shape_cast %185 : vector<1x128xf32> to vector<1x1x128xf32>
    tpu.vector_store %arg4[%c0_122, %c1_123, %c0_124], %191 {strides = array<i32>} : memref<1x8x128xf32, #tpu.memory_space<vmem>>, vector<1x1x128xf32>,
    %cst_125 = arith.constant 0.000000e+00 : f32
    %192 = vector.broadcast %cst_125 : f32 to vector<6x128xf32>
    %c0_126 = arith.constant 0 : index
    %c2_127 = arith.constant 2 : index
    %c0_128 = arith.constant 0 : index
    %193 = vector.load %arg4[%c0_126, %c2_127, %c0_128] : memref<1x8x128xf32, #tpu.memory_space<vmem>>, vector<1x6x128xf32>
    %194 = vector.shape_cast %193 : vector<1x6x128xf32> to vector<6x128xf32>
    %195 = vector.shape_cast %192 : vector<6x128xf32> to vector<1x6x128xf32>
    tpu.vector_store %arg4[%c0_126, %c2_127, %c0_128], %195 {strides = array<i32>} : memref<1x8x128xf32, #tpu.memory_space<vmem>>, vector<1x6x128xf32>,
    return
  }
  func.func @transform_0(%arg0: i32) -> (i32, i32, i32, i32) {
    %c0_i32 = arith.constant 0 : i32
    %c0_i32_0 = arith.constant 0 : i32
    %c0_i32_1 = arith.constant 0 : i32
    %c0_i32_2 = arith.constant 0 : i32
    return %arg0, %c0_i32, %c0_i32_0, %c0_i32_1 : i32, i32, i32, i32
  }
  func.func @transform_1(%arg0: i32) -> (i32, i32, i32) {
    %c0_i32 = arith.constant 0 : i32
    %c0_i32_0 = arith.constant 0 : i32
    %c0_i32_1 = arith.constant 0 : i32
    %c0_i32_2 = arith.constant 0 : i32
    return %c0_i32, %c0_i32_0, %c0_i32_1 : i32, i32, i32
  }
  func.func @transform_2(%arg0: i32) -> (i32, i32, i32, i32) {
    %c0_i32 = arith.constant 0 : i32
    %c0_i32_0 = arith.constant 0 : i32
    %c0_i32_1 = arith.constant 0 : i32
    %c0_i32_2 = arith.constant 0 : i32
    return %arg0, %c0_i32, %c0_i32_0, %c0_i32_1 : i32, i32, i32, i32
  }
  func.func @transform_3(%arg0: i32) -> (i32, i32, i32) {
    %c0_i32 = arith.constant 0 : i32
    %c0_i32_0 = arith.constant 0 : i32
    %c0_i32_1 = arith.constant 0 : i32
    return %arg0, %c0_i32, %c0_i32_0 : i32, i32, i32
  }
}

module attributes {stable_mosaic.version = 11 : i64} {
  func.func @_bn_pad_add_kernel(%arg0: i32, %arg1: memref<1x16x16x128xbf16, #tpu.memory_space<vmem>>, %arg2: memref<1x128xf32, #tpu.memory_space<vmem>>, %arg3: memref<1x128xf32, #tpu.memory_space<vmem>>, %arg4: memref<1x18x18x128xbf16, #tpu.memory_space<vmem>>, %arg5: memref<1x18x18x128xbf16, #tpu.memory_space<vmem>>) attributes {dimension_semantics = [#tpu.dimension_semantics<parallel>], iteration_bounds = array<i64: 2>, scalar_prefetch = 0 : i64, scratch_operands = 0 : i64, tpu.core_type = #tpu.core_type<tc>, window_params = [{transform_indices = @transform_0, window_bounds = array<i64: 1, 16, 16, 128>}, {pipeline_mode = #tpu.pipeline_mode<synchronous>, transform_indices = @transform_1, window_bounds = array<i64: 1, 128>}, {pipeline_mode = #tpu.pipeline_mode<synchronous>, transform_indices = @transform_2, window_bounds = array<i64: 1, 128>}, {transform_indices = @transform_3, window_bounds = array<i64: 1, 18, 18, 128>}, {transform_indices = @transform_4, window_bounds = array<i64: 1, 18, 18, 128>}]} {
    %c0 = arith.constant 0 : index
    %c0_0 = arith.constant 0 : index
    %0 = vector.load %arg2[%c0, %c0_0] : memref<1x128xf32, #tpu.memory_space<vmem>>, vector<1x128xf32>
    %1 = vector.shape_cast %0 : vector<1x128xf32> to vector<1x1x128xf32>
    %c0_1 = arith.constant 0 : index
    %c0_2 = arith.constant 0 : index
    %2 = vector.load %arg3[%c0_1, %c0_2] : memref<1x128xf32, #tpu.memory_space<vmem>>, vector<1x128xf32>
    %3 = vector.shape_cast %2 : vector<1x128xf32> to vector<1x1x128xf32>
    %c0_3 = arith.constant 0 : index
    %c0_4 = arith.constant 0 : index
    %c0_5 = arith.constant 0 : index
    %c0_6 = arith.constant 0 : index
    %4 = vector.load %arg1[%c0_3, %c0_4, %c0_5, %c0_6] : memref<1x16x16x128xbf16, #tpu.memory_space<vmem>>, vector<1x16x16x128xbf16>
    %5 = vector.shape_cast %4 : vector<1x16x16x128xbf16> to vector<16x16x128xbf16>
    %6 = arith.extf %5 : vector<16x16x128xbf16> to vector<16x16x128xf32>
    %7 = vector.broadcast %1 : vector<1x1x128xf32> to vector<16x16x128xf32>
    %8 = arith.mulf %6, %7 : vector<16x16x128xf32>
    %9 = vector.broadcast %3 : vector<1x1x128xf32> to vector<16x16x128xf32>
    %10 = arith.addf %8, %9 : vector<16x16x128xf32>
    %c0_7 = arith.constant 0 : index
    %c1 = arith.constant 1 : index
    %c1_8 = arith.constant 1 : index
    %c0_9 = arith.constant 0 : index
    %11 = vector.load %arg4[%c0_7, %c1, %c1_8, %c0_9] : memref<1x18x18x128xbf16, #tpu.memory_space<vmem>>, vector<1x16x16x128xbf16>
    %12 = vector.shape_cast %11 : vector<1x16x16x128xbf16> to vector<16x16x128xbf16>
    %13 = arith.extf %12 : vector<16x16x128xbf16> to vector<16x16x128xf32>
    %14 = arith.addf %10, %13 : vector<16x16x128xf32>
    %cst = arith.constant 0.000000e+00 : bf16
    %15 = vector.broadcast %cst : bf16 to vector<1x18x18x128xbf16>
    %c0_10 = arith.constant 0 : index
    %c0_11 = arith.constant 0 : index
    %c0_12 = arith.constant 0 : index
    %c0_13 = arith.constant 0 : index
    %16 = vector.load %arg5[%c0_10, %c0_11, %c0_12, %c0_13] : memref<1x18x18x128xbf16, #tpu.memory_space<vmem>>, vector<1x18x18x128xbf16>
    tpu.vector_store %arg5[%c0_10, %c0_11, %c0_12, %c0_13], %15 {strides = array<i32>} : memref<1x18x18x128xbf16, #tpu.memory_space<vmem>>, vector<1x18x18x128xbf16>,
    %17 = arith.truncf %14 : vector<16x16x128xf32> to vector<16x16x128xbf16>
    %c0_14 = arith.constant 0 : index
    %c1_15 = arith.constant 1 : index
    %c1_16 = arith.constant 1 : index
    %c0_17 = arith.constant 0 : index
    %18 = vector.load %arg5[%c0_14, %c1_15, %c1_16, %c0_17] : memref<1x18x18x128xbf16, #tpu.memory_space<vmem>>, vector<1x16x16x128xbf16>
    %19 = vector.shape_cast %18 : vector<1x16x16x128xbf16> to vector<16x16x128xbf16>
    %20 = vector.shape_cast %17 : vector<16x16x128xbf16> to vector<1x16x16x128xbf16>
    tpu.vector_store %arg5[%c0_14, %c1_15, %c1_16, %c0_17], %20 {strides = array<i32>} : memref<1x18x18x128xbf16, #tpu.memory_space<vmem>>, vector<1x16x16x128xbf16>,
    return
  }
  func.func @transform_0(%arg0: i32) -> (i32, i32, i32, i32) {
    %c0_i32 = arith.constant 0 : i32
    %c0_i32_0 = arith.constant 0 : i32
    %c0_i32_1 = arith.constant 0 : i32
    %c0_i32_2 = arith.constant 0 : i32
    return %arg0, %c0_i32, %c0_i32_0, %c0_i32_1 : i32, i32, i32, i32
  }
  func.func @transform_1(%arg0: i32) -> (i32, i32) {
    %c0_i32 = arith.constant 0 : i32
    %c0_i32_0 = arith.constant 0 : i32
    %c0_i32_1 = arith.constant 0 : i32
    return %c0_i32, %c0_i32_0 : i32, i32
  }
  func.func @transform_2(%arg0: i32) -> (i32, i32) {
    %c0_i32 = arith.constant 0 : i32
    %c0_i32_0 = arith.constant 0 : i32
    %c0_i32_1 = arith.constant 0 : i32
    return %c0_i32, %c0_i32_0 : i32, i32
  }
  func.func @transform_3(%arg0: i32) -> (i32, i32, i32, i32) {
    %c0_i32 = arith.constant 0 : i32
    %c0_i32_0 = arith.constant 0 : i32
    %c0_i32_1 = arith.constant 0 : i32
    %c0_i32_2 = arith.constant 0 : i32
    return %arg0, %c0_i32, %c0_i32_0, %c0_i32_1 : i32, i32, i32, i32
  }
  func.func @transform_4(%arg0: i32) -> (i32, i32, i32, i32) {
    %c0_i32 = arith.constant 0 : i32
    %c0_i32_0 = arith.constant 0 : i32
    %c0_i32_1 = arith.constant 0 : i32
    %c0_i32_2 = arith.constant 0 : i32
    return %arg0, %c0_i32, %c0_i32_0, %c0_i32_1 : i32, i32, i32, i32
  }
}

module attributes {stable_mosaic.version = 11 : i64} {
  func.func @_bn_pad_act_kernel(%arg0: i32, %arg1: memref<1x16x16x128xbf16, #tpu.memory_space<vmem>>, %arg2: memref<1x128xf32, #tpu.memory_space<vmem>>, %arg3: memref<1x128xf32, #tpu.memory_space<vmem>>, %arg4: memref<1x18x18x128xbf16, #tpu.memory_space<vmem>>) attributes {dimension_semantics = [#tpu.dimension_semantics<parallel>], iteration_bounds = array<i64: 2>, scalar_prefetch = 0 : i64, scratch_operands = 0 : i64, tpu.core_type = #tpu.core_type<tc>, window_params = [{transform_indices = @transform_0, window_bounds = array<i64: 1, 16, 16, 128>}, {pipeline_mode = #tpu.pipeline_mode<synchronous>, transform_indices = @transform_1, window_bounds = array<i64: 1, 128>}, {pipeline_mode = #tpu.pipeline_mode<synchronous>, transform_indices = @transform_2, window_bounds = array<i64: 1, 128>}, {transform_indices = @transform_3, window_bounds = array<i64: 1, 18, 18, 128>}]} {
    %c0 = arith.constant 0 : index
    %c0_0 = arith.constant 0 : index
    %0 = vector.load %arg2[%c0, %c0_0] : memref<1x128xf32, #tpu.memory_space<vmem>>, vector<1x128xf32>
    %1 = vector.shape_cast %0 : vector<1x128xf32> to vector<1x1x128xf32>
    %c0_1 = arith.constant 0 : index
    %c0_2 = arith.constant 0 : index
    %2 = vector.load %arg3[%c0_1, %c0_2] : memref<1x128xf32, #tpu.memory_space<vmem>>, vector<1x128xf32>
    %3 = vector.shape_cast %2 : vector<1x128xf32> to vector<1x1x128xf32>
    %c0_3 = arith.constant 0 : index
    %c0_4 = arith.constant 0 : index
    %c0_5 = arith.constant 0 : index
    %c0_6 = arith.constant 0 : index
    %4 = vector.load %arg1[%c0_3, %c0_4, %c0_5, %c0_6] : memref<1x16x16x128xbf16, #tpu.memory_space<vmem>>, vector<1x16x16x128xbf16>
    %5 = vector.shape_cast %4 : vector<1x16x16x128xbf16> to vector<16x16x128xbf16>
    %6 = arith.extf %5 : vector<16x16x128xbf16> to vector<16x16x128xf32>
    %7 = vector.broadcast %1 : vector<1x1x128xf32> to vector<16x16x128xf32>
    %8 = arith.mulf %6, %7 : vector<16x16x128xf32>
    %9 = vector.broadcast %3 : vector<1x1x128xf32> to vector<16x16x128xf32>
    %10 = arith.addf %8, %9 : vector<16x16x128xf32>
    %cst = arith.constant 0.000000e+00 : f32
    %11 = vector.broadcast %cst : f32 to vector<16x16x128xf32>
    %12 = arith.maximumf %10, %11 : vector<16x16x128xf32>
    %cst_7 = arith.constant 0.000000e+00 : bf16
    %13 = vector.broadcast %cst_7 : bf16 to vector<1x18x18x128xbf16>
    %c0_8 = arith.constant 0 : index
    %c0_9 = arith.constant 0 : index
    %c0_10 = arith.constant 0 : index
    %c0_11 = arith.constant 0 : index
    %14 = vector.load %arg4[%c0_8, %c0_9, %c0_10, %c0_11] : memref<1x18x18x128xbf16, #tpu.memory_space<vmem>>, vector<1x18x18x128xbf16>
    tpu.vector_store %arg4[%c0_8, %c0_9, %c0_10, %c0_11], %13 {strides = array<i32>} : memref<1x18x18x128xbf16, #tpu.memory_space<vmem>>, vector<1x18x18x128xbf16>,
    %15 = arith.truncf %12 : vector<16x16x128xf32> to vector<16x16x128xbf16>
    %c0_12 = arith.constant 0 : index
    %c1 = arith.constant 1 : index
    %c1_13 = arith.constant 1 : index
    %c0_14 = arith.constant 0 : index
    %16 = vector.load %arg4[%c0_12, %c1, %c1_13, %c0_14] : memref<1x18x18x128xbf16, #tpu.memory_space<vmem>>, vector<1x16x16x128xbf16>
    %17 = vector.shape_cast %16 : vector<1x16x16x128xbf16> to vector<16x16x128xbf16>
    %18 = vector.shape_cast %15 : vector<16x16x128xbf16> to vector<1x16x16x128xbf16>
    tpu.vector_store %arg4[%c0_12, %c1, %c1_13, %c0_14], %18 {strides = array<i32>} : memref<1x18x18x128xbf16, #tpu.memory_space<vmem>>, vector<1x16x16x128xbf16>,
    return
  }
  func.func @transform_0(%arg0: i32) -> (i32, i32, i32, i32) {
    %c0_i32 = arith.constant 0 : i32
    %c0_i32_0 = arith.constant 0 : i32
    %c0_i32_1 = arith.constant 0 : i32
    %c0_i32_2 = arith.constant 0 : i32
    return %arg0, %c0_i32, %c0_i32_0, %c0_i32_1 : i32, i32, i32, i32
  }
  func.func @transform_1(%arg0: i32) -> (i32, i32) {
    %c0_i32 = arith.constant 0 : i32
    %c0_i32_0 = arith.constant 0 : i32
    %c0_i32_1 = arith.constant 0 : i32
    return %c0_i32, %c0_i32_0 : i32, i32
  }
  func.func @transform_2(%arg0: i32) -> (i32, i32) {
    %c0_i32 = arith.constant 0 : i32
    %c0_i32_0 = arith.constant 0 : i32
    %c0_i32_1 = arith.constant 0 : i32
    return %c0_i32, %c0_i32_0 : i32, i32
  }
  func.func @transform_3(%arg0: i32) -> (i32, i32, i32, i32) {
    %c0_i32 = arith.constant 0 : i32
    %c0_i32_0 = arith.constant 0 : i32
    %c0_i32_1 = arith.constant 0 : i32
    %c0_i32_2 = arith.constant 0 : i32
    return %arg0, %c0_i32, %c0_i32_0, %c0_i32_1 : i32, i32, i32, i32
  }
}

module attributes {stable_mosaic.version = 11 : i64} {
  func.func @_bn_pad_add_kernel(%arg0: i32, %arg1: memref<1x16x16x128xbf16, #tpu.memory_space<vmem>>, %arg2: memref<1x128xf32, #tpu.memory_space<vmem>>, %arg3: memref<1x128xf32, #tpu.memory_space<vmem>>, %arg4: memref<1x18x18x128xbf16, #tpu.memory_space<vmem>>, %arg5: memref<1x18x18x128xf32, #tpu.memory_space<vmem>>) attributes {dimension_semantics = [#tpu.dimension_semantics<parallel>], iteration_bounds = array<i64: 2>, scalar_prefetch = 0 : i64, scratch_operands = 0 : i64, tpu.core_type = #tpu.core_type<tc>, window_params = [{transform_indices = @transform_0, window_bounds = array<i64: 1, 16, 16, 128>}, {pipeline_mode = #tpu.pipeline_mode<synchronous>, transform_indices = @transform_1, window_bounds = array<i64: 1, 128>}, {pipeline_mode = #tpu.pipeline_mode<synchronous>, transform_indices = @transform_2, window_bounds = array<i64: 1, 128>}, {transform_indices = @transform_3, window_bounds = array<i64: 1, 18, 18, 128>}, {transform_indices = @transform_4, window_bounds = array<i64: 1, 18, 18, 128>}]} {
    %c0 = arith.constant 0 : index
    %c0_0 = arith.constant 0 : index
    %0 = vector.load %arg2[%c0, %c0_0] : memref<1x128xf32, #tpu.memory_space<vmem>>, vector<1x128xf32>
    %1 = vector.shape_cast %0 : vector<1x128xf32> to vector<1x1x128xf32>
    %c0_1 = arith.constant 0 : index
    %c0_2 = arith.constant 0 : index
    %2 = vector.load %arg3[%c0_1, %c0_2] : memref<1x128xf32, #tpu.memory_space<vmem>>, vector<1x128xf32>
    %3 = vector.shape_cast %2 : vector<1x128xf32> to vector<1x1x128xf32>
    %c0_3 = arith.constant 0 : index
    %c0_4 = arith.constant 0 : index
    %c0_5 = arith.constant 0 : index
    %c0_6 = arith.constant 0 : index
    %4 = vector.load %arg1[%c0_3, %c0_4, %c0_5, %c0_6] : memref<1x16x16x128xbf16, #tpu.memory_space<vmem>>, vector<1x16x16x128xbf16>
    %5 = vector.shape_cast %4 : vector<1x16x16x128xbf16> to vector<16x16x128xbf16>
    %6 = arith.extf %5 : vector<16x16x128xbf16> to vector<16x16x128xf32>
    %7 = vector.broadcast %1 : vector<1x1x128xf32> to vector<16x16x128xf32>
    %8 = arith.mulf %6, %7 : vector<16x16x128xf32>
    %9 = vector.broadcast %3 : vector<1x1x128xf32> to vector<16x16x128xf32>
    %10 = arith.addf %8, %9 : vector<16x16x128xf32>
    %c0_7 = arith.constant 0 : index
    %c1 = arith.constant 1 : index
    %c1_8 = arith.constant 1 : index
    %c0_9 = arith.constant 0 : index
    %11 = vector.load %arg4[%c0_7, %c1, %c1_8, %c0_9] : memref<1x18x18x128xbf16, #tpu.memory_space<vmem>>, vector<1x16x16x128xbf16>
    %12 = vector.shape_cast %11 : vector<1x16x16x128xbf16> to vector<16x16x128xbf16>
    %13 = arith.extf %12 : vector<16x16x128xbf16> to vector<16x16x128xf32>
    %14 = arith.addf %10, %13 : vector<16x16x128xf32>
    %cst = arith.constant 0.000000e+00 : f32
    %15 = vector.broadcast %cst : f32 to vector<1x18x18x128xf32>
    %c0_10 = arith.constant 0 : index
    %c0_11 = arith.constant 0 : index
    %c0_12 = arith.constant 0 : index
    %c0_13 = arith.constant 0 : index
    %16 = vector.load %arg5[%c0_10, %c0_11, %c0_12, %c0_13] : memref<1x18x18x128xf32, #tpu.memory_space<vmem>>, vector<1x18x18x128xf32>
    tpu.vector_store %arg5[%c0_10, %c0_11, %c0_12, %c0_13], %15 {strides = array<i32>} : memref<1x18x18x128xf32, #tpu.memory_space<vmem>>, vector<1x18x18x128xf32>,
    %c0_14 = arith.constant 0 : index
    %c1_15 = arith.constant 1 : index
    %c1_16 = arith.constant 1 : index
    %c0_17 = arith.constant 0 : index
    %17 = vector.load %arg5[%c0_14, %c1_15, %c1_16, %c0_17] : memref<1x18x18x128xf32, #tpu.memory_space<vmem>>, vector<1x16x16x128xf32>
    %18 = vector.shape_cast %17 : vector<1x16x16x128xf32> to vector<16x16x128xf32>
    %19 = vector.shape_cast %14 : vector<16x16x128xf32> to vector<1x16x16x128xf32>
    tpu.vector_store %arg5[%c0_14, %c1_15, %c1_16, %c0_17], %19 {strides = array<i32>} : memref<1x18x18x128xf32, #tpu.memory_space<vmem>>, vector<1x16x16x128xf32>,
    return
  }
  func.func @transform_0(%arg0: i32) -> (i32, i32, i32, i32) {
    %c0_i32 = arith.constant 0 : i32
    %c0_i32_0 = arith.constant 0 : i32
    %c0_i32_1 = arith.constant 0 : i32
    %c0_i32_2 = arith.constant 0 : i32
    return %arg0, %c0_i32, %c0_i32_0, %c0_i32_1 : i32, i32, i32, i32
  }
  func.func @transform_1(%arg0: i32) -> (i32, i32) {
    %c0_i32 = arith.constant 0 : i32
    %c0_i32_0 = arith.constant 0 : i32
    %c0_i32_1 = arith.constant 0 : i32
    return %c0_i32, %c0_i32_0 : i32, i32
  }
  func.func @transform_2(%arg0: i32) -> (i32, i32) {
    %c0_i32 = arith.constant 0 : i32
    %c0_i32_0 = arith.constant 0 : i32
    %c0_i32_1 = arith.constant 0 : i32
    return %c0_i32, %c0_i32_0 : i32, i32
  }
  func.func @transform_3(%arg0: i32) -> (i32, i32, i32, i32) {
    %c0_i32 = arith.constant 0 : i32
    %c0_i32_0 = arith.constant 0 : i32
    %c0_i32_1 = arith.constant 0 : i32
    %c0_i32_2 = arith.constant 0 : i32
    return %arg0, %c0_i32, %c0_i32_0, %c0_i32_1 : i32, i32, i32, i32
  }
  func.func @transform_4(%arg0: i32) -> (i32, i32, i32, i32) {
    %c0_i32 = arith.constant 0 : i32
    %c0_i32_0 = arith.constant 0 : i32
    %c0_i32_1 = arith.constant 0 : i32
    %c0_i32_2 = arith.constant 0 : i32
    return %arg0, %c0_i32, %c0_i32_0, %c0_i32_1 : i32, i32, i32, i32
  }
}

</mosaic_0001>

<llo_original>
// kernel: resnet_encoder_forward.19
$region0: #{resnet_encoder_forward.19}
  #allocation0 [shape = 'u32[]', space=smem, size = 0x4, offset = 0x4, fixed_abs, tag = 'smem constant byte address 0x4 - core index']
  #allocation1 [shape = 'u32[144,128]{1,0:T(1,128)}', space=vmem, size = 0x12000, scoped, tag = 'internal scratch']
  %s0 = inlined_call_operand.vmem [shape: bf16[2,16,16,128], index: 0, kind: input, shape index: {}]
  %s1 = inlined_call_operand.vmem [shape: f32[1,128], index: 1, kind: input, shape index: {}]
  %s2 = inlined_call_operand.vmem [shape: f32[1,128], index: 2, kind: input, shape index: {}]
  %s3 = inlined_call_operand.vmem [shape: bf16[2,18,18,128], index: 3, kind: input, shape index: {}]
  %s4 = inlined_call_operand.vmem [shape: f32[2,18,18,128], index: 4, kind: output, shape index: {}]
  %s5 = sld [smem:[#allocation0]]
  $region49: #{resnet_encoder_forward.19} parent=0
    _
  %s7 = ssub.s32 1, %s5
  %s8 = scalar_select 0, %s7, %s5
  loop: start=0, step=1, limit=4
  $region2: #{resnet_encoder_forward.19} parent=0 // loop_pre_header
    _
  $region3: #{resnet_encoder_forward.19} parent=0 // loop_header
    %s10 = sphi 0, %s14
    %p11 = scmp.ge.s32.totalorder %s10, 4
    %s20 = sphi 0, %s22
    %s23 = sphi 0, %s20
    %s24 = sphi 0, %s23
    %s40 = sphi 0, %s24
    %s44 = sphi 0, %s44
    %s46 = sphi 0, %s44
    %s47 = sphi 0, %s46
    %s61 = sphi 0, %s47
    %s65 = sphi 0, %s65
    %s67 = sphi 0, %s65
    %s68 = sphi 0, %s67
    %s82 = sphi 0, %s68
    %s88 = sphi 0, %s90
    %s91 = sphi 0, %s88
    %s92 = sphi 0, %s91
    %s108 = sphi 0, %s92
    %s114 = sphi 0, %s116
    %s117 = sphi 0, %s114
    %s118 = sphi 0, %s117
    %s134 = sphi 0, %s118
  $region4: #{resnet_encoder_forward.19} parent=0 // loop_header_branch
    %13 = sbr.rel (%p11) target = $region8
  $region5: #{resnet_encoder_forward.19} parent=0 // loop_body
    %s15 = ssub.s32 %s10, 1
    %s16 = ssub.s32 %s10, 2
    %s17 = sadd.s32 %s10, 1
    %s18 = ssub.s32 %s10, %s17
    %p19 = scmp.eq.s32.totalorder %s18, 0
    %s21 = sadd.s32 %s20, 1
    %s22 = scalar_select %p19, %s20, %s21
    %p25 = pneg %p19
    %p26 = scmp.eq.s32.totalorder %s10, 1
    %p27 = por %p25, %p26
    %p28 = scmp.ne.s32.totalorder %s20, %s23
    %p29 = scmp.eq.s32.totalorder %s10, 0
    %p30 = por %p28, %p29
    %p31 = scmp.ne.s32.totalorder %s20, %s23
    %p32 = scmp.eq.s32.totalorder %s15, 1
    %p33 = por %p31, %p32
    %p34 = scmp.ne.s32.totalorder %s23, %s24
    %p35 = scmp.eq.s32.totalorder %s15, 0
    %p36 = por %p34, %p35
    %p37 = scmp.ne.s32.totalorder %s23, %s24
    %p38 = scmp.eq.s32.totalorder %s16, 1
    %p39 = por %p37, %p38
    %p41 = scmp.ne.s32.totalorder %s24, %s40
    %p42 = scmp.eq.s32.totalorder %s16, 0
    %p43 = por %p41, %p42
    %s45 = sadd.s32 %s44, 1
    %p48 = scmp.eq.s32.totalorder %s10, 1
    %p49 = scmp.ne.s32.totalorder %s44, %s46
    %p50 = scmp.eq.s32.totalorder %s10, 0
    %p51 = por %p49, %p50
    %p52 = scmp.ne.s32.totalorder %s44, %s46
    %p53 = scmp.eq.s32.totalorder %s15, 1
    %p54 = por %p52, %p53
    %p55 = scmp.ne.s32.totalorder %s46, %s47
    %p56 = scmp.eq.s32.totalorder %s15, 0
    %p57 = por %p55, %p56
    %p58 = scmp.ne.s32.totalorder %s46, %s47
    %p59 = scmp.eq.s32.totalorder %s16, 1
    %p60 = por %p58, %p59
    %p62 = scmp.ne.s32.totalorder %s47, %s61
    %p63 = scmp.eq.s32.totalorder %s16, 0
    %p64 = por %p62, %p63
    %s66 = sadd.s32 %s65, 1
    %p69 = scmp.eq.s32.totalorder %s10, 1
    %p70 = scmp.ne.s32.totalorder %s65, %s67
    %p71 = scmp.eq.s32.totalorder %s10, 0
    %p72 = por %p70, %p71
    %p73 = scmp.ne.s32.totalorder %s65, %s67
    %p74 = scmp.eq.s32.totalorder %s15, 1
    %p75 = por %p73, %p74
    %p76 = scmp.ne.s32.totalorder %s67, %s68
    %p77 = scmp.eq.s32.totalorder %s15, 0
    %p78 = por %p76, %p77
    %p79 = scmp.ne.s32.totalorder %s67, %s68
    %p80 = scmp.eq.s32.totalorder %s16, 1
    %p81 = por %p79, %p80
    %p83 = scmp.ne.s32.totalorder %s68, %s82
    %p84 = scmp.eq.s32.totalorder %s16, 0
    %p85 = por %p83, %p84
    %s86 = ssub.s32 %s10, %s17
    %p87 = scmp.eq.s32.totalorder %s86, 0
    %s89 = sadd.s32 %s88, 1
    %s90 = scalar_select %p87, %s88, %s89
    %p93 = pneg %p87
    %p94 = scmp.eq.s32.totalorder %s10, 1
    %p95 = por %p93, %p94
    %p96 = scmp.ne.s32.totalorder %s88, %s91
    %p97 = scmp.eq.s32.totalorder %s10, 0
    %p98 = por %p96, %p97
    %p99 = scmp.ne.s32.totalorder %s88, %s91
    %p100 = scmp.eq.s32.totalorder %s15, 1
    %p101 = por %p99, %p100
    %p102 = scmp.ne.s32.totalorder %s91, %s92
    %p103 = scmp.eq.s32.totalorder %s15, 0
    %p104 = por %p102, %p103
    %p105 = scmp.ne.s32.totalorder %s91, %s92
    %p106 = scmp.eq.s32.totalorder %s16, 1
    %p107 = por %p105, %p106
    %p109 = scmp.ne.s32.totalorder %s92, %s108
    %p110 = scmp.eq.s32.totalorder %s16, 0
    %p111 = por %p109, %p110
    %s112 = ssub.s32 %s10, %s17
    %p113 = scmp.eq.s32.totalorder %s112, 0
    %s115 = sadd.s32 %s114, 1
    %s116 = scalar_select %p113, %s114, %s115
    %p119 = pneg %p113
    %p120 = scmp.eq.s32.totalorder %s10, 1
    %p121 = por %p119, %p120
    %p122 = scmp.ne.s32.totalorder %s114, %s117
    %p123 = scmp.eq.s32.totalorder %s10, 0
    %p124 = por %p122, %p123
    %p125 = scmp.ne.s32.totalorder %s114, %s117
    %p126 = scmp.eq.s32.totalorder %s15, 1
    %p127 = por %p125, %p126
    %p128 = scmp.ne.s32.totalorder %s117, %s118
    %p129 = scmp.eq.s32.totalorder %s15, 0
    %p130 = por %p128, %p129
    %p131 = scmp.ne.s32.totalorder %s117, %s118
    %p132 = scmp.eq.s32.totalorder %s16, 1
    %p133 = por %p131, %p132
    %p135 = scmp.ne.s32.totalorder %s118, %s134
    %p136 = scmp.eq.s32.totalorder %s16, 0
    %p137 = por %p135, %p136
    %p138 = scmp.le.s32.totalorder 1, %s10
    %p139 = scmp.lt.s32.totalorder %s10, 3
    %p140 = pnand %p138, %p139
    %p141 = pneg %p140
    // Predicated region
    $region9: #{resnet_encoder_forward.19} parent=5 // pred_check
      _
    $region10: #{resnet_encoder_forward.19} parent=5 // pred_check_branch
      %143 = sbr.rel (%p140) target = $region12
    $region11: #{resnet_encoder_forward.19} parent=5 // pred_region
      %s144 = ssub.s32 %s10, 1
      // Predicated region
      $region13: #{resnet_encoder_forward.19} parent=11 // pred_check
        %p145 = pneg %p57
      $region14: #{resnet_encoder_forward.19} parent=11 // pred_check_branch
        %147 = sbr.rel (%p145) target = $region16
      $region15: #{resnet_encoder_forward.19} parent=11 // pred_region
        _
      $region16: #{resnet_encoder_forward.19} parent=11 // pred_fallthru
        _
      // Predicated region
      $region17: #{resnet_encoder_forward.19} parent=11 // pred_check
        %p148 = pneg %p78
      $region18: #{resnet_encoder_forward.19} parent=11 // pred_check_branch
        %150 = sbr.rel (%p148) target = $region20
      $region19: #{resnet_encoder_forward.19} parent=11 // pred_region
        _
      $region20: #{resnet_encoder_forward.19} parent=11 // pred_fallthru
        _
    $region12: #{resnet_encoder_forward.19} parent=5 // pred_fallthru
      _
    %p151 = scmp.lt.s32.totalorder %s10, 2
    // Predicated region
    $region21: #{resnet_encoder_forward.19} parent=5 // pred_check
      %p152 = pneg %p151
    $region22: #{resnet_encoder_forward.19} parent=5 // pred_check_branch
      %154 = sbr.rel (%p152) target = $region24
    $region23: #{resnet_encoder_forward.19} parent=5 // pred_region
      // Predicated region
      $region25: #{resnet_encoder_forward.19} parent=23 // pred_check
        %p155 = pneg %p30
      $region26: #{resnet_encoder_forward.19} parent=23 // pred_check_branch
        %157 = sbr.rel (%p155) target = $region28
      $region27: #{resnet_encoder_forward.19} parent=23 // pred_region
        %p158 = scmp.lt.s32.totalorder %s10, 1
        %s159 = scalar_select %p158, %s10, 1
        %s160 = smul.addr %s159, 32
        %s161 = smul.addr %s160, 4
        %s162 = scalar_lea.vmem %s0, %s161
      $region28: #{resnet_encoder_forward.19} parent=23 // pred_fallthru
        _
      // Predicated region
      $region29: #{resnet_encoder_forward.19} parent=23 // pred_check
        %p163 = pneg %p98
      $region30: #{resnet_encoder_forward.19} parent=23 // pred_check_branch
        %165 = sbr.rel (%p163) target = $region32
      $region31: #{resnet_encoder_forward.19} parent=23 // pred_region
        %p166 = scmp.lt.s32.totalorder %s10, 1
        %s167 = scalar_select %p166, %s10, 1
        %s168 = smul.addr %s167, 54
        %s169 = smul.addr %s168, 4
        %s170 = scalar_lea.vmem %s3, %s169
      $region32: #{resnet_encoder_forward.19} parent=23 // pred_fallthru
        _
    $region24: #{resnet_encoder_forward.19} parent=5 // pred_fallthru
      _
    %p171 = scmp.le.s32.totalorder 1, %s10
    %p172 = scmp.lt.s32.totalorder %s10, 3
    %p173 = pnand %p171, %p172
    %p174 = pneg %p173
    // Predicated region
    $region33: #{resnet_encoder_forward.19} parent=5 // pred_check
      _
    $region34: #{resnet_encoder_forward.19} parent=5 // pred_check_branch
      %176 = sbr.rel (%p173) target = $region36
    $region35: #{resnet_encoder_forward.19} parent=5 // pred_region
      %s177 = ssub.s32 %s10, 1
      %p178 = scmp.lt.s32.totalorder %s15, 1
      %s179 = scalar_select %p178, %s15, 1
      %s180 = smul.addr %s179, 32
      %s181 = smul.addr %s180, 4
      %s182 = scalar_lea.vmem %s0, %s181
      %p183 = pneg %p36
      %p184 = pneg %p33
      %p185 = pneg %p57
      %p186 = pneg %p54
      %p187 = pneg %p78
      %p188 = pneg %p75
      %p189 = scmp.lt.s32.totalorder %s15, 1
      %s190 = scalar_select %p189, %s15, 1
      %s191 = smul.addr %s190, 54
      %s192 = smul.addr %s191, 4
      %s193 = scalar_lea.vmem %s3, %s192
      %p194 = pneg %p104
      %p195 = pneg %p101
      %p196 = pneg %p130
      %p197 = pneg %p127
      %p198 = scmp.lt.s32.totalorder %s15, 1
      %s199 = scalar_select %p198, %s15, 1
      %s200 = smul.addr %s199, 54
      %s201 = smul.addr %s200, 8
      %s202 = scalar_lea.vmem %s4, %s201
      %p203 = scmp.lt.s32.totalorder %s15, 1
      %s204 = scalar_select %p203, %s15, 1
      %s205 = smul.addr %s204, 32
      %s206 = smul.addr %s205, 4
      %s207 = scalar_lea.vmem %s0, %s206
      %p208 = scmp.lt.s32.totalorder %s15, 1
      %s209 = scalar_select %p208, %s15, 1
      %s210 = smul.addr %s209, 54
      %s211 = smul.addr %s210, 4
      %s212 = scalar_lea.vmem %s3, %s211
      %p213 = scmp.lt.s32.totalorder %s15, 1
      %s214 = scalar_select %p213, %s15, 1
      %s215 = smul.addr %s214, 54
      %s216 = smul.addr %s215, 8
      %s217 = scalar_lea.vmem %s4, %s216
      %v218 = vld [vmem:[%s1] sm:$0x1]
      %v219 = vld [vmem:[%s2] sm:$0x1]
      %v220 = vld [vmem:[%s207] sm:$0xf]
      %v221 = vld [vmem:[%s207 + $0x4] sm:$0xf]
      %v222 = vld [vmem:[%s207 + $0x8] sm:$0xf]
      %v223 = vld [vmem:[%s207 + $0xc] sm:$0xf]
      %v224 = vld [vmem:[%s207 + $0x10] sm:$0xf]
      %v225 = vld [vmem:[%s207 + $0x14] sm:$0xf]
      %v226 = vld [vmem:[%s207 + $0x18] sm:$0xf]
      %v227 = vld [vmem:[%s207 + $0x1c] sm:$0xf]
      %v228 = vld [vmem:[%s207 + $0x20] sm:$0xf]
      %v229 = vld [vmem:[%s207 + $0x24] sm:$0xf]
      %v230 = vld [vmem:[%s207 + $0x28] sm:$0xf]
      %v231 = vld [vmem:[%s207 + $0x2c] sm:$0xf]
      %v232 = vld [vmem:[%s207 + $0x30] sm:$0xf]
      %v233 = vld [vmem:[%s207 + $0x34] sm:$0xf]
      %v234 = vld [vmem:[%s207 + $0x38] sm:$0xf]
      %v235 = vld [vmem:[%s207 + $0x3c] sm:$0xf]
      %v236 = vld [vmem:[%s207 + $0x40] sm:$0xf]
      %v237 = vld [vmem:[%s207 + $0x44] sm:$0xf]
      %v238 = vld [vmem:[%s207 + $0x48] sm:$0xf]
      %v239 = vld [vmem:[%s207 + $0x4c] sm:$0xf]
      %v240 = vld [vmem:[%s207 + $0x50] sm:$0xf]
      %v241 = vld [vmem:[%s207 + $0x54] sm:$0xf]
      %v242 = vld [vmem:[%s207 + $0x58] sm:$0xf]
      %v243 = vld [vmem:[%s207 + $0x5c] sm:$0xf]
      %v244 = vld [vmem:[%s207 + $0x60] sm:$0xf]
      %v245 = vld [vmem:[%s207 + $0x64] sm:$0xf]
      %v246 = vld [vmem:[%s207 + $0x68] sm:$0xf]
      %v247 = vld [vmem:[%s207 + $0x6c] sm:$0xf]
      %v248 = vld [vmem:[%s207 + $0x70] sm:$0xf]
      %v249 = vld [vmem:[%s207 + $0x74] sm:$0xf]
      %v250 = vld [vmem:[%s207 + $0x78] sm:$0xf]
      %v251 = vld [vmem:[%s207 + $0x7c] sm:$0xf]
      %v252 = vunpack.c.l.bf16 %v220
      %v253 = vunpack.c.l.bf16 %v221
      %v254 = vunpack.c.l.bf16 %v222
      %v255 = vunpack.c.l.bf16 %v223
      %v256 = vunpack.c.l.bf16 %v224
      %v257 = vunpack.c.l.bf16 %v225
      %v258 = vunpack.c.l.bf16 %v226
      %v259 = vunpack.c.l.bf16 %v227
      %v260 = vunpack.c.l.bf16 %v228
      %v261 = vunpack.c.l.bf16 %v229
      %v262 = vunpack.c.l.bf16 %v230
      %v263 = vunpack.c.l.bf16 %v231
      %v264 = vunpack.c.l.bf16 %v232
      %v265 = vunpack.c.l.bf16 %v233
      %v266 = vunpack.c.l.bf16 %v234
      %v267 = vunpack.c.l.bf16 %v235
      %v268 = vunpack.c.l.bf16 %v236
      %v269 = vunpack.c.l.bf16 %v237
      %v270 = vunpack.c.l.bf16 %v238
      %v271 = vunpack.c.l.bf16 %v239
      %v272 = vunpack.c.l.bf16 %v240
      %v273 = vunpack.c.l.bf16 %v241
      %v274 = vunpack.c.l.bf16 %v242
      %v275 = vunpack.c.l.bf16 %v243
      %v276 = vunpack.c.l.bf16 %v244
      %v277 = vunpack.c.l.bf16 %v245
      %v278 = vunpack.c.l.bf16 %v246
      %v279 = vunpack.c.l.bf16 %v247
      %v280 = vunpack.c.l.bf16 %v248
      %v281 = vunpack.c.l.bf16 %v249
      %v282 = vunpack.c.l.bf16 %v250
      %v283 = vunpack.c.l.bf16 %v251
      %v285 = vlaneseq
      %v286 = vshrl.u32 %v285, 7
      %v287 = vsub.s32 0, %v286
      %v288 = vrot.slane %v218, %v287
      %v290 = vmul.f32 %v252, %v288
      %v291 = vmul.f32 %v253, %v288
      %v292 = vmul.f32 %v254, %v288
      %v293 = vmul.f32 %v255, %v288
      %v294 = vmul.f32 %v256, %v288
      %v295 = vmul.f32 %v257, %v288
      %v296 = vmul.f32 %v258, %v288
      %v297 = vmul.f32 %v259, %v288
      %v298 = vmul.f32 %v260, %v288
      %v299 = vmul.f32 %v261, %v288
      %v300 = vmul.f32 %v262, %v288
      %v301 = vmul.f32 %v263, %v288
      %v302 = vmul.f32 %v264, %v288
      %v303 = vmul.f32 %v265, %v288
      %v304 = vmul.f32 %v266, %v288
      %v305 = vmul.f32 %v267, %v288
      %v306 = vmul.f32 %v268, %v288
      %v307 = vmul.f32 %v269, %v288
      %v308 = vmul.f32 %v270, %v288
      %v309 = vmul.f32 %v271, %v288
      %v310 = vmul.f32 %v272, %v288
      %v311 = vmul.f32 %v273, %v288
      %v312 = vmul.f32 %v274, %v288
      %v313 = vmul.f32 %v275, %v288
      %v314 = vmul.f32 %v276, %v288
      %v315 = vmul.f32 %v277, %v288
      %v316 = vmul.f32 %v278, %v288
      %v317 = vmul.f32 %v279, %v288
      %v318 = vmul.f32 %v280, %v288
      %v319 = vmul.f32 %v281, %v288
      %v320 = vmul.f32 %v282, %v288
      %v321 = vmul.f32 %v283, %v288
      %v323 = vlaneseq
      %v324 = vshrl.u32 %v323, 7
      %v325 = vsub.s32 0, %v324
      %v326 = vrot.slane %v219, %v325
      %v328 = vadd.f32 %v290, %v326
      %v329 = vadd.f32 %v291, %v326
      %v330 = vadd.f32 %v292, %v326
      %v331 = vadd.f32 %v293, %v326
      %v332 = vadd.f32 %v294, %v326
      %v333 = vadd.f32 %v295, %v326
      %v334 = vadd.f32 %v296, %v326
      %v335 = vadd.f32 %v297, %v326
      %v336 = vadd.f32 %v298, %v326
      %v337 = vadd.f32 %v299, %v326
      %v338 = vadd.f32 %v300, %v326
      %v339 = vadd.f32 %v301, %v326
      %v340 = vadd.f32 %v302, %v326
      %v341 = vadd.f32 %v303, %v326
      %v342 = vadd.f32 %v304, %v326
      %v343 = vadd.f32 %v305, %v326
      %v344 = vadd.f32 %v306, %v326
      %v345 = vadd.f32 %v307, %v326
      %v346 = vadd.f32 %v308, %v326
      %v347 = vadd.f32 %v309, %v326
      %v348 = vadd.f32 %v310, %v326
      %v349 = vadd.f32 %v311, %v326
      %v350 = vadd.f32 %v312, %v326
      %v351 = vadd.f32 %v313, %v326
      %v352 = vadd.f32 %v314, %v326
      %v353 = vadd.f32 %v315, %v326
      %v354 = vadd.f32 %v316, %v326
      %v355 = vadd.f32 %v317, %v326
      %v356 = vadd.f32 %v318, %v326
      %v357 = vadd.f32 %v319, %v326
      %v358 = vadd.f32 %v320, %v326
      %v359 = vadd.f32 %v321, %v326
      %s360 = scalar_lea.vmem %s212, 12
      %v361 = vld [vmem:[%s360] sm:$0xf]
      %v362 = vld [vmem:[%s360 + $0x4] sm:$0xf]
      %v363 = vld [vmem:[%s360 + $0x8] sm:$0x1]
      %v364 = vld [vmem:[%s360 + $0xc] sm:$0xf]
      %v365 = vld [vmem:[%s360 + $0x10] sm:$0xf]
      %v366 = vld [vmem:[%s360 + $0x14] sm:$0x1]
      %v367 = vld [vmem:[%s360 + $0x18] sm:$0xf]
      %v368 = vld [vmem:[%s360 + $0x1c] sm:$0xf]
      %v369 = vld [vmem:[%s360 + $0x20] sm:$0x1]
      %v370 = vld [vmem:[%s360 + $0x24] sm:$0xf]
      %v371 = vld [vmem:[%s360 + $0x28] sm:$0xf]
      %v372 = vld [vmem:[%s360 + $0x2c] sm:$0x1]
      %v373 = vld [vmem:[%s360 + $0x30] sm:$0xf]
      %v374 = vld [vmem:[%s360 + $0x34] sm:$0xf]
      %v375 = vld [vmem:[%s360 + $0x38] sm:$0x1]
      %v376 = vld [vmem:[%s360 + $0x3c] sm:$0xf]
      %v377 = vld [vmem:[%s360 + $0x40] sm:$0xf]
      %v378 = vld [vmem:[%s360 + $0x44] sm:$0x1]
      %v379 = vld [vmem:[%s360 + $0x48] sm:$0xf]
      %v380 = vld [vmem:[%s360 + $0x4c] sm:$0xf]
      %v381 = vld [vmem:[%s360 + $0x50] sm:$0x1]
      %v382 = vld [vmem:[%s360 + $0x54] sm:$0xf]
      %v383 = vld [vmem:[%s360 + $0x58] sm:$0xf]
      %v384 = vld [vmem:[%s360 + $0x5c] sm:$0x1]
      %v385 = vld [vmem:[%s360 + $0x60] sm:$0xf]
      %v386 = vld [vmem:[%s360 + $0x64] sm:$0xf]
      %v387 = vld [vmem:[%s360 + $0x68] sm:$0x1]
      %v388 = vld [vmem:[%s360 + $0x6c] sm:$0xf]
      %v389 = vld [vmem:[%s360 + $0x70] sm:$0xf]
      %v390 = vld [vmem:[%s360 + $0x74] sm:$0x1]
      %v391 = vld [vmem:[%s360 + $0x78] sm:$0xf]
      %v392 = vld [vmem:[%s360 + $0x7c] sm:$0xf]
      %v393 = vld [vmem:[%s360 + $0x80] sm:$0x1]
      %v394 = vld [vmem:[%s360 + $0x84] sm:$0xf]
      %v395 = vld [vmem:[%s360 + $0x88] sm:$0xf]
      %v396 = vld [vmem:[%s360 + $0x8c] sm:$0x1]
      %v397 = vld [vmem:[%s360 + $0x90] sm:$0xf]
      %v398 = vld [vmem:[%s360 + $0x94] sm:$0xf]
      %v399 = vld [vmem:[%s360 + $0x98] sm:$0x1]
      %v400 = vld [vmem:[%s360 + $0x9c] sm:$0xf]
      %v401 = vld [vmem:[%s360 + $0xa0] sm:$0xf]
      %v402 = vld [vmem:[%s360 + $0xa4] sm:$0x1]
      %v403 = vld [vmem:[%s360 + $0xa8] sm:$0xf]
      %v404 = vld [vmem:[%s360 + $0xac] sm:$0xf]
      %v405 = vld [vmem:[%s360 + $0xb0] sm:$0x1]
      %v406 = vld [vmem:[%s360 + $0xb4] sm:$0xf]
      %v407 = vld [vmem:[%s360 + $0xb8] sm:$0xf]
      %v408 = vld [vmem:[%s360 + $0xbc] sm:$0x1]
      %v409 = vunpack.c.l.bf16 %v361
      %v410 = vunpack.c.l.bf16 %v362
      %v411 = vunpack.c.l.bf16 %v363
      %v412 = vunpack.c.l.bf16 %v364
      %v413 = vunpack.c.l.bf16 %v365
      %v414 = vunpack.c.l.bf16 %v366
      %v415 = vunpack.c.l.bf16 %v367
      %v416 = vunpack.c.l.bf16 %v368
      %v417 = vunpack.c.l.bf16 %v369
      %v418 = vunpack.c.l.bf16 %v370
      %v419 = vunpack.c.l.bf16 %v371
      %v420 = vunpack.c.l.bf16 %v372
      %v421 = vunpack.c.l.bf16 %v373
      %v422 = vunpack.c.l.bf16 %v374
      %v423 = vunpack.c.l.bf16 %v375
      %v424 = vunpack.c.l.bf16 %v376
      %v425 = vunpack.c.l.bf16 %v377
      %v426 = vunpack.c.l.bf16 %v378
      %v427 = vunpack.c.l.bf16 %v379
      %v428 = vunpack.c.l.bf16 %v380
      %v429 = vunpack.c.l.bf16 %v381
      %v430 = vunpack.c.l.bf16 %v382
      %v431 = vunpack.c.l.bf16 %v383
      %v432 = vunpack.c.l.bf16 %v384
      %v433 = vunpack.c.l.bf16 %v385
      %v434 = vunpack.c.l.bf16 %v386
      %v435 = vunpack.c.l.bf16 %v387
      %v436 = vunpack.c.l.bf16 %v388
      %v437 = vunpack.c.l.bf16 %v389
      %v438 = vunpack.c.l.bf16 %v390
      %v439 = vunpack.c.l.bf16 %v391
      %v440 = vunpack.c.l.bf16 %v392
      %v441 = vunpack.c.l.bf16 %v393
      %v442 = vunpack.c.l.bf16 %v394
      %v443 = vunpack.c.l.bf16 %v395
      %v444 = vunpack.c.l.bf16 %v396
      %v445 = vunpack.c.l.bf16 %v397
      %v446 = vunpack.c.l.bf16 %v398
      %v447 = vunpack.c.l.bf16 %v399
      %v448 = vunpack.c.l.bf16 %v400
      %v449 = vunpack.c.l.bf16 %v401
      %v450 = vunpack.c.l.bf16 %v402
      %v451 = vunpack.c.l.bf16 %v403
      %v452 = vunpack.c.l.bf16 %v404
      %v453 = vunpack.c.l.bf16 %v405
      %v454 = vunpack.c.l.bf16 %v406
      %v455 = vunpack.c.l.bf16 %v407
      %v456 = vunpack.c.l.bf16 %v408
      %vm505 = vcmask 1046528
      %v506 = vrot.slane %v409, 1
      %v507 = vrot.slane %v410, 1
      %v508 = vsel %vm505, %v506, %v507
      %v509 = vrot.slane %v411, 1
      %v510 = vsel %vm505, %v507, %v509
      %v511 = vrot.slane %v412, 1
      %v512 = vrot.slane %v413, 1
      %v513 = vsel %vm505, %v511, %v512
      %v514 = vrot.slane %v414, 1
      %v515 = vsel %vm505, %v512, %v514
      %v516 = vrot.slane %v415, 1
      %v517 = vrot.slane %v416, 1
      %v518 = vsel %vm505, %v516, %v517
      %v519 = vrot.slane %v417, 1
      %v520 = vsel %vm505, %v517, %v519
      %v521 = vrot.slane %v418, 1
      %v522 = vrot.slane %v419, 1
      %v523 = vsel %vm505, %v521, %v522
      %v524 = vrot.slane %v420, 1
      %v525 = vsel %vm505, %v522, %v524
      %v526 = vrot.slane %v421, 1
      %v527 = vrot.slane %v422, 1
      %v528 = vsel %vm505, %v526, %v527
      %v529 = vrot.slane %v423, 1
      %v530 = vsel %vm505, %v527, %v529
      %v531 = vrot.slane %v424, 1
      %v532 = vrot.slane %v425, 1
      %v533 = vsel %vm505, %v531, %v532
      %v534 = vrot.slane %v426, 1
      %v535 = vsel %vm505, %v532, %v534
      %v536 = vrot.slane %v427, 1
      %v537 = vrot.slane %v428, 1
      %v538 = vsel %vm505, %v536, %v537
      %v539 = vrot.slane %v429, 1
      %v540 = vsel %vm505, %v537, %v539
      %v541 = vrot.slane %v430, 1
      %v542 = vrot.slane %v431, 1
      %v543 = vsel %vm505, %v541, %v542
      %v544 = vrot.slane %v432, 1
      %v545 = vsel %vm505, %v542, %v544
      %v546 = vrot.slane %v433, 1
      %v547 = vrot.slane %v434, 1
      %v548 = vsel %vm505, %v546, %v547
      %v549 = vrot.slane %v435, 1
      %v550 = vsel %vm505, %v547, %v549
      %v551 = vrot.slane %v436, 1
      %v552 = vrot.slane %v437, 1
      %v553 = vsel %vm505, %v551, %v552
      %v554 = vrot.slane %v438, 1
      %v555 = vsel %vm505, %v552, %v554
      %v556 = vrot.slane %v439, 1
      %v557 = vrot.slane %v440, 1
      %v558 = vsel %vm505, %v556, %v557
      %v559 = vrot.slane %v441, 1
      %v560 = vsel %vm505, %v557, %v559
      %v561 = vrot.slane %v442, 1
      %v562 = vrot.slane %v443, 1
      %v563 = vsel %vm505, %v561, %v562
      %v564 = vrot.slane %v444, 1
      %v565 = vsel %vm505, %v562, %v564
      %v566 = vrot.slane %v445, 1
      %v567 = vrot.slane %v446, 1
      %v568 = vsel %vm505, %v566, %v567
      %v569 = vrot.slane %v447, 1
      %v570 = vsel %vm505, %v567, %v569
      %v571 = vrot.slane %v448, 1
      %v572 = vrot.slane %v449, 1
      %v573 = vsel %vm505, %v571, %v572
      %v574 = vrot.slane %v450, 1
      %v575 = vsel %vm505, %v572, %v574
      %v576 = vrot.slane %v451, 1
      %v577 = vrot.slane %v452, 1
      %v578 = vsel %vm505, %v576, %v577
      %v579 = vrot.slane %v453, 1
      %v580 = vsel %vm505, %v577, %v579
      %v581 = vrot.slane %v454, 1
      %v582 = vrot.slane %v455, 1
      %v583 = vsel %vm505, %v581, %v582
      %v584 = vrot.slane %v456, 1
      %v585 = vsel %vm505, %v582, %v584
      %v618 = vadd.f32 %v328, %v508
      %v619 = vadd.f32 %v329, %v510
      %v620 = vadd.f32 %v330, %v513
      %v621 = vadd.f32 %v331, %v515
      %v622 = vadd.f32 %v332, %v518
      %v623 = vadd.f32 %v333, %v520
      %v624 = vadd.f32 %v334, %v523
      %v625 = vadd.f32 %v335, %v525
      %v626 = vadd.f32 %v336, %v528
      %v627 = vadd.f32 %v337, %v530
      %v628 = vadd.f32 %v338, %v533
      %v629 = vadd.f32 %v339, %v535
      %v630 = vadd.f32 %v340, %v538
      %v631 = vadd.f32 %v341, %v540
      %v632 = vadd.f32 %v342, %v543
      %v633 = vadd.f32 %v343, %v545
      %v634 = vadd.f32 %v344, %v548
      %v635 = vadd.f32 %v345, %v550
      %v636 = vadd.f32 %v346, %v553
      %v637 = vadd.f32 %v347, %v555
      %v638 = vadd.f32 %v348, %v558
      %v639 = vadd.f32 %v349, %v560
      %v640 = vadd.f32 %v350, %v563
      %v641 = vadd.f32 %v351, %v565
      %v642 = vadd.f32 %v352, %v568
      %v643 = vadd.f32 %v353, %v570
      %v644 = vadd.f32 %v354, %v573
      %v645 = vadd.f32 %v355, %v575
      %v646 = vadd.f32 %v356, %v578
      %v647 = vadd.f32 %v357, %v580
      %v648 = vadd.f32 %v358, %v583
      %v649 = vadd.f32 %v359, %v585
      %650 = vst [vmem:[%s217] sm:$0xff] 0.0
      %651 = vst [vmem:[%s217 + $0x8] sm:$0xff] 0.0
      %652 = vst [vmem:[%s217 + $0x10] sm:$0x3] 0.0
      %653 = vst [vmem:[%s217 + $0x18] sm:$0xff] 0.0
      %654 = vst [vmem:[%s217 + $0x20] sm:$0xff] 0.0
      %655 = vst [vmem:[%s217 + $0x28] sm:$0x3] 0.0
      %656 = vst [vmem:[%s217 + $0x30] sm:$0xff] 0.0
      %657 = vst [vmem:[%s217 + $0x38] sm:$0xff] 0.0
      %658 = vst [vmem:[%s217 + $0x40] sm:$0x3] 0.0
      %659 = vst [vmem:[%s217 + $0x48] sm:$0xff] 0.0
      %660 = vst [vmem:[%s217 + $0x50] sm:$0xff] 0.0
      %661 = vst [vmem:[%s217 + $0x58] sm:$0x3] 0.0
      %662 = vst [vmem:[%s217 + $0x60] sm:$0xff] 0.0
      %663 = vst [vmem:[%s217 + $0x68] sm:$0xff] 0.0
      %664 = vst [vmem:[%s217 + $0x70] sm:$0x3] 0.0
      %665 = vst [vmem:[%s217 + $0x78] sm:$0xff] 0.0
      %666 = vst [vmem:[%s217 + $0x80] sm:$0xff] 0.0
      %667 = vst [vmem:[%s217 + $0x88] sm:$0x3] 0.0
      %668 = vst [vmem:[%s217 + $0x90] sm:$0xff] 0.0
      %669 = vst [vmem:[%s217 + $0x98] sm:$0xff] 0.0
      %670 = vst [vmem:[%s217 + $0xa0] sm:$0x3] 0.0
      %671 = vst [vmem:[%s217 + $0xa8] sm:$0xff] 0.0
      %672 = vst [vmem:[%s217 + $0xb0] sm:$0xff] 0.0
      %673 = vst [vmem:[%s217 + $0xb8] sm:$0x3] 0.0
      %674 = vst [vmem:[%s217 + $0xc0] sm:$0xff] 0.0
      %675 = vst [vmem:[%s217 + $0xc8] sm:$0xff] 0.0
      %676 = vst [vmem:[%s217 + $0xd0] sm:$0x3] 0.0
      %677 = vst [vmem:[%s217 + $0xd8] sm:$0xff] 0.0
      %678 = vst [vmem:[%s217 + $0xe0] sm:$0xff] 0.0
      %679 = vst [vmem:[%s217 + $0xe8] sm:$0x3] 0.0
      %680 = vst [vmem:[%s217 + $0xf0] sm:$0xff] 0.0
      %681 = vst [vmem:[%s217 + $0xf8] sm:$0xff] 0.0
      %682 = vst [vmem:[%s217 + $0x100] sm:$0x3] 0.0
      %683 = vst [vmem:[%s217 + $0x108] sm:$0xff] 0.0
      %684 = vst [vmem:[%s217 + $0x110] sm:$0xff] 0.0
      %685 = vst [vmem:[%s217 + $0x118] sm:$0x3] 0.0
      %686 = vst [vmem:[%s217 + $0x120] sm:$0xff] 0.0
      %687 = vst [vmem:[%s217 + $0x128] sm:$0xff] 0.0
      %688 = vst [vmem:[%s217 + $0x130] sm:$0x3] 0.0
      %689 = vst [vmem:[%s217 + $0x138] sm:$0xff] 0.0
      %690 = vst [vmem:[%s217 + $0x140] sm:$0xff] 0.0
      %691 = vst [vmem:[%s217 + $0x148] sm:$0x3] 0.0
      %692 = vst [vmem:[%s217 + $0x150] sm:$0xff] 0.0
      %693 = vst [vmem:[%s217 + $0x158] sm:$0xff] 0.0
      %694 = vst [vmem:[%s217 + $0x160] sm:$0x3] 0.0
      %695 = vst [vmem:[%s217 + $0x168] sm:$0xff] 0.0
      %696 = vst [vmem:[%s217 + $0x170] sm:$0xff] 0.0
      %697 = vst [vmem:[%s217 + $0x178] sm:$0x3] 0.0
      %698 = vst [vmem:[%s217 + $0x180] sm:$0xff] 0.0
      %699 = vst [vmem:[%s217 + $0x188] sm:$0xff] 0.0
      %700 = vst [vmem:[%s217 + $0x190] sm:$0x3] 0.0
      %701 = vst [vmem:[%s217 + $0x198] sm:$0xff] 0.0
      %702 = vst [vmem:[%s217 + $0x1a0] sm:$0xff] 0.0
      %703 = vst [vmem:[%s217 + $0x1a8] sm:$0x3] 0.0
      %s704 = scalar_lea.vmem %s217, 24
      %705 = vst [vmem:[%s704 + $0x1] sm:$0xff] %v618
      %706 = vst [vmem:[%s704 + $0x9] sm:$0xff] %v619
      %707 = vst [vmem:[%s704 + $0x19] sm:$0xff] %v620
      %708 = vst [vmem:[%s704 + $0x21] sm:$0xff] %v621
      %709 = vst [vmem:[%s704 + $0x31] sm:$0xff] %v622
      %710 = vst [vmem:[%s704 + $0x39] sm:$0xff] %v623
      %711 = vst [vmem:[%s704 + $0x49] sm:$0xff] %v624
      %712 = vst [vmem:[%s704 + $0x51] sm:$0xff] %v625
      %713 = vst [vmem:[%s704 + $0x61] sm:$0xff] %v626
      %714 = vst [vmem:[%s704 + $0x69] sm:$0xff] %v627
      %715 = vst [vmem:[%s704 + $0x79] sm:$0xff] %v628
      %716 = vst [vmem:[%s704 + $0x81] sm:$0xff] %v629
      %717 = vst [vmem:[%s704 + $0x91] sm:$0xff] %v630
      %718 = vst [vmem:[%s704 + $0x99] sm:$0xff] %v631
      %719 = vst [vmem:[%s704 + $0xa9] sm:$0xff] %v632
      %720 = vst [vmem:[%s704 + $0xb1] sm:$0xff] %v633
      %721 = vst [vmem:[%s704 + $0xc1] sm:$0xff] %v634
      %722 = vst [vmem:[%s704 + $0xc9] sm:$0xff] %v635
      %723 = vst [vmem:[%s704 + $0xd9] sm:$0xff] %v636
      %724 = vst [vmem:[%s704 + $0xe1] sm:$0xff] %v637
      %725 = vst [vmem:[%s704 + $0xf1] sm:$0xff] %v638
      %726 = vst [vmem:[%s704 + $0xf9] sm:$0xff] %v639
      %727 = vst [vmem:[%s704 + $0x109] sm:$0xff] %v640
      %728 = vst [vmem:[%s704 + $0x111] sm:$0xff] %v641
      %729 = vst [vmem:[%s704 + $0x121] sm:$0xff] %v642
      %730 = vst [vmem:[%s704 + $0x129] sm:$0xff] %v643
      %731 = vst [vmem:[%s704 + $0x139] sm:$0xff] %v644
      %732 = vst [vmem:[%s704 + $0x141] sm:$0xff] %v645
      %733 = vst [vmem:[%s704 + $0x151] sm:$0xff] %v646
      %734 = vst [vmem:[%s704 + $0x159] sm:$0xff] %v647
      %735 = vst [vmem:[%s704 + $0x169] sm:$0xff] %v648
      %736 = vst [vmem:[%s704 + $0x171] sm:$0xff] %v649
      %p737 = scmp.lt.s32.totalorder %s15, 1
      %s738 = scalar_select %p737, %s15, 1
      %s739 = smul.addr %s738, 54
      %s740 = smul.addr %s739, 8
      %s741 = scalar_lea.vmem %s4, %s740
      // Predicated region
      $region37: #{resnet_encoder_forward.19} parent=35 // pred_check
        %p742 = pneg %p127
      $region38: #{resnet_encoder_forward.19} parent=35 // pred_check_branch
        %744 = sbr.rel (%p742) target = $region40
      $region39: #{resnet_encoder_forward.19} parent=35 // pred_region
        _
      $region40: #{resnet_encoder_forward.19} parent=35 // pred_fallthru
        _
    $region36: #{resnet_encoder_forward.19} parent=5 // pred_fallthru
      _
    %p745 = scmp.le.s32.totalorder 2, %s10
    // Predicated region
    $region41: #{resnet_encoder_forward.19} parent=5 // pred_check
      %p746 = pneg %p745
    $region42: #{resnet_encoder_forward.19} parent=5 // pred_check_branch
      %748 = sbr.rel (%p746) target = $region44
    $region43: #{resnet_encoder_forward.19} parent=5 // pred_region
      %s749 = ssub.s32 %s10, 2
      // Predicated region
      $region45: #{resnet_encoder_forward.19} parent=43 // pred_check
        %p750 = pneg %p133
      $region46: #{resnet_encoder_forward.19} parent=43 // pred_check_branch
        %752 = sbr.rel (%p750) target = $region48
      $region47: #{resnet_encoder_forward.19} parent=43 // pred_region
        %p753 = scmp.lt.s32.totalorder %s16, 1
        %s754 = scalar_select %p753, %s16, 1
        %s755 = smul.addr %s754, 54
        %s756 = smul.addr %s755, 8
        %s757 = scalar_lea.vmem %s4, %s756
      $region48: #{resnet_encoder_forward.19} parent=43 // pred_fallthru
        _
    $region44: #{resnet_encoder_forward.19} parent=5 // pred_fallthru
      _
  $region6: #{resnet_encoder_forward.19} parent=0 // loop_footer
    %s14 = sadd.s32 1, %s10
  $region7: #{resnet_encoder_forward.19} parent=0 // loop_footer_branch
    %9 = sbr.rel target = $region3
  $region8: #{resnet_encoder_forward.19} parent=0 // loop_exit
    _

// kernel: resnet_encoder_forward.11
$region0: #{resnet_encoder_forward.11}
  #allocation0 [shape = 'u32[]', space=smem, size = 0x4, offset = 0x4, fixed_abs, tag = 'smem constant byte address 0x4 - core index']
  #allocation1 [shape = 'u32[144,128]{1,0:T(1,128)}', space=vmem, size = 0x12000, scoped, tag = 'internal scratch']
  %s0 = inlined_call_operand.vmem [shape: bf16[2,16,16,128], index: 0, kind: input, shape index: {}]
  %s1 = inlined_call_operand.vmem [shape: f32[1,128], index: 1, kind: input, shape index: {}]
  %s2 = inlined_call_operand.vmem [shape: f32[1,128], index: 2, kind: input, shape index: {}]
  %s3 = inlined_call_operand.vmem [shape: bf16[2,18,18,128], index: 3, kind: output, shape index: {}]
  %s4 = sld [smem:[#allocation0]]
  $region45: #{resnet_encoder_forward.11} parent=0
    _
  %s6 = ssub.s32 1, %s4
  %s7 = scalar_select 0, %s6, %s4
  loop: start=0, step=1, limit=4
  $region2: #{resnet_encoder_forward.11} parent=0 // loop_pre_header
    _
  $region3: #{resnet_encoder_forward.11} parent=0 // loop_header
    %s9 = sphi 0, %s13
    %p10 = scmp.ge.s32.totalorder %s9, 4
    %s19 = sphi 0, %s21
    %s22 = sphi 0, %s19
    %s23 = sphi 0, %s22
    %s39 = sphi 0, %s23
    %s43 = sphi 0, %s43
    %s45 = sphi 0, %s43
    %s46 = sphi 0, %s45
    %s60 = sphi 0, %s46
    %s64 = sphi 0, %s64
    %s66 = sphi 0, %s64
    %s67 = sphi 0, %s66
    %s81 = sphi 0, %s67
    %s87 = sphi 0, %s89
    %s90 = sphi 0, %s87
    %s91 = sphi 0, %s90
    %s107 = sphi 0, %s91
  $region4: #{resnet_encoder_forward.11} parent=0 // loop_header_branch
    %12 = sbr.rel (%p10) target = $region8
  $region5: #{resnet_encoder_forward.11} parent=0 // loop_body
    %s14 = ssub.s32 %s9, 1
    %s15 = ssub.s32 %s9, 2
    %s16 = sadd.s32 %s9, 1
    %s17 = ssub.s32 %s9, %s16
    %p18 = scmp.eq.s32.totalorder %s17, 0
    %s20 = sadd.s32 %s19, 1
    %s21 = scalar_select %p18, %s19, %s20
    %p24 = pneg %p18
    %p25 = scmp.eq.s32.totalorder %s9, 1
    %p26 = por %p24, %p25
    %p27 = scmp.ne.s32.totalorder %s19, %s22
    %p28 = scmp.eq.s32.totalorder %s9, 0
    %p29 = por %p27, %p28
    %p30 = scmp.ne.s32.totalorder %s19, %s22
    %p31 = scmp.eq.s32.totalorder %s14, 1
    %p32 = por %p30, %p31
    %p33 = scmp.ne.s32.totalorder %s22, %s23
    %p34 = scmp.eq.s32.totalorder %s14, 0
    %p35 = por %p33, %p34
    %p36 = scmp.ne.s32.totalorder %s22, %s23
    %p37 = scmp.eq.s32.totalorder %s15, 1
    %p38 = por %p36, %p37
    %p40 = scmp.ne.s32.totalorder %s23, %s39
    %p41 = scmp.eq.s32.totalorder %s15, 0
    %p42 = por %p40, %p41
    %s44 = sadd.s32 %s43, 1
    %p47 = scmp.eq.s32.totalorder %s9, 1
    %p48 = scmp.ne.s32.totalorder %s43, %s45
    %p49 = scmp.eq.s32.totalorder %s9, 0
    %p50 = por %p48, %p49
    %p51 = scmp.ne.s32.totalorder %s43, %s45
    %p52 = scmp.eq.s32.totalorder %s14, 1
    %p53 = por %p51, %p52
    %p54 = scmp.ne.s32.totalorder %s45, %s46
    %p55 = scmp.eq.s32.totalorder %s14, 0
    %p56 = por %p54, %p55
    %p57 = scmp.ne.s32.totalorder %s45, %s46
    %p58 = scmp.eq.s32.totalorder %s15, 1
    %p59 = por %p57, %p58
    %p61 = scmp.ne.s32.totalorder %s46, %s60
    %p62 = scmp.eq.s32.totalorder %s15, 0
    %p63 = por %p61, %p62
    %s65 = sadd.s32 %s64, 1
    %p68 = scmp.eq.s32.totalorder %s9, 1
    %p69 = scmp.ne.s32.totalorder %s64, %s66
    %p70 = scmp.eq.s32.totalorder %s9, 0
    %p71 = por %p69, %p70
    %p72 = scmp.ne.s32.totalorder %s64, %s66
    %p73 = scmp.eq.s32.totalorder %s14, 1
    %p74 = por %p72, %p73
    %p75 = scmp.ne.s32.totalorder %s66, %s67
    %p76 = scmp.eq.s32.totalorder %s14, 0
    %p77 = por %p75, %p76
    %p78 = scmp.ne.s32.totalorder %s66, %s67
    %p79 = scmp.eq.s32.totalorder %s15, 1
    %p80 = por %p78, %p79
    %p82 = scmp.ne.s32.totalorder %s67, %s81
    %p83 = scmp.eq.s32.totalorder %s15, 0
    %p84 = por %p82, %p83
    %s85 = ssub.s32 %s9, %s16
    %p86 = scmp.eq.s32.totalorder %s85, 0
    %s88 = sadd.s32 %s87, 1
    %s89 = scalar_select %p86, %s87, %s88
    %p92 = pneg %p86
    %p93 = scmp.eq.s32.totalorder %s9, 1
    %p94 = por %p92, %p93
    %p95 = scmp.ne.s32.totalorder %s87, %s90
    %p96 = scmp.eq.s32.totalorder %s9, 0
    %p97 = por %p95, %p96
    %p98 = scmp.ne.s32.totalorder %s87, %s90
    %p99 = scmp.eq.s32.totalorder %s14, 1
    %p100 = por %p98, %p99
    %p101 = scmp.ne.s32.totalorder %s90, %s91
    %p102 = scmp.eq.s32.totalorder %s14, 0
    %p103 = por %p101, %p102
    %p104 = scmp.ne.s32.totalorder %s90, %s91
    %p105 = scmp.eq.s32.totalorder %s15, 1
    %p106 = por %p104, %p105
    %p108 = scmp.ne.s32.totalorder %s91, %s107
    %p109 = scmp.eq.s32.totalorder %s15, 0
    %p110 = por %p108, %p109
    %p111 = scmp.le.s32.totalorder 1, %s9
    %p112 = scmp.lt.s32.totalorder %s9, 3
    %p113 = pnand %p111, %p112
    %p114 = pneg %p113
    // Predicated region
    $region9: #{resnet_encoder_forward.11} parent=5 // pred_check
      _
    $region10: #{resnet_encoder_forward.11} parent=5 // pred_check_branch
      %116 = sbr.rel (%p113) target = $region12
    $region11: #{resnet_encoder_forward.11} parent=5 // pred_region
      %s117 = ssub.s32 %s9, 1
      // Predicated region
      $region13: #{resnet_encoder_forward.11} parent=11 // pred_check
        %p118 = pneg %p56
      $region14: #{resnet_encoder_forward.11} parent=11 // pred_check_branch
        %120 = sbr.rel (%p118) target = $region16
      $region15: #{resnet_encoder_forward.11} parent=11 // pred_region
        _
      $region16: #{resnet_encoder_forward.11} parent=11 // pred_fallthru
        _
      // Predicated region
      $region17: #{resnet_encoder_forward.11} parent=11 // pred_check
        %p121 = pneg %p77
      $region18: #{resnet_encoder_forward.11} parent=11 // pred_check_branch
        %123 = sbr.rel (%p121) target = $region20
      $region19: #{resnet_encoder_forward.11} parent=11 // pred_region
        _
      $region20: #{resnet_encoder_forward.11} parent=11 // pred_fallthru
        _
    $region12: #{resnet_encoder_forward.11} parent=5 // pred_fallthru
      _
    %p124 = scmp.lt.s32.totalorder %s9, 2
    // Predicated region
    $region21: #{resnet_encoder_forward.11} parent=5 // pred_check
      %p125 = pneg %p124
    $region22: #{resnet_encoder_forward.11} parent=5 // pred_check_branch
      %127 = sbr.rel (%p125) target = $region24
    $region23: #{resnet_encoder_forward.11} parent=5 // pred_region
      // Predicated region
      $region25: #{resnet_encoder_forward.11} parent=23 // pred_check
        %p128 = pneg %p29
      $region26: #{resnet_encoder_forward.11} parent=23 // pred_check_branch
        %130 = sbr.rel (%p128) target = $region28
      $region27: #{resnet_encoder_forward.11} parent=23 // pred_region
        %p131 = scmp.lt.s32.totalorder %s9, 1
        %s132 = scalar_select %p131, %s9, 1
        %s133 = smul.addr %s132, 32
        %s134 = smul.addr %s133, 4
        %s135 = scalar_lea.vmem %s0, %s134
      $region28: #{resnet_encoder_forward.11} parent=23 // pred_fallthru
        _
    $region24: #{resnet_encoder_forward.11} parent=5 // pred_fallthru
      _
    %p136 = scmp.le.s32.totalorder 1, %s9
    %p137 = scmp.lt.s32.totalorder %s9, 3
    %p138 = pnand %p136, %p137
    %p139 = pneg %p138
    // Predicated region
    $region29: #{resnet_encoder_forward.11} parent=5 // pred_check
      _
    $region30: #{resnet_encoder_forward.11} parent=5 // pred_check_branch
      %141 = sbr.rel (%p138) target = $region32
    $region31: #{resnet_encoder_forward.11} parent=5 // pred_region
      %s142 = ssub.s32 %s9, 1
      %p143 = scmp.lt.s32.totalorder %s14, 1
      %s144 = scalar_select %p143, %s14, 1
      %s145 = smul.addr %s144, 32
      %s146 = smul.addr %s145, 4
      %s147 = scalar_lea.vmem %s0, %s146
      %p148 = pneg %p35
      %p149 = pneg %p32
      %p150 = pneg %p56
      %p151 = pneg %p53
      %p152 = pneg %p77
      %p153 = pneg %p74
      %p154 = pneg %p103
      %p155 = pneg %p100
      %p156 = scmp.lt.s32.totalorder %s14, 1
      %s157 = scalar_select %p156, %s14, 1
      %s158 = smul.addr %s157, 54
      %s159 = smul.addr %s158, 4
      %s160 = scalar_lea.vmem %s3, %s159
      %p161 = scmp.lt.s32.totalorder %s14, 1
      %s162 = scalar_select %p161, %s14, 1
      %s163 = smul.addr %s162, 32
      %s164 = smul.addr %s163, 4
      %s165 = scalar_lea.vmem %s0, %s164
      %p166 = scmp.lt.s32.totalorder %s14, 1
      %s167 = scalar_select %p166, %s14, 1
      %s168 = smul.addr %s167, 54
      %s169 = smul.addr %s168, 4
      %s170 = scalar_lea.vmem %s3, %s169
      %v172 = vld [vmem:[%s1] sm:$0x1]
      %v173 = vld [vmem:[%s2] sm:$0x1]
      %v174 = vld [vmem:[%s165] sm:$0xf]
      %v175 = vld [vmem:[%s165 + $0x4] sm:$0xf]
      %v176 = vld [vmem:[%s165 + $0x8] sm:$0xf]
      %v177 = vld [vmem:[%s165 + $0xc] sm:$0xf]
      %v178 = vld [vmem:[%s165 + $0x10] sm:$0xf]
      %v179 = vld [vmem:[%s165 + $0x14] sm:$0xf]
      %v180 = vld [vmem:[%s165 + $0x18] sm:$0xf]
      %v181 = vld [vmem:[%s165 + $0x1c] sm:$0xf]
      %v182 = vld [vmem:[%s165 + $0x20] sm:$0xf]
      %v183 = vld [vmem:[%s165 + $0x24] sm:$0xf]
      %v184 = vld [vmem:[%s165 + $0x28] sm:$0xf]
      %v185 = vld [vmem:[%s165 + $0x2c] sm:$0xf]
      %v186 = vld [vmem:[%s165 + $0x30] sm:$0xf]
      %v187 = vld [vmem:[%s165 + $0x34] sm:$0xf]
      %v188 = vld [vmem:[%s165 + $0x38] sm:$0xf]
      %v189 = vld [vmem:[%s165 + $0x3c] sm:$0xf]
      %v190 = vld [vmem:[%s165 + $0x40] sm:$0xf]
      %v191 = vld [vmem:[%s165 + $0x44] sm:$0xf]
      %v192 = vld [vmem:[%s165 + $0x48] sm:$0xf]
      %v193 = vld [vmem:[%s165 + $0x4c] sm:$0xf]
      %v194 = vld [vmem:[%s165 + $0x50] sm:$0xf]
      %v195 = vld [vmem:[%s165 + $0x54] sm:$0xf]
      %v196 = vld [vmem:[%s165 + $0x58] sm:$0xf]
      %v197 = vld [vmem:[%s165 + $0x5c] sm:$0xf]
      %v198 = vld [vmem:[%s165 + $0x60] sm:$0xf]
      %v199 = vld [vmem:[%s165 + $0x64] sm:$0xf]
      %v200 = vld [vmem:[%s165 + $0x68] sm:$0xf]
      %v201 = vld [vmem:[%s165 + $0x6c] sm:$0xf]
      %v202 = vld [vmem:[%s165 + $0x70] sm:$0xf]
      %v203 = vld [vmem:[%s165 + $0x74] sm:$0xf]
      %v204 = vld [vmem:[%s165 + $0x78] sm:$0xf]
      %v205 = vld [vmem:[%s165 + $0x7c] sm:$0xf]
      %v206 = vunpack.c.l.bf16 %v174
      %v207 = vunpack.c.l.bf16 %v175
      %v208 = vunpack.c.l.bf16 %v176
      %v209 = vunpack.c.l.bf16 %v177
      %v210 = vunpack.c.l.bf16 %v178
      %v211 = vunpack.c.l.bf16 %v179
      %v212 = vunpack.c.l.bf16 %v180
      %v213 = vunpack.c.l.bf16 %v181
      %v214 = vunpack.c.l.bf16 %v182
      %v215 = vunpack.c.l.bf16 %v183
      %v216 = vunpack.c.l.bf16 %v184
      %v217 = vunpack.c.l.bf16 %v185
      %v218 = vunpack.c.l.bf16 %v186
      %v219 = vunpack.c.l.bf16 %v187
      %v220 = vunpack.c.l.bf16 %v188
      %v221 = vunpack.c.l.bf16 %v189
      %v222 = vunpack.c.l.bf16 %v190
      %v223 = vunpack.c.l.bf16 %v191
      %v224 = vunpack.c.l.bf16 %v192
      %v225 = vunpack.c.l.bf16 %v193
      %v226 = vunpack.c.l.bf16 %v194
      %v227 = vunpack.c.l.bf16 %v195
      %v228 = vunpack.c.l.bf16 %v196
      %v229 = vunpack.c.l.bf16 %v197
      %v230 = vunpack.c.l.bf16 %v198
      %v231 = vunpack.c.l.bf16 %v199
      %v232 = vunpack.c.l.bf16 %v200
      %v233 = vunpack.c.l.bf16 %v201
      %v234 = vunpack.c.l.bf16 %v202
      %v235 = vunpack.c.l.bf16 %v203
      %v236 = vunpack.c.l.bf16 %v204
      %v237 = vunpack.c.l.bf16 %v205
      %v239 = vlaneseq
      %v240 = vshrl.u32 %v239, 7
      %v241 = vsub.s32 0, %v240
      %v242 = vrot.slane %v172, %v241
      %v244 = vmul.f32 %v206, %v242
      %v245 = vmul.f32 %v207, %v242
      %v246 = vmul.f32 %v208, %v242
      %v247 = vmul.f32 %v209, %v242
      %v248 = vmul.f32 %v210, %v242
      %v249 = vmul.f32 %v211, %v242
      %v250 = vmul.f32 %v212, %v242
      %v251 = vmul.f32 %v213, %v242
      %v252 = vmul.f32 %v214, %v242
      %v253 = vmul.f32 %v215, %v242
      %v254 = vmul.f32 %v216, %v242
      %v255 = vmul.f32 %v217, %v242
      %v256 = vmul.f32 %v218, %v242
      %v257 = vmul.f32 %v219, %v242
      %v258 = vmul.f32 %v220, %v242
      %v259 = vmul.f32 %v221, %v242
      %v260 = vmul.f32 %v222, %v242
      %v261 = vmul.f32 %v223, %v242
      %v262 = vmul.f32 %v224, %v242
      %v263 = vmul.f32 %v225, %v242
      %v264 = vmul.f32 %v226, %v242
      %v265 = vmul.f32 %v227, %v242
      %v266 = vmul.f32 %v228, %v242
      %v267 = vmul.f32 %v229, %v242
      %v268 = vmul.f32 %v230, %v242
      %v269 = vmul.f32 %v231, %v242
      %v270 = vmul.f32 %v232, %v242
      %v271 = vmul.f32 %v233, %v242
      %v272 = vmul.f32 %v234, %v242
      %v273 = vmul.f32 %v235, %v242
      %v274 = vmul.f32 %v236, %v242
      %v275 = vmul.f32 %v237, %v242
      %v277 = vlaneseq
      %v278 = vshrl.u32 %v277, 7
      %v279 = vsub.s32 0, %v278
      %v280 = vrot.slane %v173, %v279
      %v282 = vadd.f32 %v244, %v280
      %v283 = vadd.f32 %v245, %v280
      %v284 = vadd.f32 %v246, %v280
      %v285 = vadd.f32 %v247, %v280
      %v286 = vadd.f32 %v248, %v280
      %v287 = vadd.f32 %v249, %v280
      %v288 = vadd.f32 %v250, %v280
      %v289 = vadd.f32 %v251, %v280
      %v290 = vadd.f32 %v252, %v280
      %v291 = vadd.f32 %v253, %v280
      %v292 = vadd.f32 %v254, %v280
      %v293 = vadd.f32 %v255, %v280
      %v294 = vadd.f32 %v256, %v280
      %v295 = vadd.f32 %v257, %v280
      %v296 = vadd.f32 %v258, %v280
      %v297 = vadd.f32 %v259, %v280
      %v298 = vadd.f32 %v260, %v280
      %v299 = vadd.f32 %v261, %v280
      %v300 = vadd.f32 %v262, %v280
      %v301 = vadd.f32 %v263, %v280
      %v302 = vadd.f32 %v264, %v280
      %v303 = vadd.f32 %v265, %v280
      %v304 = vadd.f32 %v266, %v280
      %v305 = vadd.f32 %v267, %v280
      %v306 = vadd.f32 %v268, %v280
      %v307 = vadd.f32 %v269, %v280
      %v308 = vadd.f32 %v270, %v280
      %v309 = vadd.f32 %v271, %v280
      %v310 = vadd.f32 %v272, %v280
      %v311 = vadd.f32 %v273, %v280
      %v312 = vadd.f32 %v274, %v280
      %v313 = vadd.f32 %v275, %v280
      %v314 = vmax.f32 %v282, 0.0
      %v315 = vmax.f32 %v283, 0.0
      %v316 = vmax.f32 %v284, 0.0
      %v317 = vmax.f32 %v285, 0.0
      %v318 = vmax.f32 %v286, 0.0
      %v319 = vmax.f32 %v287, 0.0
      %v320 = vmax.f32 %v288, 0.0
      %v321 = vmax.f32 %v289, 0.0
      %v322 = vmax.f32 %v290, 0.0
      %v323 = vmax.f32 %v291, 0.0
      %v324 = vmax.f32 %v292, 0.0
      %v325 = vmax.f32 %v293, 0.0
      %v326 = vmax.f32 %v294, 0.0
      %v327 = vmax.f32 %v295, 0.0
      %v328 = vmax.f32 %v296, 0.0
      %v329 = vmax.f32 %v297, 0.0
      %v330 = vmax.f32 %v298, 0.0
      %v331 = vmax.f32 %v299, 0.0
      %v332 = vmax.f32 %v300, 0.0
      %v333 = vmax.f32 %v301, 0.0
      %v334 = vmax.f32 %v302, 0.0
      %v335 = vmax.f32 %v303, 0.0
      %v336 = vmax.f32 %v304, 0.0
      %v337 = vmax.f32 %v305, 0.0
      %v338 = vmax.f32 %v306, 0.0
      %v339 = vmax.f32 %v307, 0.0
      %v340 = vmax.f32 %v308, 0.0
      %v341 = vmax.f32 %v309, 0.0
      %v342 = vmax.f32 %v310, 0.0
      %v343 = vmax.f32 %v311, 0.0
      %v344 = vmax.f32 %v312, 0.0
      %v345 = vmax.f32 %v313, 0.0
      %346 = vst [vmem:[%s170] sm:$0xf] 0
      %347 = vst [vmem:[%s170 + $0x4] sm:$0xf] 0
      %348 = vst [vmem:[%s170 + $0x8] sm:$0x1] 0
      %349 = vst [vmem:[%s170 + $0xc] sm:$0xf] 0
      %350 = vst [vmem:[%s170 + $0x10] sm:$0xf] 0
      %351 = vst [vmem:[%s170 + $0x14] sm:$0x1] 0
      %352 = vst [vmem:[%s170 + $0x18] sm:$0xf] 0
      %353 = vst [vmem:[%s170 + $0x1c] sm:$0xf] 0
      %354 = vst [vmem:[%s170 + $0x20] sm:$0x1] 0
      %355 = vst [vmem:[%s170 + $0x24] sm:$0xf] 0
      %356 = vst [vmem:[%s170 + $0x28] sm:$0xf] 0
      %357 = vst [vmem:[%s170 + $0x2c] sm:$0x1] 0
      %358 = vst [vmem:[%s170 + $0x30] sm:$0xf] 0
      %359 = vst [vmem:[%s170 + $0x34] sm:$0xf] 0
      %360 = vst [vmem:[%s170 + $0x38] sm:$0x1] 0
      %361 = vst [vmem:[%s170 + $0x3c] sm:$0xf] 0
      %362 = vst [vmem:[%s170 + $0x40] sm:$0xf] 0
      %363 = vst [vmem:[%s170 + $0x44] sm:$0x1] 0
      %364 = vst [vmem:[%s170 + $0x48] sm:$0xf] 0
      %365 = vst [vmem:[%s170 + $0x4c] sm:$0xf] 0
      %366 = vst [vmem:[%s170 + $0x50] sm:$0x1] 0
      %367 = vst [vmem:[%s170 + $0x54] sm:$0xf] 0
      %368 = vst [vmem:[%s170 + $0x58] sm:$0xf] 0
      %369 = vst [vmem:[%s170 + $0x5c] sm:$0x1] 0
      %370 = vst [vmem:[%s170 + $0x60] sm:$0xf] 0
      %371 = vst [vmem:[%s170 + $0x64] sm:$0xf] 0
      %372 = vst [vmem:[%s170 + $0x68] sm:$0x1] 0
      %373 = vst [vmem:[%s170 + $0x6c] sm:$0xf] 0
      %374 = vst [vmem:[%s170 + $0x70] sm:$0xf] 0
      %375 = vst [vmem:[%s170 + $0x74] sm:$0x1] 0
      %376 = vst [vmem:[%s170 + $0x78] sm:$0xf] 0
      %377 = vst [vmem:[%s170 + $0x7c] sm:$0xf] 0
      %378 = vst [vmem:[%s170 + $0x80] sm:$0x1] 0
      %379 = vst [vmem:[%s170 + $0x84] sm:$0xf] 0
      %380 = vst [vmem:[%s170 + $0x88] sm:$0xf] 0
      %381 = vst [vmem:[%s170 + $0x8c] sm:$0x1] 0
      %382 = vst [vmem:[%s170 + $0x90] sm:$0xf] 0
      %383 = vst [vmem:[%s170 + $0x94] sm:$0xf] 0
      %384 = vst [vmem:[%s170 + $0x98] sm:$0x1] 0
      %385 = vst [vmem:[%s170 + $0x9c] sm:$0xf] 0
      %386 = vst [vmem:[%s170 + $0xa0] sm:$0xf] 0
      %387 = vst [vmem:[%s170 + $0xa4] sm:$0x1] 0
      %388 = vst [vmem:[%s170 + $0xa8] sm:$0xf] 0
      %389 = vst [vmem:[%s170 + $0xac] sm:$0xf] 0
      %390 = vst [vmem:[%s170 + $0xb0] sm:$0x1] 0
      %391 = vst [vmem:[%s170 + $0xb4] sm:$0xf] 0
      %392 = vst [vmem:[%s170 + $0xb8] sm:$0xf] 0
      %393 = vst [vmem:[%s170 + $0xbc] sm:$0x1] 0
      %394 = vst [vmem:[%s170 + $0xc0] sm:$0xf] 0
      %395 = vst [vmem:[%s170 + $0xc4] sm:$0xf] 0
      %396 = vst [vmem:[%s170 + $0xc8] sm:$0x1] 0
      %397 = vst [vmem:[%s170 + $0xcc] sm:$0xf] 0
      %398 = vst [vmem:[%s170 + $0xd0] sm:$0xf] 0
      %399 = vst [vmem:[%s170 + $0xd4] sm:$0x1] 0
      %v400 = vpack.c.bf16 %v315, %v314
      %v401 = vpack.c.bf16 %v317, %v316
      %v402 = vpack.c.bf16 %v319, %v318
      %v403 = vpack.c.bf16 %v321, %v320
      %v404 = vpack.c.bf16 %v323, %v322
      %v405 = vpack.c.bf16 %v325, %v324
      %v406 = vpack.c.bf16 %v327, %v326
      %v407 = vpack.c.bf16 %v329, %v328
      %v408 = vpack.c.bf16 %v331, %v330
      %v409 = vpack.c.bf16 %v333, %v332
      %v410 = vpack.c.bf16 %v335, %v334
      %v411 = vpack.c.bf16 %v337, %v336
      %v412 = vpack.c.bf16 %v339, %v338
      %v413 = vpack.c.bf16 %v341, %v340
      %v414 = vpack.c.bf16 %v343, %v342
      %v415 = vpack.c.bf16 %v345, %v344
      %v432 = vunpack.c.l.b16 %v400
      %v433 = vunpack.c.h.b16 %v400
      %v434 = vunpack.c.l.b16 %v401
      %v435 = vunpack.c.h.b16 %v401
      %v436 = vunpack.c.l.b16 %v402
      %v437 = vunpack.c.h.b16 %v402
      %v438 = vunpack.c.l.b16 %v403
      %v439 = vunpack.c.h.b16 %v403
      %v440 = vunpack.c.l.b16 %v404
      %v441 = vunpack.c.h.b16 %v404
      %v442 = vunpack.c.l.b16 %v405
      %v443 = vunpack.c.h.b16 %v405
      %v444 = vunpack.c.l.b16 %v406
      %v445 = vunpack.c.h.b16 %v406
      %v446 = vunpack.c.l.b16 %v407
      %v447 = vunpack.c.h.b16 %v407
      %v448 = vunpack.c.l.b16 %v408
      %v449 = vunpack.c.h.b16 %v408
      %v450 = vunpack.c.l.b16 %v409
      %v451 = vunpack.c.h.b16 %v409
      %v452 = vunpack.c.l.b16 %v410
      %v453 = vunpack.c.h.b16 %v410
      %v454 = vunpack.c.l.b16 %v411
      %v455 = vunpack.c.h.b16 %v411
      %v456 = vunpack.c.l.b16 %v412
      %v457 = vunpack.c.h.b16 %v412
      %v458 = vunpack.c.l.b16 %v413
      %v459 = vunpack.c.h.b16 %v413
      %v460 = vunpack.c.l.b16 %v414
      %v461 = vunpack.c.h.b16 %v414
      %v462 = vunpack.c.l.b16 %v415
      %v463 = vunpack.c.h.b16 %v415
      %v464 = vpack.c.b16 %v432, %v432
      %v465 = vpack.c.b16 %v433, %v433
      %v466 = vpack.c.b16 %v434, %v434
      %v467 = vpack.c.b16 %v435, %v435
      %v468 = vpack.c.b16 %v436, %v436
      %v469 = vpack.c.b16 %v437, %v437
      %v470 = vpack.c.b16 %v438, %v438
      %v471 = vpack.c.b16 %v439, %v439
      %v472 = vpack.c.b16 %v440, %v440
      %v473 = vpack.c.b16 %v441, %v441
      %v474 = vpack.c.b16 %v442, %v442
      %v475 = vpack.c.b16 %v443, %v443
      %v476 = vpack.c.b16 %v444, %v444
      %v477 = vpack.c.b16 %v445, %v445
      %v478 = vpack.c.b16 %v446, %v446
      %v479 = vpack.c.b16 %v447, %v447
      %v480 = vpack.c.b16 %v448, %v448
      %v481 = vpack.c.b16 %v449, %v449
      %v482 = vpack.c.b16 %v450, %v450
      %v483 = vpack.c.b16 %v451, %v451
      %v484 = vpack.c.b16 %v452, %v452
      %v485 = vpack.c.b16 %v453, %v453
      %v486 = vpack.c.b16 %v454, %v454
      %v487 = vpack.c.b16 %v455, %v455
      %v488 = vpack.c.b16 %v456, %v456
      %v489 = vpack.c.b16 %v457, %v457
      %v490 = vpack.c.b16 %v458, %v458
      %v491 = vpack.c.b16 %v459, %v459
      %v492 = vpack.c.b16 %v460, %v460
      %v493 = vpack.c.b16 %v461, %v461
      %v494 = vpack.c.b16 %v462, %v462
      %v495 = vpack.c.b16 %v463, %v463
      %vm496 = vsmask.f32 256
      %vm497 = vsmask.f32 4368
      %vm498 = vmor %vm496, %vm497
      %v500 = vshrl.u32 %v464, 16
      %v502 = vrot.slane %v500, 7
      %v503 = vshll.u32 %v464, 16
      %v505 = vor.u32 %v502, %v503
      %v506 = vrot.slane %v502, 4
      %v508 = vshrl.u32 %v465, 16
      %v510 = vrot.slane %v508, 7
      %v511 = vshll.u32 %v465, 16
      %v513 = vor.u32 %v510, %v511
      %v514 = vsel %vm498, %v506, %v513
      %v515 = vrot.slane %v510, 4
      %v517 = vshrl.u32 %v466, 16
      %v519 = vrot.slane %v517, 7
      %v520 = vshll.u32 %v466, 16
      %v522 = vor.u32 %v519, %v520
      %v523 = vrot.slane %v519, 4
      %v525 = vshrl.u32 %v467, 16
      %v527 = vrot.slane %v525, 7
      %v528 = vshll.u32 %v467, 16
      %v530 = vor.u32 %v527, %v528
      %v531 = vsel %vm498, %v523, %v530
      %v532 = vrot.slane %v527, 4
      %v534 = vshrl.u32 %v468, 16
      %v536 = vrot.slane %v534, 7
      %v537 = vshll.u32 %v468, 16
      %v539 = vor.u32 %v536, %v537
      %v540 = vrot.slane %v536, 4
      %v542 = vshrl.u32 %v469, 16
      %v544 = vrot.slane %v542, 7
      %v545 = vshll.u32 %v469, 16
      %v547 = vor.u32 %v544, %v545
      %v548 = vsel %vm498, %v540, %v547
      %v549 = vrot.slane %v544, 4
      %v551 = vshrl.u32 %v470, 16
      %v553 = vrot.slane %v551, 7
      %v554 = vshll.u32 %v470, 16
      %v556 = vor.u32 %v553, %v554
      %v557 = vrot.slane %v553, 4
      %v559 = vshrl.u32 %v471, 16
      %v561 = vrot.slane %v559, 7
      %v562 = vshll.u32 %v471, 16
      %v564 = vor.u32 %v561, %v562
      %v565 = vsel %vm498, %v557, %v564
      %v566 = vrot.slane %v561, 4
      %v568 = vshrl.u32 %v472, 16
      %v570 = vrot.slane %v568, 7
      %v571 = vshll.u32 %v472, 16
      %v573 = vor.u32 %v570, %v571
      %v574 = vrot.slane %v570, 4
      %v576 = vshrl.u32 %v473, 16
      %v578 = vrot.slane %v576, 7
      %v579 = vshll.u32 %v473, 16
      %v581 = vor.u32 %v578, %v579
      %v582 = vsel %vm498, %v574, %v581
      %v583 = vrot.slane %v578, 4
      %v585 = vshrl.u32 %v474, 16
      %v587 = vrot.slane %v585, 7
      %v588 = vshll.u32 %v474, 16
      %v590 = vor.u32 %v587, %v588
      %v591 = vrot.slane %v587, 4
      %v593 = vshrl.u32 %v475, 16
      %v595 = vrot.slane %v593, 7
      %v596 = vshll.u32 %v475, 16
      %v598 = vor.u32 %v595, %v596
      %v599 = vsel %vm498, %v591, %v598
      %v600 = vrot.slane %v595, 4
      %v602 = vshrl.u32 %v476, 16
      %v604 = vrot.slane %v602, 7
      %v605 = vshll.u32 %v476, 16
      %v607 = vor.u32 %v604, %v605
      %v608 = vrot.slane %v604, 4
      %v610 = vshrl.u32 %v477, 16
      %v612 = vrot.slane %v610, 7
      %v613 = vshll.u32 %v477, 16
      %v615 = vor.u32 %v612, %v613
      %v616 = vsel %vm498, %v608, %v615
      %v617 = vrot.slane %v612, 4
      %v619 = vshrl.u32 %v478, 16
      %v621 = vrot.slane %v619, 7
      %v622 = vshll.u32 %v478, 16
      %v624 = vor.u32 %v621, %v622
      %v625 = vrot.slane %v621, 4
      %v627 = vshrl.u32 %v479, 16
      %v629 = vrot.slane %v627, 7
      %v630 = vshll.u32 %v479, 16
      %v632 = vor.u32 %v629, %v630
      %v633 = vsel %vm498, %v625, %v632
      %v634 = vrot.slane %v629, 4
      %v636 = vshrl.u32 %v480, 16
      %v638 = vrot.slane %v636, 7
      %v639 = vshll.u32 %v480, 16
      %v641 = vor.u32 %v638, %v639
      %v642 = vrot.slane %v638, 4
      %v644 = vshrl.u32 %v481, 16
      %v646 = vrot.slane %v644, 7
      %v647 = vshll.u32 %v481, 16
      %v649 = vor.u32 %v646, %v647
      %v650 = vsel %vm498, %v642, %v649
      %v651 = vrot.slane %v646, 4
      %v653 = vshrl.u32 %v482, 16
      %v655 = vrot.slane %v653, 7
      %v656 = vshll.u32 %v482, 16
      %v658 = vor.u32 %v655, %v656
      %v659 = vrot.slane %v655, 4
      %v661 = vshrl.u32 %v483, 16
      %v663 = vrot.slane %v661, 7
      %v664 = vshll.u32 %v483, 16
      %v666 = vor.u32 %v663, %v664
      %v667 = vsel %vm498, %v659, %v666
      %v668 = vrot.slane %v663, 4
      %v670 = vshrl.u32 %v484, 16
      %v672 = vrot.slane %v670, 7
      %v673 = vshll.u32 %v484, 16
      %v675 = vor.u32 %v672, %v673
      %v676 = vrot.slane %v672, 4
      %v678 = vshrl.u32 %v485, 16
      %v680 = vrot.slane %v678, 7
      %v681 = vshll.u32 %v485, 16
      %v683 = vor.u32 %v680, %v681
      %v684 = vsel %vm498, %v676, %v683
      %v685 = vrot.slane %v680, 4
      %v687 = vshrl.u32 %v486, 16
      %v689 = vrot.slane %v687, 7
      %v690 = vshll.u32 %v486, 16
      %v692 = vor.u32 %v689, %v690
      %v693 = vrot.slane %v689, 4
      %v695 = vshrl.u32 %v487, 16
      %v697 = vrot.slane %v695, 7
      %v698 = vshll.u32 %v487, 16
      %v700 = vor.u32 %v697, %v698
      %v701 = vsel %vm498, %v693, %v700
      %v702 = vrot.slane %v697, 4
      %v704 = vshrl.u32 %v488, 16
      %v706 = vrot.slane %v704, 7
      %v707 = vshll.u32 %v488, 16
      %v709 = vor.u32 %v706, %v707
      %v710 = vrot.slane %v706, 4
      %v712 = vshrl.u32 %v489, 16
      %v714 = vrot.slane %v712, 7
      %v715 = vshll.u32 %v489, 16
      %v717 = vor.u32 %v714, %v715
      %v718 = vsel %vm498, %v710, %v717
      %v719 = vrot.slane %v714, 4
      %v721 = vshrl.u32 %v490, 16
      %v723 = vrot.slane %v721, 7
      %v724 = vshll.u32 %v490, 16
      %v726 = vor.u32 %v723, %v724
      %v727 = vrot.slane %v723, 4
      %v729 = vshrl.u32 %v491, 16
      %v731 = vrot.slane %v729, 7
      %v732 = vshll.u32 %v491, 16
      %v734 = vor.u32 %v731, %v732
      %v735 = vsel %vm498, %v727, %v734
      %v736 = vrot.slane %v731, 4
      %v738 = vshrl.u32 %v492, 16
      %v740 = vrot.slane %v738, 7
      %v741 = vshll.u32 %v492, 16
      %v743 = vor.u32 %v740, %v741
      %v744 = vrot.slane %v740, 4
      %v746 = vshrl.u32 %v493, 16
      %v748 = vrot.slane %v746, 7
      %v749 = vshll.u32 %v493, 16
      %v751 = vor.u32 %v748, %v749
      %v752 = vsel %vm498, %v744, %v751
      %v753 = vrot.slane %v748, 4
      %v755 = vshrl.u32 %v494, 16
      %v757 = vrot.slane %v755, 7
      %v758 = vshll.u32 %v494, 16
      %v760 = vor.u32 %v757, %v758
      %v761 = vrot.slane %v757, 4
      %v763 = vshrl.u32 %v495, 16
      %v765 = vrot.slane %v763, 7
      %v766 = vshll.u32 %v495, 16
      %v768 = vor.u32 %v765, %v766
      %v769 = vsel %vm498, %v761, %v768
      %v770 = vrot.slane %v765, 4
      %s819 = scalar_lea.vmem %s170, 12
      %vm820 = vcmask 1043456
      %vm821 = vsmask.f32 7938
      %vm822 = vmand %vm820, %vm821
      %v823 = vld [vmem:[%s819] sm:$0xf]
      %v824 = vsel %vm822, %v505, %v823
      %825 = vst [vmem:[%s819] sm:$0xf] %v824
      %826 = vst [vmem:[%s819 + $0x4] sm:$0xf] %v514
      %vm827 = vcmask 1040384
      %vm828 = vmand %vm827, %vm496
      %v829 = vld [vmem:[%s819 + $0x8] sm:$0x1]
      %v830 = vsel %vm828, %v515, %v829
      %831 = vst [vmem:[%s819 + $0x8] sm:$0x1] %v830
      %v832 = vld [vmem:[%s819 + $0xc] sm:$0xf]
      %v833 = vsel %vm822, %v522, %v832
      %834 = vst [vmem:[%s819 + $0xc] sm:$0xf] %v833
      %835 = vst [vmem:[%s819 + $0x10] sm:$0xf] %v531
      %v836 = vld [vmem:[%s819 + $0x14] sm:$0x1]
      %v837 = vsel %vm828, %v532, %v836
      %838 = vst [vmem:[%s819 + $0x14] sm:$0x1] %v837
      %v839 = vld [vmem:[%s819 + $0x18] sm:$0xf]
      %v840 = vsel %vm822, %v539, %v839
      %841 = vst [vmem:[%s819 + $0x18] sm:$0xf] %v840
      %842 = vst [vmem:[%s819 + $0x1c] sm:$0xf] %v548
      %v843 = vld [vmem:[%s819 + $0x20] sm:$0x1]
      %v844 = vsel %vm828, %v549, %v843
      %845 = vst [vmem:[%s819 + $0x20] sm:$0x1] %v844
      %v846 = vld [vmem:[%s819 + $0x24] sm:$0xf]
      %v847 = vsel %vm822, %v556, %v846
      %848 = vst [vmem:[%s819 + $0x24] sm:$0xf] %v847
      %849 = vst [vmem:[%s819 + $0x28] sm:$0xf] %v565
      %v850 = vld [vmem:[%s819 + $0x2c] sm:$0x1]
      %v851 = vsel %vm828, %v566, %v850
      %852 = vst [vmem:[%s819 + $0x2c] sm:$0x1] %v851
      %v853 = vld [vmem:[%s819 + $0x30] sm:$0xf]
      %v854 = vsel %vm822, %v573, %v853
      %855 = vst [vmem:[%s819 + $0x30] sm:$0xf] %v854
      %856 = vst [vmem:[%s819 + $0x34] sm:$0xf] %v582
      %v857 = vld [vmem:[%s819 + $0x38] sm:$0x1]
      %v858 = vsel %vm828, %v583, %v857
      %859 = vst [vmem:[%s819 + $0x38] sm:$0x1] %v858
      %v860 = vld [vmem:[%s819 + $0x3c] sm:$0xf]
      %v861 = vsel %vm822, %v590, %v860
      %862 = vst [vmem:[%s819 + $0x3c] sm:$0xf] %v861
      %863 = vst [vmem:[%s819 + $0x40] sm:$0xf] %v599
      %v864 = vld [vmem:[%s819 + $0x44] sm:$0x1]
      %v865 = vsel %vm828, %v600, %v864
      %866 = vst [vmem:[%s819 + $0x44] sm:$0x1] %v865
      %v867 = vld [vmem:[%s819 + $0x48] sm:$0xf]
      %v868 = vsel %vm822, %v607, %v867
      %869 = vst [vmem:[%s819 + $0x48] sm:$0xf] %v868
      %870 = vst [vmem:[%s819 + $0x4c] sm:$0xf] %v616
      %v871 = vld [vmem:[%s819 + $0x50] sm:$0x1]
      %v872 = vsel %vm828, %v617, %v871
      %873 = vst [vmem:[%s819 + $0x50] sm:$0x1] %v872
      %v874 = vld [vmem:[%s819 + $0x54] sm:$0xf]
      %v875 = vsel %vm822, %v624, %v874
      %876 = vst [vmem:[%s819 + $0x54] sm:$0xf] %v875
      %877 = vst [vmem:[%s819 + $0x58] sm:$0xf] %v633
      %v878 = vld [vmem:[%s819 + $0x5c] sm:$0x1]
      %v879 = vsel %vm828, %v634, %v878
      %880 = vst [vmem:[%s819 + $0x5c] sm:$0x1] %v879
      %v881 = vld [vmem:[%s819 + $0x60] sm:$0xf]
      %v882 = vsel %vm822, %v641, %v881
      %883 = vst [vmem:[%s819 + $0x60] sm:$0xf] %v882
      %884 = vst [vmem:[%s819 + $0x64] sm:$0xf] %v650
      %v885 = vld [vmem:[%s819 + $0x68] sm:$0x1]
      %v886 = vsel %vm828, %v651, %v885
      %887 = vst [vmem:[%s819 + $0x68] sm:$0x1] %v886
      %v888 = vld [vmem:[%s819 + $0x6c] sm:$0xf]
      %v889 = vsel %vm822, %v658, %v888
      %890 = vst [vmem:[%s819 + $0x6c] sm:$0xf] %v889
      %891 = vst [vmem:[%s819 + $0x70] sm:$0xf] %v667
      %v892 = vld [vmem:[%s819 + $0x74] sm:$0x1]
      %v893 = vsel %vm828, %v668, %v892
      %894 = vst [vmem:[%s819 + $0x74] sm:$0x1] %v893
      %v895 = vld [vmem:[%s819 + $0x78] sm:$0xf]
      %v896 = vsel %vm822, %v675, %v895
      %897 = vst [vmem:[%s819 + $0x78] sm:$0xf] %v896
      %898 = vst [vmem:[%s819 + $0x7c] sm:$0xf] %v684
      %v899 = vld [vmem:[%s819 + $0x80] sm:$0x1]
      %v900 = vsel %vm828, %v685, %v899
      %901 = vst [vmem:[%s819 + $0x80] sm:$0x1] %v900
      %v902 = vld [vmem:[%s819 + $0x84] sm:$0xf]
      %v903 = vsel %vm822, %v692, %v902
      %904 = vst [vmem:[%s819 + $0x84] sm:$0xf] %v903
      %905 = vst [vmem:[%s819 + $0x88] sm:$0xf] %v701
      %v906 = vld [vmem:[%s819 + $0x8c] sm:$0x1]
      %v907 = vsel %vm828, %v702, %v906
      %908 = vst [vmem:[%s819 + $0x8c] sm:$0x1] %v907
      %v909 = vld [vmem:[%s819 + $0x90] sm:$0xf]
      %v910 = vsel %vm822, %v709, %v909
      %911 = vst [vmem:[%s819 + $0x90] sm:$0xf] %v910
      %912 = vst [vmem:[%s819 + $0x94] sm:$0xf] %v718
      %v913 = vld [vmem:[%s819 + $0x98] sm:$0x1]
      %v914 = vsel %vm828, %v719, %v913
      %915 = vst [vmem:[%s819 + $0x98] sm:$0x1] %v914
      %v916 = vld [vmem:[%s819 + $0x9c] sm:$0xf]
      %v917 = vsel %vm822, %v726, %v916
      %918 = vst [vmem:[%s819 + $0x9c] sm:$0xf] %v917
      %919 = vst [vmem:[%s819 + $0xa0] sm:$0xf] %v735
      %v920 = vld [vmem:[%s819 + $0xa4] sm:$0x1]
      %v921 = vsel %vm828, %v736, %v920
      %922 = vst [vmem:[%s819 + $0xa4] sm:$0x1] %v921
      %v923 = vld [vmem:[%s819 + $0xa8] sm:$0xf]
      %v924 = vsel %vm822, %v743, %v923
      %925 = vst [vmem:[%s819 + $0xa8] sm:$0xf] %v924
      %926 = vst [vmem:[%s819 + $0xac] sm:$0xf] %v752
      %v927 = vld [vmem:[%s819 + $0xb0] sm:$0x1]
      %v928 = vsel %vm828, %v753, %v927
      %929 = vst [vmem:[%s819 + $0xb0] sm:$0x1] %v928
      %v930 = vld [vmem:[%s819 + $0xb4] sm:$0xf]
      %v931 = vsel %vm822, %v760, %v930
      %932 = vst [vmem:[%s819 + $0xb4] sm:$0xf] %v931
      %933 = vst [vmem:[%s819 + $0xb8] sm:$0xf] %v769
      %v934 = vld [vmem:[%s819 + $0xbc] sm:$0x1]
      %v935 = vsel %vm828, %v770, %v934
      %936 = vst [vmem:[%s819 + $0xbc] sm:$0x1] %v935
      %p937 = scmp.lt.s32.totalorder %s14, 1
      %s938 = scalar_select %p937, %s14, 1
      %s939 = smul.addr %s938, 54
      %s940 = smul.addr %s939, 4
      %s941 = scalar_lea.vmem %s3, %s940
      // Predicated region
      $region33: #{resnet_encoder_forward.11} parent=31 // pred_check
        %p942 = pneg %p100
      $region34: #{resnet_encoder_forward.11} parent=31 // pred_check_branch
        %944 = sbr.rel (%p942) target = $region36
      $region35: #{resnet_encoder_forward.11} parent=31 // pred_region
        _
      $region36: #{resnet_encoder_forward.11} parent=31 // pred_fallthru
        _
    $region32: #{resnet_encoder_forward.11} parent=5 // pred_fallthru
      _
    %p945 = scmp.le.s32.totalorder 2, %s9
    // Predicated region
    $region37: #{resnet_encoder_forward.11} parent=5 // pred_check
      %p946 = pneg %p945
    $region38: #{resnet_encoder_forward.11} parent=5 // pred_check_branch
      %948 = sbr.rel (%p946) target = $region40
    $region39: #{resnet_encoder_forward.11} parent=5 // pred_region
      %s949 = ssub.s32 %s9, 2
      // Predicated region
      $region41: #{resnet_encoder_forward.11} parent=39 // pred_check
        %p950 = pneg %p106
      $region42: #{resnet_encoder_forward.11} parent=39 // pred_check_branch
        %952 = sbr.rel (%p950) target = $region44
      $region43: #{resnet_encoder_forward.11} parent=39 // pred_region
        %p953 = scmp.lt.s32.totalorder %s15, 1
        %s954 = scalar_select %p953, %s15, 1
        %s955 = smul.addr %s954, 54
        %s956 = smul.addr %s955, 4
        %s957 = scalar_lea.vmem %s3, %s956
      $region44: #{resnet_encoder_forward.11} parent=39 // pred_fallthru
        _
    $region40: #{resnet_encoder_forward.11} parent=5 // pred_fallthru
      _
  $region6: #{resnet_encoder_forward.11} parent=0 // loop_footer
    %s13 = sadd.s32 1, %s9
  $region7: #{resnet_encoder_forward.11} parent=0 // loop_footer_branch
    %8 = sbr.rel target = $region3
  $region8: #{resnet_encoder_forward.11} parent=0 // loop_exit
    _

// kernel: resnet_encoder_forward.15
$region0: #{resnet_encoder_forward.15}
  #allocation0 [shape = 'u32[]', space=smem, size = 0x4, offset = 0x4, fixed_abs, tag = 'smem constant byte address 0x4 - core index']
  #allocation1 [shape = 'u32[144,128]{1,0:T(1,128)}', space=vmem, size = 0x12000, scoped, tag = 'internal scratch']
  %s0 = inlined_call_operand.vmem [shape: bf16[2,16,16,128], index: 0, kind: input, shape index: {}]
  %s1 = inlined_call_operand.vmem [shape: f32[1,128], index: 1, kind: input, shape index: {}]
  %s2 = inlined_call_operand.vmem [shape: f32[1,128], index: 2, kind: input, shape index: {}]
  %s3 = inlined_call_operand.vmem [shape: bf16[2,18,18,128], index: 3, kind: input, shape index: {}]
  %s4 = inlined_call_operand.vmem [shape: bf16[2,18,18,128], index: 4, kind: output, shape index: {}]
  %s5 = sld [smem:[#allocation0]]
  $region49: #{resnet_encoder_forward.15} parent=0
    _
  %s7 = ssub.s32 1, %s5
  %s8 = scalar_select 0, %s7, %s5
  loop: start=0, step=1, limit=4
  $region2: #{resnet_encoder_forward.15} parent=0 // loop_pre_header
    _
  $region3: #{resnet_encoder_forward.15} parent=0 // loop_header
    %s10 = sphi 0, %s14
    %p11 = scmp.ge.s32.totalorder %s10, 4
    %s20 = sphi 0, %s22
    %s23 = sphi 0, %s20
    %s24 = sphi 0, %s23
    %s40 = sphi 0, %s24
    %s44 = sphi 0, %s44
    %s46 = sphi 0, %s44
    %s47 = sphi 0, %s46
    %s61 = sphi 0, %s47
    %s65 = sphi 0, %s65
    %s67 = sphi 0, %s65
    %s68 = sphi 0, %s67
    %s82 = sphi 0, %s68
    %s88 = sphi 0, %s90
    %s91 = sphi 0, %s88
    %s92 = sphi 0, %s91
    %s108 = sphi 0, %s92
    %s114 = sphi 0, %s116
    %s117 = sphi 0, %s114
    %s118 = sphi 0, %s117
    %s134 = sphi 0, %s118
  $region4: #{resnet_encoder_forward.15} parent=0 // loop_header_branch
    %13 = sbr.rel (%p11) target = $region8
  $region5: #{resnet_encoder_forward.15} parent=0 // loop_body
    %s15 = ssub.s32 %s10, 1
    %s16 = ssub.s32 %s10, 2
    %s17 = sadd.s32 %s10, 1
    %s18 = ssub.s32 %s10, %s17
    %p19 = scmp.eq.s32.totalorder %s18, 0
    %s21 = sadd.s32 %s20, 1
    %s22 = scalar_select %p19, %s20, %s21
    %p25 = pneg %p19
    %p26 = scmp.eq.s32.totalorder %s10, 1
    %p27 = por %p25, %p26
    %p28 = scmp.ne.s32.totalorder %s20, %s23
    %p29 = scmp.eq.s32.totalorder %s10, 0
    %p30 = por %p28, %p29
    %p31 = scmp.ne.s32.totalorder %s20, %s23
    %p32 = scmp.eq.s32.totalorder %s15, 1
    %p33 = por %p31, %p32
    %p34 = scmp.ne.s32.totalorder %s23, %s24
    %p35 = scmp.eq.s32.totalorder %s15, 0
    %p36 = por %p34, %p35
    %p37 = scmp.ne.s32.totalorder %s23, %s24
    %p38 = scmp.eq.s32.totalorder %s16, 1
    %p39 = por %p37, %p38
    %p41 = scmp.ne.s32.totalorder %s24, %s40
    %p42 = scmp.eq.s32.totalorder %s16, 0
    %p43 = por %p41, %p42
    %s45 = sadd.s32 %s44, 1
    %p48 = scmp.eq.s32.totalorder %s10, 1
    %p49 = scmp.ne.s32.totalorder %s44, %s46
    %p50 = scmp.eq.s32.totalorder %s10, 0
    %p51 = por %p49, %p50
    %p52 = scmp.ne.s32.totalorder %s44, %s46
    %p53 = scmp.eq.s32.totalorder %s15, 1
    %p54 = por %p52, %p53
    %p55 = scmp.ne.s32.totalorder %s46, %s47
    %p56 = scmp.eq.s32.totalorder %s15, 0
    %p57 = por %p55, %p56
    %p58 = scmp.ne.s32.totalorder %s46, %s47
    %p59 = scmp.eq.s32.totalorder %s16, 1
    %p60 = por %p58, %p59
    %p62 = scmp.ne.s32.totalorder %s47, %s61
    %p63 = scmp.eq.s32.totalorder %s16, 0
    %p64 = por %p62, %p63
    %s66 = sadd.s32 %s65, 1
    %p69 = scmp.eq.s32.totalorder %s10, 1
    %p70 = scmp.ne.s32.totalorder %s65, %s67
    %p71 = scmp.eq.s32.totalorder %s10, 0
    %p72 = por %p70, %p71
    %p73 = scmp.ne.s32.totalorder %s65, %s67
    %p74 = scmp.eq.s32.totalorder %s15, 1
    %p75 = por %p73, %p74
    %p76 = scmp.ne.s32.totalorder %s67, %s68
    %p77 = scmp.eq.s32.totalorder %s15, 0
    %p78 = por %p76, %p77
    %p79 = scmp.ne.s32.totalorder %s67, %s68
    %p80 = scmp.eq.s32.totalorder %s16, 1
    %p81 = por %p79, %p80
    %p83 = scmp.ne.s32.totalorder %s68, %s82
    %p84 = scmp.eq.s32.totalorder %s16, 0
    %p85 = por %p83, %p84
    %s86 = ssub.s32 %s10, %s17
    %p87 = scmp.eq.s32.totalorder %s86, 0
    %s89 = sadd.s32 %s88, 1
    %s90 = scalar_select %p87, %s88, %s89
    %p93 = pneg %p87
    %p94 = scmp.eq.s32.totalorder %s10, 1
    %p95 = por %p93, %p94
    %p96 = scmp.ne.s32.totalorder %s88, %s91
    %p97 = scmp.eq.s32.totalorder %s10, 0
    %p98 = por %p96, %p97
    %p99 = scmp.ne.s32.totalorder %s88, %s91
    %p100 = scmp.eq.s32.totalorder %s15, 1
    %p101 = por %p99, %p100
    %p102 = scmp.ne.s32.totalorder %s91, %s92
    %p103 = scmp.eq.s32.totalorder %s15, 0
    %p104 = por %p102, %p103
    %p105 = scmp.ne.s32.totalorder %s91, %s92
    %p106 = scmp.eq.s32.totalorder %s16, 1
    %p107 = por %p105, %p106
    %p109 = scmp.ne.s32.totalorder %s92, %s108
    %p110 = scmp.eq.s32.totalorder %s16, 0
    %p111 = por %p109, %p110
    %s112 = ssub.s32 %s10, %s17
    %p113 = scmp.eq.s32.totalorder %s112, 0
    %s115 = sadd.s32 %s114, 1
    %s116 = scalar_select %p113, %s114, %s115
    %p119 = pneg %p113
    %p120 = scmp.eq.s32.totalorder %s10, 1
    %p121 = por %p119, %p120
    %p122 = scmp.ne.s32.totalorder %s114, %s117
    %p123 = scmp.eq.s32.totalorder %s10, 0
    %p124 = por %p122, %p123
    %p125 = scmp.ne.s32.totalorder %s114, %s117
    %p126 = scmp.eq.s32.totalorder %s15, 1
    %p127 = por %p125, %p126
    %p128 = scmp.ne.s32.totalorder %s117, %s118
    %p129 = scmp.eq.s32.totalorder %s15, 0
    %p130 = por %p128, %p129
    %p131 = scmp.ne.s32.totalorder %s117, %s118
    %p132 = scmp.eq.s32.totalorder %s16, 1
    %p133 = por %p131, %p132
    %p135 = scmp.ne.s32.totalorder %s118, %s134
    %p136 = scmp.eq.s32.totalorder %s16, 0
    %p137 = por %p135, %p136
    %p138 = scmp.le.s32.totalorder 1, %s10
    %p139 = scmp.lt.s32.totalorder %s10, 3
    %p140 = pnand %p138, %p139
    %p141 = pneg %p140
    // Predicated region
    $region9: #{resnet_encoder_forward.15} parent=5 // pred_check
      _
    $region10: #{resnet_encoder_forward.15} parent=5 // pred_check_branch
      %143 = sbr.rel (%p140) target = $region12
    $region11: #{resnet_encoder_forward.15} parent=5 // pred_region
      %s144 = ssub.s32 %s10, 1
      // Predicated region
      $region13: #{resnet_encoder_forward.15} parent=11 // pred_check
        %p145 = pneg %p57
      $region14: #{resnet_encoder_forward.15} parent=11 // pred_check_branch
        %147 = sbr.rel (%p145) target = $region16
      $region15: #{resnet_encoder_forward.15} parent=11 // pred_region
        _
      $region16: #{resnet_encoder_forward.15} parent=11 // pred_fallthru
        _
      // Predicated region
      $region17: #{resnet_encoder_forward.15} parent=11 // pred_check
        %p148 = pneg %p78
      $region18: #{resnet_encoder_forward.15} parent=11 // pred_check_branch
        %150 = sbr.rel (%p148) target = $region20
      $region19: #{resnet_encoder_forward.15} parent=11 // pred_region
        _
      $region20: #{resnet_encoder_forward.15} parent=11 // pred_fallthru
        _
    $region12: #{resnet_encoder_forward.15} parent=5 // pred_fallthru
      _
    %p151 = scmp.lt.s32.totalorder %s10, 2
    // Predicated region
    $region21: #{resnet_encoder_forward.15} parent=5 // pred_check
      %p152 = pneg %p151
    $region22: #{resnet_encoder_forward.15} parent=5 // pred_check_branch
      %154 = sbr.rel (%p152) target = $region24
    $region23: #{resnet_encoder_forward.15} parent=5 // pred_region
      // Predicated region
      $region25: #{resnet_encoder_forward.15} parent=23 // pred_check
        %p155 = pneg %p30
      $region26: #{resnet_encoder_forward.15} parent=23 // pred_check_branch
        %157 = sbr.rel (%p155) target = $region28
      $region27: #{resnet_encoder_forward.15} parent=23 // pred_region
        %p158 = scmp.lt.s32.totalorder %s10, 1
        %s159 = scalar_select %p158, %s10, 1
        %s160 = smul.addr %s159, 32
        %s161 = smul.addr %s160, 4
        %s162 = scalar_lea.vmem %s0, %s161
      $region28: #{resnet_encoder_forward.15} parent=23 // pred_fallthru
        _
      // Predicated region
      $region29: #{resnet_encoder_forward.15} parent=23 // pred_check
        %p163 = pneg %p98
      $region30: #{resnet_encoder_forward.15} parent=23 // pred_check_branch
        %165 = sbr.rel (%p163) target = $region32
      $region31: #{resnet_encoder_forward.15} parent=23 // pred_region
        %p166 = scmp.lt.s32.totalorder %s10, 1
        %s167 = scalar_select %p166, %s10, 1
        %s168 = smul.addr %s167, 54
        %s169 = smul.addr %s168, 4
        %s170 = scalar_lea.vmem %s3, %s169
      $region32: #{resnet_encoder_forward.15} parent=23 // pred_fallthru
        _
    $region24: #{resnet_encoder_forward.15} parent=5 // pred_fallthru
      _
    %p171 = scmp.le.s32.totalorder 1, %s10
    %p172 = scmp.lt.s32.totalorder %s10, 3
    %p173 = pnand %p171, %p172
    %p174 = pneg %p173
    // Predicated region
    $region33: #{resnet_encoder_forward.15} parent=5 // pred_check
      _
    $region34: #{resnet_encoder_forward.15} parent=5 // pred_check_branch
      %176 = sbr.rel (%p173) target = $region36
    $region35: #{resnet_encoder_forward.15} parent=5 // pred_region
      %s177 = ssub.s32 %s10, 1
      %p178 = scmp.lt.s32.totalorder %s15, 1
      %s179 = scalar_select %p178, %s15, 1
      %s180 = smul.addr %s179, 32
      %s181 = smul.addr %s180, 4
      %s182 = scalar_lea.vmem %s0, %s181
      %p183 = pneg %p36
      %p184 = pneg %p33
      %p185 = pneg %p57
      %p186 = pneg %p54
      %p187 = pneg %p78
      %p188 = pneg %p75
      %p189 = scmp.lt.s32.totalorder %s15, 1
      %s190 = scalar_select %p189, %s15, 1
      %s191 = smul.addr %s190, 54
      %s192 = smul.addr %s191, 4
      %s193 = scalar_lea.vmem %s3, %s192
      %p194 = pneg %p104
      %p195 = pneg %p101
      %p196 = pneg %p130
      %p197 = pneg %p127
      %p198 = scmp.lt.s32.totalorder %s15, 1
      %s199 = scalar_select %p198, %s15, 1
      %s200 = smul.addr %s199, 54
      %s201 = smul.addr %s200, 4
      %s202 = scalar_lea.vmem %s4, %s201
      %p203 = scmp.lt.s32.totalorder %s15, 1
      %s204 = scalar_select %p203, %s15, 1
      %s205 = smul.addr %s204, 32
      %s206 = smul.addr %s205, 4
      %s207 = scalar_lea.vmem %s0, %s206
      %p208 = scmp.lt.s32.totalorder %s15, 1
      %s209 = scalar_select %p208, %s15, 1
      %s210 = smul.addr %s209, 54
      %s211 = smul.addr %s210, 4
      %s212 = scalar_lea.vmem %s3, %s211
      %p213 = scmp.lt.s32.totalorder %s15, 1
      %s214 = scalar_select %p213, %s15, 1
      %s215 = smul.addr %s214, 54
      %s216 = smul.addr %s215, 4
      %s217 = scalar_lea.vmem %s4, %s216
      %v219 = vld [vmem:[%s1] sm:$0x1]
      %v220 = vld [vmem:[%s2] sm:$0x1]
      %v221 = vld [vmem:[%s207] sm:$0xf]
      %v222 = vld [vmem:[%s207 + $0x4] sm:$0xf]
      %v223 = vld [vmem:[%s207 + $0x8] sm:$0xf]
      %v224 = vld [vmem:[%s207 + $0xc] sm:$0xf]
      %v225 = vld [vmem:[%s207 + $0x10] sm:$0xf]
      %v226 = vld [vmem:[%s207 + $0x14] sm:$0xf]
      %v227 = vld [vmem:[%s207 + $0x18] sm:$0xf]
      %v228 = vld [vmem:[%s207 + $0x1c] sm:$0xf]
      %v229 = vld [vmem:[%s207 + $0x20] sm:$0xf]
      %v230 = vld [vmem:[%s207 + $0x24] sm:$0xf]
      %v231 = vld [vmem:[%s207 + $0x28] sm:$0xf]
      %v232 = vld [vmem:[%s207 + $0x2c] sm:$0xf]
      %v233 = vld [vmem:[%s207 + $0x30] sm:$0xf]
      %v234 = vld [vmem:[%s207 + $0x34] sm:$0xf]
      %v235 = vld [vmem:[%s207 + $0x38] sm:$0xf]
      %v236 = vld [vmem:[%s207 + $0x3c] sm:$0xf]
      %v237 = vld [vmem:[%s207 + $0x40] sm:$0xf]
      %v238 = vld [vmem:[%s207 + $0x44] sm:$0xf]
      %v239 = vld [vmem:[%s207 + $0x48] sm:$0xf]
      %v240 = vld [vmem:[%s207 + $0x4c] sm:$0xf]
      %v241 = vld [vmem:[%s207 + $0x50] sm:$0xf]
      %v242 = vld [vmem:[%s207 + $0x54] sm:$0xf]
      %v243 = vld [vmem:[%s207 + $0x58] sm:$0xf]
      %v244 = vld [vmem:[%s207 + $0x5c] sm:$0xf]
      %v245 = vld [vmem:[%s207 + $0x60] sm:$0xf]
      %v246 = vld [vmem:[%s207 + $0x64] sm:$0xf]
      %v247 = vld [vmem:[%s207 + $0x68] sm:$0xf]
      %v248 = vld [vmem:[%s207 + $0x6c] sm:$0xf]
      %v249 = vld [vmem:[%s207 + $0x70] sm:$0xf]
      %v250 = vld [vmem:[%s207 + $0x74] sm:$0xf]
      %v251 = vld [vmem:[%s207 + $0x78] sm:$0xf]
      %v252 = vld [vmem:[%s207 + $0x7c] sm:$0xf]
      %v253 = vunpack.c.l.bf16 %v221
      %v254 = vunpack.c.l.bf16 %v222
      %v255 = vunpack.c.l.bf16 %v223
      %v256 = vunpack.c.l.bf16 %v224
      %v257 = vunpack.c.l.bf16 %v225
      %v258 = vunpack.c.l.bf16 %v226
      %v259 = vunpack.c.l.bf16 %v227
      %v260 = vunpack.c.l.bf16 %v228
      %v261 = vunpack.c.l.bf16 %v229
      %v262 = vunpack.c.l.bf16 %v230
      %v263 = vunpack.c.l.bf16 %v231
      %v264 = vunpack.c.l.bf16 %v232
      %v265 = vunpack.c.l.bf16 %v233
      %v266 = vunpack.c.l.bf16 %v234
      %v267 = vunpack.c.l.bf16 %v235
      %v268 = vunpack.c.l.bf16 %v236
      %v269 = vunpack.c.l.bf16 %v237
      %v270 = vunpack.c.l.bf16 %v238
      %v271 = vunpack.c.l.bf16 %v239
      %v272 = vunpack.c.l.bf16 %v240
      %v273 = vunpack.c.l.bf16 %v241
      %v274 = vunpack.c.l.bf16 %v242
      %v275 = vunpack.c.l.bf16 %v243
      %v276 = vunpack.c.l.bf16 %v244
      %v277 = vunpack.c.l.bf16 %v245
      %v278 = vunpack.c.l.bf16 %v246
      %v279 = vunpack.c.l.bf16 %v247
      %v280 = vunpack.c.l.bf16 %v248
      %v281 = vunpack.c.l.bf16 %v249
      %v282 = vunpack.c.l.bf16 %v250
      %v283 = vunpack.c.l.bf16 %v251
      %v284 = vunpack.c.l.bf16 %v252
      %v286 = vlaneseq
      %v287 = vshrl.u32 %v286, 7
      %v288 = vsub.s32 0, %v287
      %v289 = vrot.slane %v219, %v288
      %v291 = vmul.f32 %v253, %v289
      %v292 = vmul.f32 %v254, %v289
      %v293 = vmul.f32 %v255, %v289
      %v294 = vmul.f32 %v256, %v289
      %v295 = vmul.f32 %v257, %v289
      %v296 = vmul.f32 %v258, %v289
      %v297 = vmul.f32 %v259, %v289
      %v298 = vmul.f32 %v260, %v289
      %v299 = vmul.f32 %v261, %v289
      %v300 = vmul.f32 %v262, %v289
      %v301 = vmul.f32 %v263, %v289
      %v302 = vmul.f32 %v264, %v289
      %v303 = vmul.f32 %v265, %v289
      %v304 = vmul.f32 %v266, %v289
      %v305 = vmul.f32 %v267, %v289
      %v306 = vmul.f32 %v268, %v289
      %v307 = vmul.f32 %v269, %v289
      %v308 = vmul.f32 %v270, %v289
      %v309 = vmul.f32 %v271, %v289
      %v310 = vmul.f32 %v272, %v289
      %v311 = vmul.f32 %v273, %v289
      %v312 = vmul.f32 %v274, %v289
      %v313 = vmul.f32 %v275, %v289
      %v314 = vmul.f32 %v276, %v289
      %v315 = vmul.f32 %v277, %v289
      %v316 = vmul.f32 %v278, %v289
      %v317 = vmul.f32 %v279, %v289
      %v318 = vmul.f32 %v280, %v289
      %v319 = vmul.f32 %v281, %v289
      %v320 = vmul.f32 %v282, %v289
      %v321 = vmul.f32 %v283, %v289
      %v322 = vmul.f32 %v284, %v289
      %v324 = vlaneseq
      %v325 = vshrl.u32 %v324, 7
      %v326 = vsub.s32 0, %v325
      %v327 = vrot.slane %v220, %v326
      %v329 = vadd.f32 %v291, %v327
      %v330 = vadd.f32 %v292, %v327
      %v331 = vadd.f32 %v293, %v327
      %v332 = vadd.f32 %v294, %v327
      %v333 = vadd.f32 %v295, %v327
      %v334 = vadd.f32 %v296, %v327
      %v335 = vadd.f32 %v297, %v327
      %v336 = vadd.f32 %v298, %v327
      %v337 = vadd.f32 %v299, %v327
      %v338 = vadd.f32 %v300, %v327
      %v339 = vadd.f32 %v301, %v327
      %v340 = vadd.f32 %v302, %v327
      %v341 = vadd.f32 %v303, %v327
      %v342 = vadd.f32 %v304, %v327
      %v343 = vadd.f32 %v305, %v327
      %v344 = vadd.f32 %v306, %v327
      %v345 = vadd.f32 %v307, %v327
      %v346 = vadd.f32 %v308, %v327
      %v347 = vadd.f32 %v309, %v327
      %v348 = vadd.f32 %v310, %v327
      %v349 = vadd.f32 %v311, %v327
      %v350 = vadd.f32 %v312, %v327
      %v351 = vadd.f32 %v313, %v327
      %v352 = vadd.f32 %v314, %v327
      %v353 = vadd.f32 %v315, %v327
      %v354 = vadd.f32 %v316, %v327
      %v355 = vadd.f32 %v317, %v327
      %v356 = vadd.f32 %v318, %v327
      %v357 = vadd.f32 %v319, %v327
      %v358 = vadd.f32 %v320, %v327
      %v359 = vadd.f32 %v321, %v327
      %v360 = vadd.f32 %v322, %v327
      %s361 = scalar_lea.vmem %s212, 12
      %v362 = vld [vmem:[%s361] sm:$0xf]
      %v363 = vld [vmem:[%s361 + $0x4] sm:$0xf]
      %v364 = vld [vmem:[%s361 + $0x8] sm:$0x1]
      %v365 = vld [vmem:[%s361 + $0xc] sm:$0xf]
      %v366 = vld [vmem:[%s361 + $0x10] sm:$0xf]
      %v367 = vld [vmem:[%s361 + $0x14] sm:$0x1]
      %v368 = vld [vmem:[%s361 + $0x18] sm:$0xf]
      %v369 = vld [vmem:[%s361 + $0x1c] sm:$0xf]
      %v370 = vld [vmem:[%s361 + $0x20] sm:$0x1]
      %v371 = vld [vmem:[%s361 + $0x24] sm:$0xf]
      %v372 = vld [vmem:[%s361 + $0x28] sm:$0xf]
      %v373 = vld [vmem:[%s361 + $0x2c] sm:$0x1]
      %v374 = vld [vmem:[%s361 + $0x30] sm:$0xf]
      %v375 = vld [vmem:[%s361 + $0x34] sm:$0xf]
      %v376 = vld [vmem:[%s361 + $0x38] sm:$0x1]
      %v377 = vld [vmem:[%s361 + $0x3c] sm:$0xf]
      %v378 = vld [vmem:[%s361 + $0x40] sm:$0xf]
      %v379 = vld [vmem:[%s361 + $0x44] sm:$0x1]
      %v380 = vld [vmem:[%s361 + $0x48] sm:$0xf]
      %v381 = vld [vmem:[%s361 + $0x4c] sm:$0xf]
      %v382 = vld [vmem:[%s361 + $0x50] sm:$0x1]
      %v383 = vld [vmem:[%s361 + $0x54] sm:$0xf]
      %v384 = vld [vmem:[%s361 + $0x58] sm:$0xf]
      %v385 = vld [vmem:[%s361 + $0x5c] sm:$0x1]
      %v386 = vld [vmem:[%s361 + $0x60] sm:$0xf]
      %v387 = vld [vmem:[%s361 + $0x64] sm:$0xf]
      %v388 = vld [vmem:[%s361 + $0x68] sm:$0x1]
      %v389 = vld [vmem:[%s361 + $0x6c] sm:$0xf]
      %v390 = vld [vmem:[%s361 + $0x70] sm:$0xf]
      %v391 = vld [vmem:[%s361 + $0x74] sm:$0x1]
      %v392 = vld [vmem:[%s361 + $0x78] sm:$0xf]
      %v393 = vld [vmem:[%s361 + $0x7c] sm:$0xf]
      %v394 = vld [vmem:[%s361 + $0x80] sm:$0x1]
      %v395 = vld [vmem:[%s361 + $0x84] sm:$0xf]
      %v396 = vld [vmem:[%s361 + $0x88] sm:$0xf]
      %v397 = vld [vmem:[%s361 + $0x8c] sm:$0x1]
      %v398 = vld [vmem:[%s361 + $0x90] sm:$0xf]
      %v399 = vld [vmem:[%s361 + $0x94] sm:$0xf]
      %v400 = vld [vmem:[%s361 + $0x98] sm:$0x1]
      %v401 = vld [vmem:[%s361 + $0x9c] sm:$0xf]
      %v402 = vld [vmem:[%s361 + $0xa0] sm:$0xf]
      %v403 = vld [vmem:[%s361 + $0xa4] sm:$0x1]
      %v404 = vld [vmem:[%s361 + $0xa8] sm:$0xf]
      %v405 = vld [vmem:[%s361 + $0xac] sm:$0xf]
      %v406 = vld [vmem:[%s361 + $0xb0] sm:$0x1]
      %v407 = vld [vmem:[%s361 + $0xb4] sm:$0xf]
      %v408 = vld [vmem:[%s361 + $0xb8] sm:$0xf]
      %v409 = vld [vmem:[%s361 + $0xbc] sm:$0x1]
      %v410 = vunpack.c.l.bf16 %v362
      %v411 = vunpack.c.l.bf16 %v363
      %v412 = vunpack.c.l.bf16 %v364
      %v413 = vunpack.c.l.bf16 %v365
      %v414 = vunpack.c.l.bf16 %v366
      %v415 = vunpack.c.l.bf16 %v367
      %v416 = vunpack.c.l.bf16 %v368
      %v417 = vunpack.c.l.bf16 %v369
      %v418 = vunpack.c.l.bf16 %v370
      %v419 = vunpack.c.l.bf16 %v371
      %v420 = vunpack.c.l.bf16 %v372
      %v421 = vunpack.c.l.bf16 %v373
      %v422 = vunpack.c.l.bf16 %v374
      %v423 = vunpack.c.l.bf16 %v375
      %v424 = vunpack.c.l.bf16 %v376
      %v425 = vunpack.c.l.bf16 %v377
      %v426 = vunpack.c.l.bf16 %v378
      %v427 = vunpack.c.l.bf16 %v379
      %v428 = vunpack.c.l.bf16 %v380
      %v429 = vunpack.c.l.bf16 %v381
      %v430 = vunpack.c.l.bf16 %v382
      %v431 = vunpack.c.l.bf16 %v383
      %v432 = vunpack.c.l.bf16 %v384
      %v433 = vunpack.c.l.bf16 %v385
      %v434 = vunpack.c.l.bf16 %v386
      %v435 = vunpack.c.l.bf16 %v387
      %v436 = vunpack.c.l.bf16 %v388
      %v437 = vunpack.c.l.bf16 %v389
      %v438 = vunpack.c.l.bf16 %v390
      %v439 = vunpack.c.l.bf16 %v391
      %v440 = vunpack.c.l.bf16 %v392
      %v441 = vunpack.c.l.bf16 %v393
      %v442 = vunpack.c.l.bf16 %v394
      %v443 = vunpack.c.l.bf16 %v395
      %v444 = vunpack.c.l.bf16 %v396
      %v445 = vunpack.c.l.bf16 %v397
      %v446 = vunpack.c.l.bf16 %v398
      %v447 = vunpack.c.l.bf16 %v399
      %v448 = vunpack.c.l.bf16 %v400
      %v449 = vunpack.c.l.bf16 %v401
      %v450 = vunpack.c.l.bf16 %v402
      %v451 = vunpack.c.l.bf16 %v403
      %v452 = vunpack.c.l.bf16 %v404
      %v453 = vunpack.c.l.bf16 %v405
      %v454 = vunpack.c.l.bf16 %v406
      %v455 = vunpack.c.l.bf16 %v407
      %v456 = vunpack.c.l.bf16 %v408
      %v457 = vunpack.c.l.bf16 %v409
      %vm506 = vcmask 1046528
      %v507 = vrot.slane %v410, 1
      %v508 = vrot.slane %v411, 1
      %v509 = vsel %vm506, %v507, %v508
      %v510 = vrot.slane %v412, 1
      %v511 = vsel %vm506, %v508, %v510
      %v512 = vrot.slane %v413, 1
      %v513 = vrot.slane %v414, 1
      %v514 = vsel %vm506, %v512, %v513
      %v515 = vrot.slane %v415, 1
      %v516 = vsel %vm506, %v513, %v515
      %v517 = vrot.slane %v416, 1
      %v518 = vrot.slane %v417, 1
      %v519 = vsel %vm506, %v517, %v518
      %v520 = vrot.slane %v418, 1
      %v521 = vsel %vm506, %v518, %v520
      %v522 = vrot.slane %v419, 1
      %v523 = vrot.slane %v420, 1
      %v524 = vsel %vm506, %v522, %v523
      %v525 = vrot.slane %v421, 1
      %v526 = vsel %vm506, %v523, %v525
      %v527 = vrot.slane %v422, 1
      %v528 = vrot.slane %v423, 1
      %v529 = vsel %vm506, %v527, %v528
      %v530 = vrot.slane %v424, 1
      %v531 = vsel %vm506, %v528, %v530
      %v532 = vrot.slane %v425, 1
      %v533 = vrot.slane %v426, 1
      %v534 = vsel %vm506, %v532, %v533
      %v535 = vrot.slane %v427, 1
      %v536 = vsel %vm506, %v533, %v535
      %v537 = vrot.slane %v428, 1
      %v538 = vrot.slane %v429, 1
      %v539 = vsel %vm506, %v537, %v538
      %v540 = vrot.slane %v430, 1
      %v541 = vsel %vm506, %v538, %v540
      %v542 = vrot.slane %v431, 1
      %v543 = vrot.slane %v432, 1
      %v544 = vsel %vm506, %v542, %v543
      %v545 = vrot.slane %v433, 1
      %v546 = vsel %vm506, %v543, %v545
      %v547 = vrot.slane %v434, 1
      %v548 = vrot.slane %v435, 1
      %v549 = vsel %vm506, %v547, %v548
      %v550 = vrot.slane %v436, 1
      %v551 = vsel %vm506, %v548, %v550
      %v552 = vrot.slane %v437, 1
      %v553 = vrot.slane %v438, 1
      %v554 = vsel %vm506, %v552, %v553
      %v555 = vrot.slane %v439, 1
      %v556 = vsel %vm506, %v553, %v555
      %v557 = vrot.slane %v440, 1
      %v558 = vrot.slane %v441, 1
      %v559 = vsel %vm506, %v557, %v558
      %v560 = vrot.slane %v442, 1
      %v561 = vsel %vm506, %v558, %v560
      %v562 = vrot.slane %v443, 1
      %v563 = vrot.slane %v444, 1
      %v564 = vsel %vm506, %v562, %v563
      %v565 = vrot.slane %v445, 1
      %v566 = vsel %vm506, %v563, %v565
      %v567 = vrot.slane %v446, 1
      %v568 = vrot.slane %v447, 1
      %v569 = vsel %vm506, %v567, %v568
      %v570 = vrot.slane %v448, 1
      %v571 = vsel %vm506, %v568, %v570
      %v572 = vrot.slane %v449, 1
      %v573 = vrot.slane %v450, 1
      %v574 = vsel %vm506, %v572, %v573
      %v575 = vrot.slane %v451, 1
      %v576 = vsel %vm506, %v573, %v575
      %v577 = vrot.slane %v452, 1
      %v578 = vrot.slane %v453, 1
      %v579 = vsel %vm506, %v577, %v578
      %v580 = vrot.slane %v454, 1
      %v581 = vsel %vm506, %v578, %v580
      %v582 = vrot.slane %v455, 1
      %v583 = vrot.slane %v456, 1
      %v584 = vsel %vm506, %v582, %v583
      %v585 = vrot.slane %v457, 1
      %v586 = vsel %vm506, %v583, %v585
      %v619 = vadd.f32 %v329, %v509
      %v620 = vadd.f32 %v330, %v511
      %v621 = vadd.f32 %v331, %v514
      %v622 = vadd.f32 %v332, %v516
      %v623 = vadd.f32 %v333, %v519
      %v624 = vadd.f32 %v334, %v521
      %v625 = vadd.f32 %v335, %v524
      %v626 = vadd.f32 %v336, %v526
      %v627 = vadd.f32 %v337, %v529
      %v628 = vadd.f32 %v338, %v531
      %v629 = vadd.f32 %v339, %v534
      %v630 = vadd.f32 %v340, %v536
      %v631 = vadd.f32 %v341, %v539
      %v632 = vadd.f32 %v342, %v541
      %v633 = vadd.f32 %v343, %v544
      %v634 = vadd.f32 %v344, %v546
      %v635 = vadd.f32 %v345, %v549
      %v636 = vadd.f32 %v346, %v551
      %v637 = vadd.f32 %v347, %v554
      %v638 = vadd.f32 %v348, %v556
      %v639 = vadd.f32 %v349, %v559
      %v640 = vadd.f32 %v350, %v561
      %v641 = vadd.f32 %v351, %v564
      %v642 = vadd.f32 %v352, %v566
      %v643 = vadd.f32 %v353, %v569
      %v644 = vadd.f32 %v354, %v571
      %v645 = vadd.f32 %v355, %v574
      %v646 = vadd.f32 %v356, %v576
      %v647 = vadd.f32 %v357, %v579
      %v648 = vadd.f32 %v358, %v581
      %v649 = vadd.f32 %v359, %v584
      %v650 = vadd.f32 %v360, %v586
      %651 = vst [vmem:[%s217] sm:$0xf] 0
      %652 = vst [vmem:[%s217 + $0x4] sm:$0xf] 0
      %653 = vst [vmem:[%s217 + $0x8] sm:$0x1] 0
      %654 = vst [vmem:[%s217 + $0xc] sm:$0xf] 0
      %655 = vst [vmem:[%s217 + $0x10] sm:$0xf] 0
      %656 = vst [vmem:[%s217 + $0x14] sm:$0x1] 0
      %657 = vst [vmem:[%s217 + $0x18] sm:$0xf] 0
      %658 = vst [vmem:[%s217 + $0x1c] sm:$0xf] 0
      %659 = vst [vmem:[%s217 + $0x20] sm:$0x1] 0
      %660 = vst [vmem:[%s217 + $0x24] sm:$0xf] 0
      %661 = vst [vmem:[%s217 + $0x28] sm:$0xf] 0
      %662 = vst [vmem:[%s217 + $0x2c] sm:$0x1] 0
      %663 = vst [vmem:[%s217 + $0x30] sm:$0xf] 0
      %664 = vst [vmem:[%s217 + $0x34] sm:$0xf] 0
      %665 = vst [vmem:[%s217 + $0x38] sm:$0x1] 0
      %666 = vst [vmem:[%s217 + $0x3c] sm:$0xf] 0
      %667 = vst [vmem:[%s217 + $0x40] sm:$0xf] 0
      %668 = vst [vmem:[%s217 + $0x44] sm:$0x1] 0
      %669 = vst [vmem:[%s217 + $0x48] sm:$0xf] 0
      %670 = vst [vmem:[%s217 + $0x4c] sm:$0xf] 0
      %671 = vst [vmem:[%s217 + $0x50] sm:$0x1] 0
      %672 = vst [vmem:[%s217 + $0x54] sm:$0xf] 0
      %673 = vst [vmem:[%s217 + $0x58] sm:$0xf] 0
      %674 = vst [vmem:[%s217 + $0x5c] sm:$0x1] 0
      %675 = vst [vmem:[%s217 + $0x60] sm:$0xf] 0
      %676 = vst [vmem:[%s217 + $0x64] sm:$0xf] 0
      %677 = vst [vmem:[%s217 + $0x68] sm:$0x1] 0
      %678 = vst [vmem:[%s217 + $0x6c] sm:$0xf] 0
      %679 = vst [vmem:[%s217 + $0x70] sm:$0xf] 0
      %680 = vst [vmem:[%s217 + $0x74] sm:$0x1] 0
      %681 = vst [vmem:[%s217 + $0x78] sm:$0xf] 0
      %682 = vst [vmem:[%s217 + $0x7c] sm:$0xf] 0
      %683 = vst [vmem:[%s217 + $0x80] sm:$0x1] 0
      %684 = vst [vmem:[%s217 + $0x84] sm:$0xf] 0
      %685 = vst [vmem:[%s217 + $0x88] sm:$0xf] 0
      %686 = vst [vmem:[%s217 + $0x8c] sm:$0x1] 0
      %687 = vst [vmem:[%s217 + $0x90] sm:$0xf] 0
      %688 = vst [vmem:[%s217 + $0x94] sm:$0xf] 0
      %689 = vst [vmem:[%s217 + $0x98] sm:$0x1] 0
      %690 = vst [vmem:[%s217 + $0x9c] sm:$0xf] 0
      %691 = vst [vmem:[%s217 + $0xa0] sm:$0xf] 0
      %692 = vst [vmem:[%s217 + $0xa4] sm:$0x1] 0
      %693 = vst [vmem:[%s217 + $0xa8] sm:$0xf] 0
      %694 = vst [vmem:[%s217 + $0xac] sm:$0xf] 0
      %695 = vst [vmem:[%s217 + $0xb0] sm:$0x1] 0
      %696 = vst [vmem:[%s217 + $0xb4] sm:$0xf] 0
      %697 = vst [vmem:[%s217 + $0xb8] sm:$0xf] 0
      %698 = vst [vmem:[%s217 + $0xbc] sm:$0x1] 0
      %699 = vst [vmem:[%s217 + $0xc0] sm:$0xf] 0
      %700 = vst [vmem:[%s217 + $0xc4] sm:$0xf] 0
      %701 = vst [vmem:[%s217 + $0xc8] sm:$0x1] 0
      %702 = vst [vmem:[%s217 + $0xcc] sm:$0xf] 0
      %703 = vst [vmem:[%s217 + $0xd0] sm:$0xf] 0
      %704 = vst [vmem:[%s217 + $0xd4] sm:$0x1] 0
      %v705 = vpack.c.bf16 %v620, %v619
      %v706 = vpack.c.bf16 %v622, %v621
      %v707 = vpack.c.bf16 %v624, %v623
      %v708 = vpack.c.bf16 %v626, %v625
      %v709 = vpack.c.bf16 %v628, %v627
      %v710 = vpack.c.bf16 %v630, %v629
      %v711 = vpack.c.bf16 %v632, %v631
      %v712 = vpack.c.bf16 %v634, %v633
      %v713 = vpack.c.bf16 %v636, %v635
      %v714 = vpack.c.bf16 %v638, %v637
      %v715 = vpack.c.bf16 %v640, %v639
      %v716 = vpack.c.bf16 %v642, %v641
      %v717 = vpack.c.bf16 %v644, %v643
      %v718 = vpack.c.bf16 %v646, %v645
      %v719 = vpack.c.bf16 %v648, %v647
      %v720 = vpack.c.bf16 %v650, %v649
      %v737 = vunpack.c.l.b16 %v705
      %v738 = vunpack.c.h.b16 %v705
      %v739 = vunpack.c.l.b16 %v706
      %v740 = vunpack.c.h.b16 %v706
      %v741 = vunpack.c.l.b16 %v707
      %v742 = vunpack.c.h.b16 %v707
      %v743 = vunpack.c.l.b16 %v708
      %v744 = vunpack.c.h.b16 %v708
      %v745 = vunpack.c.l.b16 %v709
      %v746 = vunpack.c.h.b16 %v709
      %v747 = vunpack.c.l.b16 %v710
      %v748 = vunpack.c.h.b16 %v710
      %v749 = vunpack.c.l.b16 %v711
      %v750 = vunpack.c.h.b16 %v711
      %v751 = vunpack.c.l.b16 %v712
      %v752 = vunpack.c.h.b16 %v712
      %v753 = vunpack.c.l.b16 %v713
      %v754 = vunpack.c.h.b16 %v713
      %v755 = vunpack.c.l.b16 %v714
      %v756 = vunpack.c.h.b16 %v714
      %v757 = vunpack.c.l.b16 %v715
      %v758 = vunpack.c.h.b16 %v715
      %v759 = vunpack.c.l.b16 %v716
      %v760 = vunpack.c.h.b16 %v716
      %v761 = vunpack.c.l.b16 %v717
      %v762 = vunpack.c.h.b16 %v717
      %v763 = vunpack.c.l.b16 %v718
      %v764 = vunpack.c.h.b16 %v718
      %v765 = vunpack.c.l.b16 %v719
      %v766 = vunpack.c.h.b16 %v719
      %v767 = vunpack.c.l.b16 %v720
      %v768 = vunpack.c.h.b16 %v720
      %v769 = vpack.c.b16 %v737, %v737
      %v770 = vpack.c.b16 %v738, %v738
      %v771 = vpack.c.b16 %v739, %v739
      %v772 = vpack.c.b16 %v740, %v740
      %v773 = vpack.c.b16 %v741, %v741
      %v774 = vpack.c.b16 %v742, %v742
      %v775 = vpack.c.b16 %v743, %v743
      %v776 = vpack.c.b16 %v744, %v744
      %v777 = vpack.c.b16 %v745, %v745
      %v778 = vpack.c.b16 %v746, %v746
      %v779 = vpack.c.b16 %v747, %v747
      %v780 = vpack.c.b16 %v748, %v748
      %v781 = vpack.c.b16 %v749, %v749
      %v782 = vpack.c.b16 %v750, %v750
      %v783 = vpack.c.b16 %v751, %v751
      %v784 = vpack.c.b16 %v752, %v752
      %v785 = vpack.c.b16 %v753, %v753
      %v786 = vpack.c.b16 %v754, %v754
      %v787 = vpack.c.b16 %v755, %v755
      %v788 = vpack.c.b16 %v756, %v756
      %v789 = vpack.c.b16 %v757, %v757
      %v790 = vpack.c.b16 %v758, %v758
      %v791 = vpack.c.b16 %v759, %v759
      %v792 = vpack.c.b16 %v760, %v760
      %v793 = vpack.c.b16 %v761, %v761
      %v794 = vpack.c.b16 %v762, %v762
      %v795 = vpack.c.b16 %v763, %v763
      %v796 = vpack.c.b16 %v764, %v764
      %v797 = vpack.c.b16 %v765, %v765
      %v798 = vpack.c.b16 %v766, %v766
      %v799 = vpack.c.b16 %v767, %v767
      %v800 = vpack.c.b16 %v768, %v768
      %vm801 = vsmask.f32 256
      %vm802 = vsmask.f32 4368
      %vm803 = vmor %vm801, %vm802
      %v805 = vshrl.u32 %v769, 16
      %v807 = vrot.slane %v805, 7
      %v808 = vshll.u32 %v769, 16
      %v810 = vor.u32 %v807, %v808
      %v811 = vrot.slane %v807, 4
      %v813 = vshrl.u32 %v770, 16
      %v815 = vrot.slane %v813, 7
      %v816 = vshll.u32 %v770, 16
      %v818 = vor.u32 %v815, %v816
      %v819 = vsel %vm803, %v811, %v818
      %v820 = vrot.slane %v815, 4
      %v822 = vshrl.u32 %v771, 16
      %v824 = vrot.slane %v822, 7
      %v825 = vshll.u32 %v771, 16
      %v827 = vor.u32 %v824, %v825
      %v828 = vrot.slane %v824, 4
      %v830 = vshrl.u32 %v772, 16
      %v832 = vrot.slane %v830, 7
      %v833 = vshll.u32 %v772, 16
      %v835 = vor.u32 %v832, %v833
      %v836 = vsel %vm803, %v828, %v835
      %v837 = vrot.slane %v832, 4
      %v839 = vshrl.u32 %v773, 16
      %v841 = vrot.slane %v839, 7
      %v842 = vshll.u32 %v773, 16
      %v844 = vor.u32 %v841, %v842
      %v845 = vrot.slane %v841, 4
      %v847 = vshrl.u32 %v774, 16
      %v849 = vrot.slane %v847, 7
      %v850 = vshll.u32 %v774, 16
      %v852 = vor.u32 %v849, %v850
      %v853 = vsel %vm803, %v845, %v852
      %v854 = vrot.slane %v849, 4
      %v856 = vshrl.u32 %v775, 16
      %v858 = vrot.slane %v856, 7
      %v859 = vshll.u32 %v775, 16
      %v861 = vor.u32 %v858, %v859
      %v862 = vrot.slane %v858, 4
      %v864 = vshrl.u32 %v776, 16
      %v866 = vrot.slane %v864, 7
      %v867 = vshll.u32 %v776, 16
      %v869 = vor.u32 %v866, %v867
      %v870 = vsel %vm803, %v862, %v869
      %v871 = vrot.slane %v866, 4
      %v873 = vshrl.u32 %v777, 16
      %v875 = vrot.slane %v873, 7
      %v876 = vshll.u32 %v777, 16
      %v878 = vor.u32 %v875, %v876
      %v879 = vrot.slane %v875, 4
      %v881 = vshrl.u32 %v778, 16
      %v883 = vrot.slane %v881, 7
      %v884 = vshll.u32 %v778, 16
      %v886 = vor.u32 %v883, %v884
      %v887 = vsel %vm803, %v879, %v886
      %v888 = vrot.slane %v883, 4
      %v890 = vshrl.u32 %v779, 16
      %v892 = vrot.slane %v890, 7
      %v893 = vshll.u32 %v779, 16
      %v895 = vor.u32 %v892, %v893
      %v896 = vrot.slane %v892, 4
      %v898 = vshrl.u32 %v780, 16
      %v900 = vrot.slane %v898, 7
      %v901 = vshll.u32 %v780, 16
      %v903 = vor.u32 %v900, %v901
      %v904 = vsel %vm803, %v896, %v903
      %v905 = vrot.slane %v900, 4
      %v907 = vshrl.u32 %v781, 16
      %v909 = vrot.slane %v907, 7
      %v910 = vshll.u32 %v781, 16
      %v912 = vor.u32 %v909, %v910
      %v913 = vrot.slane %v909, 4
      %v915 = vshrl.u32 %v782, 16
      %v917 = vrot.slane %v915, 7
      %v918 = vshll.u32 %v782, 16
      %v920 = vor.u32 %v917, %v918
      %v921 = vsel %vm803, %v913, %v920
      %v922 = vrot.slane %v917, 4
      %v924 = vshrl.u32 %v783, 16
      %v926 = vrot.slane %v924, 7
      %v927 = vshll.u32 %v783, 16
      %v929 = vor.u32 %v926, %v927
      %v930 = vrot.slane %v926, 4
      %v932 = vshrl.u32 %v784, 16
      %v934 = vrot.slane %v932, 7
      %v935 = vshll.u32 %v784, 16
      %v937 = vor.u32 %v934, %v935
      %v938 = vsel %vm803, %v930, %v937
      %v939 = vrot.slane %v934, 4
      %v941 = vshrl.u32 %v785, 16
      %v943 = vrot.slane %v941, 7
      %v944 = vshll.u32 %v785, 16
      %v946 = vor.u32 %v943, %v944
      %v947 = vrot.slane %v943, 4
      %v949 = vshrl.u32 %v786, 16
      %v951 = vrot.slane %v949, 7
      %v952 = vshll.u32 %v786, 16
      %v954 = vor.u32 %v951, %v952
      %v955 = vsel %vm803, %v947, %v954
      %v956 = vrot.slane %v951, 4
      %v958 = vshrl.u32 %v787, 16
      %v960 = vrot.slane %v958, 7
      %v961 = vshll.u32 %v787, 16
      %v963 = vor.u32 %v960, %v961
      %v964 = vrot.slane %v960, 4
      %v966 = vshrl.u32 %v788, 16
      %v968 = vrot.slane %v966, 7
      %v969 = vshll.u32 %v788, 16
      %v971 = vor.u32 %v968, %v969
      %v972 = vsel %vm803, %v964, %v971
      %v973 = vrot.slane %v968, 4
      %v975 = vshrl.u32 %v789, 16
      %v977 = vrot.slane %v975, 7
      %v978 = vshll.u32 %v789, 16
      %v980 = vor.u32 %v977, %v978
      %v981 = vrot.slane %v977, 4
      %v983 = vshrl.u32 %v790, 16
      %v985 = vrot.slane %v983, 7
      %v986 = vshll.u32 %v790, 16
      %v988 = vor.u32 %v985, %v986
      %v989 = vsel %vm803, %v981, %v988
      %v990 = vrot.slane %v985, 4
      %v992 = vshrl.u32 %v791, 16
      %v994 = vrot.slane %v992, 7
      %v995 = vshll.u32 %v791, 16
      %v997 = vor.u32 %v994, %v995
      %v998 = vrot.slane %v994, 4
      %v1000 = vshrl.u32 %v792, 16
      %v1002 = vrot.slane %v1000, 7
      %v1003 = vshll.u32 %v792, 16
      %v1005 = vor.u32 %v1002, %v1003
      %v1006 = vsel %vm803, %v998, %v1005
      %v1007 = vrot.slane %v1002, 4
      %v1009 = vshrl.u32 %v793, 16
      %v1011 = vrot.slane %v1009, 7
      %v1012 = vshll.u32 %v793, 16
      %v1014 = vor.u32 %v1011, %v1012
      %v1015 = vrot.slane %v1011, 4
      %v1017 = vshrl.u32 %v794, 16
      %v1019 = vrot.slane %v1017, 7
      %v1020 = vshll.u32 %v794, 16
      %v1022 = vor.u32 %v1019, %v1020
      %v1023 = vsel %vm803, %v1015, %v1022
      %v1024 = vrot.slane %v1019, 4
      %v1026 = vshrl.u32 %v795, 16
      %v1028 = vrot.slane %v1026, 7
      %v1029 = vshll.u32 %v795, 16
      %v1031 = vor.u32 %v1028, %v1029
      %v1032 = vrot.slane %v1028, 4
      %v1034 = vshrl.u32 %v796, 16
      %v1036 = vrot.slane %v1034, 7
      %v1037 = vshll.u32 %v796, 16
      %v1039 = vor.u32 %v1036, %v1037
      %v1040 = vsel %vm803, %v1032, %v1039
      %v1041 = vrot.slane %v1036, 4
      %v1043 = vshrl.u32 %v797, 16
      %v1045 = vrot.slane %v1043, 7
      %v1046 = vshll.u32 %v797, 16
      %v1048 = vor.u32 %v1045, %v1046
      %v1049 = vrot.slane %v1045, 4
      %v1051 = vshrl.u32 %v798, 16
      %v1053 = vrot.slane %v1051, 7
      %v1054 = vshll.u32 %v798, 16
      %v1056 = vor.u32 %v1053, %v1054
      %v1057 = vsel %vm803, %v1049, %v1056
      %v1058 = vrot.slane %v1053, 4
      %v1060 = vshrl.u32 %v799, 16
      %v1062 = vrot.slane %v1060, 7
      %v1063 = vshll.u32 %v799, 16
      %v1065 = vor.u32 %v1062, %v1063
      %v1066 = vrot.slane %v1062, 4
      %v1068 = vshrl.u32 %v800, 16
      %v1070 = vrot.slane %v1068, 7
      %v1071 = vshll.u32 %v800, 16
      %v1073 = vor.u32 %v1070, %v1071
      %v1074 = vsel %vm803, %v1066, %v1073
      %v1075 = vrot.slane %v1070, 4
      %s1124 = scalar_lea.vmem %s217, 12
      %vm1125 = vcmask 1043456
      %vm1126 = vsmask.f32 7938
      %vm1127 = vmand %vm1125, %vm1126
      %v1128 = vld [vmem:[%s1124] sm:$0xf]
      %v1129 = vsel %vm1127, %v810, %v1128
      %1130 = vst [vmem:[%s1124] sm:$0xf] %v1129
      %1131 = vst [vmem:[%s1124 + $0x4] sm:$0xf] %v819
      %vm1132 = vcmask 1040384
      %vm1133 = vmand %vm1132, %vm801
      %v1134 = vld [vmem:[%s1124 + $0x8] sm:$0x1]
      %v1135 = vsel %vm1133, %v820, %v1134
      %1136 = vst [vmem:[%s1124 + $0x8] sm:$0x1] %v1135
      %v1137 = vld [vmem:[%s1124 + $0xc] sm:$0xf]
      %v1138 = vsel %vm1127, %v827, %v1137
      %1139 = vst [vmem:[%s1124 + $0xc] sm:$0xf] %v1138
      %1140 = vst [vmem:[%s1124 + $0x10] sm:$0xf] %v836
      %v1141 = vld [vmem:[%s1124 + $0x14] sm:$0x1]
      %v1142 = vsel %vm1133, %v837, %v1141
      %1143 = vst [vmem:[%s1124 + $0x14] sm:$0x1] %v1142
      %v1144 = vld [vmem:[%s1124 + $0x18] sm:$0xf]
      %v1145 = vsel %vm1127, %v844, %v1144
      %1146 = vst [vmem:[%s1124 + $0x18] sm:$0xf] %v1145
      %1147 = vst [vmem:[%s1124 + $0x1c] sm:$0xf] %v853
      %v1148 = vld [vmem:[%s1124 + $0x20] sm:$0x1]
      %v1149 = vsel %vm1133, %v854, %v1148
      %1150 = vst [vmem:[%s1124 + $0x20] sm:$0x1] %v1149
      %v1151 = vld [vmem:[%s1124 + $0x24] sm:$0xf]
      %v1152 = vsel %vm1127, %v861, %v1151
      %1153 = vst [vmem:[%s1124 + $0x24] sm:$0xf] %v1152
      %1154 = vst [vmem:[%s1124 + $0x28] sm:$0xf] %v870
      %v1155 = vld [vmem:[%s1124 + $0x2c] sm:$0x1]
      %v1156 = vsel %vm1133, %v871, %v1155
      %1157 = vst [vmem:[%s1124 + $0x2c] sm:$0x1] %v1156
      %v1158 = vld [vmem:[%s1124 + $0x30] sm:$0xf]
      %v1159 = vsel %vm1127, %v878, %v1158
      %1160 = vst [vmem:[%s1124 + $0x30] sm:$0xf] %v1159
      %1161 = vst [vmem:[%s1124 + $0x34] sm:$0xf] %v887
      %v1162 = vld [vmem:[%s1124 + $0x38] sm:$0x1]
      %v1163 = vsel %vm1133, %v888, %v1162
      %1164 = vst [vmem:[%s1124 + $0x38] sm:$0x1] %v1163
      %v1165 = vld [vmem:[%s1124 + $0x3c] sm:$0xf]
      %v1166 = vsel %vm1127, %v895, %v1165
      %1167 = vst [vmem:[%s1124 + $0x3c] sm:$0xf] %v1166
      %1168 = vst [vmem:[%s1124 + $0x40] sm:$0xf] %v904
      %v1169 = vld [vmem:[%s1124 + $0x44] sm:$0x1]
      %v1170 = vsel %vm1133, %v905, %v1169
      %1171 = vst [vmem:[%s1124 + $0x44] sm:$0x1] %v1170
      %v1172 = vld [vmem:[%s1124 + $0x48] sm:$0xf]
      %v1173 = vsel %vm1127, %v912, %v1172
      %1174 = vst [vmem:[%s1124 + $0x48] sm:$0xf] %v1173
      %1175 = vst [vmem:[%s1124 + $0x4c] sm:$0xf] %v921
      %v1176 = vld [vmem:[%s1124 + $0x50] sm:$0x1]
      %v1177 = vsel %vm1133, %v922, %v1176
      %1178 = vst [vmem:[%s1124 + $0x50] sm:$0x1] %v1177
      %v1179 = vld [vmem:[%s1124 + $0x54] sm:$0xf]
      %v1180 = vsel %vm1127, %v929, %v1179
      %1181 = vst [vmem:[%s1124 + $0x54] sm:$0xf] %v1180
      %1182 = vst [vmem:[%s1124 + $0x58] sm:$0xf] %v938
      %v1183 = vld [vmem:[%s1124 + $0x5c] sm:$0x1]
      %v1184 = vsel %vm1133, %v939, %v1183
      %1185 = vst [vmem:[%s1124 + $0x5c] sm:$0x1] %v1184
      %v1186 = vld [vmem:[%s1124 + $0x60] sm:$0xf]
      %v1187 = vsel %vm1127, %v946, %v1186
      %1188 = vst [vmem:[%s1124 + $0x60] sm:$0xf] %v1187
      %1189 = vst [vmem:[%s1124 + $0x64] sm:$0xf] %v955
      %v1190 = vld [vmem:[%s1124 + $0x68] sm:$0x1]
      %v1191 = vsel %vm1133, %v956, %v1190
      %1192 = vst [vmem:[%s1124 + $0x68] sm:$0x1] %v1191
      %v1193 = vld [vmem:[%s1124 + $0x6c] sm:$0xf]
      %v1194 = vsel %vm1127, %v963, %v1193
      %1195 = vst [vmem:[%s1124 + $0x6c] sm:$0xf] %v1194
      %1196 = vst [vmem:[%s1124 + $0x70] sm:$0xf] %v972
      %v1197 = vld [vmem:[%s1124 + $0x74] sm:$0x1]
      %v1198 = vsel %vm1133, %v973, %v1197
      %1199 = vst [vmem:[%s1124 + $0x74] sm:$0x1] %v1198
      %v1200 = vld [vmem:[%s1124 + $0x78] sm:$0xf]
      %v1201 = vsel %vm1127, %v980, %v1200
      %1202 = vst [vmem:[%s1124 + $0x78] sm:$0xf] %v1201
      %1203 = vst [vmem:[%s1124 + $0x7c] sm:$0xf] %v989
      %v1204 = vld [vmem:[%s1124 + $0x80] sm:$0x1]
      %v1205 = vsel %vm1133, %v990, %v1204
      %1206 = vst [vmem:[%s1124 + $0x80] sm:$0x1] %v1205
      %v1207 = vld [vmem:[%s1124 + $0x84] sm:$0xf]
      %v1208 = vsel %vm1127, %v997, %v1207
      %1209 = vst [vmem:[%s1124 + $0x84] sm:$0xf] %v1208
      %1210 = vst [vmem:[%s1124 + $0x88] sm:$0xf] %v1006
      %v1211 = vld [vmem:[%s1124 + $0x8c] sm:$0x1]
      %v1212 = vsel %vm1133, %v1007, %v1211
      %1213 = vst [vmem:[%s1124 + $0x8c] sm:$0x1] %v1212
      %v1214 = vld [vmem:[%s1124 + $0x90] sm:$0xf]
      %v1215 = vsel %vm1127, %v1014, %v1214
      %1216 = vst [vmem:[%s1124 + $0x90] sm:$0xf] %v1215
      %1217 = vst [vmem:[%s1124 + $0x94] sm:$0xf] %v1023
      %v1218 = vld [vmem:[%s1124 + $0x98] sm:$0x1]
      %v1219 = vsel %vm1133, %v1024, %v1218
      %1220 = vst [vmem:[%s1124 + $0x98] sm:$0x1] %v1219
      %v1221 = vld [vmem:[%s1124 + $0x9c] sm:$0xf]
      %v1222 = vsel %vm1127, %v1031, %v1221
      %1223 = vst [vmem:[%s1124 + $0x9c] sm:$0xf] %v1222
      %1224 = vst [vmem:[%s1124 + $0xa0] sm:$0xf] %v1040
      %v1225 = vld [vmem:[%s1124 + $0xa4] sm:$0x1]
      %v1226 = vsel %vm1133, %v1041, %v1225
      %1227 = vst [vmem:[%s1124 + $0xa4] sm:$0x1] %v1226
      %v1228 = vld [vmem:[%s1124 + $0xa8] sm:$0xf]
      %v1229 = vsel %vm1127, %v1048, %v1228
      %1230 = vst [vmem:[%s1124 + $0xa8] sm:$0xf] %v1229
      %1231 = vst [vmem:[%s1124 + $0xac] sm:$0xf] %v1057
      %v1232 = vld [vmem:[%s1124 + $0xb0] sm:$0x1]
      %v1233 = vsel %vm1133, %v1058, %v1232
      %1234 = vst [vmem:[%s1124 + $0xb0] sm:$0x1] %v1233
      %v1235 = vld [vmem:[%s1124 + $0xb4] sm:$0xf]
      %v1236 = vsel %vm1127, %v1065, %v1235
      %1237 = vst [vmem:[%s1124 + $0xb4] sm:$0xf] %v1236
      %1238 = vst [vmem:[%s1124 + $0xb8] sm:$0xf] %v1074
      %v1239 = vld [vmem:[%s1124 + $0xbc] sm:$0x1]
      %v1240 = vsel %vm1133, %v1075, %v1239
      %1241 = vst [vmem:[%s1124 + $0xbc] sm:$0x1] %v1240
      %p1242 = scmp.lt.s32.totalorder %s15, 1
      %s1243 = scalar_select %p1242, %s15, 1
      %s1244 = smul.addr %s1243, 54
      %s1245 = smul.addr %s1244, 4
      %s1246 = scalar_lea.vmem %s4, %s1245
      // Predicated region
      $region37: #{resnet_encoder_forward.15} parent=35 // pred_check
        %p1247 = pneg %p127
      $region38: #{resnet_encoder_forward.15} parent=35 // pred_check_branch
        %1249 = sbr.rel (%p1247) target = $region40
      $region39: #{resnet_encoder_forward.15} parent=35 // pred_region
        _
      $region40: #{resnet_encoder_forward.15} parent=35 // pred_fallthru
        _
    $region36: #{resnet_encoder_forward.15} parent=5 // pred_fallthru
      _
    %p1250 = scmp.le.s32.totalorder 2, %s10
    // Predicated region
    $region41: #{resnet_encoder_forward.15} parent=5 // pred_check
      %p1251 = pneg %p1250
    $region42: #{resnet_encoder_forward.15} parent=5 // pred_check_branch
      %1253 = sbr.rel (%p1251) target = $region44
    $region43: #{resnet_encoder_forward.15} parent=5 // pred_region
      %s1254 = ssub.s32 %s10, 2
      // Predicated region
      $region45: #{resnet_encoder_forward.15} parent=43 // pred_check
        %p1255 = pneg %p133
      $region46: #{resnet_encoder_forward.15} parent=43 // pred_check_branch
        %1257 = sbr.rel (%p1255) target = $region48
      $region47: #{resnet_encoder_forward.15} parent=43 // pred_region
        %p1258 = scmp.lt.s32.totalorder %s16, 1
        %s1259 = scalar_select %p1258, %s16, 1
        %s1260 = smul.addr %s1259, 54
        %s1261 = smul.addr %s1260, 4
        %s1262 = scalar_lea.vmem %s4, %s1261
      $region48: #{resnet_encoder_forward.15} parent=43 // pred_fallthru
        _
    $region44: #{resnet_encoder_forward.15} parent=5 // pred_fallthru
      _
  $region6: #{resnet_encoder_forward.15} parent=0 // loop_footer
    %s14 = sadd.s32 1, %s10
  $region7: #{resnet_encoder_forward.15} parent=0 // loop_footer_branch
    %9 = sbr.rel target = $region3
  $region8: #{resnet_encoder_forward.15} parent=0 // loop_exit
    _

// kernel: resnet_encoder_forward.10
$region0: #{resnet_encoder_forward.10}
  #allocation0 [shape = 'u32[]', space=smem, size = 0x4, offset = 0x4, fixed_abs, tag = 'smem constant byte address 0x4 - core index']
  #allocation1 [shape = 'u32[144,128]{1,0:T(1,128)}', space=vmem, size = 0x12000, scoped, tag = 'internal scratch']
  %s0 = inlined_call_operand.vmem [shape: bf16[2,18,18,128], index: 0, kind: input, shape index: {}]
  %s1 = inlined_call_operand.vmem [shape: bf16[3,384,128], index: 1, kind: input, shape index: {}]
  %s2 = inlined_call_operand.vmem [shape: bf16[2,16,16,128], index: 2, kind: output, shape index: {0}]
  %s3 = inlined_call_operand.vmem [shape: f32[1,8,128], index: 3, kind: output, shape index: {1}]
  %4 = xla_tuple %s2, %s3
  %s5 = sld [smem:[#allocation0]]
  $region26: #{resnet_encoder_forward.10} parent=0
    _
  %s7 = ssub.s32 1, %s5
  %s8 = scalar_select 0, %s7, %s5
  // Predicated region
  $region2: #{resnet_encoder_forward.10} parent=0 // pred_check
    _
  $region3: #{resnet_encoder_forward.10} parent=0 // pred_check_branch
    %10 = sbr.rel (0) target = $region5
  $region4: #{resnet_encoder_forward.10} parent=0 // pred_region
    _
  $region5: #{resnet_encoder_forward.10} parent=0 // pred_fallthru
    _
  // Predicated region
  $region6: #{resnet_encoder_forward.10} parent=0 // pred_check
    _
  $region7: #{resnet_encoder_forward.10} parent=0 // pred_check_branch
    %12 = sbr.rel (0) target = $region9
  $region8: #{resnet_encoder_forward.10} parent=0 // pred_region
    _
  $region9: #{resnet_encoder_forward.10} parent=0 // pred_fallthru
    _
  %v14 = vld [vmem:[%s0] sm:$0xf]
  %v15 = vld [vmem:[%s0 + $0x4] sm:$0xf]
  %v16 = vld [vmem:[%s0 + $0x8] sm:$0x1]
  %v17 = vld [vmem:[%s0 + $0xc] sm:$0xf]
  %v18 = vld [vmem:[%s0 + $0x10] sm:$0xf]
  %v19 = vld [vmem:[%s0 + $0x14] sm:$0x1]
  %v20 = vld [vmem:[%s0 + $0x18] sm:$0xf]
  %v21 = vld [vmem:[%s0 + $0x1c] sm:$0xf]
  %v22 = vld [vmem:[%s0 + $0x20] sm:$0x1]
  %v23 = vld [vmem:[%s0 + $0x24] sm:$0xf]
  %v24 = vld [vmem:[%s0 + $0x28] sm:$0xf]
  %v25 = vld [vmem:[%s0 + $0x2c] sm:$0x1]
  %v26 = vld [vmem:[%s0 + $0x30] sm:$0xf]
  %v27 = vld [vmem:[%s0 + $0x34] sm:$0xf]
  %v28 = vld [vmem:[%s0 + $0x38] sm:$0x1]
  %v29 = vld [vmem:[%s0 + $0x3c] sm:$0xf]
  %v30 = vld [vmem:[%s0 + $0x40] sm:$0xf]
  %v31 = vld [vmem:[%s0 + $0x44] sm:$0x1]
  %v32 = vld [vmem:[%s0 + $0x48] sm:$0xf]
  %v33 = vld [vmem:[%s0 + $0x4c] sm:$0xf]
  %v34 = vld [vmem:[%s0 + $0x50] sm:$0x1]
  %v35 = vld [vmem:[%s0 + $0x54] sm:$0xf]
  %v36 = vld [vmem:[%s0 + $0x58] sm:$0xf]
  %v37 = vld [vmem:[%s0 + $0x5c] sm:$0x1]
  %v54 = vunpack.c.l.b16 %v14
  %v55 = vunpack.c.l.b16 %v15
  %v56 = vunpack.c.l.b16 %v17
  %v57 = vunpack.c.l.b16 %v18
  %v58 = vunpack.c.l.b16 %v20
  %v59 = vunpack.c.l.b16 %v21
  %v60 = vunpack.c.l.b16 %v23
  %v61 = vunpack.c.l.b16 %v24
  %v62 = vunpack.c.l.b16 %v26
  %v63 = vunpack.c.l.b16 %v27
  %v64 = vunpack.c.l.b16 %v29
  %v65 = vunpack.c.l.b16 %v30
  %v66 = vunpack.c.l.b16 %v32
  %v67 = vunpack.c.l.b16 %v33
  %v68 = vunpack.c.l.b16 %v35
  %v69 = vunpack.c.l.b16 %v36
  %v70 = vpack.c.b16 %v55, %v54
  %v71 = vpack.c.b16 %v57, %v56
  %v72 = vpack.c.b16 %v59, %v58
  %v73 = vpack.c.b16 %v61, %v60
  %v74 = vpack.c.b16 %v63, %v62
  %v75 = vpack.c.b16 %v65, %v64
  %v76 = vpack.c.b16 %v67, %v66
  %v77 = vpack.c.b16 %v69, %v68
  %v94 = vunpack.c.l.b16 %v16
  %v95 = vunpack.c.l.b16 %v19
  %v96 = vunpack.c.l.b16 %v22
  %v97 = vunpack.c.l.b16 %v25
  %v98 = vunpack.c.l.b16 %v28
  %v99 = vunpack.c.l.b16 %v31
  %v100 = vunpack.c.l.b16 %v34
  %v101 = vunpack.c.l.b16 %v37
  %v102 = vpack.c.b16 %v94, %v94
  %v103 = vpack.c.b16 %v95, %v95
  %v104 = vpack.c.b16 %v96, %v96
  %v105 = vpack.c.b16 %v97, %v97
  %v106 = vpack.c.b16 %v98, %v98
  %v107 = vpack.c.b16 %v99, %v99
  %v108 = vpack.c.b16 %v100, %v100
  %v109 = vpack.c.b16 %v101, %v101
  %vm110 = vsmask.f32 7424
  %v112 = vshrl.u32 %v70, 16
  %v114 = vshll.u32 %v70, 16
  %v116 = vrot.slane %v114, 1
  %v117 = vor.u32 %v112, %v116
  %v119 = vshll.u32 %v102, 16
  %v121 = vrot.slane %v119, 1
  %v122 = vsel %vm110, %v117, %v121
  %v124 = vshrl.u32 %v71, 16
  %v126 = vshll.u32 %v71, 16
  %v128 = vrot.slane %v126, 1
  %v129 = vor.u32 %v124, %v128
  %v131 = vshll.u32 %v103, 16
  %v133 = vrot.slane %v131, 1
  %v134 = vsel %vm110, %v129, %v133
  %v136 = vshrl.u32 %v72, 16
  %v138 = vshll.u32 %v72, 16
  %v140 = vrot.slane %v138, 1
  %v141 = vor.u32 %v136, %v140
  %v143 = vshll.u32 %v104, 16
  %v145 = vrot.slane %v143, 1
  %v146 = vsel %vm110, %v141, %v145
  %v148 = vshrl.u32 %v73, 16
  %v150 = vshll.u32 %v73, 16
  %v152 = vrot.slane %v150, 1
  %v153 = vor.u32 %v148, %v152
  %v155 = vshll.u32 %v105, 16
  %v157 = vrot.slane %v155, 1
  %v158 = vsel %vm110, %v153, %v157
  %v160 = vshrl.u32 %v74, 16
  %v162 = vshll.u32 %v74, 16
  %v164 = vrot.slane %v162, 1
  %v165 = vor.u32 %v160, %v164
  %v167 = vshll.u32 %v106, 16
  %v169 = vrot.slane %v167, 1
  %v170 = vsel %vm110, %v165, %v169
  %v172 = vshrl.u32 %v75, 16
  %v174 = vshll.u32 %v75, 16
  %v176 = vrot.slane %v174, 1
  %v177 = vor.u32 %v172, %v176
  %v179 = vshll.u32 %v107, 16
  %v181 = vrot.slane %v179, 1
  %v182 = vsel %vm110, %v177, %v181
  %v184 = vshrl.u32 %v76, 16
  %v186 = vshll.u32 %v76, 16
  %v188 = vrot.slane %v186, 1
  %v189 = vor.u32 %v184, %v188
  %v191 = vshll.u32 %v108, 16
  %v193 = vrot.slane %v191, 1
  %v194 = vsel %vm110, %v189, %v193
  %v196 = vshrl.u32 %v77, 16
  %v198 = vshll.u32 %v77, 16
  %v200 = vrot.slane %v198, 1
  %v201 = vor.u32 %v196, %v200
  %v203 = vshll.u32 %v109, 16
  %v205 = vrot.slane %v203, 1
  %v206 = vsel %vm110, %v201, %v205
  %vm215 = vcmask 1046528
  %v216 = vrot.slane %v70, 1
  %v217 = vrot.slane %v102, 1
  %v218 = vsel %vm215, %v216, %v217
  %v219 = vrot.slane %v71, 1
  %v220 = vrot.slane %v103, 1
  %v221 = vsel %vm215, %v219, %v220
  %v222 = vrot.slane %v72, 1
  %v223 = vrot.slane %v104, 1
  %v224 = vsel %vm215, %v222, %v223
  %v225 = vrot.slane %v73, 1
  %v226 = vrot.slane %v105, 1
  %v227 = vsel %vm215, %v225, %v226
  %v228 = vrot.slane %v74, 1
  %v229 = vrot.slane %v106, 1
  %v230 = vsel %vm215, %v228, %v229
  %v231 = vrot.slane %v75, 1
  %v232 = vrot.slane %v107, 1
  %v233 = vsel %vm215, %v231, %v232
  %v234 = vrot.slane %v76, 1
  %v235 = vrot.slane %v108, 1
  %v236 = vsel %vm215, %v234, %v235
  %v237 = vrot.slane %v77, 1
  %v238 = vrot.slane %v109, 1
  %v239 = vsel %vm215, %v237, %v238
  %v248 = vld [vmem:[%s1] sm:$0xf]
  %v249 = vld [vmem:[%s1 + $0x4] sm:$0xf]
  %v250 = vld [vmem:[%s1 + $0x8] sm:$0xf]
  %v251 = vld [vmem:[%s1 + $0xc] sm:$0xf]
  %v252 = vld [vmem:[%s1 + $0x10] sm:$0xf]
  %v253 = vld [vmem:[%s1 + $0x14] sm:$0xf]
  %v254 = vld [vmem:[%s1 + $0x18] sm:$0xf]
  %v255 = vld [vmem:[%s1 + $0x1c] sm:$0xf]
  %v256 = vld [vmem:[%s1 + $0x20] sm:$0xf]
  %v257 = vld [vmem:[%s1 + $0x24] sm:$0xf]
  %v258 = vld [vmem:[%s1 + $0x28] sm:$0xf]
  %v259 = vld [vmem:[%s1 + $0x2c] sm:$0xf]
  %v260 = vld [vmem:[%s1 + $0x30] sm:$0xf]
  %v261 = vld [vmem:[%s1 + $0x34] sm:$0xf]
  %v262 = vld [vmem:[%s1 + $0x38] sm:$0xf]
  %v263 = vld [vmem:[%s1 + $0x3c] sm:$0xf]
  %v264 = vld [vmem:[%s1 + $0x40] sm:$0xf]
  %v265 = vld [vmem:[%s1 + $0x44] sm:$0xf]
  %v266 = vld [vmem:[%s1 + $0x48] sm:$0xf]
  %v267 = vld [vmem:[%s1 + $0x4c] sm:$0xf]
  %v268 = vld [vmem:[%s1 + $0x50] sm:$0xf]
  %v269 = vld [vmem:[%s1 + $0x54] sm:$0xf]
  %v270 = vld [vmem:[%s1 + $0x58] sm:$0xf]
  %v271 = vld [vmem:[%s1 + $0x5c] sm:$0xf]
  %v272 = vld [vmem:[%s1 + $0x60] sm:$0xf]
  %v273 = vld [vmem:[%s1 + $0x64] sm:$0xf]
  %v274 = vld [vmem:[%s1 + $0x68] sm:$0xf]
  %v275 = vld [vmem:[%s1 + $0x6c] sm:$0xf]
  %v276 = vld [vmem:[%s1 + $0x70] sm:$0xf]
  %v277 = vld [vmem:[%s1 + $0x74] sm:$0xf]
  %v278 = vld [vmem:[%s1 + $0x78] sm:$0xf]
  %v279 = vld [vmem:[%s1 + $0x7c] sm:$0xf]
  %v280 = vld [vmem:[%s1 + $0x80] sm:$0xf]
  %v281 = vld [vmem:[%s1 + $0x84] sm:$0xf]
  %v282 = vld [vmem:[%s1 + $0x88] sm:$0xf]
  %v283 = vld [vmem:[%s1 + $0x8c] sm:$0xf]
  %v284 = vld [vmem:[%s1 + $0x90] sm:$0xf]
  %v285 = vld [vmem:[%s1 + $0x94] sm:$0xf]
  %v286 = vld [vmem:[%s1 + $0x98] sm:$0xf]
  %v287 = vld [vmem:[%s1 + $0x9c] sm:$0xf]
  %v288 = vld [vmem:[%s1 + $0xa0] sm:$0xf]
  %v289 = vld [vmem:[%s1 + $0xa4] sm:$0xf]
  %v290 = vld [vmem:[%s1 + $0xa8] sm:$0xf]
  %v291 = vld [vmem:[%s1 + $0xac] sm:$0xf]
  %v292 = vld [vmem:[%s1 + $0xb0] sm:$0xf]
  %v293 = vld [vmem:[%s1 + $0xb4] sm:$0xf]
  %v294 = vld [vmem:[%s1 + $0xb8] sm:$0xf]
  %v295 = vld [vmem:[%s1 + $0xbc] sm:$0xf]
  %s296 = scalar_lea.vmem %s0, 12
  %v297 = vld [vmem:[%s296] sm:$0xf]
  %v298 = vld [vmem:[%s296 + $0x4] sm:$0xf]
  %v299 = vld [vmem:[%s296 + $0x8] sm:$0x1]
  %v300 = vld [vmem:[%s296 + $0xc] sm:$0xf]
  %v301 = vld [vmem:[%s296 + $0x10] sm:$0xf]
  %v302 = vld [vmem:[%s296 + $0x14] sm:$0x1]
  %v303 = vld [vmem:[%s296 + $0x18] sm:$0xf]
  %v304 = vld [vmem:[%s296 + $0x1c] sm:$0xf]
  %v305 = vld [vmem:[%s296 + $0x20] sm:$0x1]
  %v306 = vld [vmem:[%s296 + $0x24] sm:$0xf]
  %v307 = vld [vmem:[%s296 + $0x28] sm:$0xf]
  %v308 = vld [vmem:[%s296 + $0x2c] sm:$0x1]
  %v309 = vld [vmem:[%s296 + $0x30] sm:$0xf]
  %v310 = vld [vmem:[%s296 + $0x34] sm:$0xf]
  %v311 = vld [vmem:[%s296 + $0x38] sm:$0x1]
  %v312 = vld [vmem:[%s296 + $0x3c] sm:$0xf]
  %v313 = vld [vmem:[%s296 + $0x40] sm:$0xf]
  %v314 = vld [vmem:[%s296 + $0x44] sm:$0x1]
  %v315 = vld [vmem:[%s296 + $0x48] sm:$0xf]
  %v316 = vld [vmem:[%s296 + $0x4c] sm:$0xf]
  %v317 = vld [vmem:[%s296 + $0x50] sm:$0x1]
  %v318 = vld [vmem:[%s296 + $0x54] sm:$0xf]
  %v319 = vld [vmem:[%s296 + $0x58] sm:$0xf]
  %v320 = vld [vmem:[%s296 + $0x5c] sm:$0x1]
  %v337 = vunpack.c.l.b16 %v297
  %v338 = vunpack.c.l.b16 %v298
  %v339 = vunpack.c.l.b16 %v300
  %v340 = vunpack.c.l.b16 %v301
  %v341 = vunpack.c.l.b16 %v303
  %v342 = vunpack.c.l.b16 %v304
  %v343 = vunpack.c.l.b16 %v306
  %v344 = vunpack.c.l.b16 %v307
  %v345 = vunpack.c.l.b16 %v309
  %v346 = vunpack.c.l.b16 %v310
  %v347 = vunpack.c.l.b16 %v312
  %v348 = vunpack.c.l.b16 %v313
  %v349 = vunpack.c.l.b16 %v315
  %v350 = vunpack.c.l.b16 %v316
  %v351 = vunpack.c.l.b16 %v318
  %v352 = vunpack.c.l.b16 %v319
  %v353 = vpack.c.b16 %v338, %v337
  %v354 = vpack.c.b16 %v340, %v339
  %v355 = vpack.c.b16 %v342, %v341
  %v356 = vpack.c.b16 %v344, %v343
  %v357 = vpack.c.b16 %v346, %v345
  %v358 = vpack.c.b16 %v348, %v347
  %v359 = vpack.c.b16 %v350, %v349
  %v360 = vpack.c.b16 %v352, %v351
  %v377 = vunpack.c.l.b16 %v299
  %v378 = vunpack.c.l.b16 %v302
  %v379 = vunpack.c.l.b16 %v305
  %v380 = vunpack.c.l.b16 %v308
  %v381 = vunpack.c.l.b16 %v311
  %v382 = vunpack.c.l.b16 %v314
  %v383 = vunpack.c.l.b16 %v317
  %v384 = vunpack.c.l.b16 %v320
  %v385 = vpack.c.b16 %v377, %v377
  %v386 = vpack.c.b16 %v378, %v378
  %v387 = vpack.c.b16 %v379, %v379
  %v388 = vpack.c.b16 %v380, %v380
  %v389 = vpack.c.b16 %v381, %v381
  %v390 = vpack.c.b16 %v382, %v382
  %v391 = vpack.c.b16 %v383, %v383
  %v392 = vpack.c.b16 %v384, %v384
  %v394 = vshrl.u32 %v353, 16
  %v396 = vshll.u32 %v353, 16
  %v398 = vrot.slane %v396, 1
  %v399 = vor.u32 %v394, %v398
  %v401 = vshll.u32 %v385, 16
  %v403 = vrot.slane %v401, 1
  %v404 = vsel %vm110, %v399, %v403
  %v406 = vshrl.u32 %v354, 16
  %v408 = vshll.u32 %v354, 16
  %v410 = vrot.slane %v408, 1
  %v411 = vor.u32 %v406, %v410
  %v413 = vshll.u32 %v386, 16
  %v415 = vrot.slane %v413, 1
  %v416 = vsel %vm110, %v411, %v415
  %v418 = vshrl.u32 %v355, 16
  %v420 = vshll.u32 %v355, 16
  %v422 = vrot.slane %v420, 1
  %v423 = vor.u32 %v418, %v422
  %v425 = vshll.u32 %v387, 16
  %v427 = vrot.slane %v425, 1
  %v428 = vsel %vm110, %v423, %v427
  %v430 = vshrl.u32 %v356, 16
  %v432 = vshll.u32 %v356, 16
  %v434 = vrot.slane %v432, 1
  %v435 = vor.u32 %v430, %v434
  %v437 = vshll.u32 %v388, 16
  %v439 = vrot.slane %v437, 1
  %v440 = vsel %vm110, %v435, %v439
  %v442 = vshrl.u32 %v357, 16
  %v444 = vshll.u32 %v357, 16
  %v446 = vrot.slane %v444, 1
  %v447 = vor.u32 %v442, %v446
  %v449 = vshll.u32 %v389, 16
  %v451 = vrot.slane %v449, 1
  %v452 = vsel %vm110, %v447, %v451
  %v454 = vshrl.u32 %v358, 16
  %v456 = vshll.u32 %v358, 16
  %v458 = vrot.slane %v456, 1
  %v459 = vor.u32 %v454, %v458
  %v461 = vshll.u32 %v390, 16
  %v463 = vrot.slane %v461, 1
  %v464 = vsel %vm110, %v459, %v463
  %v466 = vshrl.u32 %v359, 16
  %v468 = vshll.u32 %v359, 16
  %v470 = vrot.slane %v468, 1
  %v471 = vor.u32 %v466, %v470
  %v473 = vshll.u32 %v391, 16
  %v475 = vrot.slane %v473, 1
  %v476 = vsel %vm110, %v471, %v475
  %v478 = vshrl.u32 %v360, 16
  %v480 = vshll.u32 %v360, 16
  %v482 = vrot.slane %v480, 1
  %v483 = vor.u32 %v478, %v482
  %v485 = vshll.u32 %v392, 16
  %v487 = vrot.slane %v485, 1
  %v488 = vsel %vm110, %v483, %v487
  %v497 = vrot.slane %v353, 1
  %v498 = vrot.slane %v385, 1
  %v499 = vsel %vm215, %v497, %v498
  %v500 = vrot.slane %v354, 1
  %v501 = vrot.slane %v386, 1
  %v502 = vsel %vm215, %v500, %v501
  %v503 = vrot.slane %v355, 1
  %v504 = vrot.slane %v387, 1
  %v505 = vsel %vm215, %v503, %v504
  %v506 = vrot.slane %v356, 1
  %v507 = vrot.slane %v388, 1
  %v508 = vsel %vm215, %v506, %v507
  %v509 = vrot.slane %v357, 1
  %v510 = vrot.slane %v389, 1
  %v511 = vsel %vm215, %v509, %v510
  %v512 = vrot.slane %v358, 1
  %v513 = vrot.slane %v390, 1
  %v514 = vsel %vm215, %v512, %v513
  %v515 = vrot.slane %v359, 1
  %v516 = vrot.slane %v391, 1
  %v517 = vsel %vm215, %v515, %v516
  %v518 = vrot.slane %v360, 1
  %v519 = vrot.slane %v392, 1
  %v520 = vsel %vm215, %v518, %v519
  %s529 = scalar_lea.vmem %s1, 192
  %v530 = vld [vmem:[%s529] sm:$0xf]
  %v531 = vld [vmem:[%s529 + $0x4] sm:$0xf]
  %v532 = vld [vmem:[%s529 + $0x8] sm:$0xf]
  %v533 = vld [vmem:[%s529 + $0xc] sm:$0xf]
  %v534 = vld [vmem:[%s529 + $0x10] sm:$0xf]
  %v535 = vld [vmem:[%s529 + $0x14] sm:$0xf]
  %v536 = vld [vmem:[%s529 + $0x18] sm:$0xf]
  %v537 = vld [vmem:[%s529 + $0x1c] sm:$0xf]
  %v538 = vld [vmem:[%s529 + $0x20] sm:$0xf]
  %v539 = vld [vmem:[%s529 + $0x24] sm:$0xf]
  %v540 = vld [vmem:[%s529 + $0x28] sm:$0xf]
  %v541 = vld [vmem:[%s529 + $0x2c] sm:$0xf]
  %v542 = vld [vmem:[%s529 + $0x30] sm:$0xf]
  %v543 = vld [vmem:[%s529 + $0x34] sm:$0xf]
  %v544 = vld [vmem:[%s529 + $0x38] sm:$0xf]
  %v545 = vld [vmem:[%s529 + $0x3c] sm:$0xf]
  %v546 = vld [vmem:[%s529 + $0x40] sm:$0xf]
  %v547 = vld [vmem:[%s529 + $0x44] sm:$0xf]
  %v548 = vld [vmem:[%s529 + $0x48] sm:$0xf]
  %v549 = vld [vmem:[%s529 + $0x4c] sm:$0xf]
  %v550 = vld [vmem:[%s529 + $0x50] sm:$0xf]
  %v551 = vld [vmem:[%s529 + $0x54] sm:$0xf]
  %v552 = vld [vmem:[%s529 + $0x58] sm:$0xf]
  %v553 = vld [vmem:[%s529 + $0x5c] sm:$0xf]
  %v554 = vld [vmem:[%s529 + $0x60] sm:$0xf]
  %v555 = vld [vmem:[%s529 + $0x64] sm:$0xf]
  %v556 = vld [vmem:[%s529 + $0x68] sm:$0xf]
  %v557 = vld [vmem:[%s529 + $0x6c] sm:$0xf]
  %v558 = vld [vmem:[%s529 + $0x70] sm:$0xf]
  %v559 = vld [vmem:[%s529 + $0x74] sm:$0xf]
  %v560 = vld [vmem:[%s529 + $0x78] sm:$0xf]
  %v561 = vld [vmem:[%s529 + $0x7c] sm:$0xf]
  %v562 = vld [vmem:[%s529 + $0x80] sm:$0xf]
  %v563 = vld [vmem:[%s529 + $0x84] sm:$0xf]
  %v564 = vld [vmem:[%s529 + $0x88] sm:$0xf]
  %v565 = vld [vmem:[%s529 + $0x8c] sm:$0xf]
  %v566 = vld [vmem:[%s529 + $0x90] sm:$0xf]
  %v567 = vld [vmem:[%s529 + $0x94] sm:$0xf]
  %v568 = vld [vmem:[%s529 + $0x98] sm:$0xf]
  %v569 = vld [vmem:[%s529 + $0x9c] sm:$0xf]
  %v570 = vld [vmem:[%s529 + $0xa0] sm:$0xf]
  %v571 = vld [vmem:[%s529 + $0xa4] sm:$0xf]
  %v572 = vld [vmem:[%s529 + $0xa8] sm:$0xf]
  %v573 = vld [vmem:[%s529 + $0xac] sm:$0xf]
  %v574 = vld [vmem:[%s529 + $0xb0] sm:$0xf]
  %v575 = vld [vmem:[%s529 + $0xb4] sm:$0xf]
  %v576 = vld [vmem:[%s529 + $0xb8] sm:$0xf]
  %v577 = vld [vmem:[%s529 + $0xbc] sm:$0xf]
  %v626 = vunpack.c.l.b16 %v530
  %v627 = vunpack.c.l.b16 %v531
  %v628 = vunpack.c.l.b16 %v532
  %v629 = vunpack.c.l.b16 %v533
  %v630 = vunpack.c.l.b16 %v534
  %v631 = vunpack.c.l.b16 %v535
  %v632 = vunpack.c.l.b16 %v536
  %v633 = vunpack.c.l.b16 %v537
  %v634 = vunpack.c.l.b16 %v538
  %v635 = vunpack.c.l.b16 %v539
  %v636 = vunpack.c.l.b16 %v540
  %v637 = vunpack.c.l.b16 %v541
  %v638 = vunpack.c.l.b16 %v542
  %v639 = vunpack.c.l.b16 %v543
  %v640 = vunpack.c.l.b16 %v544
  %v641 = vunpack.c.l.b16 %v545
  %v642 = vunpack.c.l.b16 %v546
  %v643 = vunpack.c.l.b16 %v547
  %v644 = vunpack.c.l.b16 %v548
  %v645 = vunpack.c.l.b16 %v549
  %v646 = vunpack.c.l.b16 %v550
  %v647 = vunpack.c.l.b16 %v551
  %v648 = vunpack.c.l.b16 %v552
  %v649 = vunpack.c.l.b16 %v553
  %v650 = vunpack.c.l.b16 %v554
  %v651 = vunpack.c.l.b16 %v555
  %v652 = vunpack.c.l.b16 %v556
  %v653 = vunpack.c.l.b16 %v557
  %v654 = vunpack.c.l.b16 %v558
  %v655 = vunpack.c.l.b16 %v559
  %v656 = vunpack.c.l.b16 %v560
  %v657 = vunpack.c.l.b16 %v561
  %v658 = vunpack.c.l.b16 %v562
  %v659 = vunpack.c.l.b16 %v563
  %v660 = vunpack.c.l.b16 %v564
  %v661 = vunpack.c.l.b16 %v565
  %v662 = vunpack.c.l.b16 %v566
  %v663 = vunpack.c.l.b16 %v567
  %v664 = vunpack.c.l.b16 %v568
  %v665 = vunpack.c.l.b16 %v569
  %v666 = vunpack.c.l.b16 %v570
  %v667 = vunpack.c.l.b16 %v571
  %v668 = vunpack.c.l.b16 %v572
  %v669 = vunpack.c.l.b16 %v573
  %v670 = vunpack.c.l.b16 %v574
  %v671 = vunpack.c.l.b16 %v575
  %v672 = vunpack.c.l.b16 %v576
  %v673 = vunpack.c.l.b16 %v577
  %v674 = vpack.c.b16 %v627, %v626
  %v675 = vpack.c.b16 %v629, %v628
  %v676 = vpack.c.b16 %v631, %v630
  %v677 = vpack.c.b16 %v633, %v632
  %v678 = vpack.c.b16 %v635, %v634
  %v679 = vpack.c.b16 %v637, %v636
  %v680 = vpack.c.b16 %v639, %v638
  %v681 = vpack.c.b16 %v641, %v640
  %v682 = vpack.c.b16 %v643, %v642
  %v683 = vpack.c.b16 %v645, %v644
  %v684 = vpack.c.b16 %v647, %v646
  %v685 = vpack.c.b16 %v649, %v648
  %v686 = vpack.c.b16 %v651, %v650
  %v687 = vpack.c.b16 %v653, %v652
  %v688 = vpack.c.b16 %v655, %v654
  %v689 = vpack.c.b16 %v657, %v656
  %v690 = vpack.c.b16 %v659, %v658
  %v691 = vpack.c.b16 %v661, %v660
  %v692 = vpack.c.b16 %v663, %v662
  %v693 = vpack.c.b16 %v665, %v664
  %v694 = vpack.c.b16 %v667, %v666
  %v695 = vpack.c.b16 %v669, %v668
  %v696 = vpack.c.b16 %v671, %v670
  %v697 = vpack.c.b16 %v673, %v672
  %722 = vmatprep.subr.bf16.mxu0 0
  %723 = vmatpush1.bf16.msra.mxu0 %v674
  %724 = vmatprep.subr.bf16.mxu0 0
  %725 = vmatpush1.bf16.msra.mxu0 %v675
  %726 = vmatprep.subr.bf16.mxu0 0
  %727 = vmatpush1.bf16.msra.mxu0 %v676
  %728 = vmatprep.subr.bf16.mxu0 0
  %729 = vmatpush1.bf16.msra.mxu0 %v677
  %730 = vmatprep.subr.bf16.mxu0 0
  %731 = vmatpush1.bf16.msra.mxu0 %v678
  %732 = vmatprep.subr.bf16.mxu0 0
  %733 = vmatpush1.bf16.msra.mxu0 %v679
  %734 = vmatprep.subr.bf16.mxu0 0
  %735 = vmatpush1.bf16.msra.mxu0 %v680
  %736 = vmatprep.subr.bf16.mxu0 0
  %737 = vmatpush1.bf16.msra.mxu0 %v681
  %738 = vmatprep.subr.bf16.mxu0 0
  %739 = vmatpush1.bf16.msra.mxu0 %v682
  %740 = vmatprep.subr.bf16.mxu0 0
  %741 = vmatpush1.bf16.msra.mxu0 %v683
  %742 = vmatprep.subr.bf16.mxu0 0
  %743 = vmatpush1.bf16.msra.mxu0 %v684
  %744 = vmatprep.subr.bf16.mxu0 0
  %745 = vmatpush1.bf16.msra.mxu0 %v685
  %746 = vmatprep.subr.bf16.mxu0 0
  %747 = vmatpush1.bf16.msra.mxu0 %v686
  %748 = vmatprep.subr.bf16.mxu0 0
  %749 = vmatpush1.bf16.msra.mxu0 %v687
  %750 = vmatprep.subr.bf16.mxu0 0
  %751 = vmatpush1.bf16.msra.mxu0 %v688
  %752 = vmatprep.subr.bf16.mxu0 0
  %753 = vmatpush1.bf16.msra.mxu0 %v689
  %754 = vmatprep.mubr.bf16.mxu0 %v404
  %755 = vmatmul.mubr.bf16.gmra.mrb[0].mxu0 %v353
  %v756 = vpop.f32.mrb[0].mxu0
  %v757 = vadd.f32 0.0, %v756
  %v758 = vpop.f32.mrb[0].mxu0
  %v759 = vpop.f32.mrb[0].mxu0
  %v760 = vadd.f32 0.0, %v759
  %v761 = vpop.f32.mrb[0].mxu0
  %762 = vmatprep.mubr.bf16.mxu0 %v416
  %763 = vmatmul.mubr.bf16.gmra.mrb[0].mxu0 %v354
  %v764 = vpop.f32.mrb[0].mxu0
  %v765 = vadd.f32 0.0, %v764
  %v766 = vpop.f32.mrb[0].mxu0
  %v767 = vpop.f32.mrb[0].mxu0
  %v768 = vadd.f32 0.0, %v767
  %v769 = vpop.f32.mrb[0].mxu0
  %770 = vmatprep.mubr.bf16.mxu0 %v428
  %771 = vmatmul.mubr.bf16.gmra.mrb[0].mxu0 %v355
  %v772 = vpop.f32.mrb[0].mxu0
  %v773 = vadd.f32 0.0, %v772
  %v774 = vpop.f32.mrb[0].mxu0
  %v775 = vpop.f32.mrb[0].mxu0
  %v776 = vadd.f32 0.0, %v775
  %v777 = vpop.f32.mrb[0].mxu0
  %778 = vmatprep.mubr.bf16.mxu0 %v440
  %779 = vmatmul.mubr.bf16.gmra.mrb[0].mxu0 %v356
  %v780 = vpop.f32.mrb[0].mxu0
  %v781 = vadd.f32 0.0, %v780
  %v782 = vpop.f32.mrb[0].mxu0
  %v783 = vpop.f32.mrb[0].mxu0
  %v784 = vadd.f32 0.0, %v783
  %v785 = vpop.f32.mrb[0].mxu0
  %786 = vmatprep.mubr.bf16.mxu0 %v452
  %787 = vmatmul.mubr.bf16.gmra.mrb[0].mxu0 %v357
  %v788 = vpop.f32.mrb[0].mxu0
  %v789 = vadd.f32 0.0, %v788
  %v790 = vpop.f32.mrb[0].mxu0
  %v791 = vpop.f32.mrb[0].mxu0
  %v792 = vadd.f32 0.0, %v791
  %v793 = vpop.f32.mrb[0].mxu0
  %794 = vmatprep.mubr.bf16.mxu0 %v464
  %795 = vmatmul.mubr.bf16.gmra.mrb[0].mxu0 %v358
  %v796 = vpop.f32.mrb[0].mxu0
  %v797 = vadd.f32 0.0, %v796
  %v798 = vpop.f32.mrb[0].mxu0
  %v799 = vpop.f32.mrb[0].mxu0
  %v800 = vadd.f32 0.0, %v799
  %v801 = vpop.f32.mrb[0].mxu0
  %802 = vmatprep.mubr.bf16.mxu0 %v476
  %803 = vmatmul.mubr.bf16.gmra.mrb[0].mxu0 %v359
  %v804 = vpop.f32.mrb[0].mxu0
  %v805 = vadd.f32 0.0, %v804
  %v806 = vpop.f32.mrb[0].mxu0
  %v807 = vpop.f32.mrb[0].mxu0
  %v808 = vadd.f32 0.0, %v807
  %v809 = vpop.f32.mrb[0].mxu0
  %810 = vmatprep.mubr.bf16.mxu0 %v488
  %811 = vmatmul.mubr.bf16.gmra.mrb[0].mxu0 %v360
  %v812 = vpop.f32.mrb[0].mxu0
  %v813 = vadd.f32 0.0, %v812
  %v814 = vpop.f32.mrb[0].mxu0
  %v815 = vpop.f32.mrb[0].mxu0
  %v816 = vadd.f32 0.0, %v815
  %v817 = vpop.f32.mrb[0].mxu0
  %818 = vdwg.mxu0
  %819 = vmatprep.subr.bf16.mxu0 0
  %820 = vmatpush1.bf16.msra.mxu0 %v690
  %821 = vmatprep.subr.bf16.mxu0 0
  %822 = vmatpush1.bf16.msra.mxu0 %v691
  %823 = vmatprep.subr.bf16.mxu0 0
  %824 = vmatpush1.bf16.msra.mxu0 %v692
  %825 = vmatprep.subr.bf16.mxu0 0
  %826 = vmatpush1.bf16.msra.mxu0 %v693
  %827 = vmatprep.subr.bf16.mxu0 0
  %828 = vmatpush1.bf16.msra.mxu0 %v694
  %829 = vmatprep.subr.bf16.mxu0 0
  %830 = vmatpush1.bf16.msra.mxu0 %v695
  %831 = vmatprep.subr.bf16.mxu0 0
  %832 = vmatpush1.bf16.msra.mxu0 %v696
  %833 = vmatprep.subr.bf16.mxu0 0
  %834 = vmatpush1.bf16.msra.mxu0 %v697
  %835 = vmatprep.subr.bf16.mxu0 0
  %836 = vmatpush1.bf16.msra.mxu0 0
  %837 = vmatprep.subr.bf16.mxu0 0
  %838 = vmatpush1.bf16.msra.mxu0 0
  %839 = vmatprep.subr.bf16.mxu0 0
  %840 = vmatpush1.bf16.msra.mxu0 0
  %841 = vmatprep.subr.bf16.mxu0 0
  %842 = vmatpush1.bf16.msra.mxu0 0
  %843 = vmatprep.subr.bf16.mxu0 0
  %844 = vmatpush1.bf16.msra.mxu0 0
  %845 = vmatprep.subr.bf16.mxu0 0
  %846 = vmatpush1.bf16.msra.mxu0 0
  %847 = vmatprep.subr.bf16.mxu0 0
  %848 = vmatpush1.bf16.msra.mxu0 0
  %849 = vmatprep.subr.bf16.mxu0 0
  %850 = vmatpush1.bf16.msra.mxu0 0
  %851 = vmatprep.mubr.bf16.mxu0 0
  %852 = vmatmul.mubr.bf16.gmra.mrb[0].mxu0 %v499
  %v853 = vpop.f32.mrb[0].mxu0
  %v854 = vadd.f32 %v757, %v853
  %v855 = vpop.f32.mrb[0].mxu0
  %v856 = vpop.f32.mrb[0].mxu0
  %v857 = vadd.f32 %v760, %v856
  %v858 = vpop.f32.mrb[0].mxu0
  %859 = vmatprep.mubr.bf16.mxu0 0
  %860 = vmatmul.mubr.bf16.gmra.mrb[0].mxu0 %v502
  %v861 = vpop.f32.mrb[0].mxu0
  %v862 = vadd.f32 %v765, %v861
  %v863 = vpop.f32.mrb[0].mxu0
  %v864 = vpop.f32.mrb[0].mxu0
  %v865 = vadd.f32 %v768, %v864
  %v866 = vpop.f32.mrb[0].mxu0
  %867 = vmatprep.mubr.bf16.mxu0 0
  %868 = vmatmul.mubr.bf16.gmra.mrb[0].mxu0 %v505
  %v869 = vpop.f32.mrb[0].mxu0
  %v870 = vadd.f32 %v773, %v869
  %v871 = vpop.f32.mrb[0].mxu0
  %v872 = vpop.f32.mrb[0].mxu0
  %v873 = vadd.f32 %v776, %v872
  %v874 = vpop.f32.mrb[0].mxu0
  %875 = vmatprep.mubr.bf16.mxu0 0
  %876 = vmatmul.mubr.bf16.gmra.mrb[0].mxu0 %v508
  %v877 = vpop.f32.mrb[0].mxu0
  %v878 = vadd.f32 %v781, %v877
  %v879 = vpop.f32.mrb[0].mxu0
  %v880 = vpop.f32.mrb[0].mxu0
  %v881 = vadd.f32 %v784, %v880
  %v882 = vpop.f32.mrb[0].mxu0
  %883 = vmatprep.mubr.bf16.mxu0 0
  %884 = vmatmul.mubr.bf16.gmra.mrb[0].mxu0 %v511
  %v885 = vpop.f32.mrb[0].mxu0
  %v886 = vadd.f32 %v789, %v885
  %v887 = vpop.f32.mrb[0].mxu0
  %v888 = vpop.f32.mrb[0].mxu0
  %v889 = vadd.f32 %v792, %v888
  %v890 = vpop.f32.mrb[0].mxu0
  %891 = vmatprep.mubr.bf16.mxu0 0
  %892 = vmatmul.mubr.bf16.gmra.mrb[0].mxu0 %v514
  %v893 = vpop.f32.mrb[0].mxu0
  %v894 = vadd.f32 %v797, %v893
  %v895 = vpop.f32.mrb[0].mxu0
  %v896 = vpop.f32.mrb[0].mxu0
  %v897 = vadd.f32 %v800, %v896
  %v898 = vpop.f32.mrb[0].mxu0
  %899 = vmatprep.mubr.bf16.mxu0 0
  %900 = vmatmul.mubr.bf16.gmra.mrb[0].mxu0 %v517
  %v901 = vpop.f32.mrb[0].mxu0
  %v902 = vadd.f32 %v805, %v901
  %v903 = vpop.f32.mrb[0].mxu0
  %v904 = vpop.f32.mrb[0].mxu0
  %v905 = vadd.f32 %v808, %v904
  %v906 = vpop.f32.mrb[0].mxu0
  %907 = vmatprep.mubr.bf16.mxu0 0
  %908 = vmatmul.mubr.bf16.gmra.mrb[0].mxu0 %v520
  %v909 = vpop.f32.mrb[0].mxu0
  %v910 = vadd.f32 %v813, %v909
  %v911 = vpop.f32.mrb[0].mxu0
  %v912 = vpop.f32.mrb[0].mxu0
  %v913 = vadd.f32 %v816, %v912
  %v914 = vpop.f32.mrb[0].mxu0
  %915 = vdwg.mxu0
  %v964 = vunpack.c.l.b16 %v248
  %v965 = vunpack.c.l.b16 %v249
  %v966 = vunpack.c.l.b16 %v250
  %v967 = vunpack.c.l.b16 %v251
  %v968 = vunpack.c.l.b16 %v252
  %v969 = vunpack.c.l.b16 %v253
  %v970 = vunpack.c.l.b16 %v254
  %v971 = vunpack.c.l.b16 %v255
  %v972 = vunpack.c.l.b16 %v256
  %v973 = vunpack.c.l.b16 %v257
  %v974 = vunpack.c.l.b16 %v258
  %v975 = vunpack.c.l.b16 %v259
  %v976 = vunpack.c.l.b16 %v260
  %v977 = vunpack.c.l.b16 %v261
  %v978 = vunpack.c.l.b16 %v262
  %v979 = vunpack.c.l.b16 %v263
  %v980 = vunpack.c.l.b16 %v264
  %v981 = vunpack.c.l.b16 %v265
  %v982 = vunpack.c.l.b16 %v266
  %v983 = vunpack.c.l.b16 %v267
  %v984 = vunpack.c.l.b16 %v268
  %v985 = vunpack.c.l.b16 %v269
  %v986 = vunpack.c.l.b16 %v270
  %v987 = vunpack.c.l.b16 %v271
  %v988 = vunpack.c.l.b16 %v272
  %v989 = vunpack.c.l.b16 %v273
  %v990 = vunpack.c.l.b16 %v274
  %v991 = vunpack.c.l.b16 %v275
  %v992 = vunpack.c.l.b16 %v276
  %v993 = vunpack.c.l.b16 %v277
  %v994 = vunpack.c.l.b16 %v278
  %v995 = vunpack.c.l.b16 %v279
  %v996 = vunpack.c.l.b16 %v280
  %v997 = vunpack.c.l.b16 %v281
  %v998 = vunpack.c.l.b16 %v282
  %v999 = vunpack.c.l.b16 %v283
  %v1000 = vunpack.c.l.b16 %v284
  %v1001 = vunpack.c.l.b16 %v285
  %v1002 = vunpack.c.l.b16 %v286
  %v1003 = vunpack.c.l.b16 %v287
  %v1004 = vunpack.c.l.b16 %v288
  %v1005 = vunpack.c.l.b16 %v289
  %v1006 = vunpack.c.l.b16 %v290
  %v1007 = vunpack.c.l.b16 %v291
  %v1008 = vunpack.c.l.b16 %v292
  %v1009 = vunpack.c.l.b16 %v293
  %v1010 = vunpack.c.l.b16 %v294
  %v1011 = vunpack.c.l.b16 %v295
  %v1012 = vpack.c.b16 %v965, %v964
  %v1013 = vpack.c.b16 %v967, %v966
  %v1014 = vpack.c.b16 %v969, %v968
  %v1015 = vpack.c.b16 %v971, %v970
  %v1016 = vpack.c.b16 %v973, %v972
  %v1017 = vpack.c.b16 %v975, %v974
  %v1018 = vpack.c.b16 %v977, %v976
  %v1019 = vpack.c.b16 %v979, %v978
  %v1020 = vpack.c.b16 %v981, %v980
  %v1021 = vpack.c.b16 %v983, %v982
  %v1022 = vpack.c.b16 %v985, %v984
  %v1023 = vpack.c.b16 %v987, %v986
  %v1024 = vpack.c.b16 %v989, %v988
  %v1025 = vpack.c.b16 %v991, %v990
  %v1026 = vpack.c.b16 %v993, %v992
  %v1027 = vpack.c.b16 %v995, %v994
  %v1028 = vpack.c.b16 %v997, %v996
  %v1029 = vpack.c.b16 %v999, %v998
  %v1030 = vpack.c.b16 %v1001, %v1000
  %v1031 = vpack.c.b16 %v1003, %v1002
  %v1032 = vpack.c.b16 %v1005, %v1004
  %v1033 = vpack.c.b16 %v1007, %v1006
  %v1034 = vpack.c.b16 %v1009, %v1008
  %v1035 = vpack.c.b16 %v1011, %v1010
  %1060 = vmatprep.subr.bf16.mxu0 0
  %1061 = vmatpush1.bf16.msra.mxu0 %v1012
  %1062 = vmatprep.subr.bf16.mxu0 0
  %1063 = vmatpush1.bf16.msra.mxu0 %v1013
  %1064 = vmatprep.subr.bf16.mxu0 0
  %1065 = vmatpush1.bf16.msra.mxu0 %v1014
  %1066 = vmatprep.subr.bf16.mxu0 0
  %1067 = vmatpush1.bf16.msra.mxu0 %v1015
  %1068 = vmatprep.subr.bf16.mxu0 0
  %1069 = vmatpush1.bf16.msra.mxu0 %v1016
  %1070 = vmatprep.subr.bf16.mxu0 0
  %1071 = vmatpush1.bf16.msra.mxu0 %v1017
  %1072 = vmatprep.subr.bf16.mxu0 0
  %1073 = vmatpush1.bf16.msra.mxu0 %v1018
  %1074 = vmatprep.subr.bf16.mxu0 0
  %1075 = vmatpush1.bf16.msra.mxu0 %v1019
  %1076 = vmatprep.subr.bf16.mxu0 0
  %1077 = vmatpush1.bf16.msra.mxu0 %v1020
  %1078 = vmatprep.subr.bf16.mxu0 0
  %1079 = vmatpush1.bf16.msra.mxu0 %v1021
  %1080 = vmatprep.subr.bf16.mxu0 0
  %1081 = vmatpush1.bf16.msra.mxu0 %v1022
  %1082 = vmatprep.subr.bf16.mxu0 0
  %1083 = vmatpush1.bf16.msra.mxu0 %v1023
  %1084 = vmatprep.subr.bf16.mxu0 0
  %1085 = vmatpush1.bf16.msra.mxu0 %v1024
  %1086 = vmatprep.subr.bf16.mxu0 0
  %1087 = vmatpush1.bf16.msra.mxu0 %v1025
  %1088 = vmatprep.subr.bf16.mxu0 0
  %1089 = vmatpush1.bf16.msra.mxu0 %v1026
  %1090 = vmatprep.subr.bf16.mxu0 0
  %1091 = vmatpush1.bf16.msra.mxu0 %v1027
  %1092 = vmatprep.mubr.bf16.mxu0 %v122
  %1093 = vmatmul.mubr.bf16.gmra.mrb[0].mxu0 %v70
  %v1094 = vpop.f32.mrb[0].mxu0
  %v1095 = vadd.f32 %v854, %v1094
  %v1096 = vpop.f32.mrb[0].mxu0
  %v1097 = vpop.f32.mrb[0].mxu0
  %v1098 = vadd.f32 %v857, %v1097
  %v1099 = vpop.f32.mrb[0].mxu0
  %1100 = vmatprep.mubr.bf16.mxu0 %v134
  %1101 = vmatmul.mubr.bf16.gmra.mrb[0].mxu0 %v71
  %v1102 = vpop.f32.mrb[0].mxu0
  %v1103 = vadd.f32 %v862, %v1102
  %v1104 = vpop.f32.mrb[0].mxu0
  %v1105 = vpop.f32.mrb[0].mxu0
  %v1106 = vadd.f32 %v865, %v1105
  %v1107 = vpop.f32.mrb[0].mxu0
  %1108 = vmatprep.mubr.bf16.mxu0 %v146
  %1109 = vmatmul.mubr.bf16.gmra.mrb[0].mxu0 %v72
  %v1110 = vpop.f32.mrb[0].mxu0
  %v1111 = vadd.f32 %v870, %v1110
  %v1112 = vpop.f32.mrb[0].mxu0
  %v1113 = vpop.f32.mrb[0].mxu0
  %v1114 = vadd.f32 %v873, %v1113
  %v1115 = vpop.f32.mrb[0].mxu0
  %1116 = vmatprep.mubr.bf16.mxu0 %v158
  %1117 = vmatmul.mubr.bf16.gmra.mrb[0].mxu0 %v73
  %v1118 = vpop.f32.mrb[0].mxu0
  %v1119 = vadd.f32 %v878, %v1118
  %v1120 = vpop.f32.mrb[0].mxu0
  %v1121 = vpop.f32.mrb[0].mxu0
  %v1122 = vadd.f32 %v881, %v1121
  %v1123 = vpop.f32.mrb[0].mxu0
  %1124 = vmatprep.mubr.bf16.mxu0 %v170
  %1125 = vmatmul.mubr.bf16.gmra.mrb[0].mxu0 %v74
  %v1126 = vpop.f32.mrb[0].mxu0
  %v1127 = vadd.f32 %v886, %v1126
  %v1128 = vpop.f32.mrb[0].mxu0
  %v1129 = vpop.f32.mrb[0].mxu0
  %v1130 = vadd.f32 %v889, %v1129
  %v1131 = vpop.f32.mrb[0].mxu0
  %1132 = vmatprep.mubr.bf16.mxu0 %v182
  %1133 = vmatmul.mubr.bf16.gmra.mrb[0].mxu0 %v75
  %v1134 = vpop.f32.mrb[0].mxu0
  %v1135 = vadd.f32 %v894, %v1134
  %v1136 = vpop.f32.mrb[0].mxu0
  %v1137 = vpop.f32.mrb[0].mxu0
  %v1138 = vadd.f32 %v897, %v1137
  %v1139 = vpop.f32.mrb[0].mxu0
  %1140 = vmatprep.mubr.bf16.mxu0 %v194
  %1141 = vmatmul.mubr.bf16.gmra.mrb[0].mxu0 %v76
  %v1142 = vpop.f32.mrb[0].mxu0
  %v1143 = vadd.f32 %v902, %v1142
  %v1144 = vpop.f32.mrb[0].mxu0
  %v1145 = vpop.f32.mrb[0].mxu0
  %v1146 = vadd.f32 %v905, %v1145
  %v1147 = vpop.f32.mrb[0].mxu0
  %1148 = vmatprep.mubr.bf16.mxu0 %v206
  %1149 = vmatmul.mubr.bf16.gmra.mrb[0].mxu0 %v77
  %v1150 = vpop.f32.mrb[0].mxu0
  %v1151 = vadd.f32 %v910, %v1150
  %v1152 = vpop.f32.mrb[0].mxu0
  %v1153 = vpop.f32.mrb[0].mxu0
  %v1154 = vadd.f32 %v913, %v1153
  %v1155 = vpop.f32.mrb[0].mxu0
  %1156 = vdwg.mxu0
  %1157 = vmatprep.subr.bf16.mxu0 0
  %1158 = vmatpush1.bf16.msra.mxu0 %v1028
  %1159 = vmatprep.subr.bf16.mxu0 0
  %1160 = vmatpush1.bf16.msra.mxu0 %v1029
  %1161 = vmatprep.subr.bf16.mxu0 0
  %1162 = vmatpush1.bf16.msra.mxu0 %v1030
  %1163 = vmatprep.subr.bf16.mxu0 0
  %1164 = vmatpush1.bf16.msra.mxu0 %v1031
  %1165 = vmatprep.subr.bf16.mxu0 0
  %1166 = vmatpush1.bf16.msra.mxu0 %v1032
  %1167 = vmatprep.subr.bf16.mxu0 0
  %1168 = vmatpush1.bf16.msra.mxu0 %v1033
  %1169 = vmatprep.subr.bf16.mxu0 0
  %1170 = vmatpush1.bf16.msra.mxu0 %v1034
  %1171 = vmatprep.subr.bf16.mxu0 0
  %1172 = vmatpush1.bf16.msra.mxu0 %v1035
  %1173 = vmatprep.subr.bf16.mxu0 0
  %1174 = vmatpush1.bf16.msra.mxu0 0
  %1175 = vmatprep.subr.bf16.mxu0 0
  %1176 = vmatpush1.bf16.msra.mxu0 0
  %1177 = vmatprep.subr.bf16.mxu0 0
  %1178 = vmatpush1.bf16.msra.mxu0 0
  %1179 = vmatprep.subr.bf16.mxu0 0
  %1180 = vmatpush1.bf16.msra.mxu0 0
  %1181 = vmatprep.subr.bf16.mxu0 0
  %1182 = vmatpush1.bf16.msra.mxu0 0
  %1183 = vmatprep.subr.bf16.mxu0 0
  %1184 = vmatpush1.bf16.msra.mxu0 0
  %1185 = vmatprep.subr.bf16.mxu0 0
  %1186 = vmatpush1.bf16.msra.mxu0 0
  %1187 = vmatprep.subr.bf16.mxu0 0
  %1188 = vmatpush1.bf16.msra.mxu0 0
  %1189 = vmatprep.mubr.bf16.mxu0 0
  %1190 = vmatmul.mubr.bf16.gmra.mrb[0].mxu0 %v218
  %v1191 = vpop.f32.mrb[0].mxu0
  %v1192 = vadd.f32 %v1095, %v1191
  %v1193 = vpop.f32.mrb[0].mxu0
  %v1194 = vpop.f32.mrb[0].mxu0
  %v1195 = vadd.f32 %v1098, %v1194
  %v1196 = vpop.f32.mrb[0].mxu0
  %1197 = vmatprep.mubr.bf16.mxu0 0
  %1198 = vmatmul.mubr.bf16.gmra.mrb[0].mxu0 %v221
  %v1199 = vpop.f32.mrb[0].mxu0
  %v1200 = vadd.f32 %v1103, %v1199
  %v1201 = vpop.f32.mrb[0].mxu0
  %v1202 = vpop.f32.mrb[0].mxu0
  %v1203 = vadd.f32 %v1106, %v1202
  %v1204 = vpop.f32.mrb[0].mxu0
  %1205 = vmatprep.mubr.bf16.mxu0 0
  %1206 = vmatmul.mubr.bf16.gmra.mrb[0].mxu0 %v224
  %v1207 = vpop.f32.mrb[0].mxu0
  %v1208 = vadd.f32 %v1111, %v1207
  %v1209 = vpop.f32.mrb[0].mxu0
  %v1210 = vpop.f32.mrb[0].mxu0
  %v1211 = vadd.f32 %v1114, %v1210
  %v1212 = vpop.f32.mrb[0].mxu0
  %1213 = vmatprep.mubr.bf16.mxu0 0
  %1214 = vmatmul.mubr.bf16.gmra.mrb[0].mxu0 %v227
  %v1215 = vpop.f32.mrb[0].mxu0
  %v1216 = vadd.f32 %v1119, %v1215
  %v1217 = vpop.f32.mrb[0].mxu0
  %v1218 = vpop.f32.mrb[0].mxu0
  %v1219 = vadd.f32 %v1122, %v1218
  %v1220 = vpop.f32.mrb[0].mxu0
  %1221 = vmatprep.mubr.bf16.mxu0 0
  %1222 = vmatmul.mubr.bf16.gmra.mrb[0].mxu0 %v230
  %v1223 = vpop.f32.mrb[0].mxu0
  %v1224 = vadd.f32 %v1127, %v1223
  %v1225 = vpop.f32.mrb[0].mxu0
  %v1226 = vpop.f32.mrb[0].mxu0
  %v1227 = vadd.f32 %v1130, %v1226
  %v1228 = vpop.f32.mrb[0].mxu0
  %1229 = vmatprep.mubr.bf16.mxu0 0
  %1230 = vmatmul.mubr.bf16.gmra.mrb[0].mxu0 %v233
  %v1231 = vpop.f32.mrb[0].mxu0
  %v1232 = vadd.f32 %v1135, %v1231
  %v1233 = vpop.f32.mrb[0].mxu0
  %v1234 = vpop.f32.mrb[0].mxu0
  %v1235 = vadd.f32 %v1138, %v1234
  %v1236 = vpop.f32.mrb[0].mxu0
  %1237 = vmatprep.mubr.bf16.mxu0 0
  %1238 = vmatmul.mubr.bf16.gmra.mrb[0].mxu0 %v236
  %v1239 = vpop.f32.mrb[0].mxu0
  %v1240 = vadd.f32 %v1143, %v1239
  %v1241 = vpop.f32.mrb[0].mxu0
  %v1242 = vpop.f32.mrb[0].mxu0
  %v1243 = vadd.f32 %v1146, %v1242
  %v1244 = vpop.f32.mrb[0].mxu0
  %1245 = vmatprep.mubr.bf16.mxu0 0
  %1246 = vmatmul.mubr.bf16.gmra.mrb[0].mxu0 %v239
  %v1247 = vpop.f32.mrb[0].mxu0
  %v1248 = vadd.f32 %v1151, %v1247
  %v1249 = vpop.f32.mrb[0].mxu0
  %v1250 = vpop.f32.mrb[0].mxu0
  %v1251 = vadd.f32 %v1154, %v1250
  %v1252 = vpop.f32.mrb[0].mxu0
  %1253 = vdwg.mxu0
  %s1254 = scalar_lea.vmem %s0, 24
  %v1255 = vld [vmem:[%s1254] sm:$0xf]
  %v1256 = vld [vmem:[%s1254 + $0x4] sm:$0xf]
  %v1257 = vld [vmem:[%s1254 + $0x8] sm:$0x1]
  %v1258 = vld [vmem:[%s1254 + $0xc] sm:$0xf]
  %v1259 = vld [vmem:[%s1254 + $0x10] sm:$0xf]
  %v1260 = vld [vmem:[%s1254 + $0x14] sm:$0x1]
  %v1261 = vld [vmem:[%s1254 + $0x18] sm:$0xf]
  %v1262 = vld [vmem:[%s1254 + $0x1c] sm:$0xf]
  %v1263 = vld [vmem:[%s1254 + $0x20] sm:$0x1]
  %v1264 = vld [vmem:[%s1254 + $0x24] sm:$0xf]
  %v1265 = vld [vmem:[%s1254 + $0x28] sm:$0xf]
  %v1266 = vld [vmem:[%s1254 + $0x2c] sm:$0x1]
  %v1267 = vld [vmem:[%s1254 + $0x30] sm:$0xf]
  %v1268 = vld [vmem:[%s1254 + $0x34] sm:$0xf]
  %v1269 = vld [vmem:[%s1254 + $0x38] sm:$0x1]
  %v1270 = vld [vmem:[%s1254 + $0x3c] sm:$0xf]
  %v1271 = vld [vmem:[%s1254 + $0x40] sm:$0xf]
  %v1272 = vld [vmem:[%s1254 + $0x44] sm:$0x1]
  %v1273 = vld [vmem:[%s1254 + $0x48] sm:$0xf]
  %v1274 = vld [vmem:[%s1254 + $0x4c] sm:$0xf]
  %v1275 = vld [vmem:[%s1254 + $0x50] sm:$0x1]
  %v1276 = vld [vmem:[%s1254 + $0x54] sm:$0xf]
  %v1277 = vld [vmem:[%s1254 + $0x58] sm:$0xf]
  %v1278 = vld [vmem:[%s1254 + $0x5c] sm:$0x1]
  %v1295 = vunpack.c.l.b16 %v1255
  %v1296 = vunpack.c.l.b16 %v1256
  %v1297 = vunpack.c.l.b16 %v1258
  %v1298 = vunpack.c.l.b16 %v1259
  %v1299 = vunpack.c.l.b16 %v1261
  %v1300 = vunpack.c.l.b16 %v1262
  %v1301 = vunpack.c.l.b16 %v1264
  %v1302 = vunpack.c.l.b16 %v1265
  %v1303 = vunpack.c.l.b16 %v1267
  %v1304 = vunpack.c.l.b16 %v1268
  %v1305 = vunpack.c.l.b16 %v1270
  %v1306 = vunpack.c.l.b16 %v1271
  %v1307 = vunpack.c.l.b16 %v1273
  %v1308 = vunpack.c.l.b16 %v1274
  %v1309 = vunpack.c.l.b16 %v1276
  %v1310 = vunpack.c.l.b16 %v1277
  %v1311 = vpack.c.b16 %v1296, %v1295
  %v1312 = vpack.c.b16 %v1298, %v1297
  %v1313 = vpack.c.b16 %v1300, %v1299
  %v1314 = vpack.c.b16 %v1302, %v1301
  %v1315 = vpack.c.b16 %v1304, %v1303
  %v1316 = vpack.c.b16 %v1306, %v1305
  %v1317 = vpack.c.b16 %v1308, %v1307
  %v1318 = vpack.c.b16 %v1310, %v1309
  %v1335 = vunpack.c.l.b16 %v1257
  %v1336 = vunpack.c.l.b16 %v1260
  %v1337 = vunpack.c.l.b16 %v1263
  %v1338 = vunpack.c.l.b16 %v1266
  %v1339 = vunpack.c.l.b16 %v1269
  %v1340 = vunpack.c.l.b16 %v1272
  %v1341 = vunpack.c.l.b16 %v1275
  %v1342 = vunpack.c.l.b16 %v1278
  %v1343 = vpack.c.b16 %v1335, %v1335
  %v1344 = vpack.c.b16 %v1336, %v1336
  %v1345 = vpack.c.b16 %v1337, %v1337
  %v1346 = vpack.c.b16 %v1338, %v1338
  %v1347 = vpack.c.b16 %v1339, %v1339
  %v1348 = vpack.c.b16 %v1340, %v1340
  %v1349 = vpack.c.b16 %v1341, %v1341
  %v1350 = vpack.c.b16 %v1342, %v1342
  %v1352 = vshrl.u32 %v1311, 16
  %v1354 = vshll.u32 %v1311, 16
  %v1356 = vrot.slane %v1354, 1
  %v1357 = vor.u32 %v1352, %v1356
  %v1359 = vshll.u32 %v1343, 16
  %v1361 = vrot.slane %v1359, 1
  %v1362 = vsel %vm110, %v1357, %v1361
  %v1364 = vshrl.u32 %v1312, 16
  %v1366 = vshll.u32 %v1312, 16
  %v1368 = vrot.slane %v1366, 1
  %v1369 = vor.u32 %v1364, %v1368
  %v1371 = vshll.u32 %v1344, 16
  %v1373 = vrot.slane %v1371, 1
  %v1374 = vsel %vm110, %v1369, %v1373
  %v1376 = vshrl.u32 %v1313, 16
  %v1378 = vshll.u32 %v1313, 16
  %v1380 = vrot.slane %v1378, 1
  %v1381 = vor.u32 %v1376, %v1380
  %v1383 = vshll.u32 %v1345, 16
  %v1385 = vrot.slane %v1383, 1
  %v1386 = vsel %vm110, %v1381, %v1385
  %v1388 = vshrl.u32 %v1314, 16
  %v1390 = vshll.u32 %v1314, 16
  %v1392 = vrot.slane %v1390, 1
  %v1393 = vor.u32 %v1388, %v1392
  %v1395 = vshll.u32 %v1346, 16
  %v1397 = vrot.slane %v1395, 1
  %v1398 = vsel %vm110, %v1393, %v1397
  %v1400 = vshrl.u32 %v1315, 16
  %v1402 = vshll.u32 %v1315, 16
  %v1404 = vrot.slane %v1402, 1
  %v1405 = vor.u32 %v1400, %v1404
  %v1407 = vshll.u32 %v1347, 16
  %v1409 = vrot.slane %v1407, 1
  %v1410 = vsel %vm110, %v1405, %v1409
  %v1412 = vshrl.u32 %v1316, 16
  %v1414 = vshll.u32 %v1316, 16
  %v1416 = vrot.slane %v1414, 1
  %v1417 = vor.u32 %v1412, %v1416
  %v1419 = vshll.u32 %v1348, 16
  %v1421 = vrot.slane %v1419, 1
  %v1422 = vsel %vm110, %v1417, %v1421
  %v1424 = vshrl.u32 %v1317, 16
  %v1426 = vshll.u32 %v1317, 16
  %v1428 = vrot.slane %v1426, 1
  %v1429 = vor.u32 %v1424, %v1428
  %v1431 = vshll.u32 %v1349, 16
  %v1433 = vrot.slane %v1431, 1
  %v1434 = vsel %vm110, %v1429, %v1433
  %v1436 = vshrl.u32 %v1318, 16
  %v1438 = vshll.u32 %v1318, 16
  %v1440 = vrot.slane %v1438, 1
  %v1441 = vor.u32 %v1436, %v1440
  %v1443 = vshll.u32 %v1350, 16
  %v1445 = vrot.slane %v1443, 1
  %v1446 = vsel %vm110, %v1441, %v1445
  %v1455 = vrot.slane %v1311, 1
  %v1456 = vrot.slane %v1343, 1
  %v1457 = vsel %vm215, %v1455, %v1456
  %v1458 = vrot.slane %v1312, 1
  %v1459 = vrot.slane %v1344, 1
  %v1460 = vsel %vm215, %v1458, %v1459
  %v1461 = vrot.slane %v1313, 1
  %v1462 = vrot.slane %v1345, 1
  %v1463 = vsel %vm215, %v1461, %v1462
  %v1464 = vrot.slane %v1314, 1
  %v1465 = vrot.slane %v1346, 1
  %v1466 = vsel %vm215, %v1464, %v1465
  %v1467 = vrot.slane %v1315, 1
  %v1468 = vrot.slane %v1347, 1
  %v1469 = vsel %vm215, %v1467, %v1468
  %v1470 = vrot.slane %v1316, 1
  %v1471 = vrot.slane %v1348, 1
  %v1472 = vsel %vm215, %v1470, %v1471
  %v1473 = vrot.slane %v1317, 1
  %v1474 = vrot.slane %v1349, 1
  %v1475 = vsel %vm215, %v1473, %v1474
  %v1476 = vrot.slane %v1318, 1
  %v1477 = vrot.slane %v1350, 1
  %v1478 = vsel %vm215, %v1476, %v1477
  %s1487 = scalar_lea.vmem %s1, 384
  %v1488 = vld [vmem:[%s1487] sm:$0xf]
  %v1489 = vld [vmem:[%s1487 + $0x4] sm:$0xf]
  %v1490 = vld [vmem:[%s1487 + $0x8] sm:$0xf]
  %v1491 = vld [vmem:[%s1487 + $0xc] sm:$0xf]
  %v1492 = vld [vmem:[%s1487 + $0x10] sm:$0xf]
  %v1493 = vld [vmem:[%s1487 + $0x14] sm:$0xf]
  %v1494 = vld [vmem:[%s1487 + $0x18] sm:$0xf]
  %v1495 = vld [vmem:[%s1487 + $0x1c] sm:$0xf]
  %v1496 = vld [vmem:[%s1487 + $0x20] sm:$0xf]
  %v1497 = vld [vmem:[%s1487 + $0x24] sm:$0xf]
  %v1498 = vld [vmem:[%s1487 + $0x28] sm:$0xf]
  %v1499 = vld [vmem:[%s1487 + $0x2c] sm:$0xf]
  %v1500 = vld [vmem:[%s1487 + $0x30] sm:$0xf]
  %v1501 = vld [vmem:[%s1487 + $0x34] sm:$0xf]
  %v1502 = vld [vmem:[%s1487 + $0x38] sm:$0xf]
  %v1503 = vld [vmem:[%s1487 + $0x3c] sm:$0xf]
  %v1504 = vld [vmem:[%s1487 + $0x40] sm:$0xf]
  %v1505 = vld [vmem:[%s1487 + $0x44] sm:$0xf]
  %v1506 = vld [vmem:[%s1487 + $0x48] sm:$0xf]
  %v1507 = vld [vmem:[%s1487 + $0x4c] sm:$0xf]
  %v1508 = vld [vmem:[%s1487 + $0x50] sm:$0xf]
  %v1509 = vld [vmem:[%s1487 + $0x54] sm:$0xf]
  %v1510 = vld [vmem:[%s1487 + $0x58] sm:$0xf]
  %v1511 = vld [vmem:[%s1487 + $0x5c] sm:$0xf]
  %v1512 = vld [vmem:[%s1487 + $0x60] sm:$0xf]
  %v1513 = vld [vmem:[%s1487 + $0x64] sm:$0xf]
  %v1514 = vld [vmem:[%s1487 + $0x68] sm:$0xf]
  %v1515 = vld [vmem:[%s1487 + $0x6c] sm:$0xf]
  %v1516 = vld [vmem:[%s1487 + $0x70] sm:$0xf]
  %v1517 = vld [vmem:[%s1487 + $0x74] sm:$0xf]
  %v1518 = vld [vmem:[%s1487 + $0x78] sm:$0xf]
  %v1519 = vld [vmem:[%s1487 + $0x7c] sm:$0xf]
  %v1520 = vld [vmem:[%s1487 + $0x80] sm:$0xf]
  %v1521 = vld [vmem:[%s1487 + $0x84] sm:$0xf]
  %v1522 = vld [vmem:[%s1487 + $0x88] sm:$0xf]
  %v1523 = vld [vmem:[%s1487 + $0x8c] sm:$0xf]
  %v1524 = vld [vmem:[%s1487 + $0x90] sm:$0xf]
  %v1525 = vld [vmem:[%s1487 + $0x94] sm:$0xf]
  %v1526 = vld [vmem:[%s1487 + $0x98] sm:$0xf]
  %v1527 = vld [vmem:[%s1487 + $0x9c] sm:$0xf]
  %v1528 = vld [vmem:[%s1487 + $0xa0] sm:$0xf]
  %v1529 = vld [vmem:[%s1487 + $0xa4] sm:$0xf]
  %v1530 = vld [vmem:[%s1487 + $0xa8] sm:$0xf]
  %v1531 = vld [vmem:[%s1487 + $0xac] sm:$0xf]
  %v1532 = vld [vmem:[%s1487 + $0xb0] sm:$0xf]
  %v1533 = vld [vmem:[%s1487 + $0xb4] sm:$0xf]
  %v1534 = vld [vmem:[%s1487 + $0xb8] sm:$0xf]
  %v1535 = vld [vmem:[%s1487 + $0xbc] sm:$0xf]
  %v1584 = vunpack.c.l.b16 %v1488
  %v1585 = vunpack.c.l.b16 %v1489
  %v1586 = vunpack.c.l.b16 %v1490
  %v1587 = vunpack.c.l.b16 %v1491
  %v1588 = vunpack.c.l.b16 %v1492
  %v1589 = vunpack.c.l.b16 %v1493
  %v1590 = vunpack.c.l.b16 %v1494
  %v1591 = vunpack.c.l.b16 %v1495
  %v1592 = vunpack.c.l.b16 %v1496
  %v1593 = vunpack.c.l.b16 %v1497
  %v1594 = vunpack.c.l.b16 %v1498
  %v1595 = vunpack.c.l.b16 %v1499
  %v1596 = vunpack.c.l.b16 %v1500
  %v1597 = vunpack.c.l.b16 %v1501
  %v1598 = vunpack.c.l.b16 %v1502
  %v1599 = vunpack.c.l.b16 %v1503
  %v1600 = vunpack.c.l.b16 %v1504
  %v1601 = vunpack.c.l.b16 %v1505
  %v1602 = vunpack.c.l.b16 %v1506
  %v1603 = vunpack.c.l.b16 %v1507
  %v1604 = vunpack.c.l.b16 %v1508
  %v1605 = vunpack.c.l.b16 %v1509
  %v1606 = vunpack.c.l.b16 %v1510
  %v1607 = vunpack.c.l.b16 %v1511
  %v1608 = vunpack.c.l.b16 %v1512
  %v1609 = vunpack.c.l.b16 %v1513
  %v1610 = vunpack.c.l.b16 %v1514
  %v1611 = vunpack.c.l.b16 %v1515
  %v1612 = vunpack.c.l.b16 %v1516
  %v1613 = vunpack.c.l.b16 %v1517
  %v1614 = vunpack.c.l.b16 %v1518
  %v1615 = vunpack.c.l.b16 %v1519
  %v1616 = vunpack.c.l.b16 %v1520
  %v1617 = vunpack.c.l.b16 %v1521
  %v1618 = vunpack.c.l.b16 %v1522
  %v1619 = vunpack.c.l.b16 %v1523
  %v1620 = vunpack.c.l.b16 %v1524
  %v1621 = vunpack.c.l.b16 %v1525
  %v1622 = vunpack.c.l.b16 %v1526
  %v1623 = vunpack.c.l.b16 %v1527
  %v1624 = vunpack.c.l.b16 %v1528
  %v1625 = vunpack.c.l.b16 %v1529
  %v1626 = vunpack.c.l.b16 %v1530
  %v1627 = vunpack.c.l.b16 %v1531
  %v1628 = vunpack.c.l.b16 %v1532
  %v1629 = vunpack.c.l.b16 %v1533
  %v1630 = vunpack.c.l.b16 %v1534
  %v1631 = vunpack.c.l.b16 %v1535
  %v1632 = vpack.c.b16 %v1585, %v1584
  %v1633 = vpack.c.b16 %v1587, %v1586
  %v1634 = vpack.c.b16 %v1589, %v1588
  %v1635 = vpack.c.b16 %v1591, %v1590
  %v1636 = vpack.c.b16 %v1593, %v1592
  %v1637 = vpack.c.b16 %v1595, %v1594
  %v1638 = vpack.c.b16 %v1597, %v1596
  %v1639 = vpack.c.b16 %v1599, %v1598
  %v1640 = vpack.c.b16 %v1601, %v1600
  %v1641 = vpack.c.b16 %v1603, %v1602
  %v1642 = vpack.c.b16 %v1605, %v1604
  %v1643 = vpack.c.b16 %v1607, %v1606
  %v1644 = vpack.c.b16 %v1609, %v1608
  %v1645 = vpack.c.b16 %v1611, %v1610
  %v1646 = vpack.c.b16 %v1613, %v1612
  %v1647 = vpack.c.b16 %v1615, %v1614
  %v1648 = vpack.c.b16 %v1617, %v1616
  %v1649 = vpack.c.b16 %v1619, %v1618
  %v1650 = vpack.c.b16 %v1621, %v1620
  %v1651 = vpack.c.b16 %v1623, %v1622
  %v1652 = vpack.c.b16 %v1625, %v1624
  %v1653 = vpack.c.b16 %v1627, %v1626
  %v1654 = vpack.c.b16 %v1629, %v1628
  %v1655 = vpack.c.b16 %v1631, %v1630
  %1680 = vmatprep.subr.bf16.mxu0 0
  %1681 = vmatpush1.bf16.msra.mxu0 %v1632
  %1682 = vmatprep.subr.bf16.mxu0 0
  %1683 = vmatpush1.bf16.msra.mxu0 %v1633
  %1684 = vmatprep.subr.bf16.mxu0 0
  %1685 = vmatpush1.bf16.msra.mxu0 %v1634
  %1686 = vmatprep.subr.bf16.mxu0 0
  %1687 = vmatpush1.bf16.msra.mxu0 %v1635
  %1688 = vmatprep.subr.bf16.mxu0 0
  %1689 = vmatpush1.bf16.msra.mxu0 %v1636
  %1690 = vmatprep.subr.bf16.mxu0 0
  %1691 = vmatpush1.bf16.msra.mxu0 %v1637
  %1692 = vmatprep.subr.bf16.mxu0 0
  %1693 = vmatpush1.bf16.msra.mxu0 %v1638
  %1694 = vmatprep.subr.bf16.mxu0 0
  %1695 = vmatpush1.bf16.msra.mxu0 %v1639
  %1696 = vmatprep.subr.bf16.mxu0 0
  %1697 = vmatpush1.bf16.msra.mxu0 %v1640
  %1698 = vmatprep.subr.bf16.mxu0 0
  %1699 = vmatpush1.bf16.msra.mxu0 %v1641
  %1700 = vmatprep.subr.bf16.mxu0 0
  %1701 = vmatpush1.bf16.msra.mxu0 %v1642
  %1702 = vmatprep.subr.bf16.mxu0 0
  %1703 = vmatpush1.bf16.msra.mxu0 %v1643
  %1704 = vmatprep.subr.bf16.mxu0 0
  %1705 = vmatpush1.bf16.msra.mxu0 %v1644
  %1706 = vmatprep.subr.bf16.mxu0 0
  %1707 = vmatpush1.bf16.msra.mxu0 %v1645
  %1708 = vmatprep.subr.bf16.mxu0 0
  %1709 = vmatpush1.bf16.msra.mxu0 %v1646
  %1710 = vmatprep.subr.bf16.mxu0 0
  %1711 = vmatpush1.bf16.msra.mxu0 %v1647
  %1712 = vmatprep.mubr.bf16.mxu0 %v1362
  %1713 = vmatmul.mubr.bf16.gmra.mrb[0].mxu0 %v1311
  %v1714 = vpop.f32.mrb[0].mxu0
  %v1715 = vadd.f32 0.0, %v1714
  %v1716 = vpop.f32.mrb[0].mxu0
  %v1717 = vpop.f32.mrb[0].mxu0
  %v1718 = vadd.f32 0.0, %v1717
  %v1719 = vpop.f32.mrb[0].mxu0
  %1720 = vmatprep.mubr.bf16.mxu0 %v1374
  %1721 = vmatmul.mubr.bf16.gmra.mrb[0].mxu0 %v1312
  %v1722 = vpop.f32.mrb[0].mxu0
  %v1723 = vadd.f32 0.0, %v1722
  %v1724 = vpop.f32.mrb[0].mxu0
  %v1725 = vpop.f32.mrb[0].mxu0
  %v1726 = vadd.f32 0.0, %v1725
  %v1727 = vpop.f32.mrb[0].mxu0
  %1728 = vmatprep.mubr.bf16.mxu0 %v1386
  %1729 = vmatmul.mubr.bf16.gmra.mrb[0].mxu0 %v1313
  %v1730 = vpop.f32.mrb[0].mxu0
  %v1731 = vadd.f32 0.0, %v1730
  %v1732 = vpop.f32.mrb[0].mxu0
  %v1733 = vpop.f32.mrb[0].mxu0
  %v1734 = vadd.f32 0.0, %v1733
  %v1735 = vpop.f32.mrb[0].mxu0
  %1736 = vmatprep.mubr.bf16.mxu0 %v1398
  %1737 = vmatmul.mubr.bf16.gmra.mrb[0].mxu0 %v1314
  %v1738 = vpop.f32.mrb[0].mxu0
  %v1739 = vadd.f32 0.0, %v1738
  %v1740 = vpop.f32.mrb[0].mxu0
  %v1741 = vpop.f32.mrb[0].mxu0
  %v1742 = vadd.f32 0.0, %v1741
  %v1743 = vpop.f32.mrb[0].mxu0
  %1744 = vmatprep.mubr.bf16.mxu0 %v1410
  %1745 = vmatmul.mubr.bf16.gmra.mrb[0].mxu0 %v1315
  %v1746 = vpop.f32.mrb[0].mxu0
  %v1747 = vadd.f32 0.0, %v1746
  %v1748 = vpop.f32.mrb[0].mxu0
  %v1749 = vpop.f32.mrb[0].mxu0
  %v1750 = vadd.f32 0.0, %v1749
  %v1751 = vpop.f32.mrb[0].mxu0
  %1752 = vmatprep.mubr.bf16.mxu0 %v1422
  %1753 = vmatmul.mubr.bf16.gmra.mrb[0].mxu0 %v1316
  %v1754 = vpop.f32.mrb[0].mxu0
  %v1755 = vadd.f32 0.0, %v1754
  %v1756 = vpop.f32.mrb[0].mxu0
  %v1757 = vpop.f32.mrb[0].mxu0
  %v1758 = vadd.f32 0.0, %v1757
  %v1759 = vpop.f32.mrb[0].mxu0
  %1760 = vmatprep.mubr.bf16.mxu0 %v1434
  %1761 = vmatmul.mubr.bf16.gmra.mrb[0].mxu0 %v1317
  %v1762 = vpop.f32.mrb[0].mxu0
  %v1763 = vadd.f32 0.0, %v1762
  %v1764 = vpop.f32.mrb[0].mxu0
  %v1765 = vpop.f32.mrb[0].mxu0
  %v1766 = vadd.f32 0.0, %v1765
  %v1767 = vpop.f32.mrb[0].mxu0
  %1768 = vmatprep.mubr.bf16.mxu0 %v1446
  %1769 = vmatmul.mubr.bf16.gmra.mrb[0].mxu0 %v1318
  %v1770 = vpop.f32.mrb[0].mxu0
  %v1771 = vadd.f32 0.0, %v1770
  %v1772 = vpop.f32.mrb[0].mxu0
  %v1773 = vpop.f32.mrb[0].mxu0
  %v1774 = vadd.f32 0.0, %v1773
  %v1775 = vpop.f32.mrb[0].mxu0
  %1776 = vdwg.mxu0
  %1777 = vmatprep.subr.bf16.mxu0 0
  %1778 = vmatpush1.bf16.msra.mxu0 %v1648
  %1779 = vmatprep.subr.bf16.mxu0 0
  %1780 = vmatpush1.bf16.msra.mxu0 %v1649
  %1781 = vmatprep.subr.bf16.mxu0 0
  %1782 = vmatpush1.bf16.msra.mxu0 %v1650
  %1783 = vmatprep.subr.bf16.mxu0 0
  %1784 = vmatpush1.bf16.msra.mxu0 %v1651
  %1785 = vmatprep.subr.bf16.mxu0 0
  %1786 = vmatpush1.bf16.msra.mxu0 %v1652
  %1787 = vmatprep.subr.bf16.mxu0 0
  %1788 = vmatpush1.bf16.msra.mxu0 %v1653
  %1789 = vmatprep.subr.bf16.mxu0 0
  %1790 = vmatpush1.bf16.msra.mxu0 %v1654
  %1791 = vmatprep.subr.bf16.mxu0 0
  %1792 = vmatpush1.bf16.msra.mxu0 %v1655
  %1793 = vmatprep.subr.bf16.mxu0 0
  %1794 = vmatpush1.bf16.msra.mxu0 0
  %1795 = vmatprep.subr.bf16.mxu0 0
  %1796 = vmatpush1.bf16.msra.mxu0 0
  %1797 = vmatprep.subr.bf16.mxu0 0
  %1798 = vmatpush1.bf16.msra.mxu0 0
  %1799 = vmatprep.subr.bf16.mxu0 0
  %1800 = vmatpush1.bf16.msra.mxu0 0
  %1801 = vmatprep.subr.bf16.mxu0 0
  %1802 = vmatpush1.bf16.msra.mxu0 0
  %1803 = vmatprep.subr.bf16.mxu0 0
  %1804 = vmatpush1.bf16.msra.mxu0 0
  %1805 = vmatprep.subr.bf16.mxu0 0
  %1806 = vmatpush1.bf16.msra.mxu0 0
  %1807 = vmatprep.subr.bf16.mxu0 0
  %1808 = vmatpush1.bf16.msra.mxu0 0
  %1809 = vmatprep.mubr.bf16.mxu0 0
  %1810 = vmatmul.mubr.bf16.gmra.mrb[0].mxu0 %v1457
  %v1811 = vpop.f32.mrb[0].mxu0
  %v1812 = vadd.f32 %v1715, %v1811
  %v1813 = vpop.f32.mrb[0].mxu0
  %v1814 = vpop.f32.mrb[0].mxu0
  %v1815 = vadd.f32 %v1718, %v1814
  %v1816 = vpop.f32.mrb[0].mxu0
  %1817 = vmatprep.mubr.bf16.mxu0 0
  %1818 = vmatmul.mubr.bf16.gmra.mrb[0].mxu0 %v1460
  %v1819 = vpop.f32.mrb[0].mxu0
  %v1820 = vadd.f32 %v1723, %v1819
  %v1821 = vpop.f32.mrb[0].mxu0
  %v1822 = vpop.f32.mrb[0].mxu0
  %v1823 = vadd.f32 %v1726, %v1822
  %v1824 = vpop.f32.mrb[0].mxu0
  %1825 = vmatprep.mubr.bf16.mxu0 0
  %1826 = vmatmul.mubr.bf16.gmra.mrb[0].mxu0 %v1463
  %v1827 = vpop.f32.mrb[0].mxu0
  %v1828 = vadd.f32 %v1731, %v1827
  %v1829 = vpop.f32.mrb[0].mxu0
  %v1830 = vpop.f32.mrb[0].mxu0
  %v1831 = vadd.f32 %v1734, %v1830
  %v1832 = vpop.f32.mrb[0].mxu0
  %1833 = vmatprep.mubr.bf16.mxu0 0
  %1834 = vmatmul.mubr.bf16.gmra.mrb[0].mxu0 %v1466
  %v1835 = vpop.f32.mrb[0].mxu0
  %v1836 = vadd.f32 %v1739, %v1835
  %v1837 = vpop.f32.mrb[0].mxu0
  %v1838 = vpop.f32.mrb[0].mxu0
  %v1839 = vadd.f32 %v1742, %v1838
  %v1840 = vpop.f32.mrb[0].mxu0
  %1841 = vmatprep.mubr.bf16.mxu0 0
  %1842 = vmatmul.mubr.bf16.gmra.mrb[0].mxu0 %v1469
  %v1843 = vpop.f32.mrb[0].mxu0
  %v1844 = vadd.f32 %v1747, %v1843
  %v1845 = vpop.f32.mrb[0].mxu0
  %v1846 = vpop.f32.mrb[0].mxu0
  %v1847 = vadd.f32 %v1750, %v1846
  %v1848 = vpop.f32.mrb[0].mxu0
  %1849 = vmatprep.mubr.bf16.mxu0 0
  %1850 = vmatmul.mubr.bf16.gmra.mrb[0].mxu0 %v1472
  %v1851 = vpop.f32.mrb[0].mxu0
  %v1852 = vadd.f32 %v1755, %v1851
  %v1853 = vpop.f32.mrb[0].mxu0
  %v1854 = vpop.f32.mrb[0].mxu0
  %v1855 = vadd.f32 %v1758, %v1854
  %v1856 = vpop.f32.mrb[0].mxu0
  %1857 = vmatprep.mubr.bf16.mxu0 0
  %1858 = vmatmul.mubr.bf16.gmra.mrb[0].mxu0 %v1475
  %v1859 = vpop.f32.mrb[0].mxu0
  %v1860 = vadd.f32 %v1763, %v1859
  %v1861 = vpop.f32.mrb[0].mxu0
  %v1862 = vpop.f32.mrb[0].mxu0
  %v1863 = vadd.f32 %v1766, %v1862
  %v1864 = vpop.f32.mrb[0].mxu0
  %1865 = vmatprep.mubr.bf16.mxu0 0
  %1866 = vmatmul.mubr.bf16.gmra.mrb[0].mxu0 %v1478
  %v1867 = vpop.f32.mrb[0].mxu0
  %v1868 = vadd.f32 %v1771, %v1867
  %v1869 = vpop.f32.mrb[0].mxu0
  %v1870 = vpop.f32.mrb[0].mxu0
  %v1871 = vadd.f32 %v1774, %v1870
  %v1872 = vpop.f32.mrb[0].mxu0
  %1873 = vdwg.mxu0
  %v1874 = vadd.f32 %v1192, %v1812
  %v1875 = vadd.f32 %v1195, %v1815
  %v1876 = vadd.f32 %v1200, %v1820
  %v1877 = vadd.f32 %v1203, %v1823
  %v1878 = vadd.f32 %v1208, %v1828
  %v1879 = vadd.f32 %v1211, %v1831
  %v1880 = vadd.f32 %v1216, %v1836
  %v1881 = vadd.f32 %v1219, %v1839
  %v1882 = vadd.f32 %v1224, %v1844
  %v1883 = vadd.f32 %v1227, %v1847
  %v1884 = vadd.f32 %v1232, %v1852
  %v1885 = vadd.f32 %v1235, %v1855
  %v1886 = vadd.f32 %v1240, %v1860
  %v1887 = vadd.f32 %v1243, %v1863
  %v1888 = vadd.f32 %v1248, %v1868
  %v1889 = vadd.f32 %v1251, %v1871
  %v1890 = vpack.c.bf16 %v1875, %v1874
  %v1891 = vpack.c.bf16 %v1877, %v1876
  %v1892 = vpack.c.bf16 %v1879, %v1878
  %v1893 = vpack.c.bf16 %v1881, %v1880
  %v1894 = vpack.c.bf16 %v1883, %v1882
  %v1895 = vpack.c.bf16 %v1885, %v1884
  %v1896 = vpack.c.bf16 %v1887, %v1886
  %v1897 = vpack.c.bf16 %v1889, %v1888
  %v1906 = vunpack.c.l.b16 %v1890
  %v1907 = vunpack.c.h.b16 %v1890
  %v1908 = vunpack.c.l.b16 %v1891
  %v1909 = vunpack.c.h.b16 %v1891
  %v1910 = vunpack.c.l.b16 %v1892
  %v1911 = vunpack.c.h.b16 %v1892
  %v1912 = vunpack.c.l.b16 %v1893
  %v1913 = vunpack.c.h.b16 %v1893
  %v1914 = vunpack.c.l.b16 %v1894
  %v1915 = vunpack.c.h.b16 %v1894
  %v1916 = vunpack.c.l.b16 %v1895
  %v1917 = vunpack.c.h.b16 %v1895
  %v1918 = vunpack.c.l.b16 %v1896
  %v1919 = vunpack.c.h.b16 %v1896
  %v1920 = vunpack.c.l.b16 %v1897
  %v1921 = vunpack.c.h.b16 %v1897
  %v1922 = vpack.c.b16 %v1906, %v1906
  %v1923 = vpack.c.b16 %v1907, %v1907
  %v1924 = vpack.c.b16 %v1908, %v1908
  %v1925 = vpack.c.b16 %v1909, %v1909
  %v1926 = vpack.c.b16 %v1910, %v1910
  %v1927 = vpack.c.b16 %v1911, %v1911
  %v1928 = vpack.c.b16 %v1912, %v1912
  %v1929 = vpack.c.b16 %v1913, %v1913
  %v1930 = vpack.c.b16 %v1914, %v1914
  %v1931 = vpack.c.b16 %v1915, %v1915
  %v1932 = vpack.c.b16 %v1916, %v1916
  %v1933 = vpack.c.b16 %v1917, %v1917
  %v1934 = vpack.c.b16 %v1918, %v1918
  %v1935 = vpack.c.b16 %v1919, %v1919
  %v1936 = vpack.c.b16 %v1920, %v1920
  %v1937 = vpack.c.b16 %v1921, %v1921
  %1954 = vst [vmem:[%s2] sm:$0xf] %v1922
  %1955 = vst [vmem:[%s2 + $0x4] sm:$0xf] %v1923
  %1956 = vst [vmem:[%s2 + $0x8] sm:$0xf] %v1924
  %1957 = vst [vmem:[%s2 + $0xc] sm:$0xf] %v1925
  %1958 = vst [vmem:[%s2 + $0x10] sm:$0xf] %v1926
  %1959 = vst [vmem:[%s2 + $0x14] sm:$0xf] %v1927
  %1960 = vst [vmem:[%s2 + $0x18] sm:$0xf] %v1928
  %1961 = vst [vmem:[%s2 + $0x1c] sm:$0xf] %v1929
  %1962 = vst [vmem:[%s2 + $0x20] sm:$0xf] %v1930
  %1963 = vst [vmem:[%s2 + $0x24] sm:$0xf] %v1931
  %1964 = vst [vmem:[%s2 + $0x28] sm:$0xf] %v1932
  %1965 = vst [vmem:[%s2 + $0x2c] sm:$0xf] %v1933
  %1966 = vst [vmem:[%s2 + $0x30] sm:$0xf] %v1934
  %1967 = vst [vmem:[%s2 + $0x34] sm:$0xf] %v1935
  %1968 = vst [vmem:[%s2 + $0x38] sm:$0xf] %v1936
  %1969 = vst [vmem:[%s2 + $0x3c] sm:$0xf] %v1937
  %v1970 = vadd.f32 %v1874, %v1875
  %v1971 = vadd.f32 %v1970, %v1876
  %v1972 = vadd.f32 %v1971, %v1877
  %v1973 = vadd.f32 %v1972, %v1878
  %v1974 = vadd.f32 %v1973, %v1879
  %v1975 = vadd.f32 %v1974, %v1880
  %v1976 = vadd.f32 %v1975, %v1881
  %v1977 = vadd.f32 %v1976, %v1882
  %v1978 = vadd.f32 %v1977, %v1883
  %v1979 = vadd.f32 %v1978, %v1884
  %v1980 = vadd.f32 %v1979, %v1885
  %v1981 = vadd.f32 %v1980, %v1886
  %v1982 = vadd.f32 %v1981, %v1887
  %v1983 = vadd.f32 %v1982, %v1888
  %v1984 = vadd.f32 %v1983, %v1889
  %v1985 = vrot.slane %v1984, 4
  %v1986 = vadd.f32 %v1984, %v1985
  %v1987 = vrot.slane %v1986, 2
  %v1988 = vadd.f32 %v1986, %v1987
  %v1989 = vrot.slane %v1988, 1
  %v1990 = vadd.f32 %v1988, %v1989
  %v1991 = vadd.f32 %v1990, 0.0
  %v1992 = vmul.f32 %v1874, %v1874
  %v1993 = vmul.f32 %v1875, %v1875
  %v1994 = vmul.f32 %v1876, %v1876
  %v1995 = vmul.f32 %v1877, %v1877
  %v1996 = vmul.f32 %v1878, %v1878
  %v1997 = vmul.f32 %v1879, %v1879
  %v1998 = vmul.f32 %v1880, %v1880
  %v1999 = vmul.f32 %v1881, %v1881
  %v2000 = vmul.f32 %v1882, %v1882
  %v2001 = vmul.f32 %v1883, %v1883
  %v2002 = vmul.f32 %v1884, %v1884
  %v2003 = vmul.f32 %v1885, %v1885
  %v2004 = vmul.f32 %v1886, %v1886
  %v2005 = vmul.f32 %v1887, %v1887
  %v2006 = vmul.f32 %v1888, %v1888
  %v2007 = vmul.f32 %v1889, %v1889
  %v2008 = vadd.f32 %v1992, %v1993
  %v2009 = vadd.f32 %v2008, %v1994
  %v2010 = vadd.f32 %v2009, %v1995
  %v2011 = vadd.f32 %v2010, %v1996
  %v2012 = vadd.f32 %v2011, %v1997
  %v2013 = vadd.f32 %v2012, %v1998
  %v2014 = vadd.f32 %v2013, %v1999
  %v2015 = vadd.f32 %v2014, %v2000
  %v2016 = vadd.f32 %v2015, %v2001
  %v2017 = vadd.f32 %v2016, %v2002
  %v2018 = vadd.f32 %v2017, %v2003
  %v2019 = vadd.f32 %v2018, %v2004
  %v2020 = vadd.f32 %v2019, %v2005
  %v2021 = vadd.f32 %v2020, %v2006
  %v2022 = vadd.f32 %v2021, %v2007
  %v2023 = vrot.slane %v2022, 4
  %v2024 = vadd.f32 %v2022, %v2023
  %v2025 = vrot.slane %v2024, 2
  %v2026 = vadd.f32 %v2024, %v2025
  %v2027 = vrot.slane %v2026, 1
  %v2028 = vadd.f32 %v2026, %v2027
  %v2029 = vadd.f32 %v2028, 0.0
  %s2030 = scalar_lea.vmem %s0, 96
  %v2031 = vld [vmem:[%s2030] sm:$0xf]
  %v2032 = vld [vmem:[%s2030 + $0x4] sm:$0xf]
  %v2033 = vld [vmem:[%s2030 + $0x8] sm:$0x1]
  %v2034 = vld [vmem:[%s2030 + $0xc] sm:$0xf]
  %v2035 = vld [vmem:[%s2030 + $0x10] sm:$0xf]
  %v2036 = vld [vmem:[%s2030 + $0x14] sm:$0x1]
  %v2037 = vld [vmem:[%s2030 + $0x18] sm:$0xf]
  %v2038 = vld [vmem:[%s2030 + $0x1c] sm:$0xf]
  %v2039 = vld [vmem:[%s2030 + $0x20] sm:$0x1]
  %v2040 = vld [vmem:[%s2030 + $0x24] sm:$0xf]
  %v2041 = vld [vmem:[%s2030 + $0x28] sm:$0xf]
  %v2042 = vld [vmem:[%s2030 + $0x2c] sm:$0x1]
  %v2043 = vld [vmem:[%s2030 + $0x30] sm:$0xf]
  %v2044 = vld [vmem:[%s2030 + $0x34] sm:$0xf]
  %v2045 = vld [vmem:[%s2030 + $0x38] sm:$0x1]
  %v2046 = vld [vmem:[%s2030 + $0x3c] sm:$0xf]
  %v2047 = vld [vmem:[%s2030 + $0x40] sm:$0xf]
  %v2048 = vld [vmem:[%s2030 + $0x44] sm:$0x1]
  %v2049 = vld [vmem:[%s2030 + $0x48] sm:$0xf]
  %v2050 = vld [vmem:[%s2030 + $0x4c] sm:$0xf]
  %v2051 = vld [vmem:[%s2030 + $0x50] sm:$0x1]
  %v2052 = vld [vmem:[%s2030 + $0x54] sm:$0xf]
  %v2053 = vld [vmem:[%s2030 + $0x58] sm:$0xf]
  %v2054 = vld [vmem:[%s2030 + $0x5c] sm:$0x1]
  %v2071 = vunpack.c.l.b16 %v2031
  %v2072 = vunpack.c.l.b16 %v2032
  %v2073 = vunpack.c.l.b16 %v2034
  %v2074 = vunpack.c.l.b16 %v2035
  %v2075 = vunpack.c.l.b16 %v2037
  %v2076 = vunpack.c.l.b16 %v2038
  %v2077 = vunpack.c.l.b16 %v2040
  %v2078 = vunpack.c.l.b16 %v2041
  %v2079 = vunpack.c.l.b16 %v2043
  %v2080 = vunpack.c.l.b16 %v2044
  %v2081 = vunpack.c.l.b16 %v2046
  %v2082 = vunpack.c.l.b16 %v2047
  %v2083 = vunpack.c.l.b16 %v2049
  %v2084 = vunpack.c.l.b16 %v2050
  %v2085 = vunpack.c.l.b16 %v2052
  %v2086 = vunpack.c.l.b16 %v2053
  %v2087 = vpack.c.b16 %v2072, %v2071
  %v2088 = vpack.c.b16 %v2074, %v2073
  %v2089 = vpack.c.b16 %v2076, %v2075
  %v2090 = vpack.c.b16 %v2078, %v2077
  %v2091 = vpack.c.b16 %v2080, %v2079
  %v2092 = vpack.c.b16 %v2082, %v2081
  %v2093 = vpack.c.b16 %v2084, %v2083
  %v2094 = vpack.c.b16 %v2086, %v2085
  %v2111 = vunpack.c.l.b16 %v2033
  %v2112 = vunpack.c.l.b16 %v2036
  %v2113 = vunpack.c.l.b16 %v2039
  %v2114 = vunpack.c.l.b16 %v2042
  %v2115 = vunpack.c.l.b16 %v2045
  %v2116 = vunpack.c.l.b16 %v2048
  %v2117 = vunpack.c.l.b16 %v2051
  %v2118 = vunpack.c.l.b16 %v2054
  %v2119 = vpack.c.b16 %v2111, %v2111
  %v2120 = vpack.c.b16 %v2112, %v2112
  %v2121 = vpack.c.b16 %v2113, %v2113
  %v2122 = vpack.c.b16 %v2114, %v2114
  %v2123 = vpack.c.b16 %v2115, %v2115
  %v2124 = vpack.c.b16 %v2116, %v2116
  %v2125 = vpack.c.b16 %v2117, %v2117
  %v2126 = vpack.c.b16 %v2118, %v2118
  %v2128 = vshrl.u32 %v2087, 16
  %v2130 = vshll.u32 %v2087, 16
  %v2132 = vrot.slane %v2130, 1
  %v2133 = vor.u32 %v2128, %v2132
  %v2135 = vshll.u32 %v2119, 16
  %v2137 = vrot.slane %v2135, 1
  %v2138 = vsel %vm110, %v2133, %v2137
  %v2140 = vshrl.u32 %v2088, 16
  %v2142 = vshll.u32 %v2088, 16
  %v2144 = vrot.slane %v2142, 1
  %v2145 = vor.u32 %v2140, %v2144
  %v2147 = vshll.u32 %v2120, 16
  %v2149 = vrot.slane %v2147, 1
  %v2150 = vsel %vm110, %v2145, %v2149
  %v2152 = vshrl.u32 %v2089, 16
  %v2154 = vshll.u32 %v2089, 16
  %v2156 = vrot.slane %v2154, 1
  %v2157 = vor.u32 %v2152, %v2156
  %v2159 = vshll.u32 %v2121, 16
  %v2161 = vrot.slane %v2159, 1
  %v2162 = vsel %vm110, %v2157, %v2161
  %v2164 = vshrl.u32 %v2090, 16
  %v2166 = vshll.u32 %v2090, 16
  %v2168 = vrot.slane %v2166, 1
  %v2169 = vor.u32 %v2164, %v2168
  %v2171 = vshll.u32 %v2122, 16
  %v2173 = vrot.slane %v2171, 1
  %v2174 = vsel %vm110, %v2169, %v2173
  %v2176 = vshrl.u32 %v2091, 16
  %v2178 = vshll.u32 %v2091, 16
  %v2180 = vrot.slane %v2178, 1
  %v2181 = vor.u32 %v2176, %v2180
  %v2183 = vshll.u32 %v2123, 16
  %v2185 = vrot.slane %v2183, 1
  %v2186 = vsel %vm110, %v2181, %v2185
  %v2188 = vshrl.u32 %v2092, 16
  %v2190 = vshll.u32 %v2092, 16
  %v2192 = vrot.slane %v2190, 1
  %v2193 = vor.u32 %v2188, %v2192
  %v2195 = vshll.u32 %v2124, 16
  %v2197 = vrot.slane %v2195, 1
  %v2198 = vsel %vm110, %v2193, %v2197
  %v2200 = vshrl.u32 %v2093, 16
  %v2202 = vshll.u32 %v2093, 16
  %v2204 = vrot.slane %v2202, 1
  %v2205 = vor.u32 %v2200, %v2204
  %v2207 = vshll.u32 %v2125, 16
  %v2209 = vrot.slane %v2207, 1
  %v2210 = vsel %vm110, %v2205, %v2209
  %v2212 = vshrl.u32 %v2094, 16
  %v2214 = vshll.u32 %v2094, 16
  %v2216 = vrot.slane %v2214, 1
  %v2217 = vor.u32 %v2212, %v2216
  %v2219 = vshll.u32 %v2126, 16
  %v2221 = vrot.slane %v2219, 1
  %v2222 = vsel %vm110, %v2217, %v2221
  %v2231 = vrot.slane %v2087, 1
  %v2232 = vrot.slane %v2119, 1
  %v2233 = vsel %vm215, %v2231, %v2232
  %v2234 = vrot.slane %v2088, 1
  %v2235 = vrot.slane %v2120, 1
  %v2236 = vsel %vm215, %v2234, %v2235
  %v2237 = vrot.slane %v2089, 1
  %v2238 = vrot.slane %v2121, 1
  %v2239 = vsel %vm215, %v2237, %v2238
  %v2240 = vrot.slane %v2090, 1
  %v2241 = vrot.slane %v2122, 1
  %v2242 = vsel %vm215, %v2240, %v2241
  %v2243 = vrot.slane %v2091, 1
  %v2244 = vrot.slane %v2123, 1
  %v2245 = vsel %vm215, %v2243, %v2244
  %v2246 = vrot.slane %v2092, 1
  %v2247 = vrot.slane %v2124, 1
  %v2248 = vsel %vm215, %v2246, %v2247
  %v2249 = vrot.slane %v2093, 1
  %v2250 = vrot.slane %v2125, 1
  %v2251 = vsel %vm215, %v2249, %v2250
  %v2252 = vrot.slane %v2094, 1
  %v2253 = vrot.slane %v2126, 1
  %v2254 = vsel %vm215, %v2252, %v2253
  %v2263 = vld [vmem:[%s1] sm:$0xf]
  %v2264 = vld [vmem:[%s1 + $0x4] sm:$0xf]
  %v2265 = vld [vmem:[%s1 + $0x8] sm:$0xf]
  %v2266 = vld [vmem:[%s1 + $0xc] sm:$0xf]
  %v2267 = vld [vmem:[%s1 + $0x10] sm:$0xf]
  %v2268 = vld [vmem:[%s1 + $0x14] sm:$0xf]
  %v2269 = vld [vmem:[%s1 + $0x18] sm:$0xf]
  %v2270 = vld [vmem:[%s1 + $0x1c] sm:$0xf]
  %v2271 = vld [vmem:[%s1 + $0x20] sm:$0xf]
  %v2272 = vld [vmem:[%s1 + $0x24] sm:$0xf]
  %v2273 = vld [vmem:[%s1 + $0x28] sm:$0xf]
  %v2274 = vld [vmem:[%s1 + $0x2c] sm:$0xf]
  %v2275 = vld [vmem:[%s1 + $0x30] sm:$0xf]
  %v2276 = vld [vmem:[%s1 + $0x34] sm:$0xf]
  %v2277 = vld [vmem:[%s1 + $0x38] sm:$0xf]
  %v2278 = vld [vmem:[%s1 + $0x3c] sm:$0xf]
  %v2279 = vld [vmem:[%s1 + $0x40] sm:$0xf]
  %v2280 = vld [vmem:[%s1 + $0x44] sm:$0xf]
  %v2281 = vld [vmem:[%s1 + $0x48] sm:$0xf]
  %v2282 = vld [vmem:[%s1 + $0x4c] sm:$0xf]
  %v2283 = vld [vmem:[%s1 + $0x50] sm:$0xf]
  %v2284 = vld [vmem:[%s1 + $0x54] sm:$0xf]
  %v2285 = vld [vmem:[%s1 + $0x58] sm:$0xf]
  %v2286 = vld [vmem:[%s1 + $0x5c] sm:$0xf]
  %v2287 = vld [vmem:[%s1 + $0x60] sm:$0xf]
  %v2288 = vld [vmem:[%s1 + $0x64] sm:$0xf]
  %v2289 = vld [vmem:[%s1 + $0x68] sm:$0xf]
  %v2290 = vld [vmem:[%s1 + $0x6c] sm:$0xf]
  %v2291 = vld [vmem:[%s1 + $0x70] sm:$0xf]
  %v2292 = vld [vmem:[%s1 + $0x74] sm:$0xf]
  %v2293 = vld [vmem:[%s1 + $0x78] sm:$0xf]
  %v2294 = vld [vmem:[%s1 + $0x7c] sm:$0xf]
  %v2295 = vld [vmem:[%s1 + $0x80] sm:$0xf]
  %v2296 = vld [vmem:[%s1 + $0x84] sm:$0xf]
  %v2297 = vld [vmem:[%s1 + $0x88] sm:$0xf]
  %v2298 = vld [vmem:[%s1 + $0x8c] sm:$0xf]
  %v2299 = vld [vmem:[%s1 + $0x90] sm:$0xf]
  %v2300 = vld [vmem:[%s1 + $0x94] sm:$0xf]
  %v2301 = vld [vmem:[%s1 + $0x98] sm:$0xf]
  %v2302 = vld [vmem:[%s1 + $0x9c] sm:$0xf]
  %v2303 = vld [vmem:[%s1 + $0xa0] sm:$0xf]
  %v2304 = vld [vmem:[%s1 + $0xa4] sm:$0xf]
  %v2305 = vld [vmem:[%s1 + $0xa8] sm:$0xf]
  %v2306 = vld [vmem:[%s1 + $0xac] sm:$0xf]
  %v2307 = vld [vmem:[%s1 + $0xb0] sm:$0xf]
  %v2308 = vld [vmem:[%s1 + $0xb4] sm:$0xf]
  %v2309 = vld [vmem:[%s1 + $0xb8] sm:$0xf]
  %v2310 = vld [vmem:[%s1 + $0xbc] sm:$0xf]
  %s2311 = scalar_lea.vmem %s0, 108
  %v2312 = vld [vmem:[%s2311] sm:$0xf]
  %v2313 = vld [vmem:[%s2311 + $0x4] sm:$0xf]
  %v2314 = vld [vmem:[%s2311 + $0x8] sm:$0x1]
  %v2315 = vld [vmem:[%s2311 + $0xc] sm:$0xf]
  %v2316 = vld [vmem:[%s2311 + $0x10] sm:$0xf]
  %v2317 = vld [vmem:[%s2311 + $0x14] sm:$0x1]
  %v2318 = vld [vmem:[%s2311 + $0x18] sm:$0xf]
  %v2319 = vld [vmem:[%s2311 + $0x1c] sm:$0xf]
  %v2320 = vld [vmem:[%s2311 + $0x20] sm:$0x1]
  %v2321 = vld [vmem:[%s2311 + $0x24] sm:$0xf]
  %v2322 = vld [vmem:[%s2311 + $0x28] sm:$0xf]
  %v2323 = vld [vmem:[%s2311 + $0x2c] sm:$0x1]
  %v2324 = vld [vmem:[%s2311 + $0x30] sm:$0xf]
  %v2325 = vld [vmem:[%s2311 + $0x34] sm:$0xf]
  %v2326 = vld [vmem:[%s2311 + $0x38] sm:$0x1]
  %v2327 = vld [vmem:[%s2311 + $0x3c] sm:$0xf]
  %v2328 = vld [vmem:[%s2311 + $0x40] sm:$0xf]
  %v2329 = vld [vmem:[%s2311 + $0x44] sm:$0x1]
  %v2330 = vld [vmem:[%s2311 + $0x48] sm:$0xf]
  %v2331 = vld [vmem:[%s2311 + $0x4c] sm:$0xf]
  %v2332 = vld [vmem:[%s2311 + $0x50] sm:$0x1]
  %v2333 = vld [vmem:[%s2311 + $0x54] sm:$0xf]
  %v2334 = vld [vmem:[%s2311 + $0x58] sm:$0xf]
  %v2335 = vld [vmem:[%s2311 + $0x5c] sm:$0x1]
  %v2352 = vunpack.c.l.b16 %v2312
  %v2353 = vunpack.c.l.b16 %v2313
  %v2354 = vunpack.c.l.b16 %v2315
  %v2355 = vunpack.c.l.b16 %v2316
  %v2356 = vunpack.c.l.b16 %v2318
  %v2357 = vunpack.c.l.b16 %v2319
  %v2358 = vunpack.c.l.b16 %v2321
  %v2359 = vunpack.c.l.b16 %v2322
  %v2360 = vunpack.c.l.b16 %v2324
  %v2361 = vunpack.c.l.b16 %v2325
  %v2362 = vunpack.c.l.b16 %v2327
  %v2363 = vunpack.c.l.b16 %v2328
  %v2364 = vunpack.c.l.b16 %v2330
  %v2365 = vunpack.c.l.b16 %v2331
  %v2366 = vunpack.c.l.b16 %v2333
  %v2367 = vunpack.c.l.b16 %v2334
  %v2368 = vpack.c.b16 %v2353, %v2352
  %v2369 = vpack.c.b16 %v2355, %v2354
  %v2370 = vpack.c.b16 %v2357, %v2356
  %v2371 = vpack.c.b16 %v2359, %v2358
  %v2372 = vpack.c.b16 %v2361, %v2360
  %v2373 = vpack.c.b16 %v2363, %v2362
  %v2374 = vpack.c.b16 %v2365, %v2364
  %v2375 = vpack.c.b16 %v2367, %v2366
  %v2392 = vunpack.c.l.b16 %v2314
  %v2393 = vunpack.c.l.b16 %v2317
  %v2394 = vunpack.c.l.b16 %v2320
  %v2395 = vunpack.c.l.b16 %v2323
  %v2396 = vunpack.c.l.b16 %v2326
  %v2397 = vunpack.c.l.b16 %v2329
  %v2398 = vunpack.c.l.b16 %v2332
  %v2399 = vunpack.c.l.b16 %v2335
  %v2400 = vpack.c.b16 %v2392, %v2392
  %v2401 = vpack.c.b16 %v2393, %v2393
  %v2402 = vpack.c.b16 %v2394, %v2394
  %v2403 = vpack.c.b16 %v2395, %v2395
  %v2404 = vpack.c.b16 %v2396, %v2396
  %v2405 = vpack.c.b16 %v2397, %v2397
  %v2406 = vpack.c.b16 %v2398, %v2398
  %v2407 = vpack.c.b16 %v2399, %v2399
  %v2409 = vshrl.u32 %v2368, 16
  %v2411 = vshll.u32 %v2368, 16
  %v2413 = vrot.slane %v2411, 1
  %v2414 = vor.u32 %v2409, %v2413
  %v2416 = vshll.u32 %v2400, 16
  %v2418 = vrot.slane %v2416, 1
  %v2419 = vsel %vm110, %v2414, %v2418
  %v2421 = vshrl.u32 %v2369, 16
  %v2423 = vshll.u32 %v2369, 16
  %v2425 = vrot.slane %v2423, 1
  %v2426 = vor.u32 %v2421, %v2425
  %v2428 = vshll.u32 %v2401, 16
  %v2430 = vrot.slane %v2428, 1
  %v2431 = vsel %vm110, %v2426, %v2430
  %v2433 = vshrl.u32 %v2370, 16
  %v2435 = vshll.u32 %v2370, 16
  %v2437 = vrot.slane %v2435, 1
  %v2438 = vor.u32 %v2433, %v2437
  %v2440 = vshll.u32 %v2402, 16
  %v2442 = vrot.slane %v2440, 1
  %v2443 = vsel %vm110, %v2438, %v2442
  %v2445 = vshrl.u32 %v2371, 16
  %v2447 = vshll.u32 %v2371, 16
  %v2449 = vrot.slane %v2447, 1
  %v2450 = vor.u32 %v2445, %v2449
  %v2452 = vshll.u32 %v2403, 16
  %v2454 = vrot.slane %v2452, 1
  %v2455 = vsel %vm110, %v2450, %v2454
  %v2457 = vshrl.u32 %v2372, 16
  %v2459 = vshll.u32 %v2372, 16
  %v2461 = vrot.slane %v2459, 1
  %v2462 = vor.u32 %v2457, %v2461
  %v2464 = vshll.u32 %v2404, 16
  %v2466 = vrot.slane %v2464, 1
  %v2467 = vsel %vm110, %v2462, %v2466
  %v2469 = vshrl.u32 %v2373, 16
  %v2471 = vshll.u32 %v2373, 16
  %v2473 = vrot.slane %v2471, 1
  %v2474 = vor.u32 %v2469, %v2473
  %v2476 = vshll.u32 %v2405, 16
  %v2478 = vrot.slane %v2476, 1
  %v2479 = vsel %vm110, %v2474, %v2478
  %v2481 = vshrl.u32 %v2374, 16
  %v2483 = vshll.u32 %v2374, 16
  %v2485 = vrot.slane %v2483, 1
  %v2486 = vor.u32 %v2481, %v2485
  %v2488 = vshll.u32 %v2406, 16
  %v2490 = vrot.slane %v2488, 1
  %v2491 = vsel %vm110, %v2486, %v2490
  %v2493 = vshrl.u32 %v2375, 16
  %v2495 = vshll.u32 %v2375, 16
  %v2497 = vrot.slane %v2495, 1
  %v2498 = vor.u32 %v2493, %v2497
  %v2500 = vshll.u32 %v2407, 16
  %v2502 = vrot.slane %v2500, 1
  %v2503 = vsel %vm110, %v2498, %v2502
  %v2512 = vrot.slane %v2368, 1
  %v2513 = vrot.slane %v2400, 1
  %v2514 = vsel %vm215, %v2512, %v2513
  %v2515 = vrot.slane %v2369, 1
  %v2516 = vrot.slane %v2401, 1
  %v2517 = vsel %vm215, %v2515, %v2516
  %v2518 = vrot.slane %v2370, 1
  %v2519 = vrot.slane %v2402, 1
  %v2520 = vsel %vm215, %v2518, %v2519
  %v2521 = vrot.slane %v2371, 1
  %v2522 = vrot.slane %v2403, 1
  %v2523 = vsel %vm215, %v2521, %v2522
  %v2524 = vrot.slane %v2372, 1
  %v2525 = vrot.slane %v2404, 1
  %v2526 = vsel %vm215, %v2524, %v2525
  %v2527 = vrot.slane %v2373, 1
  %v2528 = vrot.slane %v2405, 1
  %v2529 = vsel %vm215, %v2527, %v2528
  %v2530 = vrot.slane %v2374, 1
  %v2531 = vrot.slane %v2406, 1
  %v2532 = vsel %vm215, %v2530, %v2531
  %v2533 = vrot.slane %v2375, 1
  %v2534 = vrot.slane %v2407, 1
  %v2535 = vsel %vm215, %v2533, %v2534
  %v2544 = vld [vmem:[%s529] sm:$0xf]
  %v2545 = vld [vmem:[%s529 + $0x4] sm:$0xf]
  %v2546 = vld [vmem:[%s529 + $0x8] sm:$0xf]
  %v2547 = vld [vmem:[%s529 + $0xc] sm:$0xf]
  %v2548 = vld [vmem:[%s529 + $0x10] sm:$0xf]
  %v2549 = vld [vmem:[%s529 + $0x14] sm:$0xf]
  %v2550 = vld [vmem:[%s529 + $0x18] sm:$0xf]
  %v2551 = vld [vmem:[%s529 + $0x1c] sm:$0xf]
  %v2552 = vld [vmem:[%s529 + $0x20] sm:$0xf]
  %v2553 = vld [vmem:[%s529 + $0x24] sm:$0xf]
  %v2554 = vld [vmem:[%s529 + $0x28] sm:$0xf]
  %v2555 = vld [vmem:[%s529 + $0x2c] sm:$0xf]
  %v2556 = vld [vmem:[%s529 + $0x30] sm:$0xf]
  %v2557 = vld [vmem:[%s529 + $0x34] sm:$0xf]
  %v2558 = vld [vmem:[%s529 + $0x38] sm:$0xf]
  %v2559 = vld [vmem:[%s529 + $0x3c] sm:$0xf]
  %v2560 = vld [vmem:[%s529 + $0x40] sm:$0xf]
  %v2561 = vld [vmem:[%s529 + $0x44] sm:$0xf]
  %v2562 = vld [vmem:[%s529 + $0x48] sm:$0xf]
  %v2563 = vld [vmem:[%s529 + $0x4c] sm:$0xf]
  %v2564 = vld [vmem:[%s529 + $0x50] sm:$0xf]
  %v2565 = vld [vmem:[%s529 + $0x54] sm:$0xf]
  %v2566 = vld [vmem:[%s529 + $0x58] sm:$0xf]
  %v2567 = vld [vmem:[%s529 + $0x5c] sm:$0xf]
  %v2568 = vld [vmem:[%s529 + $0x60] sm:$0xf]
  %v2569 = vld [vmem:[%s529 + $0x64] sm:$0xf]
  %v2570 = vld [vmem:[%s529 + $0x68] sm:$0xf]
  %v2571 = vld [vmem:[%s529 + $0x6c] sm:$0xf]
  %v2572 = vld [vmem:[%s529 + $0x70] sm:$0xf]
  %v2573 = vld [vmem:[%s529 + $0x74] sm:$0xf]
  %v2574 = vld [vmem:[%s529 + $0x78] sm:$0xf]
  %v2575 = vld [vmem:[%s529 + $0x7c] sm:$0xf]
  %v2576 = vld [vmem:[%s529 + $0x80] sm:$0xf]
  %v2577 = vld [vmem:[%s529 + $0x84] sm:$0xf]
  %v2578 = vld [vmem:[%s529 + $0x88] sm:$0xf]
  %v2579 = vld [vmem:[%s529 + $0x8c] sm:$0xf]
  %v2580 = vld [vmem:[%s529 + $0x90] sm:$0xf]
  %v2581 = vld [vmem:[%s529 + $0x94] sm:$0xf]
  %v2582 = vld [vmem:[%s529 + $0x98] sm:$0xf]
  %v2583 = vld [vmem:[%s529 + $0x9c] sm:$0xf]
  %v2584 = vld [vmem:[%s529 + $0xa0] sm:$0xf]
  %v2585 = vld [vmem:[%s529 + $0xa4] sm:$0xf]
  %v2586 = vld [vmem:[%s529 + $0xa8] sm:$0xf]
  %v2587 = vld [vmem:[%s529 + $0xac] sm:$0xf]
  %v2588 = vld [vmem:[%s529 + $0xb0] sm:$0xf]
  %v2589 = vld [vmem:[%s529 + $0xb4] sm:$0xf]
  %v2590 = vld [vmem:[%s529 + $0xb8] sm:$0xf]
  %v2591 = vld [vmem:[%s529 + $0xbc] sm:$0xf]
  %v2640 = vunpack.c.l.b16 %v2544
  %v2641 = vunpack.c.l.b16 %v2545
  %v2642 = vunpack.c.l.b16 %v2546
  %v2643 = vunpack.c.l.b16 %v2547
  %v2644 = vunpack.c.l.b16 %v2548
  %v2645 = vunpack.c.l.b16 %v2549
  %v2646 = vunpack.c.l.b16 %v2550
  %v2647 = vunpack.c.l.b16 %v2551
  %v2648 = vunpack.c.l.b16 %v2552
  %v2649 = vunpack.c.l.b16 %v2553
  %v2650 = vunpack.c.l.b16 %v2554
  %v2651 = vunpack.c.l.b16 %v2555
  %v2652 = vunpack.c.l.b16 %v2556
  %v2653 = vunpack.c.l.b16 %v2557
  %v2654 = vunpack.c.l.b16 %v2558
  %v2655 = vunpack.c.l.b16 %v2559
  %v2656 = vunpack.c.l.b16 %v2560
  %v2657 = vunpack.c.l.b16 %v2561
  %v2658 = vunpack.c.l.b16 %v2562
  %v2659 = vunpack.c.l.b16 %v2563
  %v2660 = vunpack.c.l.b16 %v2564
  %v2661 = vunpack.c.l.b16 %v2565
  %v2662 = vunpack.c.l.b16 %v2566
  %v2663 = vunpack.c.l.b16 %v2567
  %v2664 = vunpack.c.l.b16 %v2568
  %v2665 = vunpack.c.l.b16 %v2569
  %v2666 = vunpack.c.l.b16 %v2570
  %v2667 = vunpack.c.l.b16 %v2571
  %v2668 = vunpack.c.l.b16 %v2572
  %v2669 = vunpack.c.l.b16 %v2573
  %v2670 = vunpack.c.l.b16 %v2574
  %v2671 = vunpack.c.l.b16 %v2575
  %v2672 = vunpack.c.l.b16 %v2576
  %v2673 = vunpack.c.l.b16 %v2577
  %v2674 = vunpack.c.l.b16 %v2578
  %v2675 = vunpack.c.l.b16 %v2579
  %v2676 = vunpack.c.l.b16 %v2580
  %v2677 = vunpack.c.l.b16 %v2581
  %v2678 = vunpack.c.l.b16 %v2582
  %v2679 = vunpack.c.l.b16 %v2583
  %v2680 = vunpack.c.l.b16 %v2584
  %v2681 = vunpack.c.l.b16 %v2585
  %v2682 = vunpack.c.l.b16 %v2586
  %v2683 = vunpack.c.l.b16 %v2587
  %v2684 = vunpack.c.l.b16 %v2588
  %v2685 = vunpack.c.l.b16 %v2589
  %v2686 = vunpack.c.l.b16 %v2590
  %v2687 = vunpack.c.l.b16 %v2591
  %v2688 = vpack.c.b16 %v2641, %v2640
  %v2689 = vpack.c.b16 %v2643, %v2642
  %v2690 = vpack.c.b16 %v2645, %v2644
  %v2691 = vpack.c.b16 %v2647, %v2646
  %v2692 = vpack.c.b16 %v2649, %v2648
  %v2693 = vpack.c.b16 %v2651, %v2650
  %v2694 = vpack.c.b16 %v2653, %v2652
  %v2695 = vpack.c.b16 %v2655, %v2654
  %v2696 = vpack.c.b16 %v2657, %v2656
  %v2697 = vpack.c.b16 %v2659, %v2658
  %v2698 = vpack.c.b16 %v2661, %v2660
  %v2699 = vpack.c.b16 %v2663, %v2662
  %v2700 = vpack.c.b16 %v2665, %v2664
  %v2701 = vpack.c.b16 %v2667, %v2666
  %v2702 = vpack.c.b16 %v2669, %v2668
  %v2703 = vpack.c.b16 %v2671, %v2670
  %v2704 = vpack.c.b16 %v2673, %v2672
  %v2705 = vpack.c.b16 %v2675, %v2674
  %v2706 = vpack.c.b16 %v2677, %v2676
  %v2707 = vpack.c.b16 %v2679, %v2678
  %v2708 = vpack.c.b16 %v2681, %v2680
  %v2709 = vpack.c.b16 %v2683, %v2682
  %v2710 = vpack.c.b16 %v2685, %v2684
  %v2711 = vpack.c.b16 %v2687, %v2686
  %2736 = vmatprep.subr.bf16.mxu0 0
  %2737 = vmatpush1.bf16.msra.mxu0 %v2688
  %2738 = vmatprep.subr.bf16.mxu0 0
  %2739 = vmatpush1.bf16.msra.mxu0 %v2689
  %2740 = vmatprep.subr.bf16.mxu0 0
  %2741 = vmatpush1.bf16.msra.mxu0 %v2690
  %2742 = vmatprep.subr.bf16.mxu0 0
  %2743 = vmatpush1.bf16.msra.mxu0 %v2691
  %2744 = vmatprep.subr.bf16.mxu0 0
  %2745 = vmatpush1.bf16.msra.mxu0 %v2692
  %2746 = vmatprep.subr.bf16.mxu0 0
  %2747 = vmatpush1.bf16.msra.mxu0 %v2693
  %2748 = vmatprep.subr.bf16.mxu0 0
  %2749 = vmatpush1.bf16.msra.mxu0 %v2694
  %2750 = vmatprep.subr.bf16.mxu0 0
  %2751 = vmatpush1.bf16.msra.mxu0 %v2695
  %2752 = vmatprep.subr.bf16.mxu0 0
  %2753 = vmatpush1.bf16.msra.mxu0 %v2696
  %2754 = vmatprep.subr.bf16.mxu0 0
  %2755 = vmatpush1.bf16.msra.mxu0 %v2697
  %2756 = vmatprep.subr.bf16.mxu0 0
  %2757 = vmatpush1.bf16.msra.mxu0 %v2698
  %2758 = vmatprep.subr.bf16.mxu0 0
  %2759 = vmatpush1.bf16.msra.mxu0 %v2699
  %2760 = vmatprep.subr.bf16.mxu0 0
  %2761 = vmatpush1.bf16.msra.mxu0 %v2700
  %2762 = vmatprep.subr.bf16.mxu0 0
  %2763 = vmatpush1.bf16.msra.mxu0 %v2701
  %2764 = vmatprep.subr.bf16.mxu0 0
  %2765 = vmatpush1.bf16.msra.mxu0 %v2702
  %2766 = vmatprep.subr.bf16.mxu0 0
  %2767 = vmatpush1.bf16.msra.mxu0 %v2703
  %2768 = vmatprep.mubr.bf16.mxu0 %v2419
  %2769 = vmatmul.mubr.bf16.gmra.mrb[0].mxu0 %v2368
  %v2770 = vpop.f32.mrb[0].mxu0
  %v2771 = vadd.f32 0.0, %v2770
  %v2772 = vpop.f32.mrb[0].mxu0
  %v2773 = vpop.f32.mrb[0].mxu0
  %v2774 = vadd.f32 0.0, %v2773
  %v2775 = vpop.f32.mrb[0].mxu0
  %2776 = vmatprep.mubr.bf16.mxu0 %v2431
  %2777 = vmatmul.mubr.bf16.gmra.mrb[0].mxu0 %v2369
  %v2778 = vpop.f32.mrb[0].mxu0
  %v2779 = vadd.f32 0.0, %v2778
  %v2780 = vpop.f32.mrb[0].mxu0
  %v2781 = vpop.f32.mrb[0].mxu0
  %v2782 = vadd.f32 0.0, %v2781
  %v2783 = vpop.f32.mrb[0].mxu0
  %2784 = vmatprep.mubr.bf16.mxu0 %v2443
  %2785 = vmatmul.mubr.bf16.gmra.mrb[0].mxu0 %v2370
  %v2786 = vpop.f32.mrb[0].mxu0
  %v2787 = vadd.f32 0.0, %v2786
  %v2788 = vpop.f32.mrb[0].mxu0
  %v2789 = vpop.f32.mrb[0].mxu0
  %v2790 = vadd.f32 0.0, %v2789
  %v2791 = vpop.f32.mrb[0].mxu0
  %2792 = vmatprep.mubr.bf16.mxu0 %v2455
  %2793 = vmatmul.mubr.bf16.gmra.mrb[0].mxu0 %v2371
  %v2794 = vpop.f32.mrb[0].mxu0
  %v2795 = vadd.f32 0.0, %v2794
  %v2796 = vpop.f32.mrb[0].mxu0
  %v2797 = vpop.f32.mrb[0].mxu0
  %v2798 = vadd.f32 0.0, %v2797
  %v2799 = vpop.f32.mrb[0].mxu0
  %2800 = vmatprep.mubr.bf16.mxu0 %v2467
  %2801 = vmatmul.mubr.bf16.gmra.mrb[0].mxu0 %v2372
  %v2802 = vpop.f32.mrb[0].mxu0
  %v2803 = vadd.f32 0.0, %v2802
  %v2804 = vpop.f32.mrb[0].mxu0
  %v2805 = vpop.f32.mrb[0].mxu0
  %v2806 = vadd.f32 0.0, %v2805
  %v2807 = vpop.f32.mrb[0].mxu0
  %2808 = vmatprep.mubr.bf16.mxu0 %v2479
  %2809 = vmatmul.mubr.bf16.gmra.mrb[0].mxu0 %v2373
  %v2810 = vpop.f32.mrb[0].mxu0
  %v2811 = vadd.f32 0.0, %v2810
  %v2812 = vpop.f32.mrb[0].mxu0
  %v2813 = vpop.f32.mrb[0].mxu0
  %v2814 = vadd.f32 0.0, %v2813
  %v2815 = vpop.f32.mrb[0].mxu0
  %2816 = vmatprep.mubr.bf16.mxu0 %v2491
  %2817 = vmatmul.mubr.bf16.gmra.mrb[0].mxu0 %v2374
  %v2818 = vpop.f32.mrb[0].mxu0
  %v2819 = vadd.f32 0.0, %v2818
  %v2820 = vpop.f32.mrb[0].mxu0
  %v2821 = vpop.f32.mrb[0].mxu0
  %v2822 = vadd.f32 0.0, %v2821
  %v2823 = vpop.f32.mrb[0].mxu0
  %2824 = vmatprep.mubr.bf16.mxu0 %v2503
  %2825 = vmatmul.mubr.bf16.gmra.mrb[0].mxu0 %v2375
  %v2826 = vpop.f32.mrb[0].mxu0
  %v2827 = vadd.f32 0.0, %v2826
  %v2828 = vpop.f32.mrb[0].mxu0
  %v2829 = vpop.f32.mrb[0].mxu0
  %v2830 = vadd.f32 0.0, %v2829
  %v2831 = vpop.f32.mrb[0].mxu0
  %2832 = vdwg.mxu0
  %2833 = vmatprep.subr.bf16.mxu0 0
  %2834 = vmatpush1.bf16.msra.mxu0 %v2704
  %2835 = vmatprep.subr.bf16.mxu0 0
  %2836 = vmatpush1.bf16.msra.mxu0 %v2705
  %2837 = vmatprep.subr.bf16.mxu0 0
  %2838 = vmatpush1.bf16.msra.mxu0 %v2706
  %2839 = vmatprep.subr.bf16.mxu0 0
  %2840 = vmatpush1.bf16.msra.mxu0 %v2707
  %2841 = vmatprep.subr.bf16.mxu0 0
  %2842 = vmatpush1.bf16.msra.mxu0 %v2708
  %2843 = vmatprep.subr.bf16.mxu0 0
  %2844 = vmatpush1.bf16.msra.mxu0 %v2709
  %2845 = vmatprep.subr.bf16.mxu0 0
  %2846 = vmatpush1.bf16.msra.mxu0 %v2710
  %2847 = vmatprep.subr.bf16.mxu0 0
  %2848 = vmatpush1.bf16.msra.mxu0 %v2711
  %2849 = vmatprep.subr.bf16.mxu0 0
  %2850 = vmatpush1.bf16.msra.mxu0 0
  %2851 = vmatprep.subr.bf16.mxu0 0
  %2852 = vmatpush1.bf16.msra.mxu0 0
  %2853 = vmatprep.subr.bf16.mxu0 0
  %2854 = vmatpush1.bf16.msra.mxu0 0
  %2855 = vmatprep.subr.bf16.mxu0 0
  %2856 = vmatpush1.bf16.msra.mxu0 0
  %2857 = vmatprep.subr.bf16.mxu0 0
  %2858 = vmatpush1.bf16.msra.mxu0 0
  %2859 = vmatprep.subr.bf16.mxu0 0
  %2860 = vmatpush1.bf16.msra.mxu0 0
  %2861 = vmatprep.subr.bf16.mxu0 0
  %2862 = vmatpush1.bf16.msra.mxu0 0
  %2863 = vmatprep.subr.bf16.mxu0 0
  %2864 = vmatpush1.bf16.msra.mxu0 0
  %2865 = vmatprep.mubr.bf16.mxu0 0
  %2866 = vmatmul.mubr.bf16.gmra.mrb[0].mxu0 %v2514
  %v2867 = vpop.f32.mrb[0].mxu0
  %v2868 = vadd.f32 %v2771, %v2867
  %v2869 = vpop.f32.mrb[0].mxu0
  %v2870 = vpop.f32.mrb[0].mxu0
  %v2871 = vadd.f32 %v2774, %v2870
  %v2872 = vpop.f32.mrb[0].mxu0
  %2873 = vmatprep.mubr.bf16.mxu0 0
  %2874 = vmatmul.mubr.bf16.gmra.mrb[0].mxu0 %v2517
  %v2875 = vpop.f32.mrb[0].mxu0
  %v2876 = vadd.f32 %v2779, %v2875
  %v2877 = vpop.f32.mrb[0].mxu0
  %v2878 = vpop.f32.mrb[0].mxu0
  %v2879 = vadd.f32 %v2782, %v2878
  %v2880 = vpop.f32.mrb[0].mxu0
  %2881 = vmatprep.mubr.bf16.mxu0 0
  %2882 = vmatmul.mubr.bf16.gmra.mrb[0].mxu0 %v2520
  %v2883 = vpop.f32.mrb[0].mxu0
  %v2884 = vadd.f32 %v2787, %v2883
  %v2885 = vpop.f32.mrb[0].mxu0
  %v2886 = vpop.f32.mrb[0].mxu0
  %v2887 = vadd.f32 %v2790, %v2886
  %v2888 = vpop.f32.mrb[0].mxu0
  %2889 = vmatprep.mubr.bf16.mxu0 0
  %2890 = vmatmul.mubr.bf16.gmra.mrb[0].mxu0 %v2523
  %v2891 = vpop.f32.mrb[0].mxu0
  %v2892 = vadd.f32 %v2795, %v2891
  %v2893 = vpop.f32.mrb[0].mxu0
  %v2894 = vpop.f32.mrb[0].mxu0
  %v2895 = vadd.f32 %v2798, %v2894
  %v2896 = vpop.f32.mrb[0].mxu0
  %2897 = vmatprep.mubr.bf16.mxu0 0
  %2898 = vmatmul.mubr.bf16.gmra.mrb[0].mxu0 %v2526
  %v2899 = vpop.f32.mrb[0].mxu0
  %v2900 = vadd.f32 %v2803, %v2899
  %v2901 = vpop.f32.mrb[0].mxu0
  %v2902 = vpop.f32.mrb[0].mxu0
  %v2903 = vadd.f32 %v2806, %v2902
  %v2904 = vpop.f32.mrb[0].mxu0
  %2905 = vmatprep.mubr.bf16.mxu0 0
  %2906 = vmatmul.mubr.bf16.gmra.mrb[0].mxu0 %v2529
  %v2907 = vpop.f32.mrb[0].mxu0
  %v2908 = vadd.f32 %v2811, %v2907
  %v2909 = vpop.f32.mrb[0].mxu0
  %v2910 = vpop.f32.mrb[0].mxu0
  %v2911 = vadd.f32 %v2814, %v2910
  %v2912 = vpop.f32.mrb[0].mxu0
  %2913 = vmatprep.mubr.bf16.mxu0 0
  %2914 = vmatmul.mubr.bf16.gmra.mrb[0].mxu0 %v2532
  %v2915 = vpop.f32.mrb[0].mxu0
  %v2916 = vadd.f32 %v2819, %v2915
  %v2917 = vpop.f32.mrb[0].mxu0
  %v2918 = vpop.f32.mrb[0].mxu0
  %v2919 = vadd.f32 %v2822, %v2918
  %v2920 = vpop.f32.mrb[0].mxu0
  %2921 = vmatprep.mubr.bf16.mxu0 0
  %2922 = vmatmul.mubr.bf16.gmra.mrb[0].mxu0 %v2535
  %v2923 = vpop.f32.mrb[0].mxu0
  %v2924 = vadd.f32 %v2827, %v2923
  %v2925 = vpop.f32.mrb[0].mxu0
  %v2926 = vpop.f32.mrb[0].mxu0
  %v2927 = vadd.f32 %v2830, %v2926
  %v2928 = vpop.f32.mrb[0].mxu0
  %2929 = vdwg.mxu0
  %v2978 = vunpack.c.l.b16 %v2263
  %v2979 = vunpack.c.l.b16 %v2264
  %v2980 = vunpack.c.l.b16 %v2265
  %v2981 = vunpack.c.l.b16 %v2266
  %v2982 = vunpack.c.l.b16 %v2267
  %v2983 = vunpack.c.l.b16 %v2268
  %v2984 = vunpack.c.l.b16 %v2269
  %v2985 = vunpack.c.l.b16 %v2270
  %v2986 = vunpack.c.l.b16 %v2271
  %v2987 = vunpack.c.l.b16 %v2272
  %v2988 = vunpack.c.l.b16 %v2273
  %v2989 = vunpack.c.l.b16 %v2274
  %v2990 = vunpack.c.l.b16 %v2275
  %v2991 = vunpack.c.l.b16 %v2276
  %v2992 = vunpack.c.l.b16 %v2277
  %v2993 = vunpack.c.l.b16 %v2278
  %v2994 = vunpack.c.l.b16 %v2279
  %v2995 = vunpack.c.l.b16 %v2280
  %v2996 = vunpack.c.l.b16 %v2281
  %v2997 = vunpack.c.l.b16 %v2282
  %v2998 = vunpack.c.l.b16 %v2283
  %v2999 = vunpack.c.l.b16 %v2284
  %v3000 = vunpack.c.l.b16 %v2285
  %v3001 = vunpack.c.l.b16 %v2286
  %v3002 = vunpack.c.l.b16 %v2287
  %v3003 = vunpack.c.l.b16 %v2288
  %v3004 = vunpack.c.l.b16 %v2289
  %v3005 = vunpack.c.l.b16 %v2290
  %v3006 = vunpack.c.l.b16 %v2291
  %v3007 = vunpack.c.l.b16 %v2292
  %v3008 = vunpack.c.l.b16 %v2293
  %v3009 = vunpack.c.l.b16 %v2294
  %v3010 = vunpack.c.l.b16 %v2295
  %v3011 = vunpack.c.l.b16 %v2296
  %v3012 = vunpack.c.l.b16 %v2297
  %v3013 = vunpack.c.l.b16 %v2298
  %v3014 = vunpack.c.l.b16 %v2299
  %v3015 = vunpack.c.l.b16 %v2300
  %v3016 = vunpack.c.l.b16 %v2301
  %v3017 = vunpack.c.l.b16 %v2302
  %v3018 = vunpack.c.l.b16 %v2303
  %v3019 = vunpack.c.l.b16 %v2304
  %v3020 = vunpack.c.l.b16 %v2305
  %v3021 = vunpack.c.l.b16 %v2306
  %v3022 = vunpack.c.l.b16 %v2307
  %v3023 = vunpack.c.l.b16 %v2308
  %v3024 = vunpack.c.l.b16 %v2309
  %v3025 = vunpack.c.l.b16 %v2310
  %v3026 = vpack.c.b16 %v2979, %v2978
  %v3027 = vpack.c.b16 %v2981, %v2980
  %v3028 = vpack.c.b16 %v2983, %v2982
  %v3029 = vpack.c.b16 %v2985, %v2984
  %v3030 = vpack.c.b16 %v2987, %v2986
  %v3031 = vpack.c.b16 %v2989, %v2988
  %v3032 = vpack.c.b16 %v2991, %v2990
  %v3033 = vpack.c.b16 %v2993, %v2992
  %v3034 = vpack.c.b16 %v2995, %v2994
  %v3035 = vpack.c.b16 %v2997, %v2996
  %v3036 = vpack.c.b16 %v2999, %v2998
  %v3037 = vpack.c.b16 %v3001, %v3000
  %v3038 = vpack.c.b16 %v3003, %v3002
  %v3039 = vpack.c.b16 %v3005, %v3004
  %v3040 = vpack.c.b16 %v3007, %v3006
  %v3041 = vpack.c.b16 %v3009, %v3008
  %v3042 = vpack.c.b16 %v3011, %v3010
  %v3043 = vpack.c.b16 %v3013, %v3012
  %v3044 = vpack.c.b16 %v3015, %v3014
  %v3045 = vpack.c.b16 %v3017, %v3016
  %v3046 = vpack.c.b16 %v3019, %v3018
  %v3047 = vpack.c.b16 %v3021, %v3020
  %v3048 = vpack.c.b16 %v3023, %v3022
  %v3049 = vpack.c.b16 %v3025, %v3024
  %3074 = vmatprep.subr.bf16.mxu0 0
  %3075 = vmatpush1.bf16.msra.mxu0 %v3026
  %3076 = vmatprep.subr.bf16.mxu0 0
  %3077 = vmatpush1.bf16.msra.mxu0 %v3027
  %3078 = vmatprep.subr.bf16.mxu0 0
  %3079 = vmatpush1.bf16.msra.mxu0 %v3028
  %3080 = vmatprep.subr.bf16.mxu0 0
  %3081 = vmatpush1.bf16.msra.mxu0 %v3029
  %3082 = vmatprep.subr.bf16.mxu0 0
  %3083 = vmatpush1.bf16.msra.mxu0 %v3030
  %3084 = vmatprep.subr.bf16.mxu0 0
  %3085 = vmatpush1.bf16.msra.mxu0 %v3031
  %3086 = vmatprep.subr.bf16.mxu0 0
  %3087 = vmatpush1.bf16.msra.mxu0 %v3032
  %3088 = vmatprep.subr.bf16.mxu0 0
  %3089 = vmatpush1.bf16.msra.mxu0 %v3033
  %3090 = vmatprep.subr.bf16.mxu0 0
  %3091 = vmatpush1.bf16.msra.mxu0 %v3034
  %3092 = vmatprep.subr.bf16.mxu0 0
  %3093 = vmatpush1.bf16.msra.mxu0 %v3035
  %3094 = vmatprep.subr.bf16.mxu0 0
  %3095 = vmatpush1.bf16.msra.mxu0 %v3036
  %3096 = vmatprep.subr.bf16.mxu0 0
  %3097 = vmatpush1.bf16.msra.mxu0 %v3037
  %3098 = vmatprep.subr.bf16.mxu0 0
  %3099 = vmatpush1.bf16.msra.mxu0 %v3038
  %3100 = vmatprep.subr.bf16.mxu0 0
  %3101 = vmatpush1.bf16.msra.mxu0 %v3039
  %3102 = vmatprep.subr.bf16.mxu0 0
  %3103 = vmatpush1.bf16.msra.mxu0 %v3040
  %3104 = vmatprep.subr.bf16.mxu0 0
  %3105 = vmatpush1.bf16.msra.mxu0 %v3041
  %3106 = vmatprep.mubr.bf16.mxu0 %v2138
  %3107 = vmatmul.mubr.bf16.gmra.mrb[0].mxu0 %v2087
  %v3108 = vpop.f32.mrb[0].mxu0
  %v3109 = vadd.f32 %v2868, %v3108
  %v3110 = vpop.f32.mrb[0].mxu0
  %v3111 = vpop.f32.mrb[0].mxu0
  %v3112 = vadd.f32 %v2871, %v3111
  %v3113 = vpop.f32.mrb[0].mxu0
  %3114 = vmatprep.mubr.bf16.mxu0 %v2150
  %3115 = vmatmul.mubr.bf16.gmra.mrb[0].mxu0 %v2088
  %v3116 = vpop.f32.mrb[0].mxu0
  %v3117 = vadd.f32 %v2876, %v3116
  %v3118 = vpop.f32.mrb[0].mxu0
  %v3119 = vpop.f32.mrb[0].mxu0
  %v3120 = vadd.f32 %v2879, %v3119
  %v3121 = vpop.f32.mrb[0].mxu0
  %3122 = vmatprep.mubr.bf16.mxu0 %v2162
  %3123 = vmatmul.mubr.bf16.gmra.mrb[0].mxu0 %v2089
  %v3124 = vpop.f32.mrb[0].mxu0
  %v3125 = vadd.f32 %v2884, %v3124
  %v3126 = vpop.f32.mrb[0].mxu0
  %v3127 = vpop.f32.mrb[0].mxu0
  %v3128 = vadd.f32 %v2887, %v3127
  %v3129 = vpop.f32.mrb[0].mxu0
  %3130 = vmatprep.mubr.bf16.mxu0 %v2174
  %3131 = vmatmul.mubr.bf16.gmra.mrb[0].mxu0 %v2090
  %v3132 = vpop.f32.mrb[0].mxu0
  %v3133 = vadd.f32 %v2892, %v3132
  %v3134 = vpop.f32.mrb[0].mxu0
  %v3135 = vpop.f32.mrb[0].mxu0
  %v3136 = vadd.f32 %v2895, %v3135
  %v3137 = vpop.f32.mrb[0].mxu0
  %3138 = vmatprep.mubr.bf16.mxu0 %v2186
  %3139 = vmatmul.mubr.bf16.gmra.mrb[0].mxu0 %v2091
  %v3140 = vpop.f32.mrb[0].mxu0
  %v3141 = vadd.f32 %v2900, %v3140
  %v3142 = vpop.f32.mrb[0].mxu0
  %v3143 = vpop.f32.mrb[0].mxu0
  %v3144 = vadd.f32 %v2903, %v3143
  %v3145 = vpop.f32.mrb[0].mxu0
  %3146 = vmatprep.mubr.bf16.mxu0 %v2198
  %3147 = vmatmul.mubr.bf16.gmra.mrb[0].mxu0 %v2092
  %v3148 = vpop.f32.mrb[0].mxu0
  %v3149 = vadd.f32 %v2908, %v3148
  %v3150 = vpop.f32.mrb[0].mxu0
  %v3151 = vpop.f32.mrb[0].mxu0
  %v3152 = vadd.f32 %v2911, %v3151
  %v3153 = vpop.f32.mrb[0].mxu0
  %3154 = vmatprep.mubr.bf16.mxu0 %v2210
  %3155 = vmatmul.mubr.bf16.gmra.mrb[0].mxu0 %v2093
  %v3156 = vpop.f32.mrb[0].mxu0
  %v3157 = vadd.f32 %v2916, %v3156
  %v3158 = vpop.f32.mrb[0].mxu0
  %v3159 = vpop.f32.mrb[0].mxu0
  %v3160 = vadd.f32 %v2919, %v3159
  %v3161 = vpop.f32.mrb[0].mxu0
  %3162 = vmatprep.mubr.bf16.mxu0 %v2222
  %3163 = vmatmul.mubr.bf16.gmra.mrb[0].mxu0 %v2094
  %v3164 = vpop.f32.mrb[0].mxu0
  %v3165 = vadd.f32 %v2924, %v3164
  %v3166 = vpop.f32.mrb[0].mxu0
  %v3167 = vpop.f32.mrb[0].mxu0
  %v3168 = vadd.f32 %v2927, %v3167
  %v3169 = vpop.f32.mrb[0].mxu0
  %3170 = vdwg.mxu0
  %3171 = vmatprep.subr.bf16.mxu0 0
  %3172 = vmatpush1.bf16.msra.mxu0 %v3042
  %3173 = vmatprep.subr.bf16.mxu0 0
  %3174 = vmatpush1.bf16.msra.mxu0 %v3043
  %3175 = vmatprep.subr.bf16.mxu0 0
  %3176 = vmatpush1.bf16.msra.mxu0 %v3044
  %3177 = vmatprep.subr.bf16.mxu0 0
  %3178 = vmatpush1.bf16.msra.mxu0 %v3045
  %3179 = vmatprep.subr.bf16.mxu0 0
  %3180 = vmatpush1.bf16.msra.mxu0 %v3046
  %3181 = vmatprep.subr.bf16.mxu0 0
  %3182 = vmatpush1.bf16.msra.mxu0 %v3047
  %3183 = vmatprep.subr.bf16.mxu0 0
  %3184 = vmatpush1.bf16.msra.mxu0 %v3048
  %3185 = vmatprep.subr.bf16.mxu0 0
  %3186 = vmatpush1.bf16.msra.mxu0 %v3049
  %3187 = vmatprep.subr.bf16.mxu0 0
  %3188 = vmatpush1.bf16.msra.mxu0 0
  %3189 = vmatprep.subr.bf16.mxu0 0
  %3190 = vmatpush1.bf16.msra.mxu0 0
  %3191 = vmatprep.subr.bf16.mxu0 0
  %3192 = vmatpush1.bf16.msra.mxu0 0
  %3193 = vmatprep.subr.bf16.mxu0 0
  %3194 = vmatpush1.bf16.msra.mxu0 0
  %3195 = vmatprep.subr.bf16.mxu0 0
  %3196 = vmatpush1.bf16.msra.mxu0 0
  %3197 = vmatprep.subr.bf16.mxu0 0
  %3198 = vmatpush1.bf16.msra.mxu0 0
  %3199 = vmatprep.subr.bf16.mxu0 0
  %3200 = vmatpush1.bf16.msra.mxu0 0
  %3201 = vmatprep.subr.bf16.mxu0 0
  %3202 = vmatpush1.bf16.msra.mxu0 0
  %3203 = vmatprep.mubr.bf16.mxu0 0
  %3204 = vmatmul.mubr.bf16.gmra.mrb[0].mxu0 %v2233
  %v3205 = vpop.f32.mrb[0].mxu0
  %v3206 = vadd.f32 %v3109, %v3205
  %v3207 = vpop.f32.mrb[0].mxu0
  %v3208 = vpop.f32.mrb[0].mxu0
  %v3209 = vadd.f32 %v3112, %v3208
  %v3210 = vpop.f32.mrb[0].mxu0
  %3211 = vmatprep.mubr.bf16.mxu0 0
  %3212 = vmatmul.mubr.bf16.gmra.mrb[0].mxu0 %v2236
  %v3213 = vpop.f32.mrb[0].mxu0
  %v3214 = vadd.f32 %v3117, %v3213
  %v3215 = vpop.f32.mrb[0].mxu0
  %v3216 = vpop.f32.mrb[0].mxu0
  %v3217 = vadd.f32 %v3120, %v3216
  %v3218 = vpop.f32.mrb[0].mxu0
  %3219 = vmatprep.mubr.bf16.mxu0 0
  %3220 = vmatmul.mubr.bf16.gmra.mrb[0].mxu0 %v2239
  %v3221 = vpop.f32.mrb[0].mxu0
  %v3222 = vadd.f32 %v3125, %v3221
  %v3223 = vpop.f32.mrb[0].mxu0
  %v3224 = vpop.f32.mrb[0].mxu0
  %v3225 = vadd.f32 %v3128, %v3224
  %v3226 = vpop.f32.mrb[0].mxu0
  %3227 = vmatprep.mubr.bf16.mxu0 0
  %3228 = vmatmul.mubr.bf16.gmra.mrb[0].mxu0 %v2242
  %v3229 = vpop.f32.mrb[0].mxu0
  %v3230 = vadd.f32 %v3133, %v3229
  %v3231 = vpop.f32.mrb[0].mxu0
  %v3232 = vpop.f32.mrb[0].mxu0
  %v3233 = vadd.f32 %v3136, %v3232
  %v3234 = vpop.f32.mrb[0].mxu0
  %3235 = vmatprep.mubr.bf16.mxu0 0
  %3236 = vmatmul.mubr.bf16.gmra.mrb[0].mxu0 %v2245
  %v3237 = vpop.f32.mrb[0].mxu0
  %v3238 = vadd.f32 %v3141, %v3237
  %v3239 = vpop.f32.mrb[0].mxu0
  %v3240 = vpop.f32.mrb[0].mxu0
  %v3241 = vadd.f32 %v3144, %v3240
  %v3242 = vpop.f32.mrb[0].mxu0
  %3243 = vmatprep.mubr.bf16.mxu0 0
  %3244 = vmatmul.mubr.bf16.gmra.mrb[0].mxu0 %v2248
  %v3245 = vpop.f32.mrb[0].mxu0
  %v3246 = vadd.f32 %v3149, %v3245
  %v3247 = vpop.f32.mrb[0].mxu0
  %v3248 = vpop.f32.mrb[0].mxu0
  %v3249 = vadd.f32 %v3152, %v3248
  %v3250 = vpop.f32.mrb[0].mxu0
  %3251 = vmatprep.mubr.bf16.mxu0 0
  %3252 = vmatmul.mubr.bf16.gmra.mrb[0].mxu0 %v2251
  %v3253 = vpop.f32.mrb[0].mxu0
  %v3254 = vadd.f32 %v3157, %v3253
  %v3255 = vpop.f32.mrb[0].mxu0
  %v3256 = vpop.f32.mrb[0].mxu0
  %v3257 = vadd.f32 %v3160, %v3256
  %v3258 = vpop.f32.mrb[0].mxu0
  %3259 = vmatprep.mubr.bf16.mxu0 0
  %3260 = vmatmul.mubr.bf16.gmra.mrb[0].mxu0 %v2254
  %v3261 = vpop.f32.mrb[0].mxu0
  %v3262 = vadd.f32 %v3165, %v3261
  %v3263 = vpop.f32.mrb[0].mxu0
  %v3264 = vpop.f32.mrb[0].mxu0
  %v3265 = vadd.f32 %v3168, %v3264
  %v3266 = vpop.f32.mrb[0].mxu0
  %3267 = vdwg.mxu0
  %s3268 = scalar_lea.vmem %s0, 120
  %v3269 = vld [vmem:[%s3268] sm:$0xf]
  %v3270 = vld [vmem:[%s3268 + $0x4] sm:$0xf]
  %v3271 = vld [vmem:[%s3268 + $0x8] sm:$0x1]
  %v3272 = vld [vmem:[%s3268 + $0xc] sm:$0xf]
  %v3273 = vld [vmem:[%s3268 + $0x10] sm:$0xf]
  %v3274 = vld [vmem:[%s3268 + $0x14] sm:$0x1]
  %v3275 = vld [vmem:[%s3268 + $0x18] sm:$0xf]
  %v3276 = vld [vmem:[%s3268 + $0x1c] sm:$0xf]
  %v3277 = vld [vmem:[%s3268 + $0x20] sm:$0x1]
  %v3278 = vld [vmem:[%s3268 + $0x24] sm:$0xf]
  %v3279 = vld [vmem:[%s3268 + $0x28] sm:$0xf]
  %v3280 = vld [vmem:[%s3268 + $0x2c] sm:$0x1]
  %v3281 = vld [vmem:[%s3268 + $0x30] sm:$0xf]
  %v3282 = vld [vmem:[%s3268 + $0x34] sm:$0xf]
  %v3283 = vld [vmem:[%s3268 + $0x38] sm:$0x1]
  %v3284 = vld [vmem:[%s3268 + $0x3c] sm:$0xf]
  %v3285 = vld [vmem:[%s3268 + $0x40] sm:$0xf]
  %v3286 = vld [vmem:[%s3268 + $0x44] sm:$0x1]
  %v3287 = vld [vmem:[%s3268 + $0x48] sm:$0xf]
  %v3288 = vld [vmem:[%s3268 + $0x4c] sm:$0xf]
  %v3289 = vld [vmem:[%s3268 + $0x50] sm:$0x1]
  %v3290 = vld [vmem:[%s3268 + $0x54] sm:$0xf]
  %v3291 = vld [vmem:[%s3268 + $0x58] sm:$0xf]
  %v3292 = vld [vmem:[%s3268 + $0x5c] sm:$0x1]
  %v3309 = vunpack.c.l.b16 %v3269
  %v3310 = vunpack.c.l.b16 %v3270
  %v3311 = vunpack.c.l.b16 %v3272
  %v3312 = vunpack.c.l.b16 %v3273
  %v3313 = vunpack.c.l.b16 %v3275
  %v3314 = vunpack.c.l.b16 %v3276
  %v3315 = vunpack.c.l.b16 %v3278
  %v3316 = vunpack.c.l.b16 %v3279
  %v3317 = vunpack.c.l.b16 %v3281
  %v3318 = vunpack.c.l.b16 %v3282
  %v3319 = vunpack.c.l.b16 %v3284
  %v3320 = vunpack.c.l.b16 %v3285
  %v3321 = vunpack.c.l.b16 %v3287
  %v3322 = vunpack.c.l.b16 %v3288
  %v3323 = vunpack.c.l.b16 %v3290
  %v3324 = vunpack.c.l.b16 %v3291
  %v3325 = vpack.c.b16 %v3310, %v3309
  %v3326 = vpack.c.b16 %v3312, %v3311
  %v3327 = vpack.c.b16 %v3314, %v3313
  %v3328 = vpack.c.b16 %v3316, %v3315
  %v3329 = vpack.c.b16 %v3318, %v3317
  %v3330 = vpack.c.b16 %v3320, %v3319
  %v3331 = vpack.c.b16 %v3322, %v3321
  %v3332 = vpack.c.b16 %v3324, %v3323
  %v3349 = vunpack.c.l.b16 %v3271
  %v3350 = vunpack.c.l.b16 %v3274
  %v3351 = vunpack.c.l.b16 %v3277
  %v3352 = vunpack.c.l.b16 %v3280
  %v3353 = vunpack.c.l.b16 %v3283
  %v3354 = vunpack.c.l.b16 %v3286
  %v3355 = vunpack.c.l.b16 %v3289
  %v3356 = vunpack.c.l.b16 %v3292
  %v3357 = vpack.c.b16 %v3349, %v3349
  %v3358 = vpack.c.b16 %v3350, %v3350
  %v3359 = vpack.c.b16 %v3351, %v3351
  %v3360 = vpack.c.b16 %v3352, %v3352
  %v3361 = vpack.c.b16 %v3353, %v3353
  %v3362 = vpack.c.b16 %v3354, %v3354
  %v3363 = vpack.c.b16 %v3355, %v3355
  %v3364 = vpack.c.b16 %v3356, %v3356
  %v3366 = vshrl.u32 %v3325, 16
  %v3368 = vshll.u32 %v3325, 16
  %v3370 = vrot.slane %v3368, 1
  %v3371 = vor.u32 %v3366, %v3370
  %v3373 = vshll.u32 %v3357, 16
  %v3375 = vrot.slane %v3373, 1
  %v3376 = vsel %vm110, %v3371, %v3375
  %v3378 = vshrl.u32 %v3326, 16
  %v3380 = vshll.u32 %v3326, 16
  %v3382 = vrot.slane %v3380, 1
  %v3383 = vor.u32 %v3378, %v3382
  %v3385 = vshll.u32 %v3358, 16
  %v3387 = vrot.slane %v3385, 1
  %v3388 = vsel %vm110, %v3383, %v3387
  %v3390 = vshrl.u32 %v3327, 16
  %v3392 = vshll.u32 %v3327, 16
  %v3394 = vrot.slane %v3392, 1
  %v3395 = vor.u32 %v3390, %v3394
  %v3397 = vshll.u32 %v3359, 16
  %v3399 = vrot.slane %v3397, 1
  %v3400 = vsel %vm110, %v3395, %v3399
  %v3402 = vshrl.u32 %v3328, 16
  %v3404 = vshll.u32 %v3328, 16
  %v3406 = vrot.slane %v3404, 1
  %v3407 = vor.u32 %v3402, %v3406
  %v3409 = vshll.u32 %v3360, 16
  %v3411 = vrot.slane %v3409, 1
  %v3412 = vsel %vm110, %v3407, %v3411
  %v3414 = vshrl.u32 %v3329, 16
  %v3416 = vshll.u32 %v3329, 16
  %v3418 = vrot.slane %v3416, 1
  %v3419 = vor.u32 %v3414, %v3418
  %v3421 = vshll.u32 %v3361, 16
  %v3423 = vrot.slane %v3421, 1
  %v3424 = vsel %vm110, %v3419, %v3423
  %v3426 = vshrl.u32 %v3330, 16
  %v3428 = vshll.u32 %v3330, 16
  %v3430 = vrot.slane %v3428, 1
  %v3431 = vor.u32 %v3426, %v3430
  %v3433 = vshll.u32 %v3362, 16
  %v3435 = vrot.slane %v3433, 1
  %v3436 = vsel %vm110, %v3431, %v3435
  %v3438 = vshrl.u32 %v3331, 16
  %v3440 = vshll.u32 %v3331, 16
  %v3442 = vrot.slane %v3440, 1
  %v3443 = vor.u32 %v3438, %v3442
  %v3445 = vshll.u32 %v3363, 16
  %v3447 = vrot.slane %v3445, 1
  %v3448 = vsel %vm110, %v3443, %v3447
  %v3450 = vshrl.u32 %v3332, 16
  %v3452 = vshll.u32 %v3332, 16
  %v3454 = vrot.slane %v3452, 1
  %v3455 = vor.u32 %v3450, %v3454
  %v3457 = vshll.u32 %v3364, 16
  %v3459 = vrot.slane %v3457, 1
  %v3460 = vsel %vm110, %v3455, %v3459
  %v3469 = vrot.slane %v3325, 1
  %v3470 = vrot.slane %v3357, 1
  %v3471 = vsel %vm215, %v3469, %v3470
  %v3472 = vrot.slane %v3326, 1
  %v3473 = vrot.slane %v3358, 1
  %v3474 = vsel %vm215, %v3472, %v3473
  %v3475 = vrot.slane %v3327, 1
  %v3476 = vrot.slane %v3359, 1
  %v3477 = vsel %vm215, %v3475, %v3476
  %v3478 = vrot.slane %v3328, 1
  %v3479 = vrot.slane %v3360, 1
  %v3480 = vsel %vm215, %v3478, %v3479
  %v3481 = vrot.slane %v3329, 1
  %v3482 = vrot.slane %v3361, 1
  %v3483 = vsel %vm215, %v3481, %v3482
  %v3484 = vrot.slane %v3330, 1
  %v3485 = vrot.slane %v3362, 1
  %v3486 = vsel %vm215, %v3484, %v3485
  %v3487 = vrot.slane %v3331, 1
  %v3488 = vrot.slane %v3363, 1
  %v3489 = vsel %vm215, %v3487, %v3488
  %v3490 = vrot.slane %v3332, 1
  %v3491 = vrot.slane %v3364, 1
  %v3492 = vsel %vm215, %v3490, %v3491
  %v3501 = vld [vmem:[%s1487] sm:$0xf]
  %v3502 = vld [vmem:[%s1487 + $0x4] sm:$0xf]
  %v3503 = vld [vmem:[%s1487 + $0x8] sm:$0xf]
  %v3504 = vld [vmem:[%s1487 + $0xc] sm:$0xf]
  %v3505 = vld [vmem:[%s1487 + $0x10] sm:$0xf]
  %v3506 = vld [vmem:[%s1487 + $0x14] sm:$0xf]
  %v3507 = vld [vmem:[%s1487 + $0x18] sm:$0xf]
  %v3508 = vld [vmem:[%s1487 + $0x1c] sm:$0xf]
  %v3509 = vld [vmem:[%s1487 + $0x20] sm:$0xf]
  %v3510 = vld [vmem:[%s1487 + $0x24] sm:$0xf]
  %v3511 = vld [vmem:[%s1487 + $0x28] sm:$0xf]
  %v3512 = vld [vmem:[%s1487 + $0x2c] sm:$0xf]
  %v3513 = vld [vmem:[%s1487 + $0x30] sm:$0xf]
  %v3514 = vld [vmem:[%s1487 + $0x34] sm:$0xf]
  %v3515 = vld [vmem:[%s1487 + $0x38] sm:$0xf]
  %v3516 = vld [vmem:[%s1487 + $0x3c] sm:$0xf]
  %v3517 = vld [vmem:[%s1487 + $0x40] sm:$0xf]
  %v3518 = vld [vmem:[%s1487 + $0x44] sm:$0xf]
  %v3519 = vld [vmem:[%s1487 + $0x48] sm:$0xf]
  %v3520 = vld [vmem:[%s1487 + $0x4c] sm:$0xf]
  %v3521 = vld [vmem:[%s1487 + $0x50] sm:$0xf]
  %v3522 = vld [vmem:[%s1487 + $0x54] sm:$0xf]
  %v3523 = vld [vmem:[%s1487 + $0x58] sm:$0xf]
  %v3524 = vld [vmem:[%s1487 + $0x5c] sm:$0xf]
  %v3525 = vld [vmem:[%s1487 + $0x60] sm:$0xf]
  %v3526 = vld [vmem:[%s1487 + $0x64] sm:$0xf]
  %v3527 = vld [vmem:[%s1487 + $0x68] sm:$0xf]
  %v3528 = vld [vmem:[%s1487 + $0x6c] sm:$0xf]
  %v3529 = vld [vmem:[%s1487 + $0x70] sm:$0xf]
  %v3530 = vld [vmem:[%s1487 + $0x74] sm:$0xf]
  %v3531 = vld [vmem:[%s1487 + $0x78] sm:$0xf]
  %v3532 = vld [vmem:[%s1487 + $0x7c] sm:$0xf]
  %v3533 = vld [vmem:[%s1487 + $0x80] sm:$0xf]
  %v3534 = vld [vmem:[%s1487 + $0x84] sm:$0xf]
  %v3535 = vld [vmem:[%s1487 + $0x88] sm:$0xf]
  %v3536 = vld [vmem:[%s1487 + $0x8c] sm:$0xf]
  %v3537 = vld [vmem:[%s1487 + $0x90] sm:$0xf]
  %v3538 = vld [vmem:[%s1487 + $0x94] sm:$0xf]
  %v3539 = vld [vmem:[%s1487 + $0x98] sm:$0xf]
  %v3540 = vld [vmem:[%s1487 + $0x9c] sm:$0xf]
  %v3541 = vld [vmem:[%s1487 + $0xa0] sm:$0xf]
  %v3542 = vld [vmem:[%s1487 + $0xa4] sm:$0xf]
  %v3543 = vld [vmem:[%s1487 + $0xa8] sm:$0xf]
  %v3544 = vld [vmem:[%s1487 + $0xac] sm:$0xf]
  %v3545 = vld [vmem:[%s1487 + $0xb0] sm:$0xf]
  %v3546 = vld [vmem:[%s1487 + $0xb4] sm:$0xf]
  %v3547 = vld [vmem:[%s1487 + $0xb8] sm:$0xf]
  %v3548 = vld [vmem:[%s1487 + $0xbc] sm:$0xf]
  %v3597 = vunpack.c.l.b16 %v3501
  %v3598 = vunpack.c.l.b16 %v3502
  %v3599 = vunpack.c.l.b16 %v3503
  %v3600 = vunpack.c.l.b16 %v3504
  %v3601 = vunpack.c.l.b16 %v3505
  %v3602 = vunpack.c.l.b16 %v3506
  %v3603 = vunpack.c.l.b16 %v3507
  %v3604 = vunpack.c.l.b16 %v3508
  %v3605 = vunpack.c.l.b16 %v3509
  %v3606 = vunpack.c.l.b16 %v3510
  %v3607 = vunpack.c.l.b16 %v3511
  %v3608 = vunpack.c.l.b16 %v3512
  %v3609 = vunpack.c.l.b16 %v3513
  %v3610 = vunpack.c.l.b16 %v3514
  %v3611 = vunpack.c.l.b16 %v3515
  %v3612 = vunpack.c.l.b16 %v3516
  %v3613 = vunpack.c.l.b16 %v3517
  %v3614 = vunpack.c.l.b16 %v3518
  %v3615 = vunpack.c.l.b16 %v3519
  %v3616 = vunpack.c.l.b16 %v3520
  %v3617 = vunpack.c.l.b16 %v3521
  %v3618 = vunpack.c.l.b16 %v3522
  %v3619 = vunpack.c.l.b16 %v3523
  %v3620 = vunpack.c.l.b16 %v3524
  %v3621 = vunpack.c.l.b16 %v3525
  %v3622 = vunpack.c.l.b16 %v3526
  %v3623 = vunpack.c.l.b16 %v3527
  %v3624 = vunpack.c.l.b16 %v3528
  %v3625 = vunpack.c.l.b16 %v3529
  %v3626 = vunpack.c.l.b16 %v3530
  %v3627 = vunpack.c.l.b16 %v3531
  %v3628 = vunpack.c.l.b16 %v3532
  %v3629 = vunpack.c.l.b16 %v3533
  %v3630 = vunpack.c.l.b16 %v3534
  %v3631 = vunpack.c.l.b16 %v3535
  %v3632 = vunpack.c.l.b16 %v3536
  %v3633 = vunpack.c.l.b16 %v3537
  %v3634 = vunpack.c.l.b16 %v3538
  %v3635 = vunpack.c.l.b16 %v3539
  %v3636 = vunpack.c.l.b16 %v3540
  %v3637 = vunpack.c.l.b16 %v3541
  %v3638 = vunpack.c.l.b16 %v3542
  %v3639 = vunpack.c.l.b16 %v3543
  %v3640 = vunpack.c.l.b16 %v3544
  %v3641 = vunpack.c.l.b16 %v3545
  %v3642 = vunpack.c.l.b16 %v3546
  %v3643 = vunpack.c.l.b16 %v3547
  %v3644 = vunpack.c.l.b16 %v3548
  %v3645 = vpack.c.b16 %v3598, %v3597
  %v3646 = vpack.c.b16 %v3600, %v3599
  %v3647 = vpack.c.b16 %v3602, %v3601
  %v3648 = vpack.c.b16 %v3604, %v3603
  %v3649 = vpack.c.b16 %v3606, %v3605
  %v3650 = vpack.c.b16 %v3608, %v3607
  %v3651 = vpack.c.b16 %v3610, %v3609
  %v3652 = vpack.c.b16 %v3612, %v3611
  %v3653 = vpack.c.b16 %v3614, %v3613
  %v3654 = vpack.c.b16 %v3616, %v3615
  %v3655 = vpack.c.b16 %v3618, %v3617
  %v3656 = vpack.c.b16 %v3620, %v3619
  %v3657 = vpack.c.b16 %v3622, %v3621
  %v3658 = vpack.c.b16 %v3624, %v3623
  %v3659 = vpack.c.b16 %v3626, %v3625
  %v3660 = vpack.c.b16 %v3628, %v3627
  %v3661 = vpack.c.b16 %v3630, %v3629
  %v3662 = vpack.c.b16 %v3632, %v3631
  %v3663 = vpack.c.b16 %v3634, %v3633
  %v3664 = vpack.c.b16 %v3636, %v3635
  %v3665 = vpack.c.b16 %v3638, %v3637
  %v3666 = vpack.c.b16 %v3640, %v3639
  %v3667 = vpack.c.b16 %v3642, %v3641
  %v3668 = vpack.c.b16 %v3644, %v3643
  %3693 = vmatprep.subr.bf16.mxu0 0
  %3694 = vmatpush1.bf16.msra.mxu0 %v3645
  %3695 = vmatprep.subr.bf16.mxu0 0
  %3696 = vmatpush1.bf16.msra.mxu0 %v3646
  %3697 = vmatprep.subr.bf16.mxu0 0
  %3698 = vmatpush1.bf16.msra.mxu0 %v3647
  %3699 = vmatprep.subr.bf16.mxu0 0
  %3700 = vmatpush1.bf16.msra.mxu0 %v3648
  %3701 = vmatprep.subr.bf16.mxu0 0
  %3702 = vmatpush1.bf16.msra.mxu0 %v3649
  %3703 = vmatprep.subr.bf16.mxu0 0
  %3704 = vmatpush1.bf16.msra.mxu0 %v3650
  %3705 = vmatprep.subr.bf16.mxu0 0
  %3706 = vmatpush1.bf16.msra.mxu0 %v3651
  %3707 = vmatprep.subr.bf16.mxu0 0
  %3708 = vmatpush1.bf16.msra.mxu0 %v3652
  %3709 = vmatprep.subr.bf16.mxu0 0
  %3710 = vmatpush1.bf16.msra.mxu0 %v3653
  %3711 = vmatprep.subr.bf16.mxu0 0
  %3712 = vmatpush1.bf16.msra.mxu0 %v3654
  %3713 = vmatprep.subr.bf16.mxu0 0
  %3714 = vmatpush1.bf16.msra.mxu0 %v3655
  %3715 = vmatprep.subr.bf16.mxu0 0
  %3716 = vmatpush1.bf16.msra.mxu0 %v3656
  %3717 = vmatprep.subr.bf16.mxu0 0
  %3718 = vmatpush1.bf16.msra.mxu0 %v3657
  %3719 = vmatprep.subr.bf16.mxu0 0
  %3720 = vmatpush1.bf16.msra.mxu0 %v3658
  %3721 = vmatprep.subr.bf16.mxu0 0
  %3722 = vmatpush1.bf16.msra.mxu0 %v3659
  %3723 = vmatprep.subr.bf16.mxu0 0
  %3724 = vmatpush1.bf16.msra.mxu0 %v3660
  %3725 = vmatprep.mubr.bf16.mxu0 %v3376
  %3726 = vmatmul.mubr.bf16.gmra.mrb[0].mxu0 %v3325
  %v3727 = vpop.f32.mrb[0].mxu0
  %v3728 = vadd.f32 0.0, %v3727
  %v3729 = vpop.f32.mrb[0].mxu0
  %v3730 = vpop.f32.mrb[0].mxu0
  %v3731 = vadd.f32 0.0, %v3730
  %v3732 = vpop.f32.mrb[0].mxu0
  %3733 = vmatprep.mubr.bf16.mxu0 %v3388
  %3734 = vmatmul.mubr.bf16.gmra.mrb[0].mxu0 %v3326
  %v3735 = vpop.f32.mrb[0].mxu0
  %v3736 = vadd.f32 0.0, %v3735
  %v3737 = vpop.f32.mrb[0].mxu0
  %v3738 = vpop.f32.mrb[0].mxu0
  %v3739 = vadd.f32 0.0, %v3738
  %v3740 = vpop.f32.mrb[0].mxu0
  %3741 = vmatprep.mubr.bf16.mxu0 %v3400
  %3742 = vmatmul.mubr.bf16.gmra.mrb[0].mxu0 %v3327
  %v3743 = vpop.f32.mrb[0].mxu0
  %v3744 = vadd.f32 0.0, %v3743
  %v3745 = vpop.f32.mrb[0].mxu0
  %v3746 = vpop.f32.mrb[0].mxu0
  %v3747 = vadd.f32 0.0, %v3746
  %v3748 = vpop.f32.mrb[0].mxu0
  %3749 = vmatprep.mubr.bf16.mxu0 %v3412
  %3750 = vmatmul.mubr.bf16.gmra.mrb[0].mxu0 %v3328
  %v3751 = vpop.f32.mrb[0].mxu0
  %v3752 = vadd.f32 0.0, %v3751
  %v3753 = vpop.f32.mrb[0].mxu0
  %v3754 = vpop.f32.mrb[0].mxu0
  %v3755 = vadd.f32 0.0, %v3754
  %v3756 = vpop.f32.mrb[0].mxu0
  %3757 = vmatprep.mubr.bf16.mxu0 %v3424
  %3758 = vmatmul.mubr.bf16.gmra.mrb[0].mxu0 %v3329
  %v3759 = vpop.f32.mrb[0].mxu0
  %v3760 = vadd.f32 0.0, %v3759
  %v3761 = vpop.f32.mrb[0].mxu0
  %v3762 = vpop.f32.mrb[0].mxu0
  %v3763 = vadd.f32 0.0, %v3762
  %v3764 = vpop.f32.mrb[0].mxu0
  %3765 = vmatprep.mubr.bf16.mxu0 %v3436
  %3766 = vmatmul.mubr.bf16.gmra.mrb[0].mxu0 %v3330
  %v3767 = vpop.f32.mrb[0].mxu0
  %v3768 = vadd.f32 0.0, %v3767
  %v3769 = vpop.f32.mrb[0].mxu0
  %v3770 = vpop.f32.mrb[0].mxu0
  %v3771 = vadd.f32 0.0, %v3770
  %v3772 = vpop.f32.mrb[0].mxu0
  %3773 = vmatprep.mubr.bf16.mxu0 %v3448
  %3774 = vmatmul.mubr.bf16.gmra.mrb[0].mxu0 %v3331
  %v3775 = vpop.f32.mrb[0].mxu0
  %v3776 = vadd.f32 0.0, %v3775
  %v3777 = vpop.f32.mrb[0].mxu0
  %v3778 = vpop.f32.mrb[0].mxu0
  %v3779 = vadd.f32 0.0, %v3778
  %v3780 = vpop.f32.mrb[0].mxu0
  %3781 = vmatprep.mubr.bf16.mxu0 %v3460
  %3782 = vmatmul.mubr.bf16.gmra.mrb[0].mxu0 %v3332
  %v3783 = vpop.f32.mrb[0].mxu0
  %v3784 = vadd.f32 0.0, %v3783
  %v3785 = vpop.f32.mrb[0].mxu0
  %v3786 = vpop.f32.mrb[0].mxu0
  %v3787 = vadd.f32 0.0, %v3786
  %v3788 = vpop.f32.mrb[0].mxu0
  %3789 = vdwg.mxu0
  %3790 = vmatprep.subr.bf16.mxu0 0
  %3791 = vmatpush1.bf16.msra.mxu0 %v3661
  %3792 = vmatprep.subr.bf16.mxu0 0
  %3793 = vmatpush1.bf16.msra.mxu0 %v3662
  %3794 = vmatprep.subr.bf16.mxu0 0
  %3795 = vmatpush1.bf16.msra.mxu0 %v3663
  %3796 = vmatprep.subr.bf16.mxu0 0
  %3797 = vmatpush1.bf16.msra.mxu0 %v3664
  %3798 = vmatprep.subr.bf16.mxu0 0
  %3799 = vmatpush1.bf16.msra.mxu0 %v3665
  %3800 = vmatprep.subr.bf16.mxu0 0
  %3801 = vmatpush1.bf16.msra.mxu0 %v3666
  %3802 = vmatprep.subr.bf16.mxu0 0
  %3803 = vmatpush1.bf16.msra.mxu0 %v3667
  %3804 = vmatprep.subr.bf16.mxu0 0
  %3805 = vmatpush1.bf16.msra.mxu0 %v3668
  %3806 = vmatprep.subr.bf16.mxu0 0
  %3807 = vmatpush1.bf16.msra.mxu0 0
  %3808 = vmatprep.subr.bf16.mxu0 0
  %3809 = vmatpush1.bf16.msra.mxu0 0
  %3810 = vmatprep.subr.bf16.mxu0 0
  %3811 = vmatpush1.bf16.msra.mxu0 0
  %3812 = vmatprep.subr.bf16.mxu0 0
  %3813 = vmatpush1.bf16.msra.mxu0 0
  %3814 = vmatprep.subr.bf16.mxu0 0
  %3815 = vmatpush1.bf16.msra.mxu0 0
  %3816 = vmatprep.subr.bf16.mxu0 0
  %3817 = vmatpush1.bf16.msra.mxu0 0
  %3818 = vmatprep.subr.bf16.mxu0 0
  %3819 = vmatpush1.bf16.msra.mxu0 0
  %3820 = vmatprep.subr.bf16.mxu0 0
  %3821 = vmatpush1.bf16.msra.mxu0 0
  %3822 = vmatprep.mubr.bf16.mxu0 0
  %3823 = vmatmul.mubr.bf16.gmra.mrb[0].mxu0 %v3471
  %v3824 = vpop.f32.mrb[0].mxu0
  %v3825 = vadd.f32 %v3728, %v3824
  %v3826 = vpop.f32.mrb[0].mxu0
  %v3827 = vpop.f32.mrb[0].mxu0
  %v3828 = vadd.f32 %v3731, %v3827
  %v3829 = vpop.f32.mrb[0].mxu0
  %3830 = vmatprep.mubr.bf16.mxu0 0
  %3831 = vmatmul.mubr.bf16.gmra.mrb[0].mxu0 %v3474
  %v3832 = vpop.f32.mrb[0].mxu0
  %v3833 = vadd.f32 %v3736, %v3832
  %v3834 = vpop.f32.mrb[0].mxu0
  %v3835 = vpop.f32.mrb[0].mxu0
  %v3836 = vadd.f32 %v3739, %v3835
  %v3837 = vpop.f32.mrb[0].mxu0
  %3838 = vmatprep.mubr.bf16.mxu0 0
  %3839 = vmatmul.mubr.bf16.gmra.mrb[0].mxu0 %v3477
  %v3840 = vpop.f32.mrb[0].mxu0
  %v3841 = vadd.f32 %v3744, %v3840
  %v3842 = vpop.f32.mrb[0].mxu0
  %v3843 = vpop.f32.mrb[0].mxu0
  %v3844 = vadd.f32 %v3747, %v3843
  %v3845 = vpop.f32.mrb[0].mxu0
  %3846 = vmatprep.mubr.bf16.mxu0 0
  %3847 = vmatmul.mubr.bf16.gmra.mrb[0].mxu0 %v3480
  %v3848 = vpop.f32.mrb[0].mxu0
  %v3849 = vadd.f32 %v3752, %v3848
  %v3850 = vpop.f32.mrb[0].mxu0
  %v3851 = vpop.f32.mrb[0].mxu0
  %v3852 = vadd.f32 %v3755, %v3851
  %v3853 = vpop.f32.mrb[0].mxu0
  %3854 = vmatprep.mubr.bf16.mxu0 0
  %3855 = vmatmul.mubr.bf16.gmra.mrb[0].mxu0 %v3483
  %v3856 = vpop.f32.mrb[0].mxu0
  %v3857 = vadd.f32 %v3760, %v3856
  %v3858 = vpop.f32.mrb[0].mxu0
  %v3859 = vpop.f32.mrb[0].mxu0
  %v3860 = vadd.f32 %v3763, %v3859
  %v3861 = vpop.f32.mrb[0].mxu0
  %3862 = vmatprep.mubr.bf16.mxu0 0
  %3863 = vmatmul.mubr.bf16.gmra.mrb[0].mxu0 %v3486
  %v3864 = vpop.f32.mrb[0].mxu0
  %v3865 = vadd.f32 %v3768, %v3864
  %v3866 = vpop.f32.mrb[0].mxu0
  %v3867 = vpop.f32.mrb[0].mxu0
  %v3868 = vadd.f32 %v3771, %v3867
  %v3869 = vpop.f32.mrb[0].mxu0
  %3870 = vmatprep.mubr.bf16.mxu0 0
  %3871 = vmatmul.mubr.bf16.gmra.mrb[0].mxu0 %v3489
  %v3872 = vpop.f32.mrb[0].mxu0
  %v3873 = vadd.f32 %v3776, %v3872
  %v3874 = vpop.f32.mrb[0].mxu0
  %v3875 = vpop.f32.mrb[0].mxu0
  %v3876 = vadd.f32 %v3779, %v3875
  %v3877 = vpop.f32.mrb[0].mxu0
  %3878 = vmatprep.mubr.bf16.mxu0 0
  %3879 = vmatmul.mubr.bf16.gmra.mrb[0].mxu0 %v3492
  %v3880 = vpop.f32.mrb[0].mxu0
  %v3881 = vadd.f32 %v3784, %v3880
  %v3882 = vpop.f32.mrb[0].mxu0
  %v3883 = vpop.f32.mrb[0].mxu0
  %v3884 = vadd.f32 %v3787, %v3883
  %v3885 = vpop.f32.mrb[0].mxu0
  %3886 = vdwg.mxu0
  %v3887 = vadd.f32 %v3206, %v3825
  %v3888 = vadd.f32 %v3209, %v3828
  %v3889 = vadd.f32 %v3214, %v3833
  %v3890 = vadd.f32 %v3217, %v3836
  %v3891 = vadd.f32 %v3222, %v3841
  %v3892 = vadd.f32 %v3225, %v3844
  %v3893 = vadd.f32 %v3230, %v3849
  %v3894 = vadd.f32 %v3233, %v3852
  %v3895 = vadd.f32 %v3238, %v3857
  %v3896 = vadd.f32 %v3241, %v3860
  %v3897 = vadd.f32 %v3246, %v3865
  %v3898 = vadd.f32 %v3249, %v3868
  %v3899 = vadd.f32 %v3254, %v3873
  %v3900 = vadd.f32 %v3257, %v3876
  %v3901 = vadd.f32 %v3262, %v3881
  %v3902 = vadd.f32 %v3265, %v3884
  %v3903 = vpack.c.bf16 %v3888, %v3887
  %v3904 = vpack.c.bf16 %v3890, %v3889
  %v3905 = vpack.c.bf16 %v3892, %v3891
  %v3906 = vpack.c.bf16 %v3894, %v3893
  %v3907 = vpack.c.bf16 %v3896, %v3895
  %v3908 = vpack.c.bf16 %v3898, %v3897
  %v3909 = vpack.c.bf16 %v3900, %v3899
  %v3910 = vpack.c.bf16 %v3902, %v3901
  %v3919 = vunpack.c.l.b16 %v3903
  %v3920 = vunpack.c.h.b16 %v3903
  %v3921 = vunpack.c.l.b16 %v3904
  %v3922 = vunpack.c.h.b16 %v3904
  %v3923 = vunpack.c.l.b16 %v3905
  %v3924 = vunpack.c.h.b16 %v3905
  %v3925 = vunpack.c.l.b16 %v3906
  %v3926 = vunpack.c.h.b16 %v3906
  %v3927 = vunpack.c.l.b16 %v3907
  %v3928 = vunpack.c.h.b16 %v3907
  %v3929 = vunpack.c.l.b16 %v3908
  %v3930 = vunpack.c.h.b16 %v3908
  %v3931 = vunpack.c.l.b16 %v3909
  %v3932 = vunpack.c.h.b16 %v3909
  %v3933 = vunpack.c.l.b16 %v3910
  %v3934 = vunpack.c.h.b16 %v3910
  %v3935 = vpack.c.b16 %v3919, %v3919
  %v3936 = vpack.c.b16 %v3920, %v3920
  %v3937 = vpack.c.b16 %v3921, %v3921
  %v3938 = vpack.c.b16 %v3922, %v3922
  %v3939 = vpack.c.b16 %v3923, %v3923
  %v3940 = vpack.c.b16 %v3924, %v3924
  %v3941 = vpack.c.b16 %v3925, %v3925
  %v3942 = vpack.c.b16 %v3926, %v3926
  %v3943 = vpack.c.b16 %v3927, %v3927
  %v3944 = vpack.c.b16 %v3928, %v3928
  %v3945 = vpack.c.b16 %v3929, %v3929
  %v3946 = vpack.c.b16 %v3930, %v3930
  %v3947 = vpack.c.b16 %v3931, %v3931
  %v3948 = vpack.c.b16 %v3932, %v3932
  %v3949 = vpack.c.b16 %v3933, %v3933
  %v3950 = vpack.c.b16 %v3934, %v3934
  %s3967 = scalar_lea.vmem %s2, 64
  %3968 = vst [vmem:[%s3967] sm:$0xf] %v3935
  %3969 = vst [vmem:[%s3967 + $0x4] sm:$0xf] %v3936
  %3970 = vst [vmem:[%s3967 + $0x8] sm:$0xf] %v3937
  %3971 = vst [vmem:[%s3967 + $0xc] sm:$0xf] %v3938
  %3972 = vst [vmem:[%s3967 + $0x10] sm:$0xf] %v3939
  %3973 = vst [vmem:[%s3967 + $0x14] sm:$0xf] %v3940
  %3974 = vst [vmem:[%s3967 + $0x18] sm:$0xf] %v3941
  %3975 = vst [vmem:[%s3967 + $0x1c] sm:$0xf] %v3942
  %3976 = vst [vmem:[%s3967 + $0x20] sm:$0xf] %v3943
  %3977 = vst [vmem:[%s3967 + $0x24] sm:$0xf] %v3944
  %3978 = vst [vmem:[%s3967 + $0x28] sm:$0xf] %v3945
  %3979 = vst [vmem:[%s3967 + $0x2c] sm:$0xf] %v3946
  %3980 = vst [vmem:[%s3967 + $0x30] sm:$0xf] %v3947
  %3981 = vst [vmem:[%s3967 + $0x34] sm:$0xf] %v3948
  %3982 = vst [vmem:[%s3967 + $0x38] sm:$0xf] %v3949
  %3983 = vst [vmem:[%s3967 + $0x3c] sm:$0xf] %v3950
  %v3984 = vadd.f32 %v3887, %v3888
  %v3985 = vadd.f32 %v3984, %v3889
  %v3986 = vadd.f32 %v3985, %v3890
  %v3987 = vadd.f32 %v3986, %v3891
  %v3988 = vadd.f32 %v3987, %v3892
  %v3989 = vadd.f32 %v3988, %v3893
  %v3990 = vadd.f32 %v3989, %v3894
  %v3991 = vadd.f32 %v3990, %v3895
  %v3992 = vadd.f32 %v3991, %v3896
  %v3993 = vadd.f32 %v3992, %v3897
  %v3994 = vadd.f32 %v3993, %v3898
  %v3995 = vadd.f32 %v3994, %v3899
  %v3996 = vadd.f32 %v3995, %v3900
  %v3997 = vadd.f32 %v3996, %v3901
  %v3998 = vadd.f32 %v3997, %v3902
  %v3999 = vrot.slane %v3998, 4
  %v4000 = vadd.f32 %v3998, %v3999
  %v4001 = vrot.slane %v4000, 2
  %v4002 = vadd.f32 %v4000, %v4001
  %v4003 = vrot.slane %v4002, 1
  %v4004 = vadd.f32 %v4002, %v4003
  %v4005 = vadd.f32 %v1991, %v4004
  %v4006 = vmul.f32 %v3887, %v3887
  %v4007 = vmul.f32 %v3888, %v3888
  %v4008 = vmul.f32 %v3889, %v3889
  %v4009 = vmul.f32 %v3890, %v3890
  %v4010 = vmul.f32 %v3891, %v3891
  %v4011 = vmul.f32 %v3892, %v3892
  %v4012 = vmul.f32 %v3893, %v3893
  %v4013 = vmul.f32 %v3894, %v3894
  %v4014 = vmul.f32 %v3895, %v3895
  %v4015 = vmul.f32 %v3896, %v3896
  %v4016 = vmul.f32 %v3897, %v3897
  %v4017 = vmul.f32 %v3898, %v3898
  %v4018 = vmul.f32 %v3899, %v3899
  %v4019 = vmul.f32 %v3900, %v3900
  %v4020 = vmul.f32 %v3901, %v3901
  %v4021 = vmul.f32 %v3902, %v3902
  %v4022 = vadd.f32 %v4006, %v4007
  %v4023 = vadd.f32 %v4022, %v4008
  %v4024 = vadd.f32 %v4023, %v4009
  %v4025 = vadd.f32 %v4024, %v4010
  %v4026 = vadd.f32 %v4025, %v4011
  %v4027 = vadd.f32 %v4026, %v4012
  %v4028 = vadd.f32 %v4027, %v4013
  %v4029 = vadd.f32 %v4028, %v4014
  %v4030 = vadd.f32 %v4029, %v4015
  %v4031 = vadd.f32 %v4030, %v4016
  %v4032 = vadd.f32 %v4031, %v4017
  %v4033 = vadd.f32 %v4032, %v4018
  %v4034 = vadd.f32 %v4033, %v4019
  %v4035 = vadd.f32 %v4034, %v4020
  %v4036 = vadd.f32 %v4035, %v4021
  %v4037 = vrot.slane %v4036, 4
  %v4038 = vadd.f32 %v4036, %v4037
  %v4039 = vrot.slane %v4038, 2
  %v4040 = vadd.f32 %v4038, %v4039
  %v4041 = vrot.slane %v4040, 1
  %v4042 = vadd.f32 %v4040, %v4041
  %v4043 = vadd.f32 %v2029, %v4042
  %s4044 = scalar_lea.vmem %s0, 216
  %v4045 = vld [vmem:[%s4044] sm:$0xf]
  %v4046 = vld [vmem:[%s4044 + $0x4] sm:$0xf]
  %v4047 = vld [vmem:[%s4044 + $0x8] sm:$0x1]
  %v4048 = vld [vmem:[%s4044 + $0xc] sm:$0xf]
  %v4049 = vld [vmem:[%s4044 + $0x10] sm:$0xf]
  %v4050 = vld [vmem:[%s4044 + $0x14] sm:$0x1]
  %v4051 = vld [vmem:[%s4044 + $0x18] sm:$0xf]
  %v4052 = vld [vmem:[%s4044 + $0x1c] sm:$0xf]
  %v4053 = vld [vmem:[%s4044 + $0x20] sm:$0x1]
  %v4054 = vld [vmem:[%s4044 + $0x24] sm:$0xf]
  %v4055 = vld [vmem:[%s4044 + $0x28] sm:$0xf]
  %v4056 = vld [vmem:[%s4044 + $0x2c] sm:$0x1]
  %v4057 = vld [vmem:[%s4044 + $0x30] sm:$0xf]
  %v4058 = vld [vmem:[%s4044 + $0x34] sm:$0xf]
  %v4059 = vld [vmem:[%s4044 + $0x38] sm:$0x1]
  %v4060 = vld [vmem:[%s4044 + $0x3c] sm:$0xf]
  %v4061 = vld [vmem:[%s4044 + $0x40] sm:$0xf]
  %v4062 = vld [vmem:[%s4044 + $0x44] sm:$0x1]
  %v4063 = vld [vmem:[%s4044 + $0x48] sm:$0xf]
  %v4064 = vld [vmem:[%s4044 + $0x4c] sm:$0xf]
  %v4065 = vld [vmem:[%s4044 + $0x50] sm:$0x1]
  %v4066 = vld [vmem:[%s4044 + $0x54] sm:$0xf]
  %v4067 = vld [vmem:[%s4044 + $0x58] sm:$0xf]
  %v4068 = vld [vmem:[%s4044 + $0x5c] sm:$0x1]
  %v4085 = vunpack.c.l.b16 %v4045
  %v4086 = vunpack.c.l.b16 %v4046
  %v4087 = vunpack.c.l.b16 %v4048
  %v4088 = vunpack.c.l.b16 %v4049
  %v4089 = vunpack.c.l.b16 %v4051
  %v4090 = vunpack.c.l.b16 %v4052
  %v4091 = vunpack.c.l.b16 %v4054
  %v4092 = vunpack.c.l.b16 %v4055
  %v4093 = vunpack.c.l.b16 %v4057
  %v4094 = vunpack.c.l.b16 %v4058
  %v4095 = vunpack.c.l.b16 %v4060
  %v4096 = vunpack.c.l.b16 %v4061
  %v4097 = vunpack.c.l.b16 %v4063
  %v4098 = vunpack.c.l.b16 %v4064
  %v4099 = vunpack.c.l.b16 %v4066
  %v4100 = vunpack.c.l.b16 %v4067
  %v4101 = vpack.c.b16 %v4086, %v4085
  %v4102 = vpack.c.b16 %v4088, %v4087
  %v4103 = vpack.c.b16 %v4090, %v4089
  %v4104 = vpack.c.b16 %v4092, %v4091
  %v4105 = vpack.c.b16 %v4094, %v4093
  %v4106 = vpack.c.b16 %v4096, %v4095
  %v4107 = vpack.c.b16 %v4098, %v4097
  %v4108 = vpack.c.b16 %v4100, %v4099
  %v4125 = vunpack.c.l.b16 %v4047
  %v4126 = vunpack.c.l.b16 %v4050
  %v4127 = vunpack.c.l.b16 %v4053
  %v4128 = vunpack.c.l.b16 %v4056
  %v4129 = vunpack.c.l.b16 %v4059
  %v4130 = vunpack.c.l.b16 %v4062
  %v4131 = vunpack.c.l.b16 %v4065
  %v4132 = vunpack.c.l.b16 %v4068
  %v4133 = vpack.c.b16 %v4125, %v4125
  %v4134 = vpack.c.b16 %v4126, %v4126
  %v4135 = vpack.c.b16 %v4127, %v4127
  %v4136 = vpack.c.b16 %v4128, %v4128
  %v4137 = vpack.c.b16 %v4129, %v4129
  %v4138 = vpack.c.b16 %v4130, %v4130
  %v4139 = vpack.c.b16 %v4131, %v4131
  %v4140 = vpack.c.b16 %v4132, %v4132
  %v4142 = vshrl.u32 %v4101, 16
  %v4144 = vshll.u32 %v4101, 16
  %v4146 = vrot.slane %v4144, 1
  %v4147 = vor.u32 %v4142, %v4146
  %v4149 = vshll.u32 %v4133, 16
  %v4151 = vrot.slane %v4149, 1
  %v4152 = vsel %vm110, %v4147, %v4151
  %v4154 = vshrl.u32 %v4102, 16
  %v4156 = vshll.u32 %v4102, 16
  %v4158 = vrot.slane %v4156, 1
  %v4159 = vor.u32 %v4154, %v4158
  %v4161 = vshll.u32 %v4134, 16
  %v4163 = vrot.slane %v4161, 1
  %v4164 = vsel %vm110, %v4159, %v4163
  %v4166 = vshrl.u32 %v4103, 16
  %v4168 = vshll.u32 %v4103, 16
  %v4170 = vrot.slane %v4168, 1
  %v4171 = vor.u32 %v4166, %v4170
  %v4173 = vshll.u32 %v4135, 16
  %v4175 = vrot.slane %v4173, 1
  %v4176 = vsel %vm110, %v4171, %v4175
  %v4178 = vshrl.u32 %v4104, 16
  %v4180 = vshll.u32 %v4104, 16
  %v4182 = vrot.slane %v4180, 1
  %v4183 = vor.u32 %v4178, %v4182
  %v4185 = vshll.u32 %v4136, 16
  %v4187 = vrot.slane %v4185, 1
  %v4188 = vsel %vm110, %v4183, %v4187
  %v4190 = vshrl.u32 %v4105, 16
  %v4192 = vshll.u32 %v4105, 16
  %v4194 = vrot.slane %v4192, 1
  %v4195 = vor.u32 %v4190, %v4194
  %v4197 = vshll.u32 %v4137, 16
  %v4199 = vrot.slane %v4197, 1
  %v4200 = vsel %vm110, %v4195, %v4199
  %v4202 = vshrl.u32 %v4106, 16
  %v4204 = vshll.u32 %v4106, 16
  %v4206 = vrot.slane %v4204, 1
  %v4207 = vor.u32 %v4202, %v4206
  %v4209 = vshll.u32 %v4138, 16
  %v4211 = vrot.slane %v4209, 1
  %v4212 = vsel %vm110, %v4207, %v4211
  %v4214 = vshrl.u32 %v4107, 16
  %v4216 = vshll.u32 %v4107, 16
  %v4218 = vrot.slane %v4216, 1
  %v4219 = vor.u32 %v4214, %v4218
  %v4221 = vshll.u32 %v4139, 16
  %v4223 = vrot.slane %v4221, 1
  %v4224 = vsel %vm110, %v4219, %v4223
  %v4226 = vshrl.u32 %v4108, 16
  %v4228 = vshll.u32 %v4108, 16
  %v4230 = vrot.slane %v4228, 1
  %v4231 = vor.u32 %v4226, %v4230
  %v4233 = vshll.u32 %v4140, 16
  %v4235 = vrot.slane %v4233, 1
  %v4236 = vsel %vm110, %v4231, %v4235
  %v4245 = vrot.slane %v4101, 1
  %v4246 = vrot.slane %v4133, 1
  %v4247 = vsel %vm215, %v4245, %v4246
  %v4248 = vrot.slane %v4102, 1
  %v4249 = vrot.slane %v4134, 1
  %v4250 = vsel %vm215, %v4248, %v4249
  %v4251 = vrot.slane %v4103, 1
  %v4252 = vrot.slane %v4135, 1
  %v4253 = vsel %vm215, %v4251, %v4252
  %v4254 = vrot.slane %v4104, 1
  %v4255 = vrot.slane %v4136, 1
  %v4256 = vsel %vm215, %v4254, %v4255
  %v4257 = vrot.slane %v4105, 1
  %v4258 = vrot.slane %v4137, 1
  %v4259 = vsel %vm215, %v4257, %v4258
  %v4260 = vrot.slane %v4106, 1
  %v4261 = vrot.slane %v4138, 1
  %v4262 = vsel %vm215, %v4260, %v4261
  %v4263 = vrot.slane %v4107, 1
  %v4264 = vrot.slane %v4139, 1
  %v4265 = vsel %vm215, %v4263, %v4264
  %v4266 = vrot.slane %v4108, 1
  %v4267 = vrot.slane %v4140, 1
  %v4268 = vsel %vm215, %v4266, %v4267
  %v4277 = vld [vmem:[%s1] sm:$0xf]
  %v4278 = vld [vmem:[%s1 + $0x4] sm:$0xf]
  %v4279 = vld [vmem:[%s1 + $0x8] sm:$0xf]
  %v4280 = vld [vmem:[%s1 + $0xc] sm:$0xf]
  %v4281 = vld [vmem:[%s1 + $0x10] sm:$0xf]
  %v4282 = vld [vmem:[%s1 + $0x14] sm:$0xf]
  %v4283 = vld [vmem:[%s1 + $0x18] sm:$0xf]
  %v4284 = vld [vmem:[%s1 + $0x1c] sm:$0xf]
  %v4285 = vld [vmem:[%s1 + $0x20] sm:$0xf]
  %v4286 = vld [vmem:[%s1 + $0x24] sm:$0xf]
  %v4287 = vld [vmem:[%s1 + $0x28] sm:$0xf]
  %v4288 = vld [vmem:[%s1 + $0x2c] sm:$0xf]
  %v4289 = vld [vmem:[%s1 + $0x30] sm:$0xf]
  %v4290 = vld [vmem:[%s1 + $0x34] sm:$0xf]
  %v4291 = vld [vmem:[%s1 + $0x38] sm:$0xf]
  %v4292 = vld [vmem:[%s1 + $0x3c] sm:$0xf]
  %v4293 = vld [vmem:[%s1 + $0x40] sm:$0xf]
  %v4294 = vld [vmem:[%s1 + $0x44] sm:$0xf]
  %v4295 = vld [vmem:[%s1 + $0x48] sm:$0xf]
  %v4296 = vld [vmem:[%s1 + $0x4c] sm:$0xf]
  %v4297 = vld [vmem:[%s1 + $0x50] sm:$0xf]
  %v4298 = vld [vmem:[%s1 + $0x54] sm:$0xf]
  %v4299 = vld [vmem:[%s1 + $0x58] sm:$0xf]
  %v4300 = vld [vmem:[%s1 + $0x5c] sm:$0xf]
  %v4301 = vld [vmem:[%s1 + $0x60] sm:$0xf]
  %v4302 = vld [vmem:[%s1 + $0x64] sm:$0xf]
  %v4303 = vld [vmem:[%s1 + $0x68] sm:$0xf]
  %v4304 = vld [vmem:[%s1 + $0x6c] sm:$0xf]
  %v4305 = vld [vmem:[%s1 + $0x70] sm:$0xf]
  %v4306 = vld [vmem:[%s1 + $0x74] sm:$0xf]
  %v4307 = vld [vmem:[%s1 + $0x78] sm:$0xf]
  %v4308 = vld [vmem:[%s1 + $0x7c] sm:$0xf]
  %v4309 = vld [vmem:[%s1 + $0x80] sm:$0xf]
  %v4310 = vld [vmem:[%s1 + $0x84] sm:$0xf]
  %v4311 = vld [vmem:[%s1 + $0x88] sm:$0xf]
  %v4312 = vld [vmem:[%s1 + $0x8c] sm:$0xf]
  %v4313 = vld [vmem:[%s1 + $0x90] sm:$0xf]
  %v4314 = vld [vmem:[%s1 + $0x94] sm:$0xf]
  %v4315 = vld [vmem:[%s1 + $0x98] sm:$0xf]
  %v4316 = vld [vmem:[%s1 + $0x9c] sm:$0xf]
  %v4317 = vld [vmem:[%s1 + $0xa0] sm:$0xf]
  %v4318 = vld [vmem:[%s1 + $0xa4] sm:$0xf]
  %v4319 = vld [vmem:[%s1 + $0xa8] sm:$0xf]
  %v4320 = vld [vmem:[%s1 + $0xac] sm:$0xf]
  %v4321 = vld [vmem:[%s1 + $0xb0] sm:$0xf]
  %v4322 = vld [vmem:[%s1 + $0xb4] sm:$0xf]
  %v4323 = vld [vmem:[%s1 + $0xb8] sm:$0xf]
  %v4324 = vld [vmem:[%s1 + $0xbc] sm:$0xf]
  %s4325 = scalar_lea.vmem %s0, 228
  %v4326 = vld [vmem:[%s4325] sm:$0xf]
  %v4327 = vld [vmem:[%s4325 + $0x4] sm:$0xf]
  %v4328 = vld [vmem:[%s4325 + $0x8] sm:$0x1]
  %v4329 = vld [vmem:[%s4325 + $0xc] sm:$0xf]
  %v4330 = vld [vmem:[%s4325 + $0x10] sm:$0xf]
  %v4331 = vld [vmem:[%s4325 + $0x14] sm:$0x1]
  %v4332 = vld [vmem:[%s4325 + $0x18] sm:$0xf]
  %v4333 = vld [vmem:[%s4325 + $0x1c] sm:$0xf]
  %v4334 = vld [vmem:[%s4325 + $0x20] sm:$0x1]
  %v4335 = vld [vmem:[%s4325 + $0x24] sm:$0xf]
  %v4336 = vld [vmem:[%s4325 + $0x28] sm:$0xf]
  %v4337 = vld [vmem:[%s4325 + $0x2c] sm:$0x1]
  %v4338 = vld [vmem:[%s4325 + $0x30] sm:$0xf]
  %v4339 = vld [vmem:[%s4325 + $0x34] sm:$0xf]
  %v4340 = vld [vmem:[%s4325 + $0x38] sm:$0x1]
  %v4341 = vld [vmem:[%s4325 + $0x3c] sm:$0xf]
  %v4342 = vld [vmem:[%s4325 + $0x40] sm:$0xf]
  %v4343 = vld [vmem:[%s4325 + $0x44] sm:$0x1]
  %v4344 = vld [vmem:[%s4325 + $0x48] sm:$0xf]
  %v4345 = vld [vmem:[%s4325 + $0x4c] sm:$0xf]
  %v4346 = vld [vmem:[%s4325 + $0x50] sm:$0x1]
  %v4347 = vld [vmem:[%s4325 + $0x54] sm:$0xf]
  %v4348 = vld [vmem:[%s4325 + $0x58] sm:$0xf]
  %v4349 = vld [vmem:[%s4325 + $0x5c] sm:$0x1]
  %v4366 = vunpack.c.l.b16 %v4326
  %v4367 = vunpack.c.l.b16 %v4327
  %v4368 = vunpack.c.l.b16 %v4329
  %v4369 = vunpack.c.l.b16 %v4330
  %v4370 = vunpack.c.l.b16 %v4332
  %v4371 = vunpack.c.l.b16 %v4333
  %v4372 = vunpack.c.l.b16 %v4335
  %v4373 = vunpack.c.l.b16 %v4336
  %v4374 = vunpack.c.l.b16 %v4338
  %v4375 = vunpack.c.l.b16 %v4339
  %v4376 = vunpack.c.l.b16 %v4341
  %v4377 = vunpack.c.l.b16 %v4342
  %v4378 = vunpack.c.l.b16 %v4344
  %v4379 = vunpack.c.l.b16 %v4345
  %v4380 = vunpack.c.l.b16 %v4347
  %v4381 = vunpack.c.l.b16 %v4348
  %v4382 = vpack.c.b16 %v4367, %v4366
  %v4383 = vpack.c.b16 %v4369, %v4368
  %v4384 = vpack.c.b16 %v4371, %v4370
  %v4385 = vpack.c.b16 %v4373, %v4372
  %v4386 = vpack.c.b16 %v4375, %v4374
  %v4387 = vpack.c.b16 %v4377, %v4376
  %v4388 = vpack.c.b16 %v4379, %v4378
  %v4389 = vpack.c.b16 %v4381, %v4380
  %v4406 = vunpack.c.l.b16 %v4328
  %v4407 = vunpack.c.l.b16 %v4331
  %v4408 = vunpack.c.l.b16 %v4334
  %v4409 = vunpack.c.l.b16 %v4337
  %v4410 = vunpack.c.l.b16 %v4340
  %v4411 = vunpack.c.l.b16 %v4343
  %v4412 = vunpack.c.l.b16 %v4346
  %v4413 = vunpack.c.l.b16 %v4349
  %v4414 = vpack.c.b16 %v4406, %v4406
  %v4415 = vpack.c.b16 %v4407, %v4407
  %v4416 = vpack.c.b16 %v4408, %v4408
  %v4417 = vpack.c.b16 %v4409, %v4409
  %v4418 = vpack.c.b16 %v4410, %v4410
  %v4419 = vpack.c.b16 %v4411, %v4411
  %v4420 = vpack.c.b16 %v4412, %v4412
  %v4421 = vpack.c.b16 %v4413, %v4413
  %v4423 = vshrl.u32 %v4382, 16
  %v4425 = vshll.u32 %v4382, 16
  %v4427 = vrot.slane %v4425, 1
  %v4428 = vor.u32 %v4423, %v4427
  %v4430 = vshll.u32 %v4414, 16
  %v4432 = vrot.slane %v4430, 1
  %v4433 = vsel %vm110, %v4428, %v4432
  %v4435 = vshrl.u32 %v4383, 16
  %v4437 = vshll.u32 %v4383, 16
  %v4439 = vrot.slane %v4437, 1
  %v4440 = vor.u32 %v4435, %v4439
  %v4442 = vshll.u32 %v4415, 16
  %v4444 = vrot.slane %v4442, 1
  %v4445 = vsel %vm110, %v4440, %v4444
  %v4447 = vshrl.u32 %v4384, 16
  %v4449 = vshll.u32 %v4384, 16
  %v4451 = vrot.slane %v4449, 1
  %v4452 = vor.u32 %v4447, %v4451
  %v4454 = vshll.u32 %v4416, 16
  %v4456 = vrot.slane %v4454, 1
  %v4457 = vsel %vm110, %v4452, %v4456
  %v4459 = vshrl.u32 %v4385, 16
  %v4461 = vshll.u32 %v4385, 16
  %v4463 = vrot.slane %v4461, 1
  %v4464 = vor.u32 %v4459, %v4463
  %v4466 = vshll.u32 %v4417, 16
  %v4468 = vrot.slane %v4466, 1
  %v4469 = vsel %vm110, %v4464, %v4468
  %v4471 = vshrl.u32 %v4386, 16
  %v4473 = vshll.u32 %v4386, 16
  %v4475 = vrot.slane %v4473, 1
  %v4476 = vor.u32 %v4471, %v4475
  %v4478 = vshll.u32 %v4418, 16
  %v4480 = vrot.slane %v4478, 1
  %v4481 = vsel %vm110, %v4476, %v4480
  %v4483 = vshrl.u32 %v4387, 16
  %v4485 = vshll.u32 %v4387, 16
  %v4487 = vrot.slane %v4485, 1
  %v4488 = vor.u32 %v4483, %v4487
  %v4490 = vshll.u32 %v4419, 16
  %v4492 = vrot.slane %v4490, 1
  %v4493 = vsel %vm110, %v4488, %v4492
  %v4495 = vshrl.u32 %v4388, 16
  %v4497 = vshll.u32 %v4388, 16
  %v4499 = vrot.slane %v4497, 1
  %v4500 = vor.u32 %v4495, %v4499
  %v4502 = vshll.u32 %v4420, 16
  %v4504 = vrot.slane %v4502, 1
  %v4505 = vsel %vm110, %v4500, %v4504
  %v4507 = vshrl.u32 %v4389, 16
  %v4509 = vshll.u32 %v4389, 16
  %v4511 = vrot.slane %v4509, 1
  %v4512 = vor.u32 %v4507, %v4511
  %v4514 = vshll.u32 %v4421, 16
  %v4516 = vrot.slane %v4514, 1
  %v4517 = vsel %vm110, %v4512, %v4516
  %v4526 = vrot.slane %v4382, 1
  %v4527 = vrot.slane %v4414, 1
  %v4528 = vsel %vm215, %v4526, %v4527
  %v4529 = vrot.slane %v4383, 1
  %v4530 = vrot.slane %v4415, 1
  %v4531 = vsel %vm215, %v4529, %v4530
  %v4532 = vrot.slane %v4384, 1
  %v4533 = vrot.slane %v4416, 1
  %v4534 = vsel %vm215, %v4532, %v4533
  %v4535 = vrot.slane %v4385, 1
  %v4536 = vrot.slane %v4417, 1
  %v4537 = vsel %vm215, %v4535, %v4536
  %v4538 = vrot.slane %v4386, 1
  %v4539 = vrot.slane %v4418, 1
  %v4540 = vsel %vm215, %v4538, %v4539
  %v4541 = vrot.slane %v4387, 1
  %v4542 = vrot.slane %v4419, 1
  %v4543 = vsel %vm215, %v4541, %v4542
  %v4544 = vrot.slane %v4388, 1
  %v4545 = vrot.slane %v4420, 1
  %v4546 = vsel %vm215, %v4544, %v4545
  %v4547 = vrot.slane %v4389, 1
  %v4548 = vrot.slane %v4421, 1
  %v4549 = vsel %vm215, %v4547, %v4548
  %v4558 = vld [vmem:[%s529] sm:$0xf]
  %v4559 = vld [vmem:[%s529 + $0x4] sm:$0xf]
  %v4560 = vld [vmem:[%s529 + $0x8] sm:$0xf]
  %v4561 = vld [vmem:[%s529 + $0xc] sm:$0xf]
  %v4562 = vld [vmem:[%s529 + $0x10] sm:$0xf]
  %v4563 = vld [vmem:[%s529 + $0x14] sm:$0xf]
  %v4564 = vld [vmem:[%s529 + $0x18] sm:$0xf]
  %v4565 = vld [vmem:[%s529 + $0x1c] sm:$0xf]
  %v4566 = vld [vmem:[%s529 + $0x20] sm:$0xf]
  %v4567 = vld [vmem:[%s529 + $0x24] sm:$0xf]
  %v4568 = vld [vmem:[%s529 + $0x28] sm:$0xf]
  %v4569 = vld [vmem:[%s529 + $0x2c] sm:$0xf]
  %v4570 = vld [vmem:[%s529 + $0x30] sm:$0xf]
  %v4571 = vld [vmem:[%s529 + $0x34] sm:$0xf]
  %v4572 = vld [vmem:[%s529 + $0x38] sm:$0xf]
  %v4573 = vld [vmem:[%s529 + $0x3c] sm:$0xf]
  %v4574 = vld [vmem:[%s529 + $0x40] sm:$0xf]
  %v4575 = vld [vmem:[%s529 + $0x44] sm:$0xf]
  %v4576 = vld [vmem:[%s529 + $0x48] sm:$0xf]
  %v4577 = vld [vmem:[%s529 + $0x4c] sm:$0xf]
  %v4578 = vld [vmem:[%s529 + $0x50] sm:$0xf]
  %v4579 = vld [vmem:[%s529 + $0x54] sm:$0xf]
  %v4580 = vld [vmem:[%s529 + $0x58] sm:$0xf]
  %v4581 = vld [vmem:[%s529 + $0x5c] sm:$0xf]
  %v4582 = vld [vmem:[%s529 + $0x60] sm:$0xf]
  %v4583 = vld [vmem:[%s529 + $0x64] sm:$0xf]
  %v4584 = vld [vmem:[%s529 + $0x68] sm:$0xf]
  %v4585 = vld [vmem:[%s529 + $0x6c] sm:$0xf]
  %v4586 = vld [vmem:[%s529 + $0x70] sm:$0xf]
  %v4587 = vld [vmem:[%s529 + $0x74] sm:$0xf]
  %v4588 = vld [vmem:[%s529 + $0x78] sm:$0xf]
  %v4589 = vld [vmem:[%s529 + $0x7c] sm:$0xf]
  %v4590 = vld [vmem:[%s529 + $0x80] sm:$0xf]
  %v4591 = vld [vmem:[%s529 + $0x84] sm:$0xf]
  %v4592 = vld [vmem:[%s529 + $0x88] sm:$0xf]
  %v4593 = vld [vmem:[%s529 + $0x8c] sm:$0xf]
  %v4594 = vld [vmem:[%s529 + $0x90] sm:$0xf]
  %v4595 = vld [vmem:[%s529 + $0x94] sm:$0xf]
  %v4596 = vld [vmem:[%s529 + $0x98] sm:$0xf]
  %v4597 = vld [vmem:[%s529 + $0x9c] sm:$0xf]
  %v4598 = vld [vmem:[%s529 + $0xa0] sm:$0xf]
  %v4599 = vld [vmem:[%s529 + $0xa4] sm:$0xf]
  %v4600 = vld [vmem:[%s529 + $0xa8] sm:$0xf]
  %v4601 = vld [vmem:[%s529 + $0xac] sm:$0xf]
  %v4602 = vld [vmem:[%s529 + $0xb0] sm:$0xf]
  %v4603 = vld [vmem:[%s529 + $0xb4] sm:$0xf]
  %v4604 = vld [vmem:[%s529 + $0xb8] sm:$0xf]
  %v4605 = vld [vmem:[%s529 + $0xbc] sm:$0xf]
  %v4654 = vunpack.c.l.b16 %v4558
  %v4655 = vunpack.c.l.b16 %v4559
  %v4656 = vunpack.c.l.b16 %v4560
  %v4657 = vunpack.c.l.b16 %v4561
  %v4658 = vunpack.c.l.b16 %v4562
  %v4659 = vunpack.c.l.b16 %v4563
  %v4660 = vunpack.c.l.b16 %v4564
  %v4661 = vunpack.c.l.b16 %v4565
  %v4662 = vunpack.c.l.b16 %v4566
  %v4663 = vunpack.c.l.b16 %v4567
  %v4664 = vunpack.c.l.b16 %v4568
  %v4665 = vunpack.c.l.b16 %v4569
  %v4666 = vunpack.c.l.b16 %v4570
  %v4667 = vunpack.c.l.b16 %v4571
  %v4668 = vunpack.c.l.b16 %v4572
  %v4669 = vunpack.c.l.b16 %v4573
  %v4670 = vunpack.c.l.b16 %v4574
  %v4671 = vunpack.c.l.b16 %v4575
  %v4672 = vunpack.c.l.b16 %v4576
  %v4673 = vunpack.c.l.b16 %v4577
  %v4674 = vunpack.c.l.b16 %v4578
  %v4675 = vunpack.c.l.b16 %v4579
  %v4676 = vunpack.c.l.b16 %v4580
  %v4677 = vunpack.c.l.b16 %v4581
  %v4678 = vunpack.c.l.b16 %v4582
  %v4679 = vunpack.c.l.b16 %v4583
  %v4680 = vunpack.c.l.b16 %v4584
  %v4681 = vunpack.c.l.b16 %v4585
  %v4682 = vunpack.c.l.b16 %v4586
  %v4683 = vunpack.c.l.b16 %v4587
  %v4684 = vunpack.c.l.b16 %v4588
  %v4685 = vunpack.c.l.b16 %v4589
  %v4686 = vunpack.c.l.b16 %v4590
  %v4687 = vunpack.c.l.b16 %v4591
  %v4688 = vunpack.c.l.b16 %v4592
  %v4689 = vunpack.c.l.b16 %v4593
  %v4690 = vunpack.c.l.b16 %v4594
  %v4691 = vunpack.c.l.b16 %v4595
  %v4692 = vunpack.c.l.b16 %v4596
  %v4693 = vunpack.c.l.b16 %v4597
  %v4694 = vunpack.c.l.b16 %v4598
  %v4695 = vunpack.c.l.b16 %v4599
  %v4696 = vunpack.c.l.b16 %v4600
  %v4697 = vunpack.c.l.b16 %v4601
  %v4698 = vunpack.c.l.b16 %v4602
  %v4699 = vunpack.c.l.b16 %v4603
  %v4700 = vunpack.c.l.b16 %v4604
  %v4701 = vunpack.c.l.b16 %v4605
  %v4702 = vpack.c.b16 %v4655, %v4654
  %v4703 = vpack.c.b16 %v4657, %v4656
  %v4704 = vpack.c.b16 %v4659, %v4658
  %v4705 = vpack.c.b16 %v4661, %v4660
  %v4706 = vpack.c.b16 %v4663, %v4662
  %v4707 = vpack.c.b16 %v4665, %v4664
  %v4708 = vpack.c.b16 %v4667, %v4666
  %v4709 = vpack.c.b16 %v4669, %v4668
  %v4710 = vpack.c.b16 %v4671, %v4670
  %v4711 = vpack.c.b16 %v4673, %v4672
  %v4712 = vpack.c.b16 %v4675, %v4674
  %v4713 = vpack.c.b16 %v4677, %v4676
  %v4714 = vpack.c.b16 %v4679, %v4678
  %v4715 = vpack.c.b16 %v4681, %v4680
  %v4716 = vpack.c.b16 %v4683, %v4682
  %v4717 = vpack.c.b16 %v4685, %v4684
  %v4718 = vpack.c.b16 %v4687, %v4686
  %v4719 = vpack.c.b16 %v4689, %v4688
  %v4720 = vpack.c.b16 %v4691, %v4690
  %v4721 = vpack.c.b16 %v4693, %v4692
  %v4722 = vpack.c.b16 %v4695, %v4694
  %v4723 = vpack.c.b16 %v4697, %v4696
  %v4724 = vpack.c.b16 %v4699, %v4698
  %v4725 = vpack.c.b16 %v4701, %v4700
  %4750 = vmatprep.subr.bf16.mxu0 0
  %4751 = vmatpush1.bf16.msra.mxu0 %v4702
  %4752 = vmatprep.subr.bf16.mxu0 0
  %4753 = vmatpush1.bf16.msra.mxu0 %v4703
  %4754 = vmatprep.subr.bf16.mxu0 0
  %4755 = vmatpush1.bf16.msra.mxu0 %v4704
  %4756 = vmatprep.subr.bf16.mxu0 0
  %4757 = vmatpush1.bf16.msra.mxu0 %v4705
  %4758 = vmatprep.subr.bf16.mxu0 0
  %4759 = vmatpush1.bf16.msra.mxu0 %v4706
  %4760 = vmatprep.subr.bf16.mxu0 0
  %4761 = vmatpush1.bf16.msra.mxu0 %v4707
  %4762 = vmatprep.subr.bf16.mxu0 0
  %4763 = vmatpush1.bf16.msra.mxu0 %v4708
  %4764 = vmatprep.subr.bf16.mxu0 0
  %4765 = vmatpush1.bf16.msra.mxu0 %v4709
  %4766 = vmatprep.subr.bf16.mxu0 0
  %4767 = vmatpush1.bf16.msra.mxu0 %v4710
  %4768 = vmatprep.subr.bf16.mxu0 0
  %4769 = vmatpush1.bf16.msra.mxu0 %v4711
  %4770 = vmatprep.subr.bf16.mxu0 0
  %4771 = vmatpush1.bf16.msra.mxu0 %v4712
  %4772 = vmatprep.subr.bf16.mxu0 0
  %4773 = vmatpush1.bf16.msra.mxu0 %v4713
  %4774 = vmatprep.subr.bf16.mxu0 0
  %4775 = vmatpush1.bf16.msra.mxu0 %v4714
  %4776 = vmatprep.subr.bf16.mxu0 0
  %4777 = vmatpush1.bf16.msra.mxu0 %v4715
  %4778 = vmatprep.subr.bf16.mxu0 0
  %4779 = vmatpush1.bf16.msra.mxu0 %v4716
  %4780 = vmatprep.subr.bf16.mxu0 0
  %4781 = vmatpush1.bf16.msra.mxu0 %v4717
  %4782 = vmatprep.mubr.bf16.mxu0 %v4433
  %4783 = vmatmul.mubr.bf16.gmra.mrb[0].mxu0 %v4382
  %v4784 = vpop.f32.mrb[0].mxu0
  %v4785 = vadd.f32 0.0, %v4784
  %v4786 = vpop.f32.mrb[0].mxu0
  %v4787 = vpop.f32.mrb[0].mxu0
  %v4788 = vadd.f32 0.0, %v4787
  %v4789 = vpop.f32.mrb[0].mxu0
  %4790 = vmatprep.mubr.bf16.mxu0 %v4445
  %4791 = vmatmul.mubr.bf16.gmra.mrb[0].mxu0 %v4383
  %v4792 = vpop.f32.mrb[0].mxu0
  %v4793 = vadd.f32 0.0, %v4792
  %v4794 = vpop.f32.mrb[0].mxu0
  %v4795 = vpop.f32.mrb[0].mxu0
  %v4796 = vadd.f32 0.0, %v4795
  %v4797 = vpop.f32.mrb[0].mxu0
  %4798 = vmatprep.mubr.bf16.mxu0 %v4457
  %4799 = vmatmul.mubr.bf16.gmra.mrb[0].mxu0 %v4384
  %v4800 = vpop.f32.mrb[0].mxu0
  %v4801 = vadd.f32 0.0, %v4800
  %v4802 = vpop.f32.mrb[0].mxu0
  %v4803 = vpop.f32.mrb[0].mxu0
  %v4804 = vadd.f32 0.0, %v4803
  %v4805 = vpop.f32.mrb[0].mxu0
  %4806 = vmatprep.mubr.bf16.mxu0 %v4469
  %4807 = vmatmul.mubr.bf16.gmra.mrb[0].mxu0 %v4385
  %v4808 = vpop.f32.mrb[0].mxu0
  %v4809 = vadd.f32 0.0, %v4808
  %v4810 = vpop.f32.mrb[0].mxu0
  %v4811 = vpop.f32.mrb[0].mxu0
  %v4812 = vadd.f32 0.0, %v4811
  %v4813 = vpop.f32.mrb[0].mxu0
  %4814 = vmatprep.mubr.bf16.mxu0 %v4481
  %4815 = vmatmul.mubr.bf16.gmra.mrb[0].mxu0 %v4386
  %v4816 = vpop.f32.mrb[0].mxu0
  %v4817 = vadd.f32 0.0, %v4816
  %v4818 = vpop.f32.mrb[0].mxu0
  %v4819 = vpop.f32.mrb[0].mxu0
  %v4820 = vadd.f32 0.0, %v4819
  %v4821 = vpop.f32.mrb[0].mxu0
  %4822 = vmatprep.mubr.bf16.mxu0 %v4493
  %4823 = vmatmul.mubr.bf16.gmra.mrb[0].mxu0 %v4387
  %v4824 = vpop.f32.mrb[0].mxu0
  %v4825 = vadd.f32 0.0, %v4824
  %v4826 = vpop.f32.mrb[0].mxu0
  %v4827 = vpop.f32.mrb[0].mxu0
  %v4828 = vadd.f32 0.0, %v4827
  %v4829 = vpop.f32.mrb[0].mxu0
  %4830 = vmatprep.mubr.bf16.mxu0 %v4505
  %4831 = vmatmul.mubr.bf16.gmra.mrb[0].mxu0 %v4388
  %v4832 = vpop.f32.mrb[0].mxu0
  %v4833 = vadd.f32 0.0, %v4832
  %v4834 = vpop.f32.mrb[0].mxu0
  %v4835 = vpop.f32.mrb[0].mxu0
  %v4836 = vadd.f32 0.0, %v4835
  %v4837 = vpop.f32.mrb[0].mxu0
  %4838 = vmatprep.mubr.bf16.mxu0 %v4517
  %4839 = vmatmul.mubr.bf16.gmra.mrb[0].mxu0 %v4389
  %v4840 = vpop.f32.mrb[0].mxu0
  %v4841 = vadd.f32 0.0, %v4840
  %v4842 = vpop.f32.mrb[0].mxu0
  %v4843 = vpop.f32.mrb[0].mxu0
  %v4844 = vadd.f32 0.0, %v4843
  %v4845 = vpop.f32.mrb[0].mxu0
  %4846 = vdwg.mxu0
  %4847 = vmatprep.subr.bf16.mxu0 0
  %4848 = vmatpush1.bf16.msra.mxu0 %v4718
  %4849 = vmatprep.subr.bf16.mxu0 0
  %4850 = vmatpush1.bf16.msra.mxu0 %v4719
  %4851 = vmatprep.subr.bf16.mxu0 0
  %4852 = vmatpush1.bf16.msra.mxu0 %v4720
  %4853 = vmatprep.subr.bf16.mxu0 0
  %4854 = vmatpush1.bf16.msra.mxu0 %v4721
  %4855 = vmatprep.subr.bf16.mxu0 0
  %4856 = vmatpush1.bf16.msra.mxu0 %v4722
  %4857 = vmatprep.subr.bf16.mxu0 0
  %4858 = vmatpush1.bf16.msra.mxu0 %v4723
  %4859 = vmatprep.subr.bf16.mxu0 0
  %4860 = vmatpush1.bf16.msra.mxu0 %v4724
  %4861 = vmatprep.subr.bf16.mxu0 0
  %4862 = vmatpush1.bf16.msra.mxu0 %v4725
  %4863 = vmatprep.subr.bf16.mxu0 0
  %4864 = vmatpush1.bf16.msra.mxu0 0
  %4865 = vmatprep.subr.bf16.mxu0 0
  %4866 = vmatpush1.bf16.msra.mxu0 0
  %4867 = vmatprep.subr.bf16.mxu0 0
  %4868 = vmatpush1.bf16.msra.mxu0 0
  %4869 = vmatprep.subr.bf16.mxu0 0
  %4870 = vmatpush1.bf16.msra.mxu0 0
  %4871 = vmatprep.subr.bf16.mxu0 0
  %4872 = vmatpush1.bf16.msra.mxu0 0
  %4873 = vmatprep.subr.bf16.mxu0 0
  %4874 = vmatpush1.bf16.msra.mxu0 0
  %4875 = vmatprep.subr.bf16.mxu0 0
  %4876 = vmatpush1.bf16.msra.mxu0 0
  %4877 = vmatprep.subr.bf16.mxu0 0
  %4878 = vmatpush1.bf16.msra.mxu0 0
  %4879 = vmatprep.mubr.bf16.mxu0 0
  %4880 = vmatmul.mubr.bf16.gmra.mrb[0].mxu0 %v4528
  %v4881 = vpop.f32.mrb[0].mxu0
  %v4882 = vadd.f32 %v4785, %v4881
  %v4883 = vpop.f32.mrb[0].mxu0
  %v4884 = vpop.f32.mrb[0].mxu0
  %v4885 = vadd.f32 %v4788, %v4884
  %v4886 = vpop.f32.mrb[0].mxu0
  %4887 = vmatprep.mubr.bf16.mxu0 0
  %4888 = vmatmul.mubr.bf16.gmra.mrb[0].mxu0 %v4531
  %v4889 = vpop.f32.mrb[0].mxu0
  %v4890 = vadd.f32 %v4793, %v4889
  %v4891 = vpop.f32.mrb[0].mxu0
  %v4892 = vpop.f32.mrb[0].mxu0
  %v4893 = vadd.f32 %v4796, %v4892
  %v4894 = vpop.f32.mrb[0].mxu0
  %4895 = vmatprep.mubr.bf16.mxu0 0
  %4896 = vmatmul.mubr.bf16.gmra.mrb[0].mxu0 %v4534
  %v4897 = vpop.f32.mrb[0].mxu0
  %v4898 = vadd.f32 %v4801, %v4897
  %v4899 = vpop.f32.mrb[0].mxu0
  %v4900 = vpop.f32.mrb[0].mxu0
  %v4901 = vadd.f32 %v4804, %v4900
  %v4902 = vpop.f32.mrb[0].mxu0
  %4903 = vmatprep.mubr.bf16.mxu0 0
  %4904 = vmatmul.mubr.bf16.gmra.mrb[0].mxu0 %v4537
  %v4905 = vpop.f32.mrb[0].mxu0
  %v4906 = vadd.f32 %v4809, %v4905
  %v4907 = vpop.f32.mrb[0].mxu0
  %v4908 = vpop.f32.mrb[0].mxu0
  %v4909 = vadd.f32 %v4812, %v4908
  %v4910 = vpop.f32.mrb[0].mxu0
  %4911 = vmatprep.mubr.bf16.mxu0 0
  %4912 = vmatmul.mubr.bf16.gmra.mrb[0].mxu0 %v4540
  %v4913 = vpop.f32.mrb[0].mxu0
  %v4914 = vadd.f32 %v4817, %v4913
  %v4915 = vpop.f32.mrb[0].mxu0
  %v4916 = vpop.f32.mrb[0].mxu0
  %v4917 = vadd.f32 %v4820, %v4916
  %v4918 = vpop.f32.mrb[0].mxu0
  %4919 = vmatprep.mubr.bf16.mxu0 0
  %4920 = vmatmul.mubr.bf16.gmra.mrb[0].mxu0 %v4543
  %v4921 = vpop.f32.mrb[0].mxu0
  %v4922 = vadd.f32 %v4825, %v4921
  %v4923 = vpop.f32.mrb[0].mxu0
  %v4924 = vpop.f32.mrb[0].mxu0
  %v4925 = vadd.f32 %v4828, %v4924
  %v4926 = vpop.f32.mrb[0].mxu0
  %4927 = vmatprep.mubr.bf16.mxu0 0
  %4928 = vmatmul.mubr.bf16.gmra.mrb[0].mxu0 %v4546
  %v4929 = vpop.f32.mrb[0].mxu0
  %v4930 = vadd.f32 %v4833, %v4929
  %v4931 = vpop.f32.mrb[0].mxu0
  %v4932 = vpop.f32.mrb[0].mxu0
  %v4933 = vadd.f32 %v4836, %v4932
  %v4934 = vpop.f32.mrb[0].mxu0
  %4935 = vmatprep.mubr.bf16.mxu0 0
  %4936 = vmatmul.mubr.bf16.gmra.mrb[0].mxu0 %v4549
  %v4937 = vpop.f32.mrb[0].mxu0
  %v4938 = vadd.f32 %v4841, %v4937
  %v4939 = vpop.f32.mrb[0].mxu0
  %v4940 = vpop.f32.mrb[0].mxu0
  %v4941 = vadd.f32 %v4844, %v4940
  %v4942 = vpop.f32.mrb[0].mxu0
  %4943 = vdwg.mxu0
  %v4992 = vunpack.c.l.b16 %v4277
  %v4993 = vunpack.c.l.b16 %v4278
  %v4994 = vunpack.c.l.b16 %v4279
  %v4995 = vunpack.c.l.b16 %v4280
  %v4996 = vunpack.c.l.b16 %v4281
  %v4997 = vunpack.c.l.b16 %v4282
  %v4998 = vunpack.c.l.b16 %v4283
  %v4999 = vunpack.c.l.b16 %v4284
  %v5000 = vunpack.c.l.b16 %v4285
  %v5001 = vunpack.c.l.b16 %v4286
  %v5002 = vunpack.c.l.b16 %v4287
  %v5003 = vunpack.c.l.b16 %v4288
  %v5004 = vunpack.c.l.b16 %v4289
  %v5005 = vunpack.c.l.b16 %v4290
  %v5006 = vunpack.c.l.b16 %v4291
  %v5007 = vunpack.c.l.b16 %v4292
  %v5008 = vunpack.c.l.b16 %v4293
  %v5009 = vunpack.c.l.b16 %v4294
  %v5010 = vunpack.c.l.b16 %v4295
  %v5011 = vunpack.c.l.b16 %v4296
  %v5012 = vunpack.c.l.b16 %v4297
  %v5013 = vunpack.c.l.b16 %v4298
  %v5014 = vunpack.c.l.b16 %v4299
  %v5015 = vunpack.c.l.b16 %v4300
  %v5016 = vunpack.c.l.b16 %v4301
  %v5017 = vunpack.c.l.b16 %v4302
  %v5018 = vunpack.c.l.b16 %v4303
  %v5019 = vunpack.c.l.b16 %v4304
  %v5020 = vunpack.c.l.b16 %v4305
  %v5021 = vunpack.c.l.b16 %v4306
  %v5022 = vunpack.c.l.b16 %v4307
  %v5023 = vunpack.c.l.b16 %v4308
  %v5024 = vunpack.c.l.b16 %v4309
  %v5025 = vunpack.c.l.b16 %v4310
  %v5026 = vunpack.c.l.b16 %v4311
  %v5027 = vunpack.c.l.b16 %v4312
  %v5028 = vunpack.c.l.b16 %v4313
  %v5029 = vunpack.c.l.b16 %v4314
  %v5030 = vunpack.c.l.b16 %v4315
  %v5031 = vunpack.c.l.b16 %v4316
  %v5032 = vunpack.c.l.b16 %v4317
  %v5033 = vunpack.c.l.b16 %v4318
  %v5034 = vunpack.c.l.b16 %v4319
  %v5035 = vunpack.c.l.b16 %v4320
  %v5036 = vunpack.c.l.b16 %v4321
  %v5037 = vunpack.c.l.b16 %v4322
  %v5038 = vunpack.c.l.b16 %v4323
  %v5039 = vunpack.c.l.b16 %v4324
  %v5040 = vpack.c.b16 %v4993, %v4992
  %v5041 = vpack.c.b16 %v4995, %v4994
  %v5042 = vpack.c.b16 %v4997, %v4996
  %v5043 = vpack.c.b16 %v4999, %v4998
  %v5044 = vpack.c.b16 %v5001, %v5000
  %v5045 = vpack.c.b16 %v5003, %v5002
  %v5046 = vpack.c.b16 %v5005, %v5004
  %v5047 = vpack.c.b16 %v5007, %v5006
  %v5048 = vpack.c.b16 %v5009, %v5008
  %v5049 = vpack.c.b16 %v5011, %v5010
  %v5050 = vpack.c.b16 %v5013, %v5012
  %v5051 = vpack.c.b16 %v5015, %v5014
  %v5052 = vpack.c.b16 %v5017, %v5016
  %v5053 = vpack.c.b16 %v5019, %v5018
  %v5054 = vpack.c.b16 %v5021, %v5020
  %v5055 = vpack.c.b16 %v5023, %v5022
  %v5056 = vpack.c.b16 %v5025, %v5024
  %v5057 = vpack.c.b16 %v5027, %v5026
  %v5058 = vpack.c.b16 %v5029, %v5028
  %v5059 = vpack.c.b16 %v5031, %v5030
  %v5060 = vpack.c.b16 %v5033, %v5032
  %v5061 = vpack.c.b16 %v5035, %v5034
  %v5062 = vpack.c.b16 %v5037, %v5036
  %v5063 = vpack.c.b16 %v5039, %v5038
  %5088 = vmatprep.subr.bf16.mxu0 0
  %5089 = vmatpush1.bf16.msra.mxu0 %v5040
  %5090 = vmatprep.subr.bf16.mxu0 0
  %5091 = vmatpush1.bf16.msra.mxu0 %v5041
  %5092 = vmatprep.subr.bf16.mxu0 0
  %5093 = vmatpush1.bf16.msra.mxu0 %v5042
  %5094 = vmatprep.subr.bf16.mxu0 0
  %5095 = vmatpush1.bf16.msra.mxu0 %v5043
  %5096 = vmatprep.subr.bf16.mxu0 0
  %5097 = vmatpush1.bf16.msra.mxu0 %v5044
  %5098 = vmatprep.subr.bf16.mxu0 0
  %5099 = vmatpush1.bf16.msra.mxu0 %v5045
  %5100 = vmatprep.subr.bf16.mxu0 0
  %5101 = vmatpush1.bf16.msra.mxu0 %v5046
  %5102 = vmatprep.subr.bf16.mxu0 0
  %5103 = vmatpush1.bf16.msra.mxu0 %v5047
  %5104 = vmatprep.subr.bf16.mxu0 0
  %5105 = vmatpush1.bf16.msra.mxu0 %v5048
  %5106 = vmatprep.subr.bf16.mxu0 0
  %5107 = vmatpush1.bf16.msra.mxu0 %v5049
  %5108 = vmatprep.subr.bf16.mxu0 0
  %5109 = vmatpush1.bf16.msra.mxu0 %v5050
  %5110 = vmatprep.subr.bf16.mxu0 0
  %5111 = vmatpush1.bf16.msra.mxu0 %v5051
  %5112 = vmatprep.subr.bf16.mxu0 0
  %5113 = vmatpush1.bf16.msra.mxu0 %v5052
  %5114 = vmatprep.subr.bf16.mxu0 0
  %5115 = vmatpush1.bf16.msra.mxu0 %v5053
  %5116 = vmatprep.subr.bf16.mxu0 0
  %5117 = vmatpush1.bf16.msra.mxu0 %v5054
  %5118 = vmatprep.subr.bf16.mxu0 0
  %5119 = vmatpush1.bf16.msra.mxu0 %v5055
  %5120 = vmatprep.mubr.bf16.mxu0 %v4152
  %5121 = vmatmul.mubr.bf16.gmra.mrb[0].mxu0 %v4101
  %v5122 = vpop.f32.mrb[0].mxu0
  %v5123 = vadd.f32 %v4882, %v5122
  %v5124 = vpop.f32.mrb[0].mxu0
  %v5125 = vpop.f32.mrb[0].mxu0
  %v5126 = vadd.f32 %v4885, %v5125
  %v5127 = vpop.f32.mrb[0].mxu0
  %5128 = vmatprep.mubr.bf16.mxu0 %v4164
  %5129 = vmatmul.mubr.bf16.gmra.mrb[0].mxu0 %v4102
  %v5130 = vpop.f32.mrb[0].mxu0
  %v5131 = vadd.f32 %v4890, %v5130
  %v5132 = vpop.f32.mrb[0].mxu0
  %v5133 = vpop.f32.mrb[0].mxu0
  %v5134 = vadd.f32 %v4893, %v5133
  %v5135 = vpop.f32.mrb[0].mxu0
  %5136 = vmatprep.mubr.bf16.mxu0 %v4176
  %5137 = vmatmul.mubr.bf16.gmra.mrb[0].mxu0 %v4103
  %v5138 = vpop.f32.mrb[0].mxu0
  %v5139 = vadd.f32 %v4898, %v5138
  %v5140 = vpop.f32.mrb[0].mxu0
  %v5141 = vpop.f32.mrb[0].mxu0
  %v5142 = vadd.f32 %v4901, %v5141
  %v5143 = vpop.f32.mrb[0].mxu0
  %5144 = vmatprep.mubr.bf16.mxu0 %v4188
  %5145 = vmatmul.mubr.bf16.gmra.mrb[0].mxu0 %v4104
  %v5146 = vpop.f32.mrb[0].mxu0
  %v5147 = vadd.f32 %v4906, %v5146
  %v5148 = vpop.f32.mrb[0].mxu0
  %v5149 = vpop.f32.mrb[0].mxu0
  %v5150 = vadd.f32 %v4909, %v5149
  %v5151 = vpop.f32.mrb[0].mxu0
  %5152 = vmatprep.mubr.bf16.mxu0 %v4200
  %5153 = vmatmul.mubr.bf16.gmra.mrb[0].mxu0 %v4105
  %v5154 = vpop.f32.mrb[0].mxu0
  %v5155 = vadd.f32 %v4914, %v5154
  %v5156 = vpop.f32.mrb[0].mxu0
  %v5157 = vpop.f32.mrb[0].mxu0
  %v5158 = vadd.f32 %v4917, %v5157
  %v5159 = vpop.f32.mrb[0].mxu0
  %5160 = vmatprep.mubr.bf16.mxu0 %v4212
  %5161 = vmatmul.mubr.bf16.gmra.mrb[0].mxu0 %v4106
  %v5162 = vpop.f32.mrb[0].mxu0
  %v5163 = vadd.f32 %v4922, %v5162
  %v5164 = vpop.f32.mrb[0].mxu0
  %v5165 = vpop.f32.mrb[0].mxu0
  %v5166 = vadd.f32 %v4925, %v5165
  %v5167 = vpop.f32.mrb[0].mxu0
  %5168 = vmatprep.mubr.bf16.mxu0 %v4224
  %5169 = vmatmul.mubr.bf16.gmra.mrb[0].mxu0 %v4107
  %v5170 = vpop.f32.mrb[0].mxu0
  %v5171 = vadd.f32 %v4930, %v5170
  %v5172 = vpop.f32.mrb[0].mxu0
  %v5173 = vpop.f32.mrb[0].mxu0
  %v5174 = vadd.f32 %v4933, %v5173
  %v5175 = vpop.f32.mrb[0].mxu0
  %5176 = vmatprep.mubr.bf16.mxu0 %v4236
  %5177 = vmatmul.mubr.bf16.gmra.mrb[0].mxu0 %v4108
  %v5178 = vpop.f32.mrb[0].mxu0
  %v5179 = vadd.f32 %v4938, %v5178
  %v5180 = vpop.f32.mrb[0].mxu0
  %v5181 = vpop.f32.mrb[0].mxu0
  %v5182 = vadd.f32 %v4941, %v5181
  %v5183 = vpop.f32.mrb[0].mxu0
  %5184 = vdwg.mxu0
  %5185 = vmatprep.subr.bf16.mxu0 0
  %5186 = vmatpush1.bf16.msra.mxu0 %v5056
  %5187 = vmatprep.subr.bf16.mxu0 0
  %5188 = vmatpush1.bf16.msra.mxu0 %v5057
  %5189 = vmatprep.subr.bf16.mxu0 0
  %5190 = vmatpush1.bf16.msra.mxu0 %v5058
  %5191 = vmatprep.subr.bf16.mxu0 0
  %5192 = vmatpush1.bf16.msra.mxu0 %v5059
  %5193 = vmatprep.subr.bf16.mxu0 0
  %5194 = vmatpush1.bf16.msra.mxu0 %v5060
  %5195 = vmatprep.subr.bf16.mxu0 0
  %5196 = vmatpush1.bf16.msra.mxu0 %v5061
  %5197 = vmatprep.subr.bf16.mxu0 0
  %5198 = vmatpush1.bf16.msra.mxu0 %v5062
  %5199 = vmatprep.subr.bf16.mxu0 0
  %5200 = vmatpush1.bf16.msra.mxu0 %v5063
  %5201 = vmatprep.subr.bf16.mxu0 0
  %5202 = vmatpush1.bf16.msra.mxu0 0
  %5203 = vmatprep.subr.bf16.mxu0 0
  %5204 = vmatpush1.bf16.msra.mxu0 0
  %5205 = vmatprep.subr.bf16.mxu0 0
  %5206 = vmatpush1.bf16.msra.mxu0 0
  %5207 = vmatprep.subr.bf16.mxu0 0
  %5208 = vmatpush1.bf16.msra.mxu0 0
  %5209 = vmatprep.subr.bf16.mxu0 0
  %5210 = vmatpush1.bf16.msra.mxu0 0
  %5211 = vmatprep.subr.bf16.mxu0 0
  %5212 = vmatpush1.bf16.msra.mxu0 0
  %5213 = vmatprep.subr.bf16.mxu0 0
  %5214 = vmatpush1.bf16.msra.mxu0 0
  %5215 = vmatprep.subr.bf16.mxu0 0
  %5216 = vmatpush1.bf16.msra.mxu0 0
  %5217 = vmatprep.mubr.bf16.mxu0 0
  %5218 = vmatmul.mubr.bf16.gmra.mrb[0].mxu0 %v4247
  %v5219 = vpop.f32.mrb[0].mxu0
  %v5220 = vadd.f32 %v5123, %v5219
  %v5221 = vpop.f32.mrb[0].mxu0
  %v5222 = vpop.f32.mrb[0].mxu0
  %v5223 = vadd.f32 %v5126, %v5222
  %v5224 = vpop.f32.mrb[0].mxu0
  %5225 = vmatprep.mubr.bf16.mxu0 0
  %5226 = vmatmul.mubr.bf16.gmra.mrb[0].mxu0 %v4250
  %v5227 = vpop.f32.mrb[0].mxu0
  %v5228 = vadd.f32 %v5131, %v5227
  %v5229 = vpop.f32.mrb[0].mxu0
  %v5230 = vpop.f32.mrb[0].mxu0
  %v5231 = vadd.f32 %v5134, %v5230
  %v5232 = vpop.f32.mrb[0].mxu0
  %5233 = vmatprep.mubr.bf16.mxu0 0
  %5234 = vmatmul.mubr.bf16.gmra.mrb[0].mxu0 %v4253
  %v5235 = vpop.f32.mrb[0].mxu0
  %v5236 = vadd.f32 %v5139, %v5235
  %v5237 = vpop.f32.mrb[0].mxu0
  %v5238 = vpop.f32.mrb[0].mxu0
  %v5239 = vadd.f32 %v5142, %v5238
  %v5240 = vpop.f32.mrb[0].mxu0
  %5241 = vmatprep.mubr.bf16.mxu0 0
  %5242 = vmatmul.mubr.bf16.gmra.mrb[0].mxu0 %v4256
  %v5243 = vpop.f32.mrb[0].mxu0
  %v5244 = vadd.f32 %v5147, %v5243
  %v5245 = vpop.f32.mrb[0].mxu0
  %v5246 = vpop.f32.mrb[0].mxu0
  %v5247 = vadd.f32 %v5150, %v5246
  %v5248 = vpop.f32.mrb[0].mxu0
  %5249 = vmatprep.mubr.bf16.mxu0 0
  %5250 = vmatmul.mubr.bf16.gmra.mrb[0].mxu0 %v4259
  %v5251 = vpop.f32.mrb[0].mxu0
  %v5252 = vadd.f32 %v5155, %v5251
  %v5253 = vpop.f32.mrb[0].mxu0
  %v5254 = vpop.f32.mrb[0].mxu0
  %v5255 = vadd.f32 %v5158, %v5254
  %v5256 = vpop.f32.mrb[0].mxu0
  %5257 = vmatprep.mubr.bf16.mxu0 0
  %5258 = vmatmul.mubr.bf16.gmra.mrb[0].mxu0 %v4262
  %v5259 = vpop.f32.mrb[0].mxu0
  %v5260 = vadd.f32 %v5163, %v5259
  %v5261 = vpop.f32.mrb[0].mxu0
  %v5262 = vpop.f32.mrb[0].mxu0
  %v5263 = vadd.f32 %v5166, %v5262
  %v5264 = vpop.f32.mrb[0].mxu0
  %5265 = vmatprep.mubr.bf16.mxu0 0
  %5266 = vmatmul.mubr.bf16.gmra.mrb[0].mxu0 %v4265
  %v5267 = vpop.f32.mrb[0].mxu0
  %v5268 = vadd.f32 %v5171, %v5267
  %v5269 = vpop.f32.mrb[0].mxu0
  %v5270 = vpop.f32.mrb[0].mxu0
  %v5271 = vadd.f32 %v5174, %v5270
  %v5272 = vpop.f32.mrb[0].mxu0
  %5273 = vmatprep.mubr.bf16.mxu0 0
  %5274 = vmatmul.mubr.bf16.gmra.mrb[0].mxu0 %v4268
  %v5275 = vpop.f32.mrb[0].mxu0
  %v5276 = vadd.f32 %v5179, %v5275
  %v5277 = vpop.f32.mrb[0].mxu0
  %v5278 = vpop.f32.mrb[0].mxu0
  %v5279 = vadd.f32 %v5182, %v5278
  %v5280 = vpop.f32.mrb[0].mxu0
  %5281 = vdwg.mxu0
  %s5282 = scalar_lea.vmem %s0, 240
  %v5283 = vld [vmem:[%s5282] sm:$0xf]
  %v5284 = vld [vmem:[%s5282 + $0x4] sm:$0xf]
  %v5285 = vld [vmem:[%s5282 + $0x8] sm:$0x1]
  %v5286 = vld [vmem:[%s5282 + $0xc] sm:$0xf]
  %v5287 = vld [vmem:[%s5282 + $0x10] sm:$0xf]
  %v5288 = vld [vmem:[%s5282 + $0x14] sm:$0x1]
  %v5289 = vld [vmem:[%s5282 + $0x18] sm:$0xf]
  %v5290 = vld [vmem:[%s5282 + $0x1c] sm:$0xf]
  %v5291 = vld [vmem:[%s5282 + $0x20] sm:$0x1]
  %v5292 = vld [vmem:[%s5282 + $0x24] sm:$0xf]
  %v5293 = vld [vmem:[%s5282 + $0x28] sm:$0xf]
  %v5294 = vld [vmem:[%s5282 + $0x2c] sm:$0x1]
  %v5295 = vld [vmem:[%s5282 + $0x30] sm:$0xf]
  %v5296 = vld [vmem:[%s5282 + $0x34] sm:$0xf]
  %v5297 = vld [vmem:[%s5282 + $0x38] sm:$0x1]
  %v5298 = vld [vmem:[%s5282 + $0x3c] sm:$0xf]
  %v5299 = vld [vmem:[%s5282 + $0x40] sm:$0xf]
  %v5300 = vld [vmem:[%s5282 + $0x44] sm:$0x1]
  %v5301 = vld [vmem:[%s5282 + $0x48] sm:$0xf]
  %v5302 = vld [vmem:[%s5282 + $0x4c] sm:$0xf]
  %v5303 = vld [vmem:[%s5282 + $0x50] sm:$0x1]
  %v5304 = vld [vmem:[%s5282 + $0x54] sm:$0xf]
  %v5305 = vld [vmem:[%s5282 + $0x58] sm:$0xf]
  %v5306 = vld [vmem:[%s5282 + $0x5c] sm:$0x1]
  %v5323 = vunpack.c.l.b16 %v5283
  %v5324 = vunpack.c.l.b16 %v5284
  %v5325 = vunpack.c.l.b16 %v5286
  %v5326 = vunpack.c.l.b16 %v5287
  %v5327 = vunpack.c.l.b16 %v5289
  %v5328 = vunpack.c.l.b16 %v5290
  %v5329 = vunpack.c.l.b16 %v5292
  %v5330 = vunpack.c.l.b16 %v5293
  %v5331 = vunpack.c.l.b16 %v5295
  %v5332 = vunpack.c.l.b16 %v5296
  %v5333 = vunpack.c.l.b16 %v5298
  %v5334 = vunpack.c.l.b16 %v5299
  %v5335 = vunpack.c.l.b16 %v5301
  %v5336 = vunpack.c.l.b16 %v5302
  %v5337 = vunpack.c.l.b16 %v5304
  %v5338 = vunpack.c.l.b16 %v5305
  %v5339 = vpack.c.b16 %v5324, %v5323
  %v5340 = vpack.c.b16 %v5326, %v5325
  %v5341 = vpack.c.b16 %v5328, %v5327
  %v5342 = vpack.c.b16 %v5330, %v5329
  %v5343 = vpack.c.b16 %v5332, %v5331
  %v5344 = vpack.c.b16 %v5334, %v5333
  %v5345 = vpack.c.b16 %v5336, %v5335
  %v5346 = vpack.c.b16 %v5338, %v5337
  %v5363 = vunpack.c.l.b16 %v5285
  %v5364 = vunpack.c.l.b16 %v5288
  %v5365 = vunpack.c.l.b16 %v5291
  %v5366 = vunpack.c.l.b16 %v5294
  %v5367 = vunpack.c.l.b16 %v5297
  %v5368 = vunpack.c.l.b16 %v5300
  %v5369 = vunpack.c.l.b16 %v5303
  %v5370 = vunpack.c.l.b16 %v5306
  %v5371 = vpack.c.b16 %v5363, %v5363
  %v5372 = vpack.c.b16 %v5364, %v5364
  %v5373 = vpack.c.b16 %v5365, %v5365
  %v5374 = vpack.c.b16 %v5366, %v5366
  %v5375 = vpack.c.b16 %v5367, %v5367
  %v5376 = vpack.c.b16 %v5368, %v5368
  %v5377 = vpack.c.b16 %v5369, %v5369
  %v5378 = vpack.c.b16 %v5370, %v5370
  %v5380 = vshrl.u32 %v5339, 16
  %v5382 = vshll.u32 %v5339, 16
  %v5384 = vrot.slane %v5382, 1
  %v5385 = vor.u32 %v5380, %v5384
  %v5387 = vshll.u32 %v5371, 16
  %v5389 = vrot.slane %v5387, 1
  %v5390 = vsel %vm110, %v5385, %v5389
  %v5392 = vshrl.u32 %v5340, 16
  %v5394 = vshll.u32 %v5340, 16
  %v5396 = vrot.slane %v5394, 1
  %v5397 = vor.u32 %v5392, %v5396
  %v5399 = vshll.u32 %v5372, 16
  %v5401 = vrot.slane %v5399, 1
  %v5402 = vsel %vm110, %v5397, %v5401
  %v5404 = vshrl.u32 %v5341, 16
  %v5406 = vshll.u32 %v5341, 16
  %v5408 = vrot.slane %v5406, 1
  %v5409 = vor.u32 %v5404, %v5408
  %v5411 = vshll.u32 %v5373, 16
  %v5413 = vrot.slane %v5411, 1
  %v5414 = vsel %vm110, %v5409, %v5413
  %v5416 = vshrl.u32 %v5342, 16
  %v5418 = vshll.u32 %v5342, 16
  %v5420 = vrot.slane %v5418, 1
  %v5421 = vor.u32 %v5416, %v5420
  %v5423 = vshll.u32 %v5374, 16
  %v5425 = vrot.slane %v5423, 1
  %v5426 = vsel %vm110, %v5421, %v5425
  %v5428 = vshrl.u32 %v5343, 16
  %v5430 = vshll.u32 %v5343, 16
  %v5432 = vrot.slane %v5430, 1
  %v5433 = vor.u32 %v5428, %v5432
  %v5435 = vshll.u32 %v5375, 16
  %v5437 = vrot.slane %v5435, 1
  %v5438 = vsel %vm110, %v5433, %v5437
  %v5440 = vshrl.u32 %v5344, 16
  %v5442 = vshll.u32 %v5344, 16
  %v5444 = vrot.slane %v5442, 1
  %v5445 = vor.u32 %v5440, %v5444
  %v5447 = vshll.u32 %v5376, 16
  %v5449 = vrot.slane %v5447, 1
  %v5450 = vsel %vm110, %v5445, %v5449
  %v5452 = vshrl.u32 %v5345, 16
  %v5454 = vshll.u32 %v5345, 16
  %v5456 = vrot.slane %v5454, 1
  %v5457 = vor.u32 %v5452, %v5456
  %v5459 = vshll.u32 %v5377, 16
  %v5461 = vrot.slane %v5459, 1
  %v5462 = vsel %vm110, %v5457, %v5461
  %v5464 = vshrl.u32 %v5346, 16
  %v5466 = vshll.u32 %v5346, 16
  %v5468 = vrot.slane %v5466, 1
  %v5469 = vor.u32 %v5464, %v5468
  %v5471 = vshll.u32 %v5378, 16
  %v5473 = vrot.slane %v5471, 1
  %v5474 = vsel %vm110, %v5469, %v5473
  %v5483 = vrot.slane %v5339, 1
  %v5484 = vrot.slane %v5371, 1
  %v5485 = vsel %vm215, %v5483, %v5484
  %v5486 = vrot.slane %v5340, 1
  %v5487 = vrot.slane %v5372, 1
  %v5488 = vsel %vm215, %v5486, %v5487
  %v5489 = vrot.slane %v5341, 1
  %v5490 = vrot.slane %v5373, 1
  %v5491 = vsel %vm215, %v5489, %v5490
  %v5492 = vrot.slane %v5342, 1
  %v5493 = vrot.slane %v5374, 1
  %v5494 = vsel %vm215, %v5492, %v5493
  %v5495 = vrot.slane %v5343, 1
  %v5496 = vrot.slane %v5375, 1
  %v5497 = vsel %vm215, %v5495, %v5496
  %v5498 = vrot.slane %v5344, 1
  %v5499 = vrot.slane %v5376, 1
  %v5500 = vsel %vm215, %v5498, %v5499
  %v5501 = vrot.slane %v5345, 1
  %v5502 = vrot.slane %v5377, 1
  %v5503 = vsel %vm215, %v5501, %v5502
  %v5504 = vrot.slane %v5346, 1
  %v5505 = vrot.slane %v5378, 1
  %v5506 = vsel %vm215, %v5504, %v5505
  %v5515 = vld [vmem:[%s1487] sm:$0xf]
  %v5516 = vld [vmem:[%s1487 + $0x4] sm:$0xf]
  %v5517 = vld [vmem:[%s1487 + $0x8] sm:$0xf]
  %v5518 = vld [vmem:[%s1487 + $0xc] sm:$0xf]
  %v5519 = vld [vmem:[%s1487 + $0x10] sm:$0xf]
  %v5520 = vld [vmem:[%s1487 + $0x14] sm:$0xf]
  %v5521 = vld [vmem:[%s1487 + $0x18] sm:$0xf]
  %v5522 = vld [vmem:[%s1487 + $0x1c] sm:$0xf]
  %v5523 = vld [vmem:[%s1487 + $0x20] sm:$0xf]
  %v5524 = vld [vmem:[%s1487 + $0x24] sm:$0xf]
  %v5525 = vld [vmem:[%s1487 + $0x28] sm:$0xf]
  %v5526 = vld [vmem:[%s1487 + $0x2c] sm:$0xf]
  %v5527 = vld [vmem:[%s1487 + $0x30] sm:$0xf]
  %v5528 = vld [vmem:[%s1487 + $0x34] sm:$0xf]
  %v5529 = vld [vmem:[%s1487 + $0x38] sm:$0xf]
  %v5530 = vld [vmem:[%s1487 + $0x3c] sm:$0xf]
  %v5531 = vld [vmem:[%s1487 + $0x40] sm:$0xf]
  %v5532 = vld [vmem:[%s1487 + $0x44] sm:$0xf]
  %v5533 = vld [vmem:[%s1487 + $0x48] sm:$0xf]
  %v5534 = vld [vmem:[%s1487 + $0x4c] sm:$0xf]
  %v5535 = vld [vmem:[%s1487 + $0x50] sm:$0xf]
  %v5536 = vld [vmem:[%s1487 + $0x54] sm:$0xf]
  %v5537 = vld [vmem:[%s1487 + $0x58] sm:$0xf]
  %v5538 = vld [vmem:[%s1487 + $0x5c] sm:$0xf]
  %v5539 = vld [vmem:[%s1487 + $0x60] sm:$0xf]
  %v5540 = vld [vmem:[%s1487 + $0x64] sm:$0xf]
  %v5541 = vld [vmem:[%s1487 + $0x68] sm:$0xf]
  %v5542 = vld [vmem:[%s1487 + $0x6c] sm:$0xf]
  %v5543 = vld [vmem:[%s1487 + $0x70] sm:$0xf]
  %v5544 = vld [vmem:[%s1487 + $0x74] sm:$0xf]
  %v5545 = vld [vmem:[%s1487 + $0x78] sm:$0xf]
  %v5546 = vld [vmem:[%s1487 + $0x7c] sm:$0xf]
  %v5547 = vld [vmem:[%s1487 + $0x80] sm:$0xf]
  %v5548 = vld [vmem:[%s1487 + $0x84] sm:$0xf]
  %v5549 = vld [vmem:[%s1487 + $0x88] sm:$0xf]
  %v5550 = vld [vmem:[%s1487 + $0x8c] sm:$0xf]
  %v5551 = vld [vmem:[%s1487 + $0x90] sm:$0xf]
  %v5552 = vld [vmem:[%s1487 + $0x94] sm:$0xf]
  %v5553 = vld [vmem:[%s1487 + $0x98] sm:$0xf]
  %v5554 = vld [vmem:[%s1487 + $0x9c] sm:$0xf]
  %v5555 = vld [vmem:[%s1487 + $0xa0] sm:$0xf]
  %v5556 = vld [vmem:[%s1487 + $0xa4] sm:$0xf]
  %v5557 = vld [vmem:[%s1487 + $0xa8] sm:$0xf]
  %v5558 = vld [vmem:[%s1487 + $0xac] sm:$0xf]
  %v5559 = vld [vmem:[%s1487 + $0xb0] sm:$0xf]
  %v5560 = vld [vmem:[%s1487 + $0xb4] sm:$0xf]
  %v5561 = vld [vmem:[%s1487 + $0xb8] sm:$0xf]
  %v5562 = vld [vmem:[%s1487 + $0xbc] sm:$0xf]
  %v5611 = vunpack.c.l.b16 %v5515
  %v5612 = vunpack.c.l.b16 %v5516
  %v5613 = vunpack.c.l.b16 %v5517
  %v5614 = vunpack.c.l.b16 %v5518
  %v5615 = vunpack.c.l.b16 %v5519
  %v5616 = vunpack.c.l.b16 %v5520
  %v5617 = vunpack.c.l.b16 %v5521
  %v5618 = vunpack.c.l.b16 %v5522
  %v5619 = vunpack.c.l.b16 %v5523
  %v5620 = vunpack.c.l.b16 %v5524
  %v5621 = vunpack.c.l.b16 %v5525
  %v5622 = vunpack.c.l.b16 %v5526
  %v5623 = vunpack.c.l.b16 %v5527
  %v5624 = vunpack.c.l.b16 %v5528
  %v5625 = vunpack.c.l.b16 %v5529
  %v5626 = vunpack.c.l.b16 %v5530
  %v5627 = vunpack.c.l.b16 %v5531
  %v5628 = vunpack.c.l.b16 %v5532
  %v5629 = vunpack.c.l.b16 %v5533
  %v5630 = vunpack.c.l.b16 %v5534
  %v5631 = vunpack.c.l.b16 %v5535
  %v5632 = vunpack.c.l.b16 %v5536
  %v5633 = vunpack.c.l.b16 %v5537
  %v5634 = vunpack.c.l.b16 %v5538
  %v5635 = vunpack.c.l.b16 %v5539
  %v5636 = vunpack.c.l.b16 %v5540
  %v5637 = vunpack.c.l.b16 %v5541
  %v5638 = vunpack.c.l.b16 %v5542
  %v5639 = vunpack.c.l.b16 %v5543
  %v5640 = vunpack.c.l.b16 %v5544
  %v5641 = vunpack.c.l.b16 %v5545
  %v5642 = vunpack.c.l.b16 %v5546
  %v5643 = vunpack.c.l.b16 %v5547
  %v5644 = vunpack.c.l.b16 %v5548
  %v5645 = vunpack.c.l.b16 %v5549
  %v5646 = vunpack.c.l.b16 %v5550
  %v5647 = vunpack.c.l.b16 %v5551
  %v5648 = vunpack.c.l.b16 %v5552
  %v5649 = vunpack.c.l.b16 %v5553
  %v5650 = vunpack.c.l.b16 %v5554
  %v5651 = vunpack.c.l.b16 %v5555
  %v5652 = vunpack.c.l.b16 %v5556
  %v5653 = vunpack.c.l.b16 %v5557
  %v5654 = vunpack.c.l.b16 %v5558
  %v5655 = vunpack.c.l.b16 %v5559
  %v5656 = vunpack.c.l.b16 %v5560
  %v5657 = vunpack.c.l.b16 %v5561
  %v5658 = vunpack.c.l.b16 %v5562
  %v5659 = vpack.c.b16 %v5612, %v5611
  %v5660 = vpack.c.b16 %v5614, %v5613
  %v5661 = vpack.c.b16 %v5616, %v5615
  %v5662 = vpack.c.b16 %v5618, %v5617
  %v5663 = vpack.c.b16 %v5620, %v5619
  %v5664 = vpack.c.b16 %v5622, %v5621
  %v5665 = vpack.c.b16 %v5624, %v5623
  %v5666 = vpack.c.b16 %v5626, %v5625
  %v5667 = vpack.c.b16 %v5628, %v5627
  %v5668 = vpack.c.b16 %v5630, %v5629
  %v5669 = vpack.c.b16 %v5632, %v5631
  %v5670 = vpack.c.b16 %v5634, %v5633
  %v5671 = vpack.c.b16 %v5636, %v5635
  %v5672 = vpack.c.b16 %v5638, %v5637
  %v5673 = vpack.c.b16 %v5640, %v5639
  %v5674 = vpack.c.b16 %v5642, %v5641
  %v5675 = vpack.c.b16 %v5644, %v5643
  %v5676 = vpack.c.b16 %v5646, %v5645
  %v5677 = vpack.c.b16 %v5648, %v5647
  %v5678 = vpack.c.b16 %v5650, %v5649
  %v5679 = vpack.c.b16 %v5652, %v5651
  %v5680 = vpack.c.b16 %v5654, %v5653
  %v5681 = vpack.c.b16 %v5656, %v5655
  %v5682 = vpack.c.b16 %v5658, %v5657
  %5707 = vmatprep.subr.bf16.mxu0 0
  %5708 = vmatpush1.bf16.msra.mxu0 %v5659
  %5709 = vmatprep.subr.bf16.mxu0 0
  %5710 = vmatpush1.bf16.msra.mxu0 %v5660
  %5711 = vmatprep.subr.bf16.mxu0 0
  %5712 = vmatpush1.bf16.msra.mxu0 %v5661
  %5713 = vmatprep.subr.bf16.mxu0 0
  %5714 = vmatpush1.bf16.msra.mxu0 %v5662
  %5715 = vmatprep.subr.bf16.mxu0 0
  %5716 = vmatpush1.bf16.msra.mxu0 %v5663
  %5717 = vmatprep.subr.bf16.mxu0 0
  %5718 = vmatpush1.bf16.msra.mxu0 %v5664
  %5719 = vmatprep.subr.bf16.mxu0 0
  %5720 = vmatpush1.bf16.msra.mxu0 %v5665
  %5721 = vmatprep.subr.bf16.mxu0 0
  %5722 = vmatpush1.bf16.msra.mxu0 %v5666
  %5723 = vmatprep.subr.bf16.mxu0 0
  %5724 = vmatpush1.bf16.msra.mxu0 %v5667
  %5725 = vmatprep.subr.bf16.mxu0 0
  %5726 = vmatpush1.bf16.msra.mxu0 %v5668
  %5727 = vmatprep.subr.bf16.mxu0 0
  %5728 = vmatpush1.bf16.msra.mxu0 %v5669
  %5729 = vmatprep.subr.bf16.mxu0 0
  %5730 = vmatpush1.bf16.msra.mxu0 %v5670
  %5731 = vmatprep.subr.bf16.mxu0 0
  %5732 = vmatpush1.bf16.msra.mxu0 %v5671
  %5733 = vmatprep.subr.bf16.mxu0 0
  %5734 = vmatpush1.bf16.msra.mxu0 %v5672
  %5735 = vmatprep.subr.bf16.mxu0 0
  %5736 = vmatpush1.bf16.msra.mxu0 %v5673
  %5737 = vmatprep.subr.bf16.mxu0 0
  %5738 = vmatpush1.bf16.msra.mxu0 %v5674
  %5739 = vmatprep.mubr.bf16.mxu0 %v5390
  %5740 = vmatmul.mubr.bf16.gmra.mrb[0].mxu0 %v5339
  %v5741 = vpop.f32.mrb[0].mxu0
  %v5742 = vadd.f32 0.0, %v5741
  %v5743 = vpop.f32.mrb[0].mxu0
  %v5744 = vpop.f32.mrb[0].mxu0
  %v5745 = vadd.f32 0.0, %v5744
  %v5746 = vpop.f32.mrb[0].mxu0
  %5747 = vmatprep.mubr.bf16.mxu0 %v5402
  %5748 = vmatmul.mubr.bf16.gmra.mrb[0].mxu0 %v5340
  %v5749 = vpop.f32.mrb[0].mxu0
  %v5750 = vadd.f32 0.0, %v5749
  %v5751 = vpop.f32.mrb[0].mxu0
  %v5752 = vpop.f32.mrb[0].mxu0
  %v5753 = vadd.f32 0.0, %v5752
  %v5754 = vpop.f32.mrb[0].mxu0
  %5755 = vmatprep.mubr.bf16.mxu0 %v5414
  %5756 = vmatmul.mubr.bf16.gmra.mrb[0].mxu0 %v5341
  %v5757 = vpop.f32.mrb[0].mxu0
  %v5758 = vadd.f32 0.0, %v5757
  %v5759 = vpop.f32.mrb[0].mxu0
  %v5760 = vpop.f32.mrb[0].mxu0
  %v5761 = vadd.f32 0.0, %v5760
  %v5762 = vpop.f32.mrb[0].mxu0
  %5763 = vmatprep.mubr.bf16.mxu0 %v5426
  %5764 = vmatmul.mubr.bf16.gmra.mrb[0].mxu0 %v5342
  %v5765 = vpop.f32.mrb[0].mxu0
  %v5766 = vadd.f32 0.0, %v5765
  %v5767 = vpop.f32.mrb[0].mxu0
  %v5768 = vpop.f32.mrb[0].mxu0
  %v5769 = vadd.f32 0.0, %v5768
  %v5770 = vpop.f32.mrb[0].mxu0
  %5771 = vmatprep.mubr.bf16.mxu0 %v5438
  %5772 = vmatmul.mubr.bf16.gmra.mrb[0].mxu0 %v5343
  %v5773 = vpop.f32.mrb[0].mxu0
  %v5774 = vadd.f32 0.0, %v5773
  %v5775 = vpop.f32.mrb[0].mxu0
  %v5776 = vpop.f32.mrb[0].mxu0
  %v5777 = vadd.f32 0.0, %v5776
  %v5778 = vpop.f32.mrb[0].mxu0
  %5779 = vmatprep.mubr.bf16.mxu0 %v5450
  %5780 = vmatmul.mubr.bf16.gmra.mrb[0].mxu0 %v5344
  %v5781 = vpop.f32.mrb[0].mxu0
  %v5782 = vadd.f32 0.0, %v5781
  %v5783 = vpop.f32.mrb[0].mxu0
  %v5784 = vpop.f32.mrb[0].mxu0
  %v5785 = vadd.f32 0.0, %v5784
  %v5786 = vpop.f32.mrb[0].mxu0
  %5787 = vmatprep.mubr.bf16.mxu0 %v5462
  %5788 = vmatmul.mubr.bf16.gmra.mrb[0].mxu0 %v5345
  %v5789 = vpop.f32.mrb[0].mxu0
  %v5790 = vadd.f32 0.0, %v5789
  %v5791 = vpop.f32.mrb[0].mxu0
  %v5792 = vpop.f32.mrb[0].mxu0
  %v5793 = vadd.f32 0.0, %v5792
  %v5794 = vpop.f32.mrb[0].mxu0
  %5795 = vmatprep.mubr.bf16.mxu0 %v5474
  %5796 = vmatmul.mubr.bf16.gmra.mrb[0].mxu0 %v5346
  %v5797 = vpop.f32.mrb[0].mxu0
  %v5798 = vadd.f32 0.0, %v5797
  %v5799 = vpop.f32.mrb[0].mxu0
  %v5800 = vpop.f32.mrb[0].mxu0
  %v5801 = vadd.f32 0.0, %v5800
  %v5802 = vpop.f32.mrb[0].mxu0
  %5803 = vdwg.mxu0
  %5804 = vmatprep.subr.bf16.mxu0 0
  %5805 = vmatpush1.bf16.msra.mxu0 %v5675
  %5806 = vmatprep.subr.bf16.mxu0 0
  %5807 = vmatpush1.bf16.msra.mxu0 %v5676
  %5808 = vmatprep.subr.bf16.mxu0 0
  %5809 = vmatpush1.bf16.msra.mxu0 %v5677
  %5810 = vmatprep.subr.bf16.mxu0 0
  %5811 = vmatpush1.bf16.msra.mxu0 %v5678
  %5812 = vmatprep.subr.bf16.mxu0 0
  %5813 = vmatpush1.bf16.msra.mxu0 %v5679
  %5814 = vmatprep.subr.bf16.mxu0 0
  %5815 = vmatpush1.bf16.msra.mxu0 %v5680
  %5816 = vmatprep.subr.bf16.mxu0 0
  %5817 = vmatpush1.bf16.msra.mxu0 %v5681
  %5818 = vmatprep.subr.bf16.mxu0 0
  %5819 = vmatpush1.bf16.msra.mxu0 %v5682
  %5820 = vmatprep.subr.bf16.mxu0 0
  %5821 = vmatpush1.bf16.msra.mxu0 0
  %5822 = vmatprep.subr.bf16.mxu0 0
  %5823 = vmatpush1.bf16.msra.mxu0 0
  %5824 = vmatprep.subr.bf16.mxu0 0
  %5825 = vmatpush1.bf16.msra.mxu0 0
  %5826 = vmatprep.subr.bf16.mxu0 0
  %5827 = vmatpush1.bf16.msra.mxu0 0
  %5828 = vmatprep.subr.bf16.mxu0 0
  %5829 = vmatpush1.bf16.msra.mxu0 0
  %5830 = vmatprep.subr.bf16.mxu0 0
  %5831 = vmatpush1.bf16.msra.mxu0 0
  %5832 = vmatprep.subr.bf16.mxu0 0
  %5833 = vmatpush1.bf16.msra.mxu0 0
  %5834 = vmatprep.subr.bf16.mxu0 0
  %5835 = vmatpush1.bf16.msra.mxu0 0
  %5836 = vmatprep.mubr.bf16.mxu0 0
  %5837 = vmatmul.mubr.bf16.gmra.mrb[0].mxu0 %v5485
  %v5838 = vpop.f32.mrb[0].mxu0
  %v5839 = vadd.f32 %v5742, %v5838
  %v5840 = vpop.f32.mrb[0].mxu0
  %v5841 = vpop.f32.mrb[0].mxu0
  %v5842 = vadd.f32 %v5745, %v5841
  %v5843 = vpop.f32.mrb[0].mxu0
  %5844 = vmatprep.mubr.bf16.mxu0 0
  %5845 = vmatmul.mubr.bf16.gmra.mrb[0].mxu0 %v5488
  %v5846 = vpop.f32.mrb[0].mxu0
  %v5847 = vadd.f32 %v5750, %v5846
  %v5848 = vpop.f32.mrb[0].mxu0
  %v5849 = vpop.f32.mrb[0].mxu0
  %v5850 = vadd.f32 %v5753, %v5849
  %v5851 = vpop.f32.mrb[0].mxu0
  %5852 = vmatprep.mubr.bf16.mxu0 0
  %5853 = vmatmul.mubr.bf16.gmra.mrb[0].mxu0 %v5491
  %v5854 = vpop.f32.mrb[0].mxu0
  %v5855 = vadd.f32 %v5758, %v5854
  %v5856 = vpop.f32.mrb[0].mxu0
  %v5857 = vpop.f32.mrb[0].mxu0
  %v5858 = vadd.f32 %v5761, %v5857
  %v5859 = vpop.f32.mrb[0].mxu0
  %5860 = vmatprep.mubr.bf16.mxu0 0
  %5861 = vmatmul.mubr.bf16.gmra.mrb[0].mxu0 %v5494
  %v5862 = vpop.f32.mrb[0].mxu0
  %v5863 = vadd.f32 %v5766, %v5862
  %v5864 = vpop.f32.mrb[0].mxu0
  %v5865 = vpop.f32.mrb[0].mxu0
  %v5866 = vadd.f32 %v5769, %v5865
  %v5867 = vpop.f32.mrb[0].mxu0
  %5868 = vmatprep.mubr.bf16.mxu0 0
  %5869 = vmatmul.mubr.bf16.gmra.mrb[0].mxu0 %v5497
  %v5870 = vpop.f32.mrb[0].mxu0
  %v5871 = vadd.f32 %v5774, %v5870
  %v5872 = vpop.f32.mrb[0].mxu0
  %v5873 = vpop.f32.mrb[0].mxu0
  %v5874 = vadd.f32 %v5777, %v5873
  %v5875 = vpop.f32.mrb[0].mxu0
  %5876 = vmatprep.mubr.bf16.mxu0 0
  %5877 = vmatmul.mubr.bf16.gmra.mrb[0].mxu0 %v5500
  %v5878 = vpop.f32.mrb[0].mxu0
  %v5879 = vadd.f32 %v5782, %v5878
  %v5880 = vpop.f32.mrb[0].mxu0
  %v5881 = vpop.f32.mrb[0].mxu0
  %v5882 = vadd.f32 %v5785, %v5881
  %v5883 = vpop.f32.mrb[0].mxu0
  %5884 = vmatprep.mubr.bf16.mxu0 0
  %5885 = vmatmul.mubr.bf16.gmra.mrb[0].mxu0 %v5503
  %v5886 = vpop.f32.mrb[0].mxu0
  %v5887 = vadd.f32 %v5790, %v5886
  %v5888 = vpop.f32.mrb[0].mxu0
  %v5889 = vpop.f32.mrb[0].mxu0
  %v5890 = vadd.f32 %v5793, %v5889
  %v5891 = vpop.f32.mrb[0].mxu0
  %5892 = vmatprep.mubr.bf16.mxu0 0
  %5893 = vmatmul.mubr.bf16.gmra.mrb[0].mxu0 %v5506
  %v5894 = vpop.f32.mrb[0].mxu0
  %v5895 = vadd.f32 %v5798, %v5894
  %v5896 = vpop.f32.mrb[0].mxu0
  %v5897 = vpop.f32.mrb[0].mxu0
  %v5898 = vadd.f32 %v5801, %v5897
  %v5899 = vpop.f32.mrb[0].mxu0
  %5900 = vdwg.mxu0
  %v5901 = vadd.f32 %v5220, %v5839
  %v5902 = vadd.f32 %v5223, %v5842
  %v5903 = vadd.f32 %v5228, %v5847
  %v5904 = vadd.f32 %v5231, %v5850
  %v5905 = vadd.f32 %v5236, %v5855
  %v5906 = vadd.f32 %v5239, %v5858
  %v5907 = vadd.f32 %v5244, %v5863
  %v5908 = vadd.f32 %v5247, %v5866
  %v5909 = vadd.f32 %v5252, %v5871
  %v5910 = vadd.f32 %v5255, %v5874
  %v5911 = vadd.f32 %v5260, %v5879
  %v5912 = vadd.f32 %v5263, %v5882
  %v5913 = vadd.f32 %v5268, %v5887
  %v5914 = vadd.f32 %v5271, %v5890
  %v5915 = vadd.f32 %v5276, %v5895
  %v5916 = vadd.f32 %v5279, %v5898
  %v5917 = vpack.c.bf16 %v5902, %v5901
  %v5918 = vpack.c.bf16 %v5904, %v5903
  %v5919 = vpack.c.bf16 %v5906, %v5905
  %v5920 = vpack.c.bf16 %v5908, %v5907
  %v5921 = vpack.c.bf16 %v5910, %v5909
  %v5922 = vpack.c.bf16 %v5912, %v5911
  %v5923 = vpack.c.bf16 %v5914, %v5913
  %v5924 = vpack.c.bf16 %v5916, %v5915
  %v5933 = vunpack.c.l.b16 %v5917
  %v5934 = vunpack.c.h.b16 %v5917
  %v5935 = vunpack.c.l.b16 %v5918
  %v5936 = vunpack.c.h.b16 %v5918
  %v5937 = vunpack.c.l.b16 %v5919
  %v5938 = vunpack.c.h.b16 %v5919
  %v5939 = vunpack.c.l.b16 %v5920
  %v5940 = vunpack.c.h.b16 %v5920
  %v5941 = vunpack.c.l.b16 %v5921
  %v5942 = vunpack.c.h.b16 %v5921
  %v5943 = vunpack.c.l.b16 %v5922
  %v5944 = vunpack.c.h.b16 %v5922
  %v5945 = vunpack.c.l.b16 %v5923
  %v5946 = vunpack.c.h.b16 %v5923
  %v5947 = vunpack.c.l.b16 %v5924
  %v5948 = vunpack.c.h.b16 %v5924
  %v5949 = vpack.c.b16 %v5933, %v5933
  %v5950 = vpack.c.b16 %v5934, %v5934
  %v5951 = vpack.c.b16 %v5935, %v5935
  %v5952 = vpack.c.b16 %v5936, %v5936
  %v5953 = vpack.c.b16 %v5937, %v5937
  %v5954 = vpack.c.b16 %v5938, %v5938
  %v5955 = vpack.c.b16 %v5939, %v5939
  %v5956 = vpack.c.b16 %v5940, %v5940
  %v5957 = vpack.c.b16 %v5941, %v5941
  %v5958 = vpack.c.b16 %v5942, %v5942
  %v5959 = vpack.c.b16 %v5943, %v5943
  %v5960 = vpack.c.b16 %v5944, %v5944
  %v5961 = vpack.c.b16 %v5945, %v5945
  %v5962 = vpack.c.b16 %v5946, %v5946
  %v5963 = vpack.c.b16 %v5947, %v5947
  %v5964 = vpack.c.b16 %v5948, %v5948
  %s5981 = scalar_lea.vmem %s2, 128
  %5982 = vst [vmem:[%s5981] sm:$0xf] %v5949
  %5983 = vst [vmem:[%s5981 + $0x4] sm:$0xf] %v5950
  %5984 = vst [vmem:[%s5981 + $0x8] sm:$0xf] %v5951
  %5985 = vst [vmem:[%s5981 + $0xc] sm:$0xf] %v5952
  %5986 = vst [vmem:[%s5981 + $0x10] sm:$0xf] %v5953
  %5987 = vst [vmem:[%s5981 + $0x14] sm:$0xf] %v5954
  %5988 = vst [vmem:[%s5981 + $0x18] sm:$0xf] %v5955
  %5989 = vst [vmem:[%s5981 + $0x1c] sm:$0xf] %v5956
  %5990 = vst [vmem:[%s5981 + $0x20] sm:$0xf] %v5957
  %5991 = vst [vmem:[%s5981 + $0x24] sm:$0xf] %v5958
  %5992 = vst [vmem:[%s5981 + $0x28] sm:$0xf] %v5959
  %5993 = vst [vmem:[%s5981 + $0x2c] sm:$0xf] %v5960
  %5994 = vst [vmem:[%s5981 + $0x30] sm:$0xf] %v5961
  %5995 = vst [vmem:[%s5981 + $0x34] sm:$0xf] %v5962
  %5996 = vst [vmem:[%s5981 + $0x38] sm:$0xf] %v5963
  %5997 = vst [vmem:[%s5981 + $0x3c] sm:$0xf] %v5964
  %v5998 = vadd.f32 %v5901, %v5902
  %v5999 = vadd.f32 %v5998, %v5903
  %v6000 = vadd.f32 %v5999, %v5904
  %v6001 = vadd.f32 %v6000, %v5905
  %v6002 = vadd.f32 %v6001, %v5906
  %v6003 = vadd.f32 %v6002, %v5907
  %v6004 = vadd.f32 %v6003, %v5908
  %v6005 = vadd.f32 %v6004, %v5909
  %v6006 = vadd.f32 %v6005, %v5910
  %v6007 = vadd.f32 %v6006, %v5911
  %v6008 = vadd.f32 %v6007, %v5912
  %v6009 = vadd.f32 %v6008, %v5913
  %v6010 = vadd.f32 %v6009, %v5914
  %v6011 = vadd.f32 %v6010, %v5915
  %v6012 = vadd.f32 %v6011, %v5916
  %v6013 = vrot.slane %v6012, 4
  %v6014 = vadd.f32 %v6012, %v6013
  %v6015 = vrot.slane %v6014, 2
  %v6016 = vadd.f32 %v6014, %v6015
  %v6017 = vrot.slane %v6016, 1
  %v6018 = vadd.f32 %v6016, %v6017
  %v6019 = vadd.f32 %v4005, %v6018
  %v6020 = vmul.f32 %v5901, %v5901
  %v6021 = vmul.f32 %v5902, %v5902
  %v6022 = vmul.f32 %v5903, %v5903
  %v6023 = vmul.f32 %v5904, %v5904
  %v6024 = vmul.f32 %v5905, %v5905
  %v6025 = vmul.f32 %v5906, %v5906
  %v6026 = vmul.f32 %v5907, %v5907
  %v6027 = vmul.f32 %v5908, %v5908
  %v6028 = vmul.f32 %v5909, %v5909
  %v6029 = vmul.f32 %v5910, %v5910
  %v6030 = vmul.f32 %v5911, %v5911
  %v6031 = vmul.f32 %v5912, %v5912
  %v6032 = vmul.f32 %v5913, %v5913
  %v6033 = vmul.f32 %v5914, %v5914
  %v6034 = vmul.f32 %v5915, %v5915
  %v6035 = vmul.f32 %v5916, %v5916
  %v6036 = vadd.f32 %v6020, %v6021
  %v6037 = vadd.f32 %v6036, %v6022
  %v6038 = vadd.f32 %v6037, %v6023
  %v6039 = vadd.f32 %v6038, %v6024
  %v6040 = vadd.f32 %v6039, %v6025
  %v6041 = vadd.f32 %v6040, %v6026
  %v6042 = vadd.f32 %v6041, %v6027
  %v6043 = vadd.f32 %v6042, %v6028
  %v6044 = vadd.f32 %v6043, %v6029
  %v6045 = vadd.f32 %v6044, %v6030
  %v6046 = vadd.f32 %v6045, %v6031
  %v6047 = vadd.f32 %v6046, %v6032
  %v6048 = vadd.f32 %v6047, %v6033
  %v6049 = vadd.f32 %v6048, %v6034
  %v6050 = vadd.f32 %v6049, %v6035
  %v6051 = vrot.slane %v6050, 4
  %v6052 = vadd.f32 %v6050, %v6051
  %v6053 = vrot.slane %v6052, 2
  %v6054 = vadd.f32 %v6052, %v6053
  %v6055 = vrot.slane %v6054, 1
  %v6056 = vadd.f32 %v6054, %v6055
  %v6057 = vadd.f32 %v4043, %v6056
  %s6058 = scalar_lea.vmem %s0, 312
  %v6059 = vld [vmem:[%s6058] sm:$0xf]
  %v6060 = vld [vmem:[%s6058 + $0x4] sm:$0xf]
  %v6061 = vld [vmem:[%s6058 + $0x8] sm:$0x1]
  %v6062 = vld [vmem:[%s6058 + $0xc] sm:$0xf]
  %v6063 = vld [vmem:[%s6058 + $0x10] sm:$0xf]
  %v6064 = vld [vmem:[%s6058 + $0x14] sm:$0x1]
  %v6065 = vld [vmem:[%s6058 + $0x18] sm:$0xf]
  %v6066 = vld [vmem:[%s6058 + $0x1c] sm:$0xf]
  %v6067 = vld [vmem:[%s6058 + $0x20] sm:$0x1]
  %v6068 = vld [vmem:[%s6058 + $0x24] sm:$0xf]
  %v6069 = vld [vmem:[%s6058 + $0x28] sm:$0xf]
  %v6070 = vld [vmem:[%s6058 + $0x2c] sm:$0x1]
  %v6071 = vld [vmem:[%s6058 + $0x30] sm:$0xf]
  %v6072 = vld [vmem:[%s6058 + $0x34] sm:$0xf]
  %v6073 = vld [vmem:[%s6058 + $0x38] sm:$0x1]
  %v6074 = vld [vmem:[%s6058 + $0x3c] sm:$0xf]
  %v6075 = vld [vmem:[%s6058 + $0x40] sm:$0xf]
  %v6076 = vld [vmem:[%s6058 + $0x44] sm:$0x1]
  %v6077 = vld [vmem:[%s6058 + $0x48] sm:$0xf]
  %v6078 = vld [vmem:[%s6058 + $0x4c] sm:$0xf]
  %v6079 = vld [vmem:[%s6058 + $0x50] sm:$0x1]
  %v6080 = vld [vmem:[%s6058 + $0x54] sm:$0xf]
  %v6081 = vld [vmem:[%s6058 + $0x58] sm:$0xf]
  %v6082 = vld [vmem:[%s6058 + $0x5c] sm:$0x1]
  %v6099 = vunpack.c.l.b16 %v6059
  %v6100 = vunpack.c.l.b16 %v6060
  %v6101 = vunpack.c.l.b16 %v6062
  %v6102 = vunpack.c.l.b16 %v6063
  %v6103 = vunpack.c.l.b16 %v6065
  %v6104 = vunpack.c.l.b16 %v6066
  %v6105 = vunpack.c.l.b16 %v6068
  %v6106 = vunpack.c.l.b16 %v6069
  %v6107 = vunpack.c.l.b16 %v6071
  %v6108 = vunpack.c.l.b16 %v6072
  %v6109 = vunpack.c.l.b16 %v6074
  %v6110 = vunpack.c.l.b16 %v6075
  %v6111 = vunpack.c.l.b16 %v6077
  %v6112 = vunpack.c.l.b16 %v6078
  %v6113 = vunpack.c.l.b16 %v6080
  %v6114 = vunpack.c.l.b16 %v6081
  %v6115 = vpack.c.b16 %v6100, %v6099
  %v6116 = vpack.c.b16 %v6102, %v6101
  %v6117 = vpack.c.b16 %v6104, %v6103
  %v6118 = vpack.c.b16 %v6106, %v6105
  %v6119 = vpack.c.b16 %v6108, %v6107
  %v6120 = vpack.c.b16 %v6110, %v6109
  %v6121 = vpack.c.b16 %v6112, %v6111
  %v6122 = vpack.c.b16 %v6114, %v6113
  %v6139 = vunpack.c.l.b16 %v6061
  %v6140 = vunpack.c.l.b16 %v6064
  %v6141 = vunpack.c.l.b16 %v6067
  %v6142 = vunpack.c.l.b16 %v6070
  %v6143 = vunpack.c.l.b16 %v6073
  %v6144 = vunpack.c.l.b16 %v6076
  %v6145 = vunpack.c.l.b16 %v6079
  %v6146 = vunpack.c.l.b16 %v6082
  %v6147 = vpack.c.b16 %v6139, %v6139
  %v6148 = vpack.c.b16 %v6140, %v6140
  %v6149 = vpack.c.b16 %v6141, %v6141
  %v6150 = vpack.c.b16 %v6142, %v6142
  %v6151 = vpack.c.b16 %v6143, %v6143
  %v6152 = vpack.c.b16 %v6144, %v6144
  %v6153 = vpack.c.b16 %v6145, %v6145
  %v6154 = vpack.c.b16 %v6146, %v6146
  %v6156 = vshrl.u32 %v6115, 16
  %v6158 = vshll.u32 %v6115, 16
  %v6160 = vrot.slane %v6158, 1
  %v6161 = vor.u32 %v6156, %v6160
  %v6163 = vshll.u32 %v6147, 16
  %v6165 = vrot.slane %v6163, 1
  %v6166 = vsel %vm110, %v6161, %v6165
  %v6168 = vshrl.u32 %v6116, 16
  %v6170 = vshll.u32 %v6116, 16
  %v6172 = vrot.slane %v6170, 1
  %v6173 = vor.u32 %v6168, %v6172
  %v6175 = vshll.u32 %v6148, 16
  %v6177 = vrot.slane %v6175, 1
  %v6178 = vsel %vm110, %v6173, %v6177
  %v6180 = vshrl.u32 %v6117, 16
  %v6182 = vshll.u32 %v6117, 16
  %v6184 = vrot.slane %v6182, 1
  %v6185 = vor.u32 %v6180, %v6184
  %v6187 = vshll.u32 %v6149, 16
  %v6189 = vrot.slane %v6187, 1
  %v6190 = vsel %vm110, %v6185, %v6189
  %v6192 = vshrl.u32 %v6118, 16
  %v6194 = vshll.u32 %v6118, 16
  %v6196 = vrot.slane %v6194, 1
  %v6197 = vor.u32 %v6192, %v6196
  %v6199 = vshll.u32 %v6150, 16
  %v6201 = vrot.slane %v6199, 1
  %v6202 = vsel %vm110, %v6197, %v6201
  %v6204 = vshrl.u32 %v6119, 16
  %v6206 = vshll.u32 %v6119, 16
  %v6208 = vrot.slane %v6206, 1
  %v6209 = vor.u32 %v6204, %v6208
  %v6211 = vshll.u32 %v6151, 16
  %v6213 = vrot.slane %v6211, 1
  %v6214 = vsel %vm110, %v6209, %v6213
  %v6216 = vshrl.u32 %v6120, 16
  %v6218 = vshll.u32 %v6120, 16
  %v6220 = vrot.slane %v6218, 1
  %v6221 = vor.u32 %v6216, %v6220
  %v6223 = vshll.u32 %v6152, 16
  %v6225 = vrot.slane %v6223, 1
  %v6226 = vsel %vm110, %v6221, %v6225
  %v6228 = vshrl.u32 %v6121, 16
  %v6230 = vshll.u32 %v6121, 16
  %v6232 = vrot.slane %v6230, 1
  %v6233 = vor.u32 %v6228, %v6232
  %v6235 = vshll.u32 %v6153, 16
  %v6237 = vrot.slane %v6235, 1
  %v6238 = vsel %vm110, %v6233, %v6237
  %v6240 = vshrl.u32 %v6122, 16
  %v6242 = vshll.u32 %v6122, 16
  %v6244 = vrot.slane %v6242, 1
  %v6245 = vor.u32 %v6240, %v6244
  %v6247 = vshll.u32 %v6154, 16
  %v6249 = vrot.slane %v6247, 1
  %v6250 = vsel %vm110, %v6245, %v6249
  %v6259 = vrot.slane %v6115, 1
  %v6260 = vrot.slane %v6147, 1
  %v6261 = vsel %vm215, %v6259, %v6260
  %v6262 = vrot.slane %v6116, 1
  %v6263 = vrot.slane %v6148, 1
  %v6264 = vsel %vm215, %v6262, %v6263
  %v6265 = vrot.slane %v6117, 1
  %v6266 = vrot.slane %v6149, 1
  %v6267 = vsel %vm215, %v6265, %v6266
  %v6268 = vrot.slane %v6118, 1
  %v6269 = vrot.slane %v6150, 1
  %v6270 = vsel %vm215, %v6268, %v6269
  %v6271 = vrot.slane %v6119, 1
  %v6272 = vrot.slane %v6151, 1
  %v6273 = vsel %vm215, %v6271, %v6272
  %v6274 = vrot.slane %v6120, 1
  %v6275 = vrot.slane %v6152, 1
  %v6276 = vsel %vm215, %v6274, %v6275
  %v6277 = vrot.slane %v6121, 1
  %v6278 = vrot.slane %v6153, 1
  %v6279 = vsel %vm215, %v6277, %v6278
  %v6280 = vrot.slane %v6122, 1
  %v6281 = vrot.slane %v6154, 1
  %v6282 = vsel %vm215, %v6280, %v6281
  %v6291 = vld [vmem:[%s1] sm:$0xf]
  %v6292 = vld [vmem:[%s1 + $0x4] sm:$0xf]
  %v6293 = vld [vmem:[%s1 + $0x8] sm:$0xf]
  %v6294 = vld [vmem:[%s1 + $0xc] sm:$0xf]
  %v6295 = vld [vmem:[%s1 + $0x10] sm:$0xf]
  %v6296 = vld [vmem:[%s1 + $0x14] sm:$0xf]
  %v6297 = vld [vmem:[%s1 + $0x18] sm:$0xf]
  %v6298 = vld [vmem:[%s1 + $0x1c] sm:$0xf]
  %v6299 = vld [vmem:[%s1 + $0x20] sm:$0xf]
  %v6300 = vld [vmem:[%s1 + $0x24] sm:$0xf]
  %v6301 = vld [vmem:[%s1 + $0x28] sm:$0xf]
  %v6302 = vld [vmem:[%s1 + $0x2c] sm:$0xf]
  %v6303 = vld [vmem:[%s1 + $0x30] sm:$0xf]
  %v6304 = vld [vmem:[%s1 + $0x34] sm:$0xf]
  %v6305 = vld [vmem:[%s1 + $0x38] sm:$0xf]
  %v6306 = vld [vmem:[%s1 + $0x3c] sm:$0xf]
  %v6307 = vld [vmem:[%s1 + $0x40] sm:$0xf]
  %v6308 = vld [vmem:[%s1 + $0x44] sm:$0xf]
  %v6309 = vld [vmem:[%s1 + $0x48] sm:$0xf]
  %v6310 = vld [vmem:[%s1 + $0x4c] sm:$0xf]
  %v6311 = vld [vmem:[%s1 + $0x50] sm:$0xf]
  %v6312 = vld [vmem:[%s1 + $0x54] sm:$0xf]
  %v6313 = vld [vmem:[%s1 + $0x58] sm:$0xf]
  %v6314 = vld [vmem:[%s1 + $0x5c] sm:$0xf]
  %v6315 = vld [vmem:[%s1 + $0x60] sm:$0xf]
  %v6316 = vld [vmem:[%s1 + $0x64] sm:$0xf]
  %v6317 = vld [vmem:[%s1 + $0x68] sm:$0xf]
  %v6318 = vld [vmem:[%s1 + $0x6c] sm:$0xf]
  %v6319 = vld [vmem:[%s1 + $0x70] sm:$0xf]
  %v6320 = vld [vmem:[%s1 + $0x74] sm:$0xf]
  %v6321 = vld [vmem:[%s1 + $0x78] sm:$0xf]
  %v6322 = vld [vmem:[%s1 + $0x7c] sm:$0xf]
  %v6323 = vld [vmem:[%s1 + $0x80] sm:$0xf]
  %v6324 = vld [vmem:[%s1 + $0x84] sm:$0xf]
  %v6325 = vld [vmem:[%s1 + $0x88] sm:$0xf]
  %v6326 = vld [vmem:[%s1 + $0x8c] sm:$0xf]
  %v6327 = vld [vmem:[%s1 + $0x90] sm:$0xf]
  %v6328 = vld [vmem:[%s1 + $0x94] sm:$0xf]
  %v6329 = vld [vmem:[%s1 + $0x98] sm:$0xf]
  %v6330 = vld [vmem:[%s1 + $0x9c] sm:$0xf]
  %v6331 = vld [vmem:[%s1 + $0xa0] sm:$0xf]
  %v6332 = vld [vmem:[%s1 + $0xa4] sm:$0xf]
  %v6333 = vld [vmem:[%s1 + $0xa8] sm:$0xf]
  %v6334 = vld [vmem:[%s1 + $0xac] sm:$0xf]
  %v6335 = vld [vmem:[%s1 + $0xb0] sm:$0xf]
  %v6336 = vld [vmem:[%s1 + $0xb4] sm:$0xf]
  %v6337 = vld [vmem:[%s1 + $0xb8] sm:$0xf]
  %v6338 = vld [vmem:[%s1 + $0xbc] sm:$0xf]
  %s6339 = scalar_lea.vmem %s0, 324
  %v6340 = vld [vmem:[%s6339] sm:$0xf]
  %v6341 = vld [vmem:[%s6339 + $0x4] sm:$0xf]
  %v6342 = vld [vmem:[%s6339 + $0x8] sm:$0x1]
  %v6343 = vld [vmem:[%s6339 + $0xc] sm:$0xf]
  %v6344 = vld [vmem:[%s6339 + $0x10] sm:$0xf]
  %v6345 = vld [vmem:[%s6339 + $0x14] sm:$0x1]
  %v6346 = vld [vmem:[%s6339 + $0x18] sm:$0xf]
  %v6347 = vld [vmem:[%s6339 + $0x1c] sm:$0xf]
  %v6348 = vld [vmem:[%s6339 + $0x20] sm:$0x1]
  %v6349 = vld [vmem:[%s6339 + $0x24] sm:$0xf]
  %v6350 = vld [vmem:[%s6339 + $0x28] sm:$0xf]
  %v6351 = vld [vmem:[%s6339 + $0x2c] sm:$0x1]
  %v6352 = vld [vmem:[%s6339 + $0x30] sm:$0xf]
  %v6353 = vld [vmem:[%s6339 + $0x34] sm:$0xf]
  %v6354 = vld [vmem:[%s6339 + $0x38] sm:$0x1]
  %v6355 = vld [vmem:[%s6339 + $0x3c] sm:$0xf]
  %v6356 = vld [vmem:[%s6339 + $0x40] sm:$0xf]
  %v6357 = vld [vmem:[%s6339 + $0x44] sm:$0x1]
  %v6358 = vld [vmem:[%s6339 + $0x48] sm:$0xf]
  %v6359 = vld [vmem:[%s6339 + $0x4c] sm:$0xf]
  %v6360 = vld [vmem:[%s6339 + $0x50] sm:$0x1]
  %v6361 = vld [vmem:[%s6339 + $0x54] sm:$0xf]
  %v6362 = vld [vmem:[%s6339 + $0x58] sm:$0xf]
  %v6363 = vld [vmem:[%s6339 + $0x5c] sm:$0x1]
  %v6380 = vunpack.c.l.b16 %v6340
  %v6381 = vunpack.c.l.b16 %v6341
  %v6382 = vunpack.c.l.b16 %v6343
  %v6383 = vunpack.c.l.b16 %v6344
  %v6384 = vunpack.c.l.b16 %v6346
  %v6385 = vunpack.c.l.b16 %v6347
  %v6386 = vunpack.c.l.b16 %v6349
  %v6387 = vunpack.c.l.b16 %v6350
  %v6388 = vunpack.c.l.b16 %v6352
  %v6389 = vunpack.c.l.b16 %v6353
  %v6390 = vunpack.c.l.b16 %v6355
  %v6391 = vunpack.c.l.b16 %v6356
  %v6392 = vunpack.c.l.b16 %v6358
  %v6393 = vunpack.c.l.b16 %v6359
  %v6394 = vunpack.c.l.b16 %v6361
  %v6395 = vunpack.c.l.b16 %v6362
  %v6396 = vpack.c.b16 %v6381, %v6380
  %v6397 = vpack.c.b16 %v6383, %v6382
  %v6398 = vpack.c.b16 %v6385, %v6384
  %v6399 = vpack.c.b16 %v6387, %v6386
  %v6400 = vpack.c.b16 %v6389, %v6388
  %v6401 = vpack.c.b16 %v6391, %v6390
  %v6402 = vpack.c.b16 %v6393, %v6392
  %v6403 = vpack.c.b16 %v6395, %v6394
  %v6420 = vunpack.c.l.b16 %v6342
  %v6421 = vunpack.c.l.b16 %v6345
  %v6422 = vunpack.c.l.b16 %v6348
  %v6423 = vunpack.c.l.b16 %v6351
  %v6424 = vunpack.c.l.b16 %v6354
  %v6425 = vunpack.c.l.b16 %v6357
  %v6426 = vunpack.c.l.b16 %v6360
  %v6427 = vunpack.c.l.b16 %v6363
  %v6428 = vpack.c.b16 %v6420, %v6420
  %v6429 = vpack.c.b16 %v6421, %v6421
  %v6430 = vpack.c.b16 %v6422, %v6422
  %v6431 = vpack.c.b16 %v6423, %v6423
  %v6432 = vpack.c.b16 %v6424, %v6424
  %v6433 = vpack.c.b16 %v6425, %v6425
  %v6434 = vpack.c.b16 %v6426, %v6426
  %v6435 = vpack.c.b16 %v6427, %v6427
  %v6437 = vshrl.u32 %v6396, 16
  %v6439 = vshll.u32 %v6396, 16
  %v6441 = vrot.slane %v6439, 1
  %v6442 = vor.u32 %v6437, %v6441
  %v6444 = vshll.u32 %v6428, 16
  %v6446 = vrot.slane %v6444, 1
  %v6447 = vsel %vm110, %v6442, %v6446
  %v6449 = vshrl.u32 %v6397, 16
  %v6451 = vshll.u32 %v6397, 16
  %v6453 = vrot.slane %v6451, 1
  %v6454 = vor.u32 %v6449, %v6453
  %v6456 = vshll.u32 %v6429, 16
  %v6458 = vrot.slane %v6456, 1
  %v6459 = vsel %vm110, %v6454, %v6458
  %v6461 = vshrl.u32 %v6398, 16
  %v6463 = vshll.u32 %v6398, 16
  %v6465 = vrot.slane %v6463, 1
  %v6466 = vor.u32 %v6461, %v6465
  %v6468 = vshll.u32 %v6430, 16
  %v6470 = vrot.slane %v6468, 1
  %v6471 = vsel %vm110, %v6466, %v6470
  %v6473 = vshrl.u32 %v6399, 16
  %v6475 = vshll.u32 %v6399, 16
  %v6477 = vrot.slane %v6475, 1
  %v6478 = vor.u32 %v6473, %v6477
  %v6480 = vshll.u32 %v6431, 16
  %v6482 = vrot.slane %v6480, 1
  %v6483 = vsel %vm110, %v6478, %v6482
  %v6485 = vshrl.u32 %v6400, 16
  %v6487 = vshll.u32 %v6400, 16
  %v6489 = vrot.slane %v6487, 1
  %v6490 = vor.u32 %v6485, %v6489
  %v6492 = vshll.u32 %v6432, 16
  %v6494 = vrot.slane %v6492, 1
  %v6495 = vsel %vm110, %v6490, %v6494
  %v6497 = vshrl.u32 %v6401, 16
  %v6499 = vshll.u32 %v6401, 16
  %v6501 = vrot.slane %v6499, 1
  %v6502 = vor.u32 %v6497, %v6501
  %v6504 = vshll.u32 %v6433, 16
  %v6506 = vrot.slane %v6504, 1
  %v6507 = vsel %vm110, %v6502, %v6506
  %v6509 = vshrl.u32 %v6402, 16
  %v6511 = vshll.u32 %v6402, 16
  %v6513 = vrot.slane %v6511, 1
  %v6514 = vor.u32 %v6509, %v6513
  %v6516 = vshll.u32 %v6434, 16
  %v6518 = vrot.slane %v6516, 1
  %v6519 = vsel %vm110, %v6514, %v6518
  %v6521 = vshrl.u32 %v6403, 16
  %v6523 = vshll.u32 %v6403, 16
  %v6525 = vrot.slane %v6523, 1
  %v6526 = vor.u32 %v6521, %v6525
  %v6528 = vshll.u32 %v6435, 16
  %v6530 = vrot.slane %v6528, 1
  %v6531 = vsel %vm110, %v6526, %v6530
  %v6540 = vrot.slane %v6396, 1
  %v6541 = vrot.slane %v6428, 1
  %v6542 = vsel %vm215, %v6540, %v6541
  %v6543 = vrot.slane %v6397, 1
  %v6544 = vrot.slane %v6429, 1
  %v6545 = vsel %vm215, %v6543, %v6544
  %v6546 = vrot.slane %v6398, 1
  %v6547 = vrot.slane %v6430, 1
  %v6548 = vsel %vm215, %v6546, %v6547
  %v6549 = vrot.slane %v6399, 1
  %v6550 = vrot.slane %v6431, 1
  %v6551 = vsel %vm215, %v6549, %v6550
  %v6552 = vrot.slane %v6400, 1
  %v6553 = vrot.slane %v6432, 1
  %v6554 = vsel %vm215, %v6552, %v6553
  %v6555 = vrot.slane %v6401, 1
  %v6556 = vrot.slane %v6433, 1
  %v6557 = vsel %vm215, %v6555, %v6556
  %v6558 = vrot.slane %v6402, 1
  %v6559 = vrot.slane %v6434, 1
  %v6560 = vsel %vm215, %v6558, %v6559
  %v6561 = vrot.slane %v6403, 1
  %v6562 = vrot.slane %v6435, 1
  %v6563 = vsel %vm215, %v6561, %v6562
  %v6572 = vld [vmem:[%s529] sm:$0xf]
  %v6573 = vld [vmem:[%s529 + $0x4] sm:$0xf]
  %v6574 = vld [vmem:[%s529 + $0x8] sm:$0xf]
  %v6575 = vld [vmem:[%s529 + $0xc] sm:$0xf]
  %v6576 = vld [vmem:[%s529 + $0x10] sm:$0xf]
  %v6577 = vld [vmem:[%s529 + $0x14] sm:$0xf]
  %v6578 = vld [vmem:[%s529 + $0x18] sm:$0xf]
  %v6579 = vld [vmem:[%s529 + $0x1c] sm:$0xf]
  %v6580 = vld [vmem:[%s529 + $0x20] sm:$0xf]
  %v6581 = vld [vmem:[%s529 + $0x24] sm:$0xf]
  %v6582 = vld [vmem:[%s529 + $0x28] sm:$0xf]
  %v6583 = vld [vmem:[%s529 + $0x2c] sm:$0xf]
  %v6584 = vld [vmem:[%s529 + $0x30] sm:$0xf]
  %v6585 = vld [vmem:[%s529 + $0x34] sm:$0xf]
  %v6586 = vld [vmem:[%s529 + $0x38] sm:$0xf]
  %v6587 = vld [vmem:[%s529 + $0x3c] sm:$0xf]
  %v6588 = vld [vmem:[%s529 + $0x40] sm:$0xf]
  %v6589 = vld [vmem:[%s529 + $0x44] sm:$0xf]
  %v6590 = vld [vmem:[%s529 + $0x48] sm:$0xf]
  %v6591 = vld [vmem:[%s529 + $0x4c] sm:$0xf]
  %v6592 = vld [vmem:[%s529 + $0x50] sm:$0xf]
  %v6593 = vld [vmem:[%s529 + $0x54] sm:$0xf]
  %v6594 = vld [vmem:[%s529 + $0x58] sm:$0xf]
  %v6595 = vld [vmem:[%s529 + $0x5c] sm:$0xf]
  %v6596 = vld [vmem:[%s529 + $0x60] sm:$0xf]
  %v6597 = vld [vmem:[%s529 + $0x64] sm:$0xf]
  %v6598 = vld [vmem:[%s529 + $0x68] sm:$0xf]
  %v6599 = vld [vmem:[%s529 + $0x6c] sm:$0xf]
  %v6600 = vld [vmem:[%s529 + $0x70] sm:$0xf]
  %v6601 = vld [vmem:[%s529 + $0x74] sm:$0xf]
  %v6602 = vld [vmem:[%s529 + $0x78] sm:$0xf]
  %v6603 = vld [vmem:[%s529 + $0x7c] sm:$0xf]
  %v6604 = vld [vmem:[%s529 + $0x80] sm:$0xf]
  %v6605 = vld [vmem:[%s529 + $0x84] sm:$0xf]
  %v6606 = vld [vmem:[%s529 + $0x88] sm:$0xf]
  %v6607 = vld [vmem:[%s529 + $0x8c] sm:$0xf]
  %v6608 = vld [vmem:[%s529 + $0x90] sm:$0xf]
  %v6609 = vld [vmem:[%s529 + $0x94] sm:$0xf]
  %v6610 = vld [vmem:[%s529 + $0x98] sm:$0xf]
  %v6611 = vld [vmem:[%s529 + $0x9c] sm:$0xf]
  %v6612 = vld [vmem:[%s529 + $0xa0] sm:$0xf]
  %v6613 = vld [vmem:[%s529 + $0xa4] sm:$0xf]
  %v6614 = vld [vmem:[%s529 + $0xa8] sm:$0xf]
  %v6615 = vld [vmem:[%s529 + $0xac] sm:$0xf]
  %v6616 = vld [vmem:[%s529 + $0xb0] sm:$0xf]
  %v6617 = vld [vmem:[%s529 + $0xb4] sm:$0xf]
  %v6618 = vld [vmem:[%s529 + $0xb8] sm:$0xf]
  %v6619 = vld [vmem:[%s529 + $0xbc] sm:$0xf]
  %v6668 = vunpack.c.l.b16 %v6572
  %v6669 = vunpack.c.l.b16 %v6573
  %v6670 = vunpack.c.l.b16 %v6574
  %v6671 = vunpack.c.l.b16 %v6575
  %v6672 = vunpack.c.l.b16 %v6576
  %v6673 = vunpack.c.l.b16 %v6577
  %v6674 = vunpack.c.l.b16 %v6578
  %v6675 = vunpack.c.l.b16 %v6579
  %v6676 = vunpack.c.l.b16 %v6580
  %v6677 = vunpack.c.l.b16 %v6581
  %v6678 = vunpack.c.l.b16 %v6582
  %v6679 = vunpack.c.l.b16 %v6583
  %v6680 = vunpack.c.l.b16 %v6584
  %v6681 = vunpack.c.l.b16 %v6585
  %v6682 = vunpack.c.l.b16 %v6586
  %v6683 = vunpack.c.l.b16 %v6587
  %v6684 = vunpack.c.l.b16 %v6588
  %v6685 = vunpack.c.l.b16 %v6589
  %v6686 = vunpack.c.l.b16 %v6590
  %v6687 = vunpack.c.l.b16 %v6591
  %v6688 = vunpack.c.l.b16 %v6592
  %v6689 = vunpack.c.l.b16 %v6593
  %v6690 = vunpack.c.l.b16 %v6594
  %v6691 = vunpack.c.l.b16 %v6595
  %v6692 = vunpack.c.l.b16 %v6596
  %v6693 = vunpack.c.l.b16 %v6597
  %v6694 = vunpack.c.l.b16 %v6598
  %v6695 = vunpack.c.l.b16 %v6599
  %v6696 = vunpack.c.l.b16 %v6600
  %v6697 = vunpack.c.l.b16 %v6601
  %v6698 = vunpack.c.l.b16 %v6602
  %v6699 = vunpack.c.l.b16 %v6603
  %v6700 = vunpack.c.l.b16 %v6604
  %v6701 = vunpack.c.l.b16 %v6605
  %v6702 = vunpack.c.l.b16 %v6606
  %v6703 = vunpack.c.l.b16 %v6607
  %v6704 = vunpack.c.l.b16 %v6608
  %v6705 = vunpack.c.l.b16 %v6609
  %v6706 = vunpack.c.l.b16 %v6610
  %v6707 = vunpack.c.l.b16 %v6611
  %v6708 = vunpack.c.l.b16 %v6612
  %v6709 = vunpack.c.l.b16 %v6613
  %v6710 = vunpack.c.l.b16 %v6614
  %v6711 = vunpack.c.l.b16 %v6615
  %v6712 = vunpack.c.l.b16 %v6616
  %v6713 = vunpack.c.l.b16 %v6617
  %v6714 = vunpack.c.l.b16 %v6618
  %v6715 = vunpack.c.l.b16 %v6619
  %v6716 = vpack.c.b16 %v6669, %v6668
  %v6717 = vpack.c.b16 %v6671, %v6670
  %v6718 = vpack.c.b16 %v6673, %v6672
  %v6719 = vpack.c.b16 %v6675, %v6674
  %v6720 = vpack.c.b16 %v6677, %v6676
  %v6721 = vpack.c.b16 %v6679, %v6678
  %v6722 = vpack.c.b16 %v6681, %v6680
  %v6723 = vpack.c.b16 %v6683, %v6682
  %v6724 = vpack.c.b16 %v6685, %v6684
  %v6725 = vpack.c.b16 %v6687, %v6686
  %v6726 = vpack.c.b16 %v6689, %v6688
  %v6727 = vpack.c.b16 %v6691, %v6690
  %v6728 = vpack.c.b16 %v6693, %v6692
  %v6729 = vpack.c.b16 %v6695, %v6694
  %v6730 = vpack.c.b16 %v6697, %v6696
  %v6731 = vpack.c.b16 %v6699, %v6698
  %v6732 = vpack.c.b16 %v6701, %v6700
  %v6733 = vpack.c.b16 %v6703, %v6702
  %v6734 = vpack.c.b16 %v6705, %v6704
  %v6735 = vpack.c.b16 %v6707, %v6706
  %v6736 = vpack.c.b16 %v6709, %v6708
  %v6737 = vpack.c.b16 %v6711, %v6710
  %v6738 = vpack.c.b16 %v6713, %v6712
  %v6739 = vpack.c.b16 %v6715, %v6714
  %6764 = vmatprep.subr.bf16.mxu0 0
  %6765 = vmatpush1.bf16.msra.mxu0 %v6716
  %6766 = vmatprep.subr.bf16.mxu0 0
  %6767 = vmatpush1.bf16.msra.mxu0 %v6717
  %6768 = vmatprep.subr.bf16.mxu0 0
  %6769 = vmatpush1.bf16.msra.mxu0 %v6718
  %6770 = vmatprep.subr.bf16.mxu0 0
  %6771 = vmatpush1.bf16.msra.mxu0 %v6719
  %6772 = vmatprep.subr.bf16.mxu0 0
  %6773 = vmatpush1.bf16.msra.mxu0 %v6720
  %6774 = vmatprep.subr.bf16.mxu0 0
  %6775 = vmatpush1.bf16.msra.mxu0 %v6721
  %6776 = vmatprep.subr.bf16.mxu0 0
  %6777 = vmatpush1.bf16.msra.mxu0 %v6722
  %6778 = vmatprep.subr.bf16.mxu0 0
  %6779 = vmatpush1.bf16.msra.mxu0 %v6723
  %6780 = vmatprep.subr.bf16.mxu0 0
  %6781 = vmatpush1.bf16.msra.mxu0 %v6724
  %6782 = vmatprep.subr.bf16.mxu0 0
  %6783 = vmatpush1.bf16.msra.mxu0 %v6725
  %6784 = vmatprep.subr.bf16.mxu0 0
  %6785 = vmatpush1.bf16.msra.mxu0 %v6726
  %6786 = vmatprep.subr.bf16.mxu0 0
  %6787 = vmatpush1.bf16.msra.mxu0 %v6727
  %6788 = vmatprep.subr.bf16.mxu0 0
  %6789 = vmatpush1.bf16.msra.mxu0 %v6728
  %6790 = vmatprep.subr.bf16.mxu0 0
  %6791 = vmatpush1.bf16.msra.mxu0 %v6729
  %6792 = vmatprep.subr.bf16.mxu0 0
  %6793 = vmatpush1.bf16.msra.mxu0 %v6730
  %6794 = vmatprep.subr.bf16.mxu0 0
  %6795 = vmatpush1.bf16.msra.mxu0 %v6731
  %6796 = vmatprep.mubr.bf16.mxu0 %v6447
  %6797 = vmatmul.mubr.bf16.gmra.mrb[0].mxu0 %v6396
  %v6798 = vpop.f32.mrb[0].mxu0
  %v6799 = vadd.f32 0.0, %v6798
  %v6800 = vpop.f32.mrb[0].mxu0
  %v6801 = vpop.f32.mrb[0].mxu0
  %v6802 = vadd.f32 0.0, %v6801
  %v6803 = vpop.f32.mrb[0].mxu0
  %6804 = vmatprep.mubr.bf16.mxu0 %v6459
  %6805 = vmatmul.mubr.bf16.gmra.mrb[0].mxu0 %v6397
  %v6806 = vpop.f32.mrb[0].mxu0
  %v6807 = vadd.f32 0.0, %v6806
  %v6808 = vpop.f32.mrb[0].mxu0
  %v6809 = vpop.f32.mrb[0].mxu0
  %v6810 = vadd.f32 0.0, %v6809
  %v6811 = vpop.f32.mrb[0].mxu0
  %6812 = vmatprep.mubr.bf16.mxu0 %v6471
  %6813 = vmatmul.mubr.bf16.gmra.mrb[0].mxu0 %v6398
  %v6814 = vpop.f32.mrb[0].mxu0
  %v6815 = vadd.f32 0.0, %v6814
  %v6816 = vpop.f32.mrb[0].mxu0
  %v6817 = vpop.f32.mrb[0].mxu0
  %v6818 = vadd.f32 0.0, %v6817
  %v6819 = vpop.f32.mrb[0].mxu0
  %6820 = vmatprep.mubr.bf16.mxu0 %v6483
  %6821 = vmatmul.mubr.bf16.gmra.mrb[0].mxu0 %v6399
  %v6822 = vpop.f32.mrb[0].mxu0
  %v6823 = vadd.f32 0.0, %v6822
  %v6824 = vpop.f32.mrb[0].mxu0
  %v6825 = vpop.f32.mrb[0].mxu0
  %v6826 = vadd.f32 0.0, %v6825
  %v6827 = vpop.f32.mrb[0].mxu0
  %6828 = vmatprep.mubr.bf16.mxu0 %v6495
  %6829 = vmatmul.mubr.bf16.gmra.mrb[0].mxu0 %v6400
  %v6830 = vpop.f32.mrb[0].mxu0
  %v6831 = vadd.f32 0.0, %v6830
  %v6832 = vpop.f32.mrb[0].mxu0
  %v6833 = vpop.f32.mrb[0].mxu0
  %v6834 = vadd.f32 0.0, %v6833
  %v6835 = vpop.f32.mrb[0].mxu0
  %6836 = vmatprep.mubr.bf16.mxu0 %v6507
  %6837 = vmatmul.mubr.bf16.gmra.mrb[0].mxu0 %v6401
  %v6838 = vpop.f32.mrb[0].mxu0
  %v6839 = vadd.f32 0.0, %v6838
  %v6840 = vpop.f32.mrb[0].mxu0
  %v6841 = vpop.f32.mrb[0].mxu0
  %v6842 = vadd.f32 0.0, %v6841
  %v6843 = vpop.f32.mrb[0].mxu0
  %6844 = vmatprep.mubr.bf16.mxu0 %v6519
  %6845 = vmatmul.mubr.bf16.gmra.mrb[0].mxu0 %v6402
  %v6846 = vpop.f32.mrb[0].mxu0
  %v6847 = vadd.f32 0.0, %v6846
  %v6848 = vpop.f32.mrb[0].mxu0
  %v6849 = vpop.f32.mrb[0].mxu0
  %v6850 = vadd.f32 0.0, %v6849
  %v6851 = vpop.f32.mrb[0].mxu0
  %6852 = vmatprep.mubr.bf16.mxu0 %v6531
  %6853 = vmatmul.mubr.bf16.gmra.mrb[0].mxu0 %v6403
  %v6854 = vpop.f32.mrb[0].mxu0
  %v6855 = vadd.f32 0.0, %v6854
  %v6856 = vpop.f32.mrb[0].mxu0
  %v6857 = vpop.f32.mrb[0].mxu0
  %v6858 = vadd.f32 0.0, %v6857
  %v6859 = vpop.f32.mrb[0].mxu0
  %6860 = vdwg.mxu0
  %6861 = vmatprep.subr.bf16.mxu0 0
  %6862 = vmatpush1.bf16.msra.mxu0 %v6732
  %6863 = vmatprep.subr.bf16.mxu0 0
  %6864 = vmatpush1.bf16.msra.mxu0 %v6733
  %6865 = vmatprep.subr.bf16.mxu0 0
  %6866 = vmatpush1.bf16.msra.mxu0 %v6734
  %6867 = vmatprep.subr.bf16.mxu0 0
  %6868 = vmatpush1.bf16.msra.mxu0 %v6735
  %6869 = vmatprep.subr.bf16.mxu0 0
  %6870 = vmatpush1.bf16.msra.mxu0 %v6736
  %6871 = vmatprep.subr.bf16.mxu0 0
  %6872 = vmatpush1.bf16.msra.mxu0 %v6737
  %6873 = vmatprep.subr.bf16.mxu0 0
  %6874 = vmatpush1.bf16.msra.mxu0 %v6738
  %6875 = vmatprep.subr.bf16.mxu0 0
  %6876 = vmatpush1.bf16.msra.mxu0 %v6739
  %6877 = vmatprep.subr.bf16.mxu0 0
  %6878 = vmatpush1.bf16.msra.mxu0 0
  %6879 = vmatprep.subr.bf16.mxu0 0
  %6880 = vmatpush1.bf16.msra.mxu0 0
  %6881 = vmatprep.subr.bf16.mxu0 0
  %6882 = vmatpush1.bf16.msra.mxu0 0
  %6883 = vmatprep.subr.bf16.mxu0 0
  %6884 = vmatpush1.bf16.msra.mxu0 0
  %6885 = vmatprep.subr.bf16.mxu0 0
  %6886 = vmatpush1.bf16.msra.mxu0 0
  %6887 = vmatprep.subr.bf16.mxu0 0
  %6888 = vmatpush1.bf16.msra.mxu0 0
  %6889 = vmatprep.subr.bf16.mxu0 0
  %6890 = vmatpush1.bf16.msra.mxu0 0
  %6891 = vmatprep.subr.bf16.mxu0 0
  %6892 = vmatpush1.bf16.msra.mxu0 0
  %6893 = vmatprep.mubr.bf16.mxu0 0
  %6894 = vmatmul.mubr.bf16.gmra.mrb[0].mxu0 %v6542
  %v6895 = vpop.f32.mrb[0].mxu0
  %v6896 = vadd.f32 %v6799, %v6895
  %v6897 = vpop.f32.mrb[0].mxu0
  %v6898 = vpop.f32.mrb[0].mxu0
  %v6899 = vadd.f32 %v6802, %v6898
  %v6900 = vpop.f32.mrb[0].mxu0
  %6901 = vmatprep.mubr.bf16.mxu0 0
  %6902 = vmatmul.mubr.bf16.gmra.mrb[0].mxu0 %v6545
  %v6903 = vpop.f32.mrb[0].mxu0
  %v6904 = vadd.f32 %v6807, %v6903
  %v6905 = vpop.f32.mrb[0].mxu0
  %v6906 = vpop.f32.mrb[0].mxu0
  %v6907 = vadd.f32 %v6810, %v6906
  %v6908 = vpop.f32.mrb[0].mxu0
  %6909 = vmatprep.mubr.bf16.mxu0 0
  %6910 = vmatmul.mubr.bf16.gmra.mrb[0].mxu0 %v6548
  %v6911 = vpop.f32.mrb[0].mxu0
  %v6912 = vadd.f32 %v6815, %v6911
  %v6913 = vpop.f32.mrb[0].mxu0
  %v6914 = vpop.f32.mrb[0].mxu0
  %v6915 = vadd.f32 %v6818, %v6914
  %v6916 = vpop.f32.mrb[0].mxu0
  %6917 = vmatprep.mubr.bf16.mxu0 0
  %6918 = vmatmul.mubr.bf16.gmra.mrb[0].mxu0 %v6551
  %v6919 = vpop.f32.mrb[0].mxu0
  %v6920 = vadd.f32 %v6823, %v6919
  %v6921 = vpop.f32.mrb[0].mxu0
  %v6922 = vpop.f32.mrb[0].mxu0
  %v6923 = vadd.f32 %v6826, %v6922
  %v6924 = vpop.f32.mrb[0].mxu0
  %6925 = vmatprep.mubr.bf16.mxu0 0
  %6926 = vmatmul.mubr.bf16.gmra.mrb[0].mxu0 %v6554
  %v6927 = vpop.f32.mrb[0].mxu0
  %v6928 = vadd.f32 %v6831, %v6927
  %v6929 = vpop.f32.mrb[0].mxu0
  %v6930 = vpop.f32.mrb[0].mxu0
  %v6931 = vadd.f32 %v6834, %v6930
  %v6932 = vpop.f32.mrb[0].mxu0
  %6933 = vmatprep.mubr.bf16.mxu0 0
  %6934 = vmatmul.mubr.bf16.gmra.mrb[0].mxu0 %v6557
  %v6935 = vpop.f32.mrb[0].mxu0
  %v6936 = vadd.f32 %v6839, %v6935
  %v6937 = vpop.f32.mrb[0].mxu0
  %v6938 = vpop.f32.mrb[0].mxu0
  %v6939 = vadd.f32 %v6842, %v6938
  %v6940 = vpop.f32.mrb[0].mxu0
  %6941 = vmatprep.mubr.bf16.mxu0 0
  %6942 = vmatmul.mubr.bf16.gmra.mrb[0].mxu0 %v6560
  %v6943 = vpop.f32.mrb[0].mxu0
  %v6944 = vadd.f32 %v6847, %v6943
  %v6945 = vpop.f32.mrb[0].mxu0
  %v6946 = vpop.f32.mrb[0].mxu0
  %v6947 = vadd.f32 %v6850, %v6946
  %v6948 = vpop.f32.mrb[0].mxu0
  %6949 = vmatprep.mubr.bf16.mxu0 0
  %6950 = vmatmul.mubr.bf16.gmra.mrb[0].mxu0 %v6563
  %v6951 = vpop.f32.mrb[0].mxu0
  %v6952 = vadd.f32 %v6855, %v6951
  %v6953 = vpop.f32.mrb[0].mxu0
  %v6954 = vpop.f32.mrb[0].mxu0
  %v6955 = vadd.f32 %v6858, %v6954
  %v6956 = vpop.f32.mrb[0].mxu0
  %6957 = vdwg.mxu0
  %v7006 = vunpack.c.l.b16 %v6291
  %v7007 = vunpack.c.l.b16 %v6292
  %v7008 = vunpack.c.l.b16 %v6293
  %v7009 = vunpack.c.l.b16 %v6294
  %v7010 = vunpack.c.l.b16 %v6295
  %v7011 = vunpack.c.l.b16 %v6296
  %v7012 = vunpack.c.l.b16 %v6297
  %v7013 = vunpack.c.l.b16 %v6298
  %v7014 = vunpack.c.l.b16 %v6299
  %v7015 = vunpack.c.l.b16 %v6300
  %v7016 = vunpack.c.l.b16 %v6301
  %v7017 = vunpack.c.l.b16 %v6302
  %v7018 = vunpack.c.l.b16 %v6303
  %v7019 = vunpack.c.l.b16 %v6304
  %v7020 = vunpack.c.l.b16 %v6305
  %v7021 = vunpack.c.l.b16 %v6306
  %v7022 = vunpack.c.l.b16 %v6307
  %v7023 = vunpack.c.l.b16 %v6308
  %v7024 = vunpack.c.l.b16 %v6309
  %v7025 = vunpack.c.l.b16 %v6310
  %v7026 = vunpack.c.l.b16 %v6311
  %v7027 = vunpack.c.l.b16 %v6312
  %v7028 = vunpack.c.l.b16 %v6313
  %v7029 = vunpack.c.l.b16 %v6314
  %v7030 = vunpack.c.l.b16 %v6315
  %v7031 = vunpack.c.l.b16 %v6316
  %v7032 = vunpack.c.l.b16 %v6317
  %v7033 = vunpack.c.l.b16 %v6318
  %v7034 = vunpack.c.l.b16 %v6319
  %v7035 = vunpack.c.l.b16 %v6320
  %v7036 = vunpack.c.l.b16 %v6321
  %v7037 = vunpack.c.l.b16 %v6322
  %v7038 = vunpack.c.l.b16 %v6323
  %v7039 = vunpack.c.l.b16 %v6324
  %v7040 = vunpack.c.l.b16 %v6325
  %v7041 = vunpack.c.l.b16 %v6326
  %v7042 = vunpack.c.l.b16 %v6327
  %v7043 = vunpack.c.l.b16 %v6328
  %v7044 = vunpack.c.l.b16 %v6329
  %v7045 = vunpack.c.l.b16 %v6330
  %v7046 = vunpack.c.l.b16 %v6331
  %v7047 = vunpack.c.l.b16 %v6332
  %v7048 = vunpack.c.l.b16 %v6333
  %v7049 = vunpack.c.l.b16 %v6334
  %v7050 = vunpack.c.l.b16 %v6335
  %v7051 = vunpack.c.l.b16 %v6336
  %v7052 = vunpack.c.l.b16 %v6337
  %v7053 = vunpack.c.l.b16 %v6338
  %v7054 = vpack.c.b16 %v7007, %v7006
  %v7055 = vpack.c.b16 %v7009, %v7008
  %v7056 = vpack.c.b16 %v7011, %v7010
  %v7057 = vpack.c.b16 %v7013, %v7012
  %v7058 = vpack.c.b16 %v7015, %v7014
  %v7059 = vpack.c.b16 %v7017, %v7016
  %v7060 = vpack.c.b16 %v7019, %v7018
  %v7061 = vpack.c.b16 %v7021, %v7020
  %v7062 = vpack.c.b16 %v7023, %v7022
  %v7063 = vpack.c.b16 %v7025, %v7024
  %v7064 = vpack.c.b16 %v7027, %v7026
  %v7065 = vpack.c.b16 %v7029, %v7028
  %v7066 = vpack.c.b16 %v7031, %v7030
  %v7067 = vpack.c.b16 %v7033, %v7032
  %v7068 = vpack.c.b16 %v7035, %v7034
  %v7069 = vpack.c.b16 %v7037, %v7036
  %v7070 = vpack.c.b16 %v7039, %v7038
  %v7071 = vpack.c.b16 %v7041, %v7040
  %v7072 = vpack.c.b16 %v7043, %v7042
  %v7073 = vpack.c.b16 %v7045, %v7044
  %v7074 = vpack.c.b16 %v7047, %v7046
  %v7075 = vpack.c.b16 %v7049, %v7048
  %v7076 = vpack.c.b16 %v7051, %v7050
  %v7077 = vpack.c.b16 %v7053, %v7052
  %7102 = vmatprep.subr.bf16.mxu0 0
  %7103 = vmatpush1.bf16.msra.mxu0 %v7054
  %7104 = vmatprep.subr.bf16.mxu0 0
  %7105 = vmatpush1.bf16.msra.mxu0 %v7055
  %7106 = vmatprep.subr.bf16.mxu0 0
  %7107 = vmatpush1.bf16.msra.mxu0 %v7056
  %7108 = vmatprep.subr.bf16.mxu0 0
  %7109 = vmatpush1.bf16.msra.mxu0 %v7057
  %7110 = vmatprep.subr.bf16.mxu0 0
  %7111 = vmatpush1.bf16.msra.mxu0 %v7058
  %7112 = vmatprep.subr.bf16.mxu0 0
  %7113 = vmatpush1.bf16.msra.mxu0 %v7059
  %7114 = vmatprep.subr.bf16.mxu0 0
  %7115 = vmatpush1.bf16.msra.mxu0 %v7060
  %7116 = vmatprep.subr.bf16.mxu0 0
  %7117 = vmatpush1.bf16.msra.mxu0 %v7061
  %7118 = vmatprep.subr.bf16.mxu0 0
  %7119 = vmatpush1.bf16.msra.mxu0 %v7062
  %7120 = vmatprep.subr.bf16.mxu0 0
  %7121 = vmatpush1.bf16.msra.mxu0 %v7063
  %7122 = vmatprep.subr.bf16.mxu0 0
  %7123 = vmatpush1.bf16.msra.mxu0 %v7064
  %7124 = vmatprep.subr.bf16.mxu0 0
  %7125 = vmatpush1.bf16.msra.mxu0 %v7065
  %7126 = vmatprep.subr.bf16.mxu0 0
  %7127 = vmatpush1.bf16.msra.mxu0 %v7066
  %7128 = vmatprep.subr.bf16.mxu0 0
  %7129 = vmatpush1.bf16.msra.mxu0 %v7067
  %7130 = vmatprep.subr.bf16.mxu0 0
  %7131 = vmatpush1.bf16.msra.mxu0 %v7068
  %7132 = vmatprep.subr.bf16.mxu0 0
  %7133 = vmatpush1.bf16.msra.mxu0 %v7069
  %7134 = vmatprep.mubr.bf16.mxu0 %v6166
  %7135 = vmatmul.mubr.bf16.gmra.mrb[0].mxu0 %v6115
  %v7136 = vpop.f32.mrb[0].mxu0
  %v7137 = vadd.f32 %v6896, %v7136
  %v7138 = vpop.f32.mrb[0].mxu0
  %v7139 = vpop.f32.mrb[0].mxu0
  %v7140 = vadd.f32 %v6899, %v7139
  %v7141 = vpop.f32.mrb[0].mxu0
  %7142 = vmatprep.mubr.bf16.mxu0 %v6178
  %7143 = vmatmul.mubr.bf16.gmra.mrb[0].mxu0 %v6116
  %v7144 = vpop.f32.mrb[0].mxu0
  %v7145 = vadd.f32 %v6904, %v7144
  %v7146 = vpop.f32.mrb[0].mxu0
  %v7147 = vpop.f32.mrb[0].mxu0
  %v7148 = vadd.f32 %v6907, %v7147
  %v7149 = vpop.f32.mrb[0].mxu0
  %7150 = vmatprep.mubr.bf16.mxu0 %v6190
  %7151 = vmatmul.mubr.bf16.gmra.mrb[0].mxu0 %v6117
  %v7152 = vpop.f32.mrb[0].mxu0
  %v7153 = vadd.f32 %v6912, %v7152
  %v7154 = vpop.f32.mrb[0].mxu0
  %v7155 = vpop.f32.mrb[0].mxu0
  %v7156 = vadd.f32 %v6915, %v7155
  %v7157 = vpop.f32.mrb[0].mxu0
  %7158 = vmatprep.mubr.bf16.mxu0 %v6202
  %7159 = vmatmul.mubr.bf16.gmra.mrb[0].mxu0 %v6118
  %v7160 = vpop.f32.mrb[0].mxu0
  %v7161 = vadd.f32 %v6920, %v7160
  %v7162 = vpop.f32.mrb[0].mxu0
  %v7163 = vpop.f32.mrb[0].mxu0
  %v7164 = vadd.f32 %v6923, %v7163
  %v7165 = vpop.f32.mrb[0].mxu0
  %7166 = vmatprep.mubr.bf16.mxu0 %v6214
  %7167 = vmatmul.mubr.bf16.gmra.mrb[0].mxu0 %v6119
  %v7168 = vpop.f32.mrb[0].mxu0
  %v7169 = vadd.f32 %v6928, %v7168
  %v7170 = vpop.f32.mrb[0].mxu0
  %v7171 = vpop.f32.mrb[0].mxu0
  %v7172 = vadd.f32 %v6931, %v7171
  %v7173 = vpop.f32.mrb[0].mxu0
  %7174 = vmatprep.mubr.bf16.mxu0 %v6226
  %7175 = vmatmul.mubr.bf16.gmra.mrb[0].mxu0 %v6120
  %v7176 = vpop.f32.mrb[0].mxu0
  %v7177 = vadd.f32 %v6936, %v7176
  %v7178 = vpop.f32.mrb[0].mxu0
  %v7179 = vpop.f32.mrb[0].mxu0
  %v7180 = vadd.f32 %v6939, %v7179
  %v7181 = vpop.f32.mrb[0].mxu0
  %7182 = vmatprep.mubr.bf16.mxu0 %v6238
  %7183 = vmatmul.mubr.bf16.gmra.mrb[0].mxu0 %v6121
  %v7184 = vpop.f32.mrb[0].mxu0
  %v7185 = vadd.f32 %v6944, %v7184
  %v7186 = vpop.f32.mrb[0].mxu0
  %v7187 = vpop.f32.mrb[0].mxu0
  %v7188 = vadd.f32 %v6947, %v7187
  %v7189 = vpop.f32.mrb[0].mxu0
  %7190 = vmatprep.mubr.bf16.mxu0 %v6250
  %7191 = vmatmul.mubr.bf16.gmra.mrb[0].mxu0 %v6122
  %v7192 = vpop.f32.mrb[0].mxu0
  %v7193 = vadd.f32 %v6952, %v7192
  %v7194 = vpop.f32.mrb[0].mxu0
  %v7195 = vpop.f32.mrb[0].mxu0
  %v7196 = vadd.f32 %v6955, %v7195
  %v7197 = vpop.f32.mrb[0].mxu0
  %7198 = vdwg.mxu0
  %7199 = vmatprep.subr.bf16.mxu0 0
  %7200 = vmatpush1.bf16.msra.mxu0 %v7070
  %7201 = vmatprep.subr.bf16.mxu0 0
  %7202 = vmatpush1.bf16.msra.mxu0 %v7071
  %7203 = vmatprep.subr.bf16.mxu0 0
  %7204 = vmatpush1.bf16.msra.mxu0 %v7072
  %7205 = vmatprep.subr.bf16.mxu0 0
  %7206 = vmatpush1.bf16.msra.mxu0 %v7073
  %7207 = vmatprep.subr.bf16.mxu0 0
  %7208 = vmatpush1.bf16.msra.mxu0 %v7074
  %7209 = vmatprep.subr.bf16.mxu0 0
  %7210 = vmatpush1.bf16.msra.mxu0 %v7075
  %7211 = vmatprep.subr.bf16.mxu0 0
  %7212 = vmatpush1.bf16.msra.mxu0 %v7076
  %7213 = vmatprep.subr.bf16.mxu0 0
  %7214 = vmatpush1.bf16.msra.mxu0 %v7077
  %7215 = vmatprep.subr.bf16.mxu0 0
  %7216 = vmatpush1.bf16.msra.mxu0 0
  %7217 = vmatprep.subr.bf16.mxu0 0
  %7218 = vmatpush1.bf16.msra.mxu0 0
  %7219 = vmatprep.subr.bf16.mxu0 0
  %7220 = vmatpush1.bf16.msra.mxu0 0
  %7221 = vmatprep.subr.bf16.mxu0 0
  %7222 = vmatpush1.bf16.msra.mxu0 0
  %7223 = vmatprep.subr.bf16.mxu0 0
  %7224 = vmatpush1.bf16.msra.mxu0 0
  %7225 = vmatprep.subr.bf16.mxu0 0
  %7226 = vmatpush1.bf16.msra.mxu0 0
  %7227 = vmatprep.subr.bf16.mxu0 0
  %7228 = vmatpush1.bf16.msra.mxu0 0
  %7229 = vmatprep.subr.bf16.mxu0 0
  %7230 = vmatpush1.bf16.msra.mxu0 0
  %7231 = vmatprep.mubr.bf16.mxu0 0
  %7232 = vmatmul.mubr.bf16.gmra.mrb[0].mxu0 %v6261
  %v7233 = vpop.f32.mrb[0].mxu0
  %v7234 = vadd.f32 %v7137, %v7233
  %v7235 = vpop.f32.mrb[0].mxu0
  %v7236 = vpop.f32.mrb[0].mxu0
  %v7237 = vadd.f32 %v7140, %v7236
  %v7238 = vpop.f32.mrb[0].mxu0
  %7239 = vmatprep.mubr.bf16.mxu0 0
  %7240 = vmatmul.mubr.bf16.gmra.mrb[0].mxu0 %v6264
  %v7241 = vpop.f32.mrb[0].mxu0
  %v7242 = vadd.f32 %v7145, %v7241
  %v7243 = vpop.f32.mrb[0].mxu0
  %v7244 = vpop.f32.mrb[0].mxu0
  %v7245 = vadd.f32 %v7148, %v7244
  %v7246 = vpop.f32.mrb[0].mxu0
  %7247 = vmatprep.mubr.bf16.mxu0 0
  %7248 = vmatmul.mubr.bf16.gmra.mrb[0].mxu0 %v6267
  %v7249 = vpop.f32.mrb[0].mxu0
  %v7250 = vadd.f32 %v7153, %v7249
  %v7251 = vpop.f32.mrb[0].mxu0
  %v7252 = vpop.f32.mrb[0].mxu0
  %v7253 = vadd.f32 %v7156, %v7252
  %v7254 = vpop.f32.mrb[0].mxu0
  %7255 = vmatprep.mubr.bf16.mxu0 0
  %7256 = vmatmul.mubr.bf16.gmra.mrb[0].mxu0 %v6270
  %v7257 = vpop.f32.mrb[0].mxu0
  %v7258 = vadd.f32 %v7161, %v7257
  %v7259 = vpop.f32.mrb[0].mxu0
  %v7260 = vpop.f32.mrb[0].mxu0
  %v7261 = vadd.f32 %v7164, %v7260
  %v7262 = vpop.f32.mrb[0].mxu0
  %7263 = vmatprep.mubr.bf16.mxu0 0
  %7264 = vmatmul.mubr.bf16.gmra.mrb[0].mxu0 %v6273
  %v7265 = vpop.f32.mrb[0].mxu0
  %v7266 = vadd.f32 %v7169, %v7265
  %v7267 = vpop.f32.mrb[0].mxu0
  %v7268 = vpop.f32.mrb[0].mxu0
  %v7269 = vadd.f32 %v7172, %v7268
  %v7270 = vpop.f32.mrb[0].mxu0
  %7271 = vmatprep.mubr.bf16.mxu0 0
  %7272 = vmatmul.mubr.bf16.gmra.mrb[0].mxu0 %v6276
  %v7273 = vpop.f32.mrb[0].mxu0
  %v7274 = vadd.f32 %v7177, %v7273
  %v7275 = vpop.f32.mrb[0].mxu0
  %v7276 = vpop.f32.mrb[0].mxu0
  %v7277 = vadd.f32 %v7180, %v7276
  %v7278 = vpop.f32.mrb[0].mxu0
  %7279 = vmatprep.mubr.bf16.mxu0 0
  %7280 = vmatmul.mubr.bf16.gmra.mrb[0].mxu0 %v6279
  %v7281 = vpop.f32.mrb[0].mxu0
  %v7282 = vadd.f32 %v7185, %v7281
  %v7283 = vpop.f32.mrb[0].mxu0
  %v7284 = vpop.f32.mrb[0].mxu0
  %v7285 = vadd.f32 %v7188, %v7284
  %v7286 = vpop.f32.mrb[0].mxu0
  %7287 = vmatprep.mubr.bf16.mxu0 0
  %7288 = vmatmul.mubr.bf16.gmra.mrb[0].mxu0 %v6282
  %v7289 = vpop.f32.mrb[0].mxu0
  %v7290 = vadd.f32 %v7193, %v7289
  %v7291 = vpop.f32.mrb[0].mxu0
  %v7292 = vpop.f32.mrb[0].mxu0
  %v7293 = vadd.f32 %v7196, %v7292
  %v7294 = vpop.f32.mrb[0].mxu0
  %7295 = vdwg.mxu0
  %s7296 = scalar_lea.vmem %s0, 336
  %v7297 = vld [vmem:[%s7296] sm:$0xf]
  %v7298 = vld [vmem:[%s7296 + $0x4] sm:$0xf]
  %v7299 = vld [vmem:[%s7296 + $0x8] sm:$0x1]
  %v7300 = vld [vmem:[%s7296 + $0xc] sm:$0xf]
  %v7301 = vld [vmem:[%s7296 + $0x10] sm:$0xf]
  %v7302 = vld [vmem:[%s7296 + $0x14] sm:$0x1]
  %v7303 = vld [vmem:[%s7296 + $0x18] sm:$0xf]
  %v7304 = vld [vmem:[%s7296 + $0x1c] sm:$0xf]
  %v7305 = vld [vmem:[%s7296 + $0x20] sm:$0x1]
  %v7306 = vld [vmem:[%s7296 + $0x24] sm:$0xf]
  %v7307 = vld [vmem:[%s7296 + $0x28] sm:$0xf]
  %v7308 = vld [vmem:[%s7296 + $0x2c] sm:$0x1]
  %v7309 = vld [vmem:[%s7296 + $0x30] sm:$0xf]
  %v7310 = vld [vmem:[%s7296 + $0x34] sm:$0xf]
  %v7311 = vld [vmem:[%s7296 + $0x38] sm:$0x1]
  %v7312 = vld [vmem:[%s7296 + $0x3c] sm:$0xf]
  %v7313 = vld [vmem:[%s7296 + $0x40] sm:$0xf]
  %v7314 = vld [vmem:[%s7296 + $0x44] sm:$0x1]
  %v7315 = vld [vmem:[%s7296 + $0x48] sm:$0xf]
  %v7316 = vld [vmem:[%s7296 + $0x4c] sm:$0xf]
  %v7317 = vld [vmem:[%s7296 + $0x50] sm:$0x1]
  %v7318 = vld [vmem:[%s7296 + $0x54] sm:$0xf]
  %v7319 = vld [vmem:[%s7296 + $0x58] sm:$0xf]
  %v7320 = vld [vmem:[%s7296 + $0x5c] sm:$0x1]
  %v7337 = vunpack.c.l.b16 %v7297
  %v7338 = vunpack.c.l.b16 %v7298
  %v7339 = vunpack.c.l.b16 %v7300
  %v7340 = vunpack.c.l.b16 %v7301
  %v7341 = vunpack.c.l.b16 %v7303
  %v7342 = vunpack.c.l.b16 %v7304
  %v7343 = vunpack.c.l.b16 %v7306
  %v7344 = vunpack.c.l.b16 %v7307
  %v7345 = vunpack.c.l.b16 %v7309
  %v7346 = vunpack.c.l.b16 %v7310
  %v7347 = vunpack.c.l.b16 %v7312
  %v7348 = vunpack.c.l.b16 %v7313
  %v7349 = vunpack.c.l.b16 %v7315
  %v7350 = vunpack.c.l.b16 %v7316
  %v7351 = vunpack.c.l.b16 %v7318
  %v7352 = vunpack.c.l.b16 %v7319
  %v7353 = vpack.c.b16 %v7338, %v7337
  %v7354 = vpack.c.b16 %v7340, %v7339
  %v7355 = vpack.c.b16 %v7342, %v7341
  %v7356 = vpack.c.b16 %v7344, %v7343
  %v7357 = vpack.c.b16 %v7346, %v7345
  %v7358 = vpack.c.b16 %v7348, %v7347
  %v7359 = vpack.c.b16 %v7350, %v7349
  %v7360 = vpack.c.b16 %v7352, %v7351
  %v7377 = vunpack.c.l.b16 %v7299
  %v7378 = vunpack.c.l.b16 %v7302
  %v7379 = vunpack.c.l.b16 %v7305
  %v7380 = vunpack.c.l.b16 %v7308
  %v7381 = vunpack.c.l.b16 %v7311
  %v7382 = vunpack.c.l.b16 %v7314
  %v7383 = vunpack.c.l.b16 %v7317
  %v7384 = vunpack.c.l.b16 %v7320
  %v7385 = vpack.c.b16 %v7377, %v7377
  %v7386 = vpack.c.b16 %v7378, %v7378
  %v7387 = vpack.c.b16 %v7379, %v7379
  %v7388 = vpack.c.b16 %v7380, %v7380
  %v7389 = vpack.c.b16 %v7381, %v7381
  %v7390 = vpack.c.b16 %v7382, %v7382
  %v7391 = vpack.c.b16 %v7383, %v7383
  %v7392 = vpack.c.b16 %v7384, %v7384
  %v7394 = vshrl.u32 %v7353, 16
  %v7396 = vshll.u32 %v7353, 16
  %v7398 = vrot.slane %v7396, 1
  %v7399 = vor.u32 %v7394, %v7398
  %v7401 = vshll.u32 %v7385, 16
  %v7403 = vrot.slane %v7401, 1
  %v7404 = vsel %vm110, %v7399, %v7403
  %v7406 = vshrl.u32 %v7354, 16
  %v7408 = vshll.u32 %v7354, 16
  %v7410 = vrot.slane %v7408, 1
  %v7411 = vor.u32 %v7406, %v7410
  %v7413 = vshll.u32 %v7386, 16
  %v7415 = vrot.slane %v7413, 1
  %v7416 = vsel %vm110, %v7411, %v7415
  %v7418 = vshrl.u32 %v7355, 16
  %v7420 = vshll.u32 %v7355, 16
  %v7422 = vrot.slane %v7420, 1
  %v7423 = vor.u32 %v7418, %v7422
  %v7425 = vshll.u32 %v7387, 16
  %v7427 = vrot.slane %v7425, 1
  %v7428 = vsel %vm110, %v7423, %v7427
  %v7430 = vshrl.u32 %v7356, 16
  %v7432 = vshll.u32 %v7356, 16
  %v7434 = vrot.slane %v7432, 1
  %v7435 = vor.u32 %v7430, %v7434
  %v7437 = vshll.u32 %v7388, 16
  %v7439 = vrot.slane %v7437, 1
  %v7440 = vsel %vm110, %v7435, %v7439
  %v7442 = vshrl.u32 %v7357, 16
  %v7444 = vshll.u32 %v7357, 16
  %v7446 = vrot.slane %v7444, 1
  %v7447 = vor.u32 %v7442, %v7446
  %v7449 = vshll.u32 %v7389, 16
  %v7451 = vrot.slane %v7449, 1
  %v7452 = vsel %vm110, %v7447, %v7451
  %v7454 = vshrl.u32 %v7358, 16
  %v7456 = vshll.u32 %v7358, 16
  %v7458 = vrot.slane %v7456, 1
  %v7459 = vor.u32 %v7454, %v7458
  %v7461 = vshll.u32 %v7390, 16
  %v7463 = vrot.slane %v7461, 1
  %v7464 = vsel %vm110, %v7459, %v7463
  %v7466 = vshrl.u32 %v7359, 16
  %v7468 = vshll.u32 %v7359, 16
  %v7470 = vrot.slane %v7468, 1
  %v7471 = vor.u32 %v7466, %v7470
  %v7473 = vshll.u32 %v7391, 16
  %v7475 = vrot.slane %v7473, 1
  %v7476 = vsel %vm110, %v7471, %v7475
  %v7478 = vshrl.u32 %v7360, 16
  %v7480 = vshll.u32 %v7360, 16
  %v7482 = vrot.slane %v7480, 1
  %v7483 = vor.u32 %v7478, %v7482
  %v7485 = vshll.u32 %v7392, 16
  %v7487 = vrot.slane %v7485, 1
  %v7488 = vsel %vm110, %v7483, %v7487
  %v7497 = vrot.slane %v7353, 1
  %v7498 = vrot.slane %v7385, 1
  %v7499 = vsel %vm215, %v7497, %v7498
  %v7500 = vrot.slane %v7354, 1
  %v7501 = vrot.slane %v7386, 1
  %v7502 = vsel %vm215, %v7500, %v7501
  %v7503 = vrot.slane %v7355, 1
  %v7504 = vrot.slane %v7387, 1
  %v7505 = vsel %vm215, %v7503, %v7504
  %v7506 = vrot.slane %v7356, 1
  %v7507 = vrot.slane %v7388, 1
  %v7508 = vsel %vm215, %v7506, %v7507
  %v7509 = vrot.slane %v7357, 1
  %v7510 = vrot.slane %v7389, 1
  %v7511 = vsel %vm215, %v7509, %v7510
  %v7512 = vrot.slane %v7358, 1
  %v7513 = vrot.slane %v7390, 1
  %v7514 = vsel %vm215, %v7512, %v7513
  %v7515 = vrot.slane %v7359, 1
  %v7516 = vrot.slane %v7391, 1
  %v7517 = vsel %vm215, %v7515, %v7516
  %v7518 = vrot.slane %v7360, 1
  %v7519 = vrot.slane %v7392, 1
  %v7520 = vsel %vm215, %v7518, %v7519
  %v7529 = vld [vmem:[%s1487] sm:$0xf]
  %v7530 = vld [vmem:[%s1487 + $0x4] sm:$0xf]
  %v7531 = vld [vmem:[%s1487 + $0x8] sm:$0xf]
  %v7532 = vld [vmem:[%s1487 + $0xc] sm:$0xf]
  %v7533 = vld [vmem:[%s1487 + $0x10] sm:$0xf]
  %v7534 = vld [vmem:[%s1487 + $0x14] sm:$0xf]
  %v7535 = vld [vmem:[%s1487 + $0x18] sm:$0xf]
  %v7536 = vld [vmem:[%s1487 + $0x1c] sm:$0xf]
  %v7537 = vld [vmem:[%s1487 + $0x20] sm:$0xf]
  %v7538 = vld [vmem:[%s1487 + $0x24] sm:$0xf]
  %v7539 = vld [vmem:[%s1487 + $0x28] sm:$0xf]
  %v7540 = vld [vmem:[%s1487 + $0x2c] sm:$0xf]
  %v7541 = vld [vmem:[%s1487 + $0x30] sm:$0xf]
  %v7542 = vld [vmem:[%s1487 + $0x34] sm:$0xf]
  %v7543 = vld [vmem:[%s1487 + $0x38] sm:$0xf]
  %v7544 = vld [vmem:[%s1487 + $0x3c] sm:$0xf]
  %v7545 = vld [vmem:[%s1487 + $0x40] sm:$0xf]
  %v7546 = vld [vmem:[%s1487 + $0x44] sm:$0xf]
  %v7547 = vld [vmem:[%s1487 + $0x48] sm:$0xf]
  %v7548 = vld [vmem:[%s1487 + $0x4c] sm:$0xf]
  %v7549 = vld [vmem:[%s1487 + $0x50] sm:$0xf]
  %v7550 = vld [vmem:[%s1487 + $0x54] sm:$0xf]
  %v7551 = vld [vmem:[%s1487 + $0x58] sm:$0xf]
  %v7552 = vld [vmem:[%s1487 + $0x5c] sm:$0xf]
  %v7553 = vld [vmem:[%s1487 + $0x60] sm:$0xf]
  %v7554 = vld [vmem:[%s1487 + $0x64] sm:$0xf]
  %v7555 = vld [vmem:[%s1487 + $0x68] sm:$0xf]
  %v7556 = vld [vmem:[%s1487 + $0x6c] sm:$0xf]
  %v7557 = vld [vmem:[%s1487 + $0x70] sm:$0xf]
  %v7558 = vld [vmem:[%s1487 + $0x74] sm:$0xf]
  %v7559 = vld [vmem:[%s1487 + $0x78] sm:$0xf]
  %v7560 = vld [vmem:[%s1487 + $0x7c] sm:$0xf]
  %v7561 = vld [vmem:[%s1487 + $0x80] sm:$0xf]
  %v7562 = vld [vmem:[%s1487 + $0x84] sm:$0xf]
  %v7563 = vld [vmem:[%s1487 + $0x88] sm:$0xf]
  %v7564 = vld [vmem:[%s1487 + $0x8c] sm:$0xf]
  %v7565 = vld [vmem:[%s1487 + $0x90] sm:$0xf]
  %v7566 = vld [vmem:[%s1487 + $0x94] sm:$0xf]
  %v7567 = vld [vmem:[%s1487 + $0x98] sm:$0xf]
  %v7568 = vld [vmem:[%s1487 + $0x9c] sm:$0xf]
  %v7569 = vld [vmem:[%s1487 + $0xa0] sm:$0xf]
  %v7570 = vld [vmem:[%s1487 + $0xa4] sm:$0xf]
  %v7571 = vld [vmem:[%s1487 + $0xa8] sm:$0xf]
  %v7572 = vld [vmem:[%s1487 + $0xac] sm:$0xf]
  %v7573 = vld [vmem:[%s1487 + $0xb0] sm:$0xf]
  %v7574 = vld [vmem:[%s1487 + $0xb4] sm:$0xf]
  %v7575 = vld [vmem:[%s1487 + $0xb8] sm:$0xf]
  %v7576 = vld [vmem:[%s1487 + $0xbc] sm:$0xf]
  %v7625 = vunpack.c.l.b16 %v7529
  %v7626 = vunpack.c.l.b16 %v7530
  %v7627 = vunpack.c.l.b16 %v7531
  %v7628 = vunpack.c.l.b16 %v7532
  %v7629 = vunpack.c.l.b16 %v7533
  %v7630 = vunpack.c.l.b16 %v7534
  %v7631 = vunpack.c.l.b16 %v7535
  %v7632 = vunpack.c.l.b16 %v7536
  %v7633 = vunpack.c.l.b16 %v7537
  %v7634 = vunpack.c.l.b16 %v7538
  %v7635 = vunpack.c.l.b16 %v7539
  %v7636 = vunpack.c.l.b16 %v7540
  %v7637 = vunpack.c.l.b16 %v7541
  %v7638 = vunpack.c.l.b16 %v7542
  %v7639 = vunpack.c.l.b16 %v7543
  %v7640 = vunpack.c.l.b16 %v7544
  %v7641 = vunpack.c.l.b16 %v7545
  %v7642 = vunpack.c.l.b16 %v7546
  %v7643 = vunpack.c.l.b16 %v7547
  %v7644 = vunpack.c.l.b16 %v7548
  %v7645 = vunpack.c.l.b16 %v7549
  %v7646 = vunpack.c.l.b16 %v7550
  %v7647 = vunpack.c.l.b16 %v7551
  %v7648 = vunpack.c.l.b16 %v7552
  %v7649 = vunpack.c.l.b16 %v7553
  %v7650 = vunpack.c.l.b16 %v7554
  %v7651 = vunpack.c.l.b16 %v7555
  %v7652 = vunpack.c.l.b16 %v7556
  %v7653 = vunpack.c.l.b16 %v7557
  %v7654 = vunpack.c.l.b16 %v7558
  %v7655 = vunpack.c.l.b16 %v7559
  %v7656 = vunpack.c.l.b16 %v7560
  %v7657 = vunpack.c.l.b16 %v7561
  %v7658 = vunpack.c.l.b16 %v7562
  %v7659 = vunpack.c.l.b16 %v7563
  %v7660 = vunpack.c.l.b16 %v7564
  %v7661 = vunpack.c.l.b16 %v7565
  %v7662 = vunpack.c.l.b16 %v7566
  %v7663 = vunpack.c.l.b16 %v7567
  %v7664 = vunpack.c.l.b16 %v7568
  %v7665 = vunpack.c.l.b16 %v7569
  %v7666 = vunpack.c.l.b16 %v7570
  %v7667 = vunpack.c.l.b16 %v7571
  %v7668 = vunpack.c.l.b16 %v7572
  %v7669 = vunpack.c.l.b16 %v7573
  %v7670 = vunpack.c.l.b16 %v7574
  %v7671 = vunpack.c.l.b16 %v7575
  %v7672 = vunpack.c.l.b16 %v7576
  %v7673 = vpack.c.b16 %v7626, %v7625
  %v7674 = vpack.c.b16 %v7628, %v7627
  %v7675 = vpack.c.b16 %v7630, %v7629
  %v7676 = vpack.c.b16 %v7632, %v7631
  %v7677 = vpack.c.b16 %v7634, %v7633
  %v7678 = vpack.c.b16 %v7636, %v7635
  %v7679 = vpack.c.b16 %v7638, %v7637
  %v7680 = vpack.c.b16 %v7640, %v7639
  %v7681 = vpack.c.b16 %v7642, %v7641
  %v7682 = vpack.c.b16 %v7644, %v7643
  %v7683 = vpack.c.b16 %v7646, %v7645
  %v7684 = vpack.c.b16 %v7648, %v7647
  %v7685 = vpack.c.b16 %v7650, %v7649
  %v7686 = vpack.c.b16 %v7652, %v7651
  %v7687 = vpack.c.b16 %v7654, %v7653
  %v7688 = vpack.c.b16 %v7656, %v7655
  %v7689 = vpack.c.b16 %v7658, %v7657
  %v7690 = vpack.c.b16 %v7660, %v7659
  %v7691 = vpack.c.b16 %v7662, %v7661
  %v7692 = vpack.c.b16 %v7664, %v7663
  %v7693 = vpack.c.b16 %v7666, %v7665
  %v7694 = vpack.c.b16 %v7668, %v7667
  %v7695 = vpack.c.b16 %v7670, %v7669
  %v7696 = vpack.c.b16 %v7672, %v7671
  %7721 = vmatprep.subr.bf16.mxu0 0
  %7722 = vmatpush1.bf16.msra.mxu0 %v7673
  %7723 = vmatprep.subr.bf16.mxu0 0
  %7724 = vmatpush1.bf16.msra.mxu0 %v7674
  %7725 = vmatprep.subr.bf16.mxu0 0
  %7726 = vmatpush1.bf16.msra.mxu0 %v7675
  %7727 = vmatprep.subr.bf16.mxu0 0
  %7728 = vmatpush1.bf16.msra.mxu0 %v7676
  %7729 = vmatprep.subr.bf16.mxu0 0
  %7730 = vmatpush1.bf16.msra.mxu0 %v7677
  %7731 = vmatprep.subr.bf16.mxu0 0
  %7732 = vmatpush1.bf16.msra.mxu0 %v7678
  %7733 = vmatprep.subr.bf16.mxu0 0
  %7734 = vmatpush1.bf16.msra.mxu0 %v7679
  %7735 = vmatprep.subr.bf16.mxu0 0
  %7736 = vmatpush1.bf16.msra.mxu0 %v7680
  %7737 = vmatprep.subr.bf16.mxu0 0
  %7738 = vmatpush1.bf16.msra.mxu0 %v7681
  %7739 = vmatprep.subr.bf16.mxu0 0
  %7740 = vmatpush1.bf16.msra.mxu0 %v7682
  %7741 = vmatprep.subr.bf16.mxu0 0
  %7742 = vmatpush1.bf16.msra.mxu0 %v7683
  %7743 = vmatprep.subr.bf16.mxu0 0
  %7744 = vmatpush1.bf16.msra.mxu0 %v7684
  %7745 = vmatprep.subr.bf16.mxu0 0
  %7746 = vmatpush1.bf16.msra.mxu0 %v7685
  %7747 = vmatprep.subr.bf16.mxu0 0
  %7748 = vmatpush1.bf16.msra.mxu0 %v7686
  %7749 = vmatprep.subr.bf16.mxu0 0
  %7750 = vmatpush1.bf16.msra.mxu0 %v7687
  %7751 = vmatprep.subr.bf16.mxu0 0
  %7752 = vmatpush1.bf16.msra.mxu0 %v7688
  %7753 = vmatprep.mubr.bf16.mxu0 %v7404
  %7754 = vmatmul.mubr.bf16.gmra.mrb[0].mxu0 %v7353
  %v7755 = vpop.f32.mrb[0].mxu0
  %v7756 = vadd.f32 0.0, %v7755
  %v7757 = vpop.f32.mrb[0].mxu0
  %v7758 = vpop.f32.mrb[0].mxu0
  %v7759 = vadd.f32 0.0, %v7758
  %v7760 = vpop.f32.mrb[0].mxu0
  %7761 = vmatprep.mubr.bf16.mxu0 %v7416
  %7762 = vmatmul.mubr.bf16.gmra.mrb[0].mxu0 %v7354
  %v7763 = vpop.f32.mrb[0].mxu0
  %v7764 = vadd.f32 0.0, %v7763
  %v7765 = vpop.f32.mrb[0].mxu0
  %v7766 = vpop.f32.mrb[0].mxu0
  %v7767 = vadd.f32 0.0, %v7766
  %v7768 = vpop.f32.mrb[0].mxu0
  %7769 = vmatprep.mubr.bf16.mxu0 %v7428
  %7770 = vmatmul.mubr.bf16.gmra.mrb[0].mxu0 %v7355
  %v7771 = vpop.f32.mrb[0].mxu0
  %v7772 = vadd.f32 0.0, %v7771
  %v7773 = vpop.f32.mrb[0].mxu0
  %v7774 = vpop.f32.mrb[0].mxu0
  %v7775 = vadd.f32 0.0, %v7774
  %v7776 = vpop.f32.mrb[0].mxu0
  %7777 = vmatprep.mubr.bf16.mxu0 %v7440
  %7778 = vmatmul.mubr.bf16.gmra.mrb[0].mxu0 %v7356
  %v7779 = vpop.f32.mrb[0].mxu0
  %v7780 = vadd.f32 0.0, %v7779
  %v7781 = vpop.f32.mrb[0].mxu0
  %v7782 = vpop.f32.mrb[0].mxu0
  %v7783 = vadd.f32 0.0, %v7782
  %v7784 = vpop.f32.mrb[0].mxu0
  %7785 = vmatprep.mubr.bf16.mxu0 %v7452
  %7786 = vmatmul.mubr.bf16.gmra.mrb[0].mxu0 %v7357
  %v7787 = vpop.f32.mrb[0].mxu0
  %v7788 = vadd.f32 0.0, %v7787
  %v7789 = vpop.f32.mrb[0].mxu0
  %v7790 = vpop.f32.mrb[0].mxu0
  %v7791 = vadd.f32 0.0, %v7790
  %v7792 = vpop.f32.mrb[0].mxu0
  %7793 = vmatprep.mubr.bf16.mxu0 %v7464
  %7794 = vmatmul.mubr.bf16.gmra.mrb[0].mxu0 %v7358
  %v7795 = vpop.f32.mrb[0].mxu0
  %v7796 = vadd.f32 0.0, %v7795
  %v7797 = vpop.f32.mrb[0].mxu0
  %v7798 = vpop.f32.mrb[0].mxu0
  %v7799 = vadd.f32 0.0, %v7798
  %v7800 = vpop.f32.mrb[0].mxu0
  %7801 = vmatprep.mubr.bf16.mxu0 %v7476
  %7802 = vmatmul.mubr.bf16.gmra.mrb[0].mxu0 %v7359
  %v7803 = vpop.f32.mrb[0].mxu0
  %v7804 = vadd.f32 0.0, %v7803
  %v7805 = vpop.f32.mrb[0].mxu0
  %v7806 = vpop.f32.mrb[0].mxu0
  %v7807 = vadd.f32 0.0, %v7806
  %v7808 = vpop.f32.mrb[0].mxu0
  %7809 = vmatprep.mubr.bf16.mxu0 %v7488
  %7810 = vmatmul.mubr.bf16.gmra.mrb[0].mxu0 %v7360
  %v7811 = vpop.f32.mrb[0].mxu0
  %v7812 = vadd.f32 0.0, %v7811
  %v7813 = vpop.f32.mrb[0].mxu0
  %v7814 = vpop.f32.mrb[0].mxu0
  %v7815 = vadd.f32 0.0, %v7814
  %v7816 = vpop.f32.mrb[0].mxu0
  %7817 = vdwg.mxu0
  %7818 = vmatprep.subr.bf16.mxu0 0
  %7819 = vmatpush1.bf16.msra.mxu0 %v7689
  %7820 = vmatprep.subr.bf16.mxu0 0
  %7821 = vmatpush1.bf16.msra.mxu0 %v7690
  %7822 = vmatprep.subr.bf16.mxu0 0
  %7823 = vmatpush1.bf16.msra.mxu0 %v7691
  %7824 = vmatprep.subr.bf16.mxu0 0
  %7825 = vmatpush1.bf16.msra.mxu0 %v7692
  %7826 = vmatprep.subr.bf16.mxu0 0
  %7827 = vmatpush1.bf16.msra.mxu0 %v7693
  %7828 = vmatprep.subr.bf16.mxu0 0
  %7829 = vmatpush1.bf16.msra.mxu0 %v7694
  %7830 = vmatprep.subr.bf16.mxu0 0
  %7831 = vmatpush1.bf16.msra.mxu0 %v7695
  %7832 = vmatprep.subr.bf16.mxu0 0
  %7833 = vmatpush1.bf16.msra.mxu0 %v7696
  %7834 = vmatprep.subr.bf16.mxu0 0
  %7835 = vmatpush1.bf16.msra.mxu0 0
  %7836 = vmatprep.subr.bf16.mxu0 0
  %7837 = vmatpush1.bf16.msra.mxu0 0
  %7838 = vmatprep.subr.bf16.mxu0 0
  %7839 = vmatpush1.bf16.msra.mxu0 0
  %7840 = vmatprep.subr.bf16.mxu0 0
  %7841 = vmatpush1.bf16.msra.mxu0 0
  %7842 = vmatprep.subr.bf16.mxu0 0
  %7843 = vmatpush1.bf16.msra.mxu0 0
  %7844 = vmatprep.subr.bf16.mxu0 0
  %7845 = vmatpush1.bf16.msra.mxu0 0
  %7846 = vmatprep.subr.bf16.mxu0 0
  %7847 = vmatpush1.bf16.msra.mxu0 0
  %7848 = vmatprep.subr.bf16.mxu0 0
  %7849 = vmatpush1.bf16.msra.mxu0 0
  %7850 = vmatprep.mubr.bf16.mxu0 0
  %7851 = vmatmul.mubr.bf16.gmra.mrb[0].mxu0 %v7499
  %v7852 = vpop.f32.mrb[0].mxu0
  %v7853 = vadd.f32 %v7756, %v7852
  %v7854 = vpop.f32.mrb[0].mxu0
  %v7855 = vpop.f32.mrb[0].mxu0
  %v7856 = vadd.f32 %v7759, %v7855
  %v7857 = vpop.f32.mrb[0].mxu0
  %7858 = vmatprep.mubr.bf16.mxu0 0
  %7859 = vmatmul.mubr.bf16.gmra.mrb[0].mxu0 %v7502
  %v7860 = vpop.f32.mrb[0].mxu0
  %v7861 = vadd.f32 %v7764, %v7860
  %v7862 = vpop.f32.mrb[0].mxu0
  %v7863 = vpop.f32.mrb[0].mxu0
  %v7864 = vadd.f32 %v7767, %v7863
  %v7865 = vpop.f32.mrb[0].mxu0
  %7866 = vmatprep.mubr.bf16.mxu0 0
  %7867 = vmatmul.mubr.bf16.gmra.mrb[0].mxu0 %v7505
  %v7868 = vpop.f32.mrb[0].mxu0
  %v7869 = vadd.f32 %v7772, %v7868
  %v7870 = vpop.f32.mrb[0].mxu0
  %v7871 = vpop.f32.mrb[0].mxu0
  %v7872 = vadd.f32 %v7775, %v7871
  %v7873 = vpop.f32.mrb[0].mxu0
  %7874 = vmatprep.mubr.bf16.mxu0 0
  %7875 = vmatmul.mubr.bf16.gmra.mrb[0].mxu0 %v7508
  %v7876 = vpop.f32.mrb[0].mxu0
  %v7877 = vadd.f32 %v7780, %v7876
  %v7878 = vpop.f32.mrb[0].mxu0
  %v7879 = vpop.f32.mrb[0].mxu0
  %v7880 = vadd.f32 %v7783, %v7879
  %v7881 = vpop.f32.mrb[0].mxu0
  %7882 = vmatprep.mubr.bf16.mxu0 0
  %7883 = vmatmul.mubr.bf16.gmra.mrb[0].mxu0 %v7511
  %v7884 = vpop.f32.mrb[0].mxu0
  %v7885 = vadd.f32 %v7788, %v7884
  %v7886 = vpop.f32.mrb[0].mxu0
  %v7887 = vpop.f32.mrb[0].mxu0
  %v7888 = vadd.f32 %v7791, %v7887
  %v7889 = vpop.f32.mrb[0].mxu0
  %7890 = vmatprep.mubr.bf16.mxu0 0
  %7891 = vmatmul.mubr.bf16.gmra.mrb[0].mxu0 %v7514
  %v7892 = vpop.f32.mrb[0].mxu0
  %v7893 = vadd.f32 %v7796, %v7892
  %v7894 = vpop.f32.mrb[0].mxu0
  %v7895 = vpop.f32.mrb[0].mxu0
  %v7896 = vadd.f32 %v7799, %v7895
  %v7897 = vpop.f32.mrb[0].mxu0
  %7898 = vmatprep.mubr.bf16.mxu0 0
  %7899 = vmatmul.mubr.bf16.gmra.mrb[0].mxu0 %v7517
  %v7900 = vpop.f32.mrb[0].mxu0
  %v7901 = vadd.f32 %v7804, %v7900
  %v7902 = vpop.f32.mrb[0].mxu0
  %v7903 = vpop.f32.mrb[0].mxu0
  %v7904 = vadd.f32 %v7807, %v7903
  %v7905 = vpop.f32.mrb[0].mxu0
  %7906 = vmatprep.mubr.bf16.mxu0 0
  %7907 = vmatmul.mubr.bf16.gmra.mrb[0].mxu0 %v7520
  %v7908 = vpop.f32.mrb[0].mxu0
  %v7909 = vadd.f32 %v7812, %v7908
  %v7910 = vpop.f32.mrb[0].mxu0
  %v7911 = vpop.f32.mrb[0].mxu0
  %v7912 = vadd.f32 %v7815, %v7911
  %v7913 = vpop.f32.mrb[0].mxu0
  %7914 = vdwg.mxu0
  %v7915 = vadd.f32 %v7234, %v7853
  %v7916 = vadd.f32 %v7237, %v7856
  %v7917 = vadd.f32 %v7242, %v7861
  %v7918 = vadd.f32 %v7245, %v7864
  %v7919 = vadd.f32 %v7250, %v7869
  %v7920 = vadd.f32 %v7253, %v7872
  %v7921 = vadd.f32 %v7258, %v7877
  %v7922 = vadd.f32 %v7261, %v7880
  %v7923 = vadd.f32 %v7266, %v7885
  %v7924 = vadd.f32 %v7269, %v7888
  %v7925 = vadd.f32 %v7274, %v7893
  %v7926 = vadd.f32 %v7277, %v7896
  %v7927 = vadd.f32 %v7282, %v7901
  %v7928 = vadd.f32 %v7285, %v7904
  %v7929 = vadd.f32 %v7290, %v7909
  %v7930 = vadd.f32 %v7293, %v7912
  %v7931 = vpack.c.bf16 %v7916, %v7915
  %v7932 = vpack.c.bf16 %v7918, %v7917
  %v7933 = vpack.c.bf16 %v7920, %v7919
  %v7934 = vpack.c.bf16 %v7922, %v7921
  %v7935 = vpack.c.bf16 %v7924, %v7923
  %v7936 = vpack.c.bf16 %v7926, %v7925
  %v7937 = vpack.c.bf16 %v7928, %v7927
  %v7938 = vpack.c.bf16 %v7930, %v7929
  %v7947 = vunpack.c.l.b16 %v7931
  %v7948 = vunpack.c.h.b16 %v7931
  %v7949 = vunpack.c.l.b16 %v7932
  %v7950 = vunpack.c.h.b16 %v7932
  %v7951 = vunpack.c.l.b16 %v7933
  %v7952 = vunpack.c.h.b16 %v7933
  %v7953 = vunpack.c.l.b16 %v7934
  %v7954 = vunpack.c.h.b16 %v7934
  %v7955 = vunpack.c.l.b16 %v7935
  %v7956 = vunpack.c.h.b16 %v7935
  %v7957 = vunpack.c.l.b16 %v7936
  %v7958 = vunpack.c.h.b16 %v7936
  %v7959 = vunpack.c.l.b16 %v7937
  %v7960 = vunpack.c.h.b16 %v7937
  %v7961 = vunpack.c.l.b16 %v7938
  %v7962 = vunpack.c.h.b16 %v7938
  %v7963 = vpack.c.b16 %v7947, %v7947
  %v7964 = vpack.c.b16 %v7948, %v7948
  %v7965 = vpack.c.b16 %v7949, %v7949
  %v7966 = vpack.c.b16 %v7950, %v7950
  %v7967 = vpack.c.b16 %v7951, %v7951
  %v7968 = vpack.c.b16 %v7952, %v7952
  %v7969 = vpack.c.b16 %v7953, %v7953
  %v7970 = vpack.c.b16 %v7954, %v7954
  %v7971 = vpack.c.b16 %v7955, %v7955
  %v7972 = vpack.c.b16 %v7956, %v7956
  %v7973 = vpack.c.b16 %v7957, %v7957
  %v7974 = vpack.c.b16 %v7958, %v7958
  %v7975 = vpack.c.b16 %v7959, %v7959
  %v7976 = vpack.c.b16 %v7960, %v7960
  %v7977 = vpack.c.b16 %v7961, %v7961
  %v7978 = vpack.c.b16 %v7962, %v7962
  %s7995 = scalar_lea.vmem %s2, 192
  %7996 = vst [vmem:[%s7995] sm:$0xf] %v7963
  %7997 = vst [vmem:[%s7995 + $0x4] sm:$0xf] %v7964
  %7998 = vst [vmem:[%s7995 + $0x8] sm:$0xf] %v7965
  %7999 = vst [vmem:[%s7995 + $0xc] sm:$0xf] %v7966
  %8000 = vst [vmem:[%s7995 + $0x10] sm:$0xf] %v7967
  %8001 = vst [vmem:[%s7995 + $0x14] sm:$0xf] %v7968
  %8002 = vst [vmem:[%s7995 + $0x18] sm:$0xf] %v7969
  %8003 = vst [vmem:[%s7995 + $0x1c] sm:$0xf] %v7970
  %8004 = vst [vmem:[%s7995 + $0x20] sm:$0xf] %v7971
  %8005 = vst [vmem:[%s7995 + $0x24] sm:$0xf] %v7972
  %8006 = vst [vmem:[%s7995 + $0x28] sm:$0xf] %v7973
  %8007 = vst [vmem:[%s7995 + $0x2c] sm:$0xf] %v7974
  %8008 = vst [vmem:[%s7995 + $0x30] sm:$0xf] %v7975
  %8009 = vst [vmem:[%s7995 + $0x34] sm:$0xf] %v7976
  %8010 = vst [vmem:[%s7995 + $0x38] sm:$0xf] %v7977
  %8011 = vst [vmem:[%s7995 + $0x3c] sm:$0xf] %v7978
  %v8012 = vadd.f32 %v7915, %v7916
  %v8013 = vadd.f32 %v8012, %v7917
  %v8014 = vadd.f32 %v8013, %v7918
  %v8015 = vadd.f32 %v8014, %v7919
  %v8016 = vadd.f32 %v8015, %v7920
  %v8017 = vadd.f32 %v8016, %v7921
  %v8018 = vadd.f32 %v8017, %v7922
  %v8019 = vadd.f32 %v8018, %v7923
  %v8020 = vadd.f32 %v8019, %v7924
  %v8021 = vadd.f32 %v8020, %v7925
  %v8022 = vadd.f32 %v8021, %v7926
  %v8023 = vadd.f32 %v8022, %v7927
  %v8024 = vadd.f32 %v8023, %v7928
  %v8025 = vadd.f32 %v8024, %v7929
  %v8026 = vadd.f32 %v8025, %v7930
  %v8027 = vrot.slane %v8026, 4
  %v8028 = vadd.f32 %v8026, %v8027
  %v8029 = vrot.slane %v8028, 2
  %v8030 = vadd.f32 %v8028, %v8029
  %v8031 = vrot.slane %v8030, 1
  %v8032 = vadd.f32 %v8030, %v8031
  %v8033 = vadd.f32 %v6019, %v8032
  %v8034 = vmul.f32 %v7915, %v7915
  %v8035 = vmul.f32 %v7916, %v7916
  %v8036 = vmul.f32 %v7917, %v7917
  %v8037 = vmul.f32 %v7918, %v7918
  %v8038 = vmul.f32 %v7919, %v7919
  %v8039 = vmul.f32 %v7920, %v7920
  %v8040 = vmul.f32 %v7921, %v7921
  %v8041 = vmul.f32 %v7922, %v7922
  %v8042 = vmul.f32 %v7923, %v7923
  %v8043 = vmul.f32 %v7924, %v7924
  %v8044 = vmul.f32 %v7925, %v7925
  %v8045 = vmul.f32 %v7926, %v7926
  %v8046 = vmul.f32 %v7927, %v7927
  %v8047 = vmul.f32 %v7928, %v7928
  %v8048 = vmul.f32 %v7929, %v7929
  %v8049 = vmul.f32 %v7930, %v7930
  %v8050 = vadd.f32 %v8034, %v8035
  %v8051 = vadd.f32 %v8050, %v8036
  %v8052 = vadd.f32 %v8051, %v8037
  %v8053 = vadd.f32 %v8052, %v8038
  %v8054 = vadd.f32 %v8053, %v8039
  %v8055 = vadd.f32 %v8054, %v8040
  %v8056 = vadd.f32 %v8055, %v8041
  %v8057 = vadd.f32 %v8056, %v8042
  %v8058 = vadd.f32 %v8057, %v8043
  %v8059 = vadd.f32 %v8058, %v8044
  %v8060 = vadd.f32 %v8059, %v8045
  %v8061 = vadd.f32 %v8060, %v8046
  %v8062 = vadd.f32 %v8061, %v8047
  %v8063 = vadd.f32 %v8062, %v8048
  %v8064 = vadd.f32 %v8063, %v8049
  %v8065 = vrot.slane %v8064, 4
  %v8066 = vadd.f32 %v8064, %v8065
  %v8067 = vrot.slane %v8066, 2
  %v8068 = vadd.f32 %v8066, %v8067
  %v8069 = vrot.slane %v8068, 1
  %v8070 = vadd.f32 %v8068, %v8069
  %v8071 = vadd.f32 %v6057, %v8070
  %8072 = vst [vmem:[%s3] sm:$0x1] %v8033
  %8073 = vst [vmem:[%s3 + $0x1] sm:$0x1] %v8071
  %8074 = vst [vmem:[%s3 + $0x2] sm:$0x3f] 0.0
  // Predicated region
  $region10: #{resnet_encoder_forward.10} parent=0 // pred_check
    _
  $region11: #{resnet_encoder_forward.10} parent=0 // pred_check_branch
    %8076 = sbr.rel (0) target = $region13
  $region12: #{resnet_encoder_forward.10} parent=0 // pred_region
    _
  $region13: #{resnet_encoder_forward.10} parent=0 // pred_fallthru
    _
  // Predicated region
  $region14: #{resnet_encoder_forward.10} parent=0 // pred_check
    _
  $region15: #{resnet_encoder_forward.10} parent=0 // pred_check_branch
    %8078 = sbr.rel (0) target = $region17
  $region16: #{resnet_encoder_forward.10} parent=0 // pred_region
    _
  $region17: #{resnet_encoder_forward.10} parent=0 // pred_fallthru
    _
  // Predicated region
  $region18: #{resnet_encoder_forward.10} parent=0 // pred_check
    _
  $region19: #{resnet_encoder_forward.10} parent=0 // pred_check_branch
    %8080 = sbr.rel (0) target = $region21
  $region20: #{resnet_encoder_forward.10} parent=0 // pred_region
    _
  $region21: #{resnet_encoder_forward.10} parent=0 // pred_fallthru
    _
  // Predicated region
  $region22: #{resnet_encoder_forward.10} parent=0 // pred_check
    _
  $region23: #{resnet_encoder_forward.10} parent=0 // pred_check_branch
    %8082 = sbr.rel (0) target = $region25
  $region24: #{resnet_encoder_forward.10} parent=0 // pred_region
    _
  $region25: #{resnet_encoder_forward.10} parent=0 // pred_fallthru
    _

</llo_original>
